<compile_context>
chip_gen: v7x
topology: tpu7x:2x2x1
jax: 0.10.0
libtpu: 0.0.40
codegen_flags: <defaults>
</compile_context>

<pallas_src>
import functools

import jax
import jax.numpy as jnp
from jax import lax
from jax.experimental import pallas as pl
from jax.experimental.pallas import tpu as pltpu

jax.config.update("jax_default_matmul_precision", "highest")

# ---- synthetic EmbeddingNet dimensions ----
CIN, IMG_H, IMG_W = 3, 16, 16
KH = KW = 3
STRIDE, PAD = 2, 1
OH = (IMG_H + 2 * PAD - KH) // STRIDE + 1
OW = (IMG_W + 2 * PAD - KW) // STRIDE + 1
P = OH * OW                 # 64 output spatial positions
K = CIN * KH * KW           # 27 patch length
C1 = 8                      # conv output channels
APP = 128                   # appearance feature dim
MOT = 16                    # motion feature dim
FEAT = APP + MOT            # 144  (matches torch.zeros(len(...), 144))
HID = 64                    # pairwise classifier hidden dim
MOTION_DIM = 4

_VMEM = pl.BlockSpec(memory_space=pltpu.MemorySpace.VMEM)


# ---------------------------------------------------------------------------
# Pallas kernels
# ---------------------------------------------------------------------------
def _conv_relu_kernel(p_ref, wc_ref, bc_ref, o_ref):
    # ((N+M)*P, K) @ (K, C1) + bias, ReLU. Single MXU matmul, whole-array VMEM.
    o_ref[...] = jnp.maximum(
        jnp.dot(p_ref[...], wc_ref[...], preferred_element_type=jnp.float32)
        + bc_ref[...], 0.0)


def conv_relu(patches, wc, bc):
    rows = patches.shape[0]
    return pl.pallas_call(
        _conv_relu_kernel,
        out_shape=jax.ShapeDtypeStruct((rows, C1), jnp.float32),
        in_specs=[_VMEM, _VMEM, _VMEM],
        out_specs=_VMEM,
    )(patches, wc, bc.reshape(1, C1))


def _head_kernel(n_pre, flat_ref, motin_ref, wfp_ref, bf_ref, wm_ref, bm_ref,
                 whpa_ref, whpm_ref, whca_ref, whcm_ref, bh_ref, wd_ref, bd_ref,
                 mat_ref, pre_ref, cur_ref):
    # Appearance FC + motion FC for ALL (pre ++ cur) rows in one shot.
    app = jnp.maximum(
        jnp.dot(flat_ref[...], wfp_ref[...], preferred_element_type=jnp.float32)
        + bf_ref[...], 0.0)                                        # (N+M, 128)
    mot = jnp.maximum(
        jnp.dot(motin_ref[...], wm_ref[...], preferred_element_type=jnp.float32)
        + bm_ref[...], 0.0)                                        # (N+M, 16)

    app_p, app_c = app[:n_pre, :], app[n_pre:, :]
    mot_p, mot_c = mot[:n_pre, :], mot[n_pre:, :]

    # 144-d feature outputs (app | mot concat), written straight from vregs.
    pre_ref[:, 0:APP] = app_p
    pre_ref[:, APP:FEAT] = mot_p
    cur_ref[:, 0:APP] = app_c
    cur_ref[:, APP:FEAT] = mot_c

    # Pairwise head: concat(pre_i, cur_j) @ Wh == pre_i @ Wh_top + cur_j @ Wh_bot,
    # with each half further split into appearance/motion blocks so no in-kernel
    # concatenation is needed.
    a = (jnp.dot(app_p, whpa_ref[...], preferred_element_type=jnp.float32)
         + jnp.dot(mot_p, whpm_ref[...], preferred_element_type=jnp.float32)
         + bh_ref[...])                                            # (N, HID)
    b = (jnp.dot(app_c, whca_ref[...], preferred_element_type=jnp.float32)
         + jnp.dot(mot_c, whcm_ref[...], preferred_element_type=jnp.float32))  # (M, HID)

    # All N*M hidden vectors at once (no per-row loop, no tiny MXU ops).
    h = jnp.maximum(a[:, None, :] + b[None, :, :], 0.0)            # (N, M, HID)
    # softmax(logits)[1] == sigmoid(logit1 - logit0): wd folds the 2-way head.
    d = jnp.sum(h * wd_ref[...][None, :, :], axis=-1)              # (N, M)
    mat_ref[...] = jax.nn.sigmoid(d + bd_ref[...])                 # single store


# ---------------------------------------------------------------------------
# XLA glue (patch extraction, weight re-layout) + forward
# ---------------------------------------------------------------------------
def _extract_patches(crop):
    # (B, CIN, H, W) NCHW -> (B*P, K): one conv_general_dilated_patches op.
    # Channel ordering of K is (Cin, KH, KW)-major, matching PyTorch's
    # (Cout, Cin, KH, KW) conv-weight flattening; the reference uses the same
    # extraction so the basis is consistent by construction.
    bsz = crop.shape[0]
    patches = lax.conv_general_dilated_patches(
        crop, (KH, KW), (STRIDE, STRIDE), ((PAD, PAD), (PAD, PAD)),
        dimension_numbers=("NCHW", "OIHW", "NHWC"))                # (B, OH, OW, K)
    return patches.reshape(bsz * P, K)


def embnet_forward(pre_crop, cur_crop, pre_motion, cur_motion, params):
    n = pre_crop.shape[0]
    m = cur_crop.shape[0]

    # ---- tiny XLA glue: shared patch extraction + weight re-layout ----
    crops = jnp.concatenate([pre_crop, cur_crop], axis=0)          # (N+M, CIN, H, W)
    patches = _extract_patches(crops)                              # ((N+M)*P, K)
    motions = jnp.concatenate([pre_motion, cur_motion], axis=0)    # (N+M, 4)

    # Fold the PyTorch NCHW flatten (B,P,C1)->(B,C1*P) into wf: wf rows are
    # c*P+p (c-major); the kernel's flat rows are p*C1+c (p-major).
    wf_perm = params["wf"].reshape(C1, P, APP).transpose(1, 0, 2).reshape(C1 * P, APP)

    wh = params["wh"]
    whp_a, whp_m = wh[0:APP], wh[APP:FEAT]                         # pre half
    whc_a, whc_m = wh[FEAT:FEAT + APP], wh[FEAT + APP:2 * FEAT]    # cur half
    wd = (params["wo"][:, 1] - params["wo"][:, 0]).reshape(1, HID)
    bd = (params["bo"][1] - params["bo"][0]).reshape(1, 1)

    # ---- kernel 1: conv matmul + ReLU for every crop at once ----
    conv = conv_relu(patches, params["wc"], params["bc"])          # ((N+M)*P, C1)
    flat = conv.reshape(n + m, P * C1)                             # free, contiguous

    # ---- kernel 2: fused FCs + feature concat + pairwise matching head ----
    matrix, pre_feature, cur_feature = pl.pallas_call(
        functools.partial(_head_kernel, n),
        out_shape=(jax.ShapeDtypeStruct((n, m), jnp.float32),
                   jax.ShapeDtypeStruct((n, FEAT), jnp.float32),
                   jax.ShapeDtypeStruct((m, FEAT), jnp.float32)),
        in_specs=[_VMEM] * 13,
        out_specs=(_VMEM, _VMEM, _VMEM),
    )(flat, motions, wf_perm, params["bf"].reshape(1, APP),
      params["wm"], params["bm"].reshape(1, MOT),
      whp_a, whp_m, whc_a, whc_m, params["bh"].reshape(1, HID), wd, bd)

    return matrix, pre_feature, cur_feature


def init_params(key):
    ks = jax.random.split(key, 10)
    s = 0.05
    return dict(
        wc=s * jax.random.normal(ks[0], (K, C1), jnp.float32),
        bc=s * jax.random.normal(ks[1], (C1,), jnp.float32),
        wf=s * jax.random.normal(ks[2], (C1 * P, APP), jnp.float32),
        bf=s * jax.random.normal(ks[3], (APP,), jnp.float32),
        wm=s * jax.random.normal(ks[4], (MOTION_DIM, MOT), jnp.float32),
        bm=s * jax.random.normal(ks[5], (MOT,), jnp.float32),
        wh=s * jax.random.normal(ks[6], (2 * FEAT, HID), jnp.float32),
        bh=s * jax.random.normal(ks[7], (HID,), jnp.float32),
        wo=s * jax.random.normal(ks[8], (HID, 2), jnp.float32),
        bo=s * jax.random.normal(ks[9], (2,), jnp.float32),
    )


# ---------------------------------------------------------------------------
# Pure-JAX reference for validation (PyTorch-style layout & math)
# ---------------------------------------------------------------------------
def reference_forward(pre_crop, cur_crop, pre_motion, cur_motion, p):
    def ref_embed(crop, motion):
        bsz = crop.shape[0]
        patches = _extract_patches(crop)                           # same basis
        conv = jnp.maximum(patches @ p["wc"] + p["bc"], 0.0)
        # PyTorch NCHW flatten: (B, C1, OH*OW) -> (B, C1*P)
        flat = conv.reshape(bsz, P, C1).transpose(0, 2, 1).reshape(bsz, C1 * P)
        app = jnp.maximum(flat @ p["wf"] + p["bf"], 0.0)
        mot = jnp.maximum(motion @ p["wm"] + p["bm"], 0.0)
        return jnp.concatenate([app, mot], axis=1)

    pre_f = ref_embed(pre_crop, pre_motion)
    cur_f = ref_embed(cur_crop, cur_motion)
    a = pre_f @ p["wh"][:FEAT]
    b = cur_f @ p["wh"][FEAT:]
    h = jnp.maximum(a[:, None, :] + b[None, :, :] + p["bh"], 0.0)
    logits = h @ p["wo"] + p["bo"]
    matrix = jax.nn.softmax(logits, axis=-1)[..., 1]
    return matrix, pre_f, cur_f


if __name__ == "__main__":
    key = jax.random.PRNGKey(0)
    kp, kc, kpm, kcm, kw = jax.random.split(key, 5)
    n_pre, n_cur = 3, 4
    pre_crop = jax.random.normal(kp, (n_pre, CIN, IMG_H, IMG_W), jnp.float32)
    cur_crop = jax.random.normal(kc, (n_cur, CIN, IMG_H, IMG_W), jnp.float32)
    pre_motion = jax.random.normal(kpm, (n_pre, MOTION_DIM), jnp.float32)
    cur_motion = jax.random.normal(kcm, (n_cur, MOTION_DIM), jnp.float32)
    params = init_params(kw)

    matrix, pre_feat, cur_feat = jax.jit(embnet_forward)(
        pre_crop, cur_crop, pre_motion, cur_motion, params)
    jax.block_until_ready((matrix, pre_feat, cur_feat))

    r_matrix, r_pre, r_cur = reference_forward(
        pre_crop, cur_crop, pre_motion, cur_motion, params)

    assert matrix.shape == (n_pre, n_cur)
    assert pre_feat.shape == (n_pre, FEAT)
    assert cur_feat.shape == (n_cur, FEAT)
    assert jnp.allclose(matrix, r_matrix, atol=2e-3, rtol=2e-3), "matrix mismatch"
    assert jnp.allclose(pre_feat, r_pre, atol=2e-3, rtol=2e-3), "pre_feature mismatch"
    assert jnp.allclose(cur_feat, r_cur, atol=2e-3, rtol=2e-3), "cur_feature mismatch"

    print("KERNEL_OK")
</pallas_src>

<mosaic_0001>
module attributes {stable_mosaic.version = 11 : i64} {
  func.func @_conv_relu_kernel(%arg0: memref<448x27xf32, #tpu.memory_space<vmem>>, %arg1: memref<27x8xf32, #tpu.memory_space<vmem>>, %arg2: memref<1x8xf32, #tpu.memory_space<vmem>>, %arg3: memref<448x8xf32, #tpu.memory_space<vmem>>) attributes {dimension_semantics = [], scalar_prefetch = 0 : i64, scratch_operands = 0 : i64, tpu.core_type = #tpu.core_type<tc>} {
    %c0 = arith.constant 0 : index
    %c0_0 = arith.constant 0 : index
    %0 = vector.load %arg0[%c0, %c0_0] : memref<448x27xf32, #tpu.memory_space<vmem>>, vector<448x27xf32>
    %c0_1 = arith.constant 0 : index
    %c0_2 = arith.constant 0 : index
    %1 = vector.load %arg1[%c0_1, %c0_2] : memref<27x8xf32, #tpu.memory_space<vmem>>, vector<27x8xf32>
    %cst = arith.constant dense<0.000000e+00> : vector<448x8xf32>
    %2 = tpu.matmul %0, %1, %cst {dimension_numbers = #tpu.dot_dimension_numbers<[1], [0], [0], [1], [0, 0, 1, 1], [], []>, precision = #tpu.contract_precision<fp32>} : vector<448x27xf32>, vector<27x8xf32>, vector<448x8xf32> -> vector<448x8xf32>
    %c0_3 = arith.constant 0 : index
    %c0_4 = arith.constant 0 : index
    %3 = vector.load %arg2[%c0_3, %c0_4] : memref<1x8xf32, #tpu.memory_space<vmem>>, vector<1x8xf32>
    %4 = vector.broadcast %3 : vector<1x8xf32> to vector<448x8xf32>
    %5 = arith.addf %2, %4 : vector<448x8xf32>
    %cst_5 = arith.constant 0.000000e+00 : f32
    %6 = vector.broadcast %cst_5 : f32 to vector<448x8xf32>
    %7 = arith.maximumf %5, %6 : vector<448x8xf32>
    %c0_6 = arith.constant 0 : index
    %c0_7 = arith.constant 0 : index
    %8 = vector.load %arg3[%c0_6, %c0_7] : memref<448x8xf32, #tpu.memory_space<vmem>>, vector<448x8xf32>
    tpu.vector_store %arg3[%c0_6, %c0_7], %7 {strides = array<i32>} : memref<448x8xf32, #tpu.memory_space<vmem>>, vector<448x8xf32>,
    return
  }
}

module attributes {stable_mosaic.version = 11 : i64} {
  func.func @_head_kernel(%arg0: memref<7x512xf32, #tpu.memory_space<vmem>>, %arg1: memref<7x4xf32, #tpu.memory_space<vmem>>, %arg2: memref<512x128xf32, #tpu.memory_space<vmem>>, %arg3: memref<1x128xf32, #tpu.memory_space<vmem>>, %arg4: memref<4x16xf32, #tpu.memory_space<vmem>>, %arg5: memref<1x16xf32, #tpu.memory_space<vmem>>, %arg6: memref<128x64xf32, #tpu.memory_space<vmem>>, %arg7: memref<16x64xf32, #tpu.memory_space<vmem>>, %arg8: memref<128x64xf32, #tpu.memory_space<vmem>>, %arg9: memref<16x64xf32, #tpu.memory_space<vmem>>, %arg10: memref<1x64xf32, #tpu.memory_space<vmem>>, %arg11: memref<1x64xf32, #tpu.memory_space<vmem>>, %arg12: memref<1x1xf32, #tpu.memory_space<vmem>>, %arg13: memref<3x4xf32, #tpu.memory_space<vmem>>, %arg14: memref<3x144xf32, #tpu.memory_space<vmem>>, %arg15: memref<4x144xf32, #tpu.memory_space<vmem>>) attributes {dimension_semantics = [], scalar_prefetch = 0 : i64, scratch_operands = 0 : i64, tpu.core_type = #tpu.core_type<tc>} {
    %c0 = arith.constant 0 : index
    %c0_0 = arith.constant 0 : index
    %0 = vector.load %arg0[%c0, %c0_0] : memref<7x512xf32, #tpu.memory_space<vmem>>, vector<7x512xf32>
    %c0_1 = arith.constant 0 : index
    %c0_2 = arith.constant 0 : index
    %1 = vector.load %arg2[%c0_1, %c0_2] : memref<512x128xf32, #tpu.memory_space<vmem>>, vector<512x128xf32>
    %cst = arith.constant dense<0.000000e+00> : vector<7x128xf32>
    %2 = tpu.matmul %0, %1, %cst {dimension_numbers = #tpu.dot_dimension_numbers<[1], [0], [0], [1], [0, 0, 1, 1], [], []>, precision = #tpu.contract_precision<fp32>} : vector<7x512xf32>, vector<512x128xf32>, vector<7x128xf32> -> vector<7x128xf32>
    %c0_3 = arith.constant 0 : index
    %c0_4 = arith.constant 0 : index
    %3 = vector.load %arg3[%c0_3, %c0_4] : memref<1x128xf32, #tpu.memory_space<vmem>>, vector<1x128xf32>
    %4 = vector.broadcast %3 : vector<1x128xf32> to vector<7x128xf32>
    %5 = arith.addf %2, %4 : vector<7x128xf32>
    %cst_5 = arith.constant 0.000000e+00 : f32
    %6 = vector.broadcast %cst_5 : f32 to vector<7x128xf32>
    %7 = arith.maximumf %5, %6 : vector<7x128xf32>
    %c0_6 = arith.constant 0 : index
    %c0_7 = arith.constant 0 : index
    %8 = vector.load %arg1[%c0_6, %c0_7] : memref<7x4xf32, #tpu.memory_space<vmem>>, vector<7x4xf32>
    %c0_8 = arith.constant 0 : index
    %c0_9 = arith.constant 0 : index
    %9 = vector.load %arg4[%c0_8, %c0_9] : memref<4x16xf32, #tpu.memory_space<vmem>>, vector<4x16xf32>
    %cst_10 = arith.constant dense<0.000000e+00> : vector<7x16xf32>
    %10 = tpu.matmul %8, %9, %cst_10 {dimension_numbers = #tpu.dot_dimension_numbers<[1], [0], [0], [1], [0, 0, 1, 1], [], []>, precision = #tpu.contract_precision<fp32>} : vector<7x4xf32>, vector<4x16xf32>, vector<7x16xf32> -> vector<7x16xf32>
    %c0_11 = arith.constant 0 : index
    %c0_12 = arith.constant 0 : index
    %11 = vector.load %arg5[%c0_11, %c0_12] : memref<1x16xf32, #tpu.memory_space<vmem>>, vector<1x16xf32>
    %12 = vector.broadcast %11 : vector<1x16xf32> to vector<7x16xf32>
    %13 = arith.addf %10, %12 : vector<7x16xf32>
    %cst_13 = arith.constant 0.000000e+00 : f32
    %14 = vector.broadcast %cst_13 : f32 to vector<7x16xf32>
    %15 = arith.maximumf %13, %14 : vector<7x16xf32>
    %16 = vector.extract_strided_slice %7 {offsets = [0, 0], sizes = [3, 128], strides = [1, 1]} : vector<7x128xf32> to vector<3x128xf32>
    %17 = vector.extract_strided_slice %7 {offsets = [3, 0], sizes = [4, 128], strides = [1, 1]} : vector<7x128xf32> to vector<4x128xf32>
    %18 = vector.extract_strided_slice %15 {offsets = [0, 0], sizes = [3, 16], strides = [1, 1]} : vector<7x16xf32> to vector<3x16xf32>
    %19 = vector.extract_strided_slice %15 {offsets = [3, 0], sizes = [4, 16], strides = [1, 1]} : vector<7x16xf32> to vector<4x16xf32>
    %c0_14 = arith.constant 0 : index
    %c0_15 = arith.constant 0 : index
    %20 = vector.load %arg14[%c0_14, %c0_15] : memref<3x144xf32, #tpu.memory_space<vmem>>, vector<3x128xf32>
    tpu.vector_store %arg14[%c0_14, %c0_15], %16 {strides = array<i32>} : memref<3x144xf32, #tpu.memory_space<vmem>>, vector<3x128xf32>,
    %c0_16 = arith.constant 0 : index
    %c128 = arith.constant 128 : index
    %21 = vector.load %arg14[%c0_16, %c128] : memref<3x144xf32, #tpu.memory_space<vmem>>, vector<3x16xf32>
    tpu.vector_store %arg14[%c0_16, %c128], %18 {strides = array<i32>} : memref<3x144xf32, #tpu.memory_space<vmem>>, vector<3x16xf32>,
    %c0_17 = arith.constant 0 : index
    %c0_18 = arith.constant 0 : index
    %22 = vector.load %arg15[%c0_17, %c0_18] : memref<4x144xf32, #tpu.memory_space<vmem>>, vector<4x128xf32>
    tpu.vector_store %arg15[%c0_17, %c0_18], %17 {strides = array<i32>} : memref<4x144xf32, #tpu.memory_space<vmem>>, vector<4x128xf32>,
    %c0_19 = arith.constant 0 : index
    %c128_20 = arith.constant 128 : index
    %23 = vector.load %arg15[%c0_19, %c128_20] : memref<4x144xf32, #tpu.memory_space<vmem>>, vector<4x16xf32>
    tpu.vector_store %arg15[%c0_19, %c128_20], %19 {strides = array<i32>} : memref<4x144xf32, #tpu.memory_space<vmem>>, vector<4x16xf32>,
    %c0_21 = arith.constant 0 : index
    %c0_22 = arith.constant 0 : index
    %24 = vector.load %arg6[%c0_21, %c0_22] : memref<128x64xf32, #tpu.memory_space<vmem>>, vector<128x64xf32>
    %cst_23 = arith.constant dense<0.000000e+00> : vector<3x64xf32>
    %25 = tpu.matmul %16, %24, %cst_23 {dimension_numbers = #tpu.dot_dimension_numbers<[1], [0], [0], [1], [0, 0, 1, 1], [], []>, precision = #tpu.contract_precision<fp32>} : vector<3x128xf32>, vector<128x64xf32>, vector<3x64xf32> -> vector<3x64xf32>
    %c0_24 = arith.constant 0 : index
    %c0_25 = arith.constant 0 : index
    %26 = vector.load %arg7[%c0_24, %c0_25] : memref<16x64xf32, #tpu.memory_space<vmem>>, vector<16x64xf32>
    %cst_26 = arith.constant dense<0.000000e+00> : vector<3x64xf32>
    %27 = tpu.matmul %18, %26, %cst_26 {dimension_numbers = #tpu.dot_dimension_numbers<[1], [0], [0], [1], [0, 0, 1, 1], [], []>, precision = #tpu.contract_precision<fp32>} : vector<3x16xf32>, vector<16x64xf32>, vector<3x64xf32> -> vector<3x64xf32>
    %28 = arith.addf %25, %27 : vector<3x64xf32>
    %c0_27 = arith.constant 0 : index
    %c0_28 = arith.constant 0 : index
    %29 = vector.load %arg10[%c0_27, %c0_28] : memref<1x64xf32, #tpu.memory_space<vmem>>, vector<1x64xf32>
    %30 = vector.broadcast %29 : vector<1x64xf32> to vector<3x64xf32>
    %31 = arith.addf %28, %30 : vector<3x64xf32>
    %c0_29 = arith.constant 0 : index
    %c0_30 = arith.constant 0 : index
    %32 = vector.load %arg8[%c0_29, %c0_30] : memref<128x64xf32, #tpu.memory_space<vmem>>, vector<128x64xf32>
    %cst_31 = arith.constant dense<0.000000e+00> : vector<4x64xf32>
    %33 = tpu.matmul %17, %32, %cst_31 {dimension_numbers = #tpu.dot_dimension_numbers<[1], [0], [0], [1], [0, 0, 1, 1], [], []>, precision = #tpu.contract_precision<fp32>} : vector<4x128xf32>, vector<128x64xf32>, vector<4x64xf32> -> vector<4x64xf32>
    %c0_32 = arith.constant 0 : index
    %c0_33 = arith.constant 0 : index
    %34 = vector.load %arg9[%c0_32, %c0_33] : memref<16x64xf32, #tpu.memory_space<vmem>>, vector<16x64xf32>
    %cst_34 = arith.constant dense<0.000000e+00> : vector<4x64xf32>
    %35 = tpu.matmul %19, %34, %cst_34 {dimension_numbers = #tpu.dot_dimension_numbers<[1], [0], [0], [1], [0, 0, 1, 1], [], []>, precision = #tpu.contract_precision<fp32>} : vector<4x16xf32>, vector<16x64xf32>, vector<4x64xf32> -> vector<4x64xf32>
    %36 = arith.addf %33, %35 : vector<4x64xf32>
    %37 = vector.shape_cast %31 : vector<3x64xf32> to vector<3x1x64xf32>
    %38 = vector.shape_cast %36 : vector<4x64xf32> to vector<1x4x64xf32>
    %39 = vector.broadcast %37 : vector<3x1x64xf32> to vector<3x4x64xf32>
    %40 = vector.broadcast %38 : vector<1x4x64xf32> to vector<3x4x64xf32>
    %41 = arith.addf %39, %40 : vector<3x4x64xf32>
    %cst_35 = arith.constant 0.000000e+00 : f32
    %42 = vector.broadcast %cst_35 : f32 to vector<3x4x64xf32>
    %43 = arith.maximumf %41, %42 : vector<3x4x64xf32>
    %c0_36 = arith.constant 0 : index
    %c0_37 = arith.constant 0 : index
    %44 = vector.load %arg11[%c0_36, %c0_37] : memref<1x64xf32, #tpu.memory_space<vmem>>, vector<1x64xf32>
    %45 = vector.shape_cast %44 : vector<1x64xf32> to vector<1x1x64xf32>
    %46 = vector.broadcast %45 : vector<1x1x64xf32> to vector<3x4x64xf32>
    %47 = arith.mulf %43, %46 : vector<3x4x64xf32>
    %cst_38 = arith.constant dense<0.000000e+00> : vector<3x4xf32>
    %48 = vector.multi_reduction <add>, %47, %cst_38 [2] : vector<3x4x64xf32> to vector<3x4xf32>
    %c0_39 = arith.constant 0 : index
    %c0_40 = arith.constant 0 : index
    %49 = vector.load %arg12[%c0_39, %c0_40] : memref<1x1xf32, #tpu.memory_space<vmem>>, vector<1x1xf32>
    %50 = vector.broadcast %49 : vector<1x1xf32> to vector<3x4xf32>
    %51 = arith.addf %48, %50 : vector<3x4xf32>
    %52 = arith.negf %51 : vector<3x4xf32>
    %53 = math.exp %52 : vector<3x4xf32>
    %cst_41 = arith.constant 1.000000e+00 : f32
    %54 = vector.broadcast %cst_41 : f32 to vector<3x4xf32>
    %55 = arith.addf %54, %53 : vector<3x4xf32>
    %56 = arith.divf %54, %55 : vector<3x4xf32>
    %c0_42 = arith.constant 0 : index
    %c0_43 = arith.constant 0 : index
    %57 = vector.load %arg13[%c0_42, %c0_43] : memref<3x4xf32, #tpu.memory_space<vmem>>, vector<3x4xf32>
    tpu.vector_store %arg13[%c0_42, %c0_43], %56 {strides = array<i32>} : memref<3x4xf32, #tpu.memory_space<vmem>>, vector<3x4xf32>,
    return
  }
}

</mosaic_0001>

<llo_original>
// kernel: embnet_forward.2
$region0: #{embnet_forward.2}
  #allocation0 [shape = 'u32[]', space=smem, size = 0x4, offset = 0x4, fixed_abs, tag = 'smem constant byte address 0x4 - core index']
  #allocation1 [shape = 'u32[144,128]{1,0:T(1,128)}', space=vmem, size = 0x12000, scoped, tag = 'internal scratch']
  %s0 = inlined_call_operand.vmem [shape: f32[448,27], index: 0, kind: input, shape index: {}]
  %s1 = inlined_call_operand.vmem [shape: f32[27,8], index: 1, kind: input, shape index: {}]
  %s2 = inlined_call_operand.vmem [shape: f32[1,8], index: 2, kind: input, shape index: {}]
  %s3 = inlined_call_operand.vmem [shape: f32[448,8], index: 3, kind: output, shape index: {}]
  %s4 = sld [smem:[#allocation0]]
  $region22: #{embnet_forward.2} parent=0
    _
  %s6 = ssub.s32 1, %s4
  %s7 = scalar_select 0, %s6, %s4
  // Predicated region
  $region2: #{embnet_forward.2} parent=0 // pred_check
    _
  $region3: #{embnet_forward.2} parent=0 // pred_check_branch
    %9 = sbr.rel (0) target = $region5
  $region4: #{embnet_forward.2} parent=0 // pred_region
    _
  $region5: #{embnet_forward.2} parent=0 // pred_fallthru
    _
  // Predicated region
  $region6: #{embnet_forward.2} parent=0 // pred_check
    _
  $region7: #{embnet_forward.2} parent=0 // pred_check_branch
    %11 = sbr.rel (0) target = $region9
  $region8: #{embnet_forward.2} parent=0 // pred_region
    _
  $region9: #{embnet_forward.2} parent=0 // pred_fallthru
    _
  // Predicated region
  $region10: #{embnet_forward.2} parent=0 // pred_check
    _
  $region11: #{embnet_forward.2} parent=0 // pred_check_branch
    %13 = sbr.rel (0) target = $region13
  $region12: #{embnet_forward.2} parent=0 // pred_region
    _
  $region13: #{embnet_forward.2} parent=0 // pred_fallthru
    _
  %v14 = vld [vmem:[%s0] sm:$0xff]
  %v15 = vld [vmem:[%s0 + $0x8] sm:$0xff]
  %v16 = vld [vmem:[%s0 + $0x10] sm:$0xff]
  %v17 = vld [vmem:[%s0 + $0x18] sm:$0xff]
  %v18 = vld [vmem:[%s0 + $0x20] sm:$0xff]
  %v19 = vld [vmem:[%s0 + $0x28] sm:$0xff]
  %v20 = vld [vmem:[%s0 + $0x30] sm:$0xff]
  %v21 = vld [vmem:[%s0 + $0x38] sm:$0xff]
  %v22 = vld [vmem:[%s0 + $0x40] sm:$0xff]
  %v23 = vld [vmem:[%s0 + $0x48] sm:$0xff]
  %v24 = vld [vmem:[%s0 + $0x50] sm:$0xff]
  %v25 = vld [vmem:[%s0 + $0x58] sm:$0xff]
  %v26 = vld [vmem:[%s0 + $0x60] sm:$0xff]
  %v27 = vld [vmem:[%s0 + $0x68] sm:$0xff]
  %v28 = vld [vmem:[%s0 + $0x70] sm:$0xff]
  %v29 = vld [vmem:[%s0 + $0x78] sm:$0xff]
  %v30 = vld [vmem:[%s0 + $0x80] sm:$0xff]
  %v31 = vld [vmem:[%s0 + $0x88] sm:$0xff]
  %v32 = vld [vmem:[%s0 + $0x90] sm:$0xff]
  %v33 = vld [vmem:[%s0 + $0x98] sm:$0xff]
  %v34 = vld [vmem:[%s0 + $0xa0] sm:$0xff]
  %v35 = vld [vmem:[%s0 + $0xa8] sm:$0xff]
  %v36 = vld [vmem:[%s0 + $0xb0] sm:$0xff]
  %v37 = vld [vmem:[%s0 + $0xb8] sm:$0xff]
  %v38 = vld [vmem:[%s0 + $0xc0] sm:$0xff]
  %v39 = vld [vmem:[%s0 + $0xc8] sm:$0xff]
  %v40 = vld [vmem:[%s0 + $0xd0] sm:$0xff]
  %v41 = vld [vmem:[%s0 + $0xd8] sm:$0xff]
  %v42 = vld [vmem:[%s0 + $0xe0] sm:$0xff]
  %v43 = vld [vmem:[%s0 + $0xe8] sm:$0xff]
  %v44 = vld [vmem:[%s0 + $0xf0] sm:$0xff]
  %v45 = vld [vmem:[%s0 + $0xf8] sm:$0xff]
  %v46 = vld [vmem:[%s0 + $0x100] sm:$0xff]
  %v47 = vld [vmem:[%s0 + $0x108] sm:$0xff]
  %v48 = vld [vmem:[%s0 + $0x110] sm:$0xff]
  %v49 = vld [vmem:[%s0 + $0x118] sm:$0xff]
  %v50 = vld [vmem:[%s0 + $0x120] sm:$0xff]
  %v51 = vld [vmem:[%s0 + $0x128] sm:$0xff]
  %v52 = vld [vmem:[%s0 + $0x130] sm:$0xff]
  %v53 = vld [vmem:[%s0 + $0x138] sm:$0xff]
  %v54 = vld [vmem:[%s0 + $0x140] sm:$0xff]
  %v55 = vld [vmem:[%s0 + $0x148] sm:$0xff]
  %v56 = vld [vmem:[%s0 + $0x150] sm:$0xff]
  %v57 = vld [vmem:[%s0 + $0x158] sm:$0xff]
  %v58 = vld [vmem:[%s0 + $0x160] sm:$0xff]
  %v59 = vld [vmem:[%s0 + $0x168] sm:$0xff]
  %v60 = vld [vmem:[%s0 + $0x170] sm:$0xff]
  %v61 = vld [vmem:[%s0 + $0x178] sm:$0xff]
  %v62 = vld [vmem:[%s0 + $0x180] sm:$0xff]
  %v63 = vld [vmem:[%s0 + $0x188] sm:$0xff]
  %v64 = vld [vmem:[%s0 + $0x190] sm:$0xff]
  %v65 = vld [vmem:[%s0 + $0x198] sm:$0xff]
  %v66 = vld [vmem:[%s0 + $0x1a0] sm:$0xff]
  %v67 = vld [vmem:[%s0 + $0x1a8] sm:$0xff]
  %v68 = vld [vmem:[%s0 + $0x1b0] sm:$0xff]
  %v69 = vld [vmem:[%s0 + $0x1b8] sm:$0xff]
  %v70 = vld [vmem:[%s1] sm:$0xff]
  %v71 = vld [vmem:[%s1 + $0x8] sm:$0xff]
  %v72 = vld [vmem:[%s1 + $0x10] sm:$0xff]
  %v73 = vld [vmem:[%s1 + $0x18] sm:$0x7]
  %v74 = vld [vmem:[%s2] sm:$0x1]
  %v76 = vlaneseq
  %v77 = vshrl.u32 %v76, 7
  %v78 = vsub.s32 0, %v77
  %v79 = vrot.slane %v74, %v78
  %vm81 = vcmask 220160
  %v83 = vsel %vm81, %v14, 0
  %v86 = vsel %vm81, %v15, 0
  %v89 = vsel %vm81, %v16, 0
  %v92 = vsel %vm81, %v17, 0
  %v95 = vsel %vm81, %v18, 0
  %v98 = vsel %vm81, %v19, 0
  %v101 = vsel %vm81, %v20, 0
  %v104 = vsel %vm81, %v21, 0
  %v107 = vsel %vm81, %v22, 0
  %v110 = vsel %vm81, %v23, 0
  %v113 = vsel %vm81, %v24, 0
  %v116 = vsel %vm81, %v25, 0
  %v119 = vsel %vm81, %v26, 0
  %v122 = vsel %vm81, %v27, 0
  %v125 = vsel %vm81, %v28, 0
  %v128 = vsel %vm81, %v29, 0
  %v131 = vsel %vm81, %v30, 0
  %v134 = vsel %vm81, %v31, 0
  %v137 = vsel %vm81, %v32, 0
  %v140 = vsel %vm81, %v33, 0
  %v143 = vsel %vm81, %v34, 0
  %v146 = vsel %vm81, %v35, 0
  %v149 = vsel %vm81, %v36, 0
  %v152 = vsel %vm81, %v37, 0
  %v155 = vsel %vm81, %v38, 0
  %v158 = vsel %vm81, %v39, 0
  %v161 = vsel %vm81, %v40, 0
  %v164 = vsel %vm81, %v41, 0
  %v167 = vsel %vm81, %v42, 0
  %v170 = vsel %vm81, %v43, 0
  %v173 = vsel %vm81, %v44, 0
  %v176 = vsel %vm81, %v45, 0
  %v179 = vsel %vm81, %v46, 0
  %v182 = vsel %vm81, %v47, 0
  %v185 = vsel %vm81, %v48, 0
  %v188 = vsel %vm81, %v49, 0
  %v191 = vsel %vm81, %v50, 0
  %v194 = vsel %vm81, %v51, 0
  %v197 = vsel %vm81, %v52, 0
  %v200 = vsel %vm81, %v53, 0
  %v203 = vsel %vm81, %v54, 0
  %v206 = vsel %vm81, %v55, 0
  %v209 = vsel %vm81, %v56, 0
  %v212 = vsel %vm81, %v57, 0
  %v215 = vsel %vm81, %v58, 0
  %v218 = vsel %vm81, %v59, 0
  %v221 = vsel %vm81, %v60, 0
  %v224 = vsel %vm81, %v61, 0
  %v227 = vsel %vm81, %v62, 0
  %v230 = vsel %vm81, %v63, 0
  %v233 = vsel %vm81, %v64, 0
  %v236 = vsel %vm81, %v65, 0
  %v239 = vsel %vm81, %v66, 0
  %v242 = vsel %vm81, %v67, 0
  %v245 = vsel %vm81, %v68, 0
  %v248 = vsel %vm81, %v69, 0
  %vm250 = vcmask 1042432
  %v252 = vsel %vm250, %v73, 0
  %254 = vmatprep.subr.mxu0 0.0
  %v255 = vand.u32 %v70, 4294901760
  %256 = vmatpush1.msra.mxu0 %v255
  %257 = vmatprep.subr.mxu0 0.0
  %v258 = vand.u32 %v71, 4294901760
  %259 = vmatpush1.msra.mxu0 %v258
  %260 = vmatprep.subr.mxu0 0.0
  %v261 = vand.u32 %v72, 4294901760
  %262 = vmatpush1.msra.mxu0 %v261
  %263 = vmatprep.subr.mxu0 0.0
  %v264 = vand.u32 %v252, 4294901760
  %265 = vmatpush1.msra.mxu0 %v264
  %266 = vmatprep.subr.mxu0 0.0
  %267 = vmatpush1.msra.mxu0 0.0
  %268 = vmatprep.subr.mxu0 0.0
  %269 = vmatpush1.msra.mxu0 0.0
  %270 = vmatprep.subr.mxu0 0.0
  %271 = vmatpush1.msra.mxu0 0.0
  %272 = vmatprep.subr.mxu0 0.0
  %273 = vmatpush1.msra.mxu0 0.0
  %274 = vmatprep.subr.mxu0 0.0
  %275 = vmatpush1.msra.mxu0 0.0
  %276 = vmatprep.subr.mxu0 0.0
  %277 = vmatpush1.msra.mxu0 0.0
  %278 = vmatprep.subr.mxu0 0.0
  %279 = vmatpush1.msra.mxu0 0.0
  %280 = vmatprep.subr.mxu0 0.0
  %281 = vmatpush1.msra.mxu0 0.0
  %282 = vmatprep.subr.mxu0 0.0
  %283 = vmatpush1.msra.mxu0 0.0
  %284 = vmatprep.subr.mxu0 0.0
  %285 = vmatpush1.msra.mxu0 0.0
  %286 = vmatprep.subr.mxu0 0.0
  %287 = vmatpush1.msra.mxu0 0.0
  %288 = vmatprep.subr.mxu0 0.0
  %289 = vmatpush1.msra.mxu0 0.0
  %290 = vmatprep.subr.mxu0 0.0
  %291 = vmatpush1.msra.mxu0 0.0
  %292 = vmatprep.subr.mxu0 0.0
  %293 = vmatpush1.msra.mxu0 0.0
  %294 = vmatprep.subr.mxu0 0.0
  %295 = vmatpush1.msra.mxu0 0.0
  %296 = vmatprep.subr.mxu0 0.0
  %297 = vmatpush1.msra.mxu0 0.0
  %298 = vmatprep.subr.mxu0 0.0
  %299 = vmatpush1.msra.mxu0 0.0
  %300 = vmatprep.subr.mxu0 0.0
  %301 = vmatpush1.msra.mxu0 0.0
  %302 = vmatprep.subr.mxu0 0.0
  %303 = vmatpush1.msra.mxu0 0.0
  %304 = vmatprep.subr.mxu0 0.0
  %305 = vmatpush1.msra.mxu0 0.0
  %306 = vmatprep.subr.mxu0 0.0
  %307 = vmatpush1.msra.mxu0 0.0
  %308 = vmatprep.subr.mxu0 0.0
  %309 = vmatpush1.msra.mxu0 0.0
  %310 = vmatprep.subr.mxu0 0.0
  %311 = vmatpush1.msra.mxu0 0.0
  %312 = vmatprep.subr.mxu0 0.0
  %313 = vmatpush1.msra.mxu0 0.0
  %314 = vmatprep.subr.mxu0 0.0
  %315 = vmatpush1.msra.mxu0 0.0
  %316 = vmatprep.subr.mxu0 0.0
  %317 = vmatpush1.msra.mxu0 0.0
  %318 = vmatprep.subr.mxu0 0.0
  %319 = vmatpush1.msra.mxu0 0.0
  %320 = vmatprep.subr.mxu0 0.0
  %321 = vmatpush1.msra.mxu0 0.0
  %322 = vmatprep.mubr.f32.mxu0 0.0
  %v323 = vand.u32 %v83, 4294901760
  %v324 = vsub.f32 %v83, %v323
  %v325 = vand.u32 %v324, 4294901760
  %v326 = vsub.f32 %v324, %v325
  %v327 = vand.u32 %v326, 4294901760
  %328 = vmatmul.mubr.f32.gmra.mrb[0].mxu0 %v327
  %v329 = vpop.f32.mrb[0].mxu0
  %v330 = vadd.f32 %v79, %v329
  %v331 = vpop.f32.mrb[0].mxu0
  %332 = vmatprep.mubr.f32.mxu0 0.0
  %v333 = vand.u32 %v86, 4294901760
  %v334 = vsub.f32 %v86, %v333
  %v335 = vand.u32 %v334, 4294901760
  %v336 = vsub.f32 %v334, %v335
  %v337 = vand.u32 %v336, 4294901760
  %338 = vmatmul.mubr.f32.gmra.mrb[0].mxu0 %v337
  %v339 = vpop.f32.mrb[0].mxu0
  %v340 = vadd.f32 %v79, %v339
  %v341 = vpop.f32.mrb[0].mxu0
  %342 = vmatprep.mubr.f32.mxu0 0.0
  %v343 = vand.u32 %v89, 4294901760
  %v344 = vsub.f32 %v89, %v343
  %v345 = vand.u32 %v344, 4294901760
  %v346 = vsub.f32 %v344, %v345
  %v347 = vand.u32 %v346, 4294901760
  %348 = vmatmul.mubr.f32.gmra.mrb[0].mxu0 %v347
  %v349 = vpop.f32.mrb[0].mxu0
  %v350 = vadd.f32 %v79, %v349
  %v351 = vpop.f32.mrb[0].mxu0
  %352 = vmatprep.mubr.f32.mxu0 0.0
  %v353 = vand.u32 %v92, 4294901760
  %v354 = vsub.f32 %v92, %v353
  %v355 = vand.u32 %v354, 4294901760
  %v356 = vsub.f32 %v354, %v355
  %v357 = vand.u32 %v356, 4294901760
  %358 = vmatmul.mubr.f32.gmra.mrb[0].mxu0 %v357
  %v359 = vpop.f32.mrb[0].mxu0
  %v360 = vadd.f32 %v79, %v359
  %v361 = vpop.f32.mrb[0].mxu0
  %362 = vmatprep.mubr.f32.mxu0 0.0
  %v363 = vand.u32 %v95, 4294901760
  %v364 = vsub.f32 %v95, %v363
  %v365 = vand.u32 %v364, 4294901760
  %v366 = vsub.f32 %v364, %v365
  %v367 = vand.u32 %v366, 4294901760
  %368 = vmatmul.mubr.f32.gmra.mrb[0].mxu0 %v367
  %v369 = vpop.f32.mrb[0].mxu0
  %v370 = vadd.f32 %v79, %v369
  %v371 = vpop.f32.mrb[0].mxu0
  %372 = vmatprep.mubr.f32.mxu0 0.0
  %v373 = vand.u32 %v98, 4294901760
  %v374 = vsub.f32 %v98, %v373
  %v375 = vand.u32 %v374, 4294901760
  %v376 = vsub.f32 %v374, %v375
  %v377 = vand.u32 %v376, 4294901760
  %378 = vmatmul.mubr.f32.gmra.mrb[0].mxu0 %v377
  %v379 = vpop.f32.mrb[0].mxu0
  %v380 = vadd.f32 %v79, %v379
  %v381 = vpop.f32.mrb[0].mxu0
  %382 = vmatprep.mubr.f32.mxu0 0.0
  %v383 = vand.u32 %v101, 4294901760
  %v384 = vsub.f32 %v101, %v383
  %v385 = vand.u32 %v384, 4294901760
  %v386 = vsub.f32 %v384, %v385
  %v387 = vand.u32 %v386, 4294901760
  %388 = vmatmul.mubr.f32.gmra.mrb[0].mxu0 %v387
  %v389 = vpop.f32.mrb[0].mxu0
  %v390 = vadd.f32 %v79, %v389
  %v391 = vpop.f32.mrb[0].mxu0
  %392 = vmatprep.mubr.f32.mxu0 0.0
  %v393 = vand.u32 %v104, 4294901760
  %v394 = vsub.f32 %v104, %v393
  %v395 = vand.u32 %v394, 4294901760
  %v396 = vsub.f32 %v394, %v395
  %v397 = vand.u32 %v396, 4294901760
  %398 = vmatmul.mubr.f32.gmra.mrb[0].mxu0 %v397
  %v399 = vpop.f32.mrb[0].mxu0
  %v400 = vadd.f32 %v79, %v399
  %v401 = vpop.f32.mrb[0].mxu0
  %402 = vmatprep.mubr.f32.mxu0 0.0
  %v403 = vand.u32 %v107, 4294901760
  %v404 = vsub.f32 %v107, %v403
  %v405 = vand.u32 %v404, 4294901760
  %v406 = vsub.f32 %v404, %v405
  %v407 = vand.u32 %v406, 4294901760
  %408 = vmatmul.mubr.f32.gmra.mrb[0].mxu0 %v407
  %v409 = vpop.f32.mrb[0].mxu0
  %v410 = vadd.f32 %v79, %v409
  %v411 = vpop.f32.mrb[0].mxu0
  %412 = vmatprep.mubr.f32.mxu0 0.0
  %v413 = vand.u32 %v110, 4294901760
  %v414 = vsub.f32 %v110, %v413
  %v415 = vand.u32 %v414, 4294901760
  %v416 = vsub.f32 %v414, %v415
  %v417 = vand.u32 %v416, 4294901760
  %418 = vmatmul.mubr.f32.gmra.mrb[0].mxu0 %v417
  %v419 = vpop.f32.mrb[0].mxu0
  %v420 = vadd.f32 %v79, %v419
  %v421 = vpop.f32.mrb[0].mxu0
  %422 = vmatprep.mubr.f32.mxu0 0.0
  %v423 = vand.u32 %v113, 4294901760
  %v424 = vsub.f32 %v113, %v423
  %v425 = vand.u32 %v424, 4294901760
  %v426 = vsub.f32 %v424, %v425
  %v427 = vand.u32 %v426, 4294901760
  %428 = vmatmul.mubr.f32.gmra.mrb[0].mxu0 %v427
  %v429 = vpop.f32.mrb[0].mxu0
  %v430 = vadd.f32 %v79, %v429
  %v431 = vpop.f32.mrb[0].mxu0
  %432 = vmatprep.mubr.f32.mxu0 0.0
  %v433 = vand.u32 %v116, 4294901760
  %v434 = vsub.f32 %v116, %v433
  %v435 = vand.u32 %v434, 4294901760
  %v436 = vsub.f32 %v434, %v435
  %v437 = vand.u32 %v436, 4294901760
  %438 = vmatmul.mubr.f32.gmra.mrb[0].mxu0 %v437
  %v439 = vpop.f32.mrb[0].mxu0
  %v440 = vadd.f32 %v79, %v439
  %v441 = vpop.f32.mrb[0].mxu0
  %442 = vmatprep.mubr.f32.mxu0 0.0
  %v443 = vand.u32 %v119, 4294901760
  %v444 = vsub.f32 %v119, %v443
  %v445 = vand.u32 %v444, 4294901760
  %v446 = vsub.f32 %v444, %v445
  %v447 = vand.u32 %v446, 4294901760
  %448 = vmatmul.mubr.f32.gmra.mrb[0].mxu0 %v447
  %v449 = vpop.f32.mrb[0].mxu0
  %v450 = vadd.f32 %v79, %v449
  %v451 = vpop.f32.mrb[0].mxu0
  %452 = vmatprep.mubr.f32.mxu0 0.0
  %v453 = vand.u32 %v122, 4294901760
  %v454 = vsub.f32 %v122, %v453
  %v455 = vand.u32 %v454, 4294901760
  %v456 = vsub.f32 %v454, %v455
  %v457 = vand.u32 %v456, 4294901760
  %458 = vmatmul.mubr.f32.gmra.mrb[0].mxu0 %v457
  %v459 = vpop.f32.mrb[0].mxu0
  %v460 = vadd.f32 %v79, %v459
  %v461 = vpop.f32.mrb[0].mxu0
  %462 = vmatprep.mubr.f32.mxu0 0.0
  %v463 = vand.u32 %v125, 4294901760
  %v464 = vsub.f32 %v125, %v463
  %v465 = vand.u32 %v464, 4294901760
  %v466 = vsub.f32 %v464, %v465
  %v467 = vand.u32 %v466, 4294901760
  %468 = vmatmul.mubr.f32.gmra.mrb[0].mxu0 %v467
  %v469 = vpop.f32.mrb[0].mxu0
  %v470 = vadd.f32 %v79, %v469
  %v471 = vpop.f32.mrb[0].mxu0
  %472 = vmatprep.mubr.f32.mxu0 0.0
  %v473 = vand.u32 %v128, 4294901760
  %v474 = vsub.f32 %v128, %v473
  %v475 = vand.u32 %v474, 4294901760
  %v476 = vsub.f32 %v474, %v475
  %v477 = vand.u32 %v476, 4294901760
  %478 = vmatmul.mubr.f32.gmra.mrb[0].mxu0 %v477
  %v479 = vpop.f32.mrb[0].mxu0
  %v480 = vadd.f32 %v79, %v479
  %v481 = vpop.f32.mrb[0].mxu0
  %482 = vmatprep.mubr.f32.mxu0 0.0
  %v483 = vand.u32 %v131, 4294901760
  %v484 = vsub.f32 %v131, %v483
  %v485 = vand.u32 %v484, 4294901760
  %v486 = vsub.f32 %v484, %v485
  %v487 = vand.u32 %v486, 4294901760
  %488 = vmatmul.mubr.f32.gmra.mrb[0].mxu0 %v487
  %v489 = vpop.f32.mrb[0].mxu0
  %v490 = vadd.f32 %v79, %v489
  %v491 = vpop.f32.mrb[0].mxu0
  %492 = vmatprep.mubr.f32.mxu0 0.0
  %v493 = vand.u32 %v134, 4294901760
  %v494 = vsub.f32 %v134, %v493
  %v495 = vand.u32 %v494, 4294901760
  %v496 = vsub.f32 %v494, %v495
  %v497 = vand.u32 %v496, 4294901760
  %498 = vmatmul.mubr.f32.gmra.mrb[0].mxu0 %v497
  %v499 = vpop.f32.mrb[0].mxu0
  %v500 = vadd.f32 %v79, %v499
  %v501 = vpop.f32.mrb[0].mxu0
  %502 = vmatprep.mubr.f32.mxu0 0.0
  %v503 = vand.u32 %v137, 4294901760
  %v504 = vsub.f32 %v137, %v503
  %v505 = vand.u32 %v504, 4294901760
  %v506 = vsub.f32 %v504, %v505
  %v507 = vand.u32 %v506, 4294901760
  %508 = vmatmul.mubr.f32.gmra.mrb[0].mxu0 %v507
  %v509 = vpop.f32.mrb[0].mxu0
  %v510 = vadd.f32 %v79, %v509
  %v511 = vpop.f32.mrb[0].mxu0
  %512 = vmatprep.mubr.f32.mxu0 0.0
  %v513 = vand.u32 %v140, 4294901760
  %v514 = vsub.f32 %v140, %v513
  %v515 = vand.u32 %v514, 4294901760
  %v516 = vsub.f32 %v514, %v515
  %v517 = vand.u32 %v516, 4294901760
  %518 = vmatmul.mubr.f32.gmra.mrb[0].mxu0 %v517
  %v519 = vpop.f32.mrb[0].mxu0
  %v520 = vadd.f32 %v79, %v519
  %v521 = vpop.f32.mrb[0].mxu0
  %522 = vmatprep.mubr.f32.mxu0 0.0
  %v523 = vand.u32 %v143, 4294901760
  %v524 = vsub.f32 %v143, %v523
  %v525 = vand.u32 %v524, 4294901760
  %v526 = vsub.f32 %v524, %v525
  %v527 = vand.u32 %v526, 4294901760
  %528 = vmatmul.mubr.f32.gmra.mrb[0].mxu0 %v527
  %v529 = vpop.f32.mrb[0].mxu0
  %v530 = vadd.f32 %v79, %v529
  %v531 = vpop.f32.mrb[0].mxu0
  %532 = vmatprep.mubr.f32.mxu0 0.0
  %v533 = vand.u32 %v146, 4294901760
  %v534 = vsub.f32 %v146, %v533
  %v535 = vand.u32 %v534, 4294901760
  %v536 = vsub.f32 %v534, %v535
  %v537 = vand.u32 %v536, 4294901760
  %538 = vmatmul.mubr.f32.gmra.mrb[0].mxu0 %v537
  %v539 = vpop.f32.mrb[0].mxu0
  %v540 = vadd.f32 %v79, %v539
  %v541 = vpop.f32.mrb[0].mxu0
  %542 = vmatprep.mubr.f32.mxu0 0.0
  %v543 = vand.u32 %v149, 4294901760
  %v544 = vsub.f32 %v149, %v543
  %v545 = vand.u32 %v544, 4294901760
  %v546 = vsub.f32 %v544, %v545
  %v547 = vand.u32 %v546, 4294901760
  %548 = vmatmul.mubr.f32.gmra.mrb[0].mxu0 %v547
  %v549 = vpop.f32.mrb[0].mxu0
  %v550 = vadd.f32 %v79, %v549
  %v551 = vpop.f32.mrb[0].mxu0
  %552 = vmatprep.mubr.f32.mxu0 0.0
  %v553 = vand.u32 %v152, 4294901760
  %v554 = vsub.f32 %v152, %v553
  %v555 = vand.u32 %v554, 4294901760
  %v556 = vsub.f32 %v554, %v555
  %v557 = vand.u32 %v556, 4294901760
  %558 = vmatmul.mubr.f32.gmra.mrb[0].mxu0 %v557
  %v559 = vpop.f32.mrb[0].mxu0
  %v560 = vadd.f32 %v79, %v559
  %v561 = vpop.f32.mrb[0].mxu0
  %562 = vmatprep.mubr.f32.mxu0 0.0
  %v563 = vand.u32 %v155, 4294901760
  %v564 = vsub.f32 %v155, %v563
  %v565 = vand.u32 %v564, 4294901760
  %v566 = vsub.f32 %v564, %v565
  %v567 = vand.u32 %v566, 4294901760
  %568 = vmatmul.mubr.f32.gmra.mrb[0].mxu0 %v567
  %v569 = vpop.f32.mrb[0].mxu0
  %v570 = vadd.f32 %v79, %v569
  %v571 = vpop.f32.mrb[0].mxu0
  %572 = vmatprep.mubr.f32.mxu0 0.0
  %v573 = vand.u32 %v158, 4294901760
  %v574 = vsub.f32 %v158, %v573
  %v575 = vand.u32 %v574, 4294901760
  %v576 = vsub.f32 %v574, %v575
  %v577 = vand.u32 %v576, 4294901760
  %578 = vmatmul.mubr.f32.gmra.mrb[0].mxu0 %v577
  %v579 = vpop.f32.mrb[0].mxu0
  %v580 = vadd.f32 %v79, %v579
  %v581 = vpop.f32.mrb[0].mxu0
  %582 = vmatprep.mubr.f32.mxu0 0.0
  %v583 = vand.u32 %v161, 4294901760
  %v584 = vsub.f32 %v161, %v583
  %v585 = vand.u32 %v584, 4294901760
  %v586 = vsub.f32 %v584, %v585
  %v587 = vand.u32 %v586, 4294901760
  %588 = vmatmul.mubr.f32.gmra.mrb[0].mxu0 %v587
  %v589 = vpop.f32.mrb[0].mxu0
  %v590 = vadd.f32 %v79, %v589
  %v591 = vpop.f32.mrb[0].mxu0
  %592 = vmatprep.mubr.f32.mxu0 0.0
  %v593 = vand.u32 %v164, 4294901760
  %v594 = vsub.f32 %v164, %v593
  %v595 = vand.u32 %v594, 4294901760
  %v596 = vsub.f32 %v594, %v595
  %v597 = vand.u32 %v596, 4294901760
  %598 = vmatmul.mubr.f32.gmra.mrb[0].mxu0 %v597
  %v599 = vpop.f32.mrb[0].mxu0
  %v600 = vadd.f32 %v79, %v599
  %v601 = vpop.f32.mrb[0].mxu0
  %602 = vmatprep.mubr.f32.mxu0 0.0
  %v603 = vand.u32 %v167, 4294901760
  %v604 = vsub.f32 %v167, %v603
  %v605 = vand.u32 %v604, 4294901760
  %v606 = vsub.f32 %v604, %v605
  %v607 = vand.u32 %v606, 4294901760
  %608 = vmatmul.mubr.f32.gmra.mrb[0].mxu0 %v607
  %v609 = vpop.f32.mrb[0].mxu0
  %v610 = vadd.f32 %v79, %v609
  %v611 = vpop.f32.mrb[0].mxu0
  %612 = vmatprep.mubr.f32.mxu0 0.0
  %v613 = vand.u32 %v170, 4294901760
  %v614 = vsub.f32 %v170, %v613
  %v615 = vand.u32 %v614, 4294901760
  %v616 = vsub.f32 %v614, %v615
  %v617 = vand.u32 %v616, 4294901760
  %618 = vmatmul.mubr.f32.gmra.mrb[0].mxu0 %v617
  %v619 = vpop.f32.mrb[0].mxu0
  %v620 = vadd.f32 %v79, %v619
  %v621 = vpop.f32.mrb[0].mxu0
  %622 = vmatprep.mubr.f32.mxu0 0.0
  %v623 = vand.u32 %v173, 4294901760
  %v624 = vsub.f32 %v173, %v623
  %v625 = vand.u32 %v624, 4294901760
  %v626 = vsub.f32 %v624, %v625
  %v627 = vand.u32 %v626, 4294901760
  %628 = vmatmul.mubr.f32.gmra.mrb[0].mxu0 %v627
  %v629 = vpop.f32.mrb[0].mxu0
  %v630 = vadd.f32 %v79, %v629
  %v631 = vpop.f32.mrb[0].mxu0
  %632 = vmatprep.mubr.f32.mxu0 0.0
  %v633 = vand.u32 %v176, 4294901760
  %v634 = vsub.f32 %v176, %v633
  %v635 = vand.u32 %v634, 4294901760
  %v636 = vsub.f32 %v634, %v635
  %v637 = vand.u32 %v636, 4294901760
  %638 = vmatmul.mubr.f32.gmra.mrb[0].mxu0 %v637
  %v639 = vpop.f32.mrb[0].mxu0
  %v640 = vadd.f32 %v79, %v639
  %v641 = vpop.f32.mrb[0].mxu0
  %642 = vmatprep.mubr.f32.mxu0 0.0
  %v643 = vand.u32 %v179, 4294901760
  %v644 = vsub.f32 %v179, %v643
  %v645 = vand.u32 %v644, 4294901760
  %v646 = vsub.f32 %v644, %v645
  %v647 = vand.u32 %v646, 4294901760
  %648 = vmatmul.mubr.f32.gmra.mrb[0].mxu0 %v647
  %v649 = vpop.f32.mrb[0].mxu0
  %v650 = vadd.f32 %v79, %v649
  %v651 = vpop.f32.mrb[0].mxu0
  %652 = vmatprep.mubr.f32.mxu0 0.0
  %v653 = vand.u32 %v182, 4294901760
  %v654 = vsub.f32 %v182, %v653
  %v655 = vand.u32 %v654, 4294901760
  %v656 = vsub.f32 %v654, %v655
  %v657 = vand.u32 %v656, 4294901760
  %658 = vmatmul.mubr.f32.gmra.mrb[0].mxu0 %v657
  %v659 = vpop.f32.mrb[0].mxu0
  %v660 = vadd.f32 %v79, %v659
  %v661 = vpop.f32.mrb[0].mxu0
  %662 = vmatprep.mubr.f32.mxu0 0.0
  %v663 = vand.u32 %v185, 4294901760
  %v664 = vsub.f32 %v185, %v663
  %v665 = vand.u32 %v664, 4294901760
  %v666 = vsub.f32 %v664, %v665
  %v667 = vand.u32 %v666, 4294901760
  %668 = vmatmul.mubr.f32.gmra.mrb[0].mxu0 %v667
  %v669 = vpop.f32.mrb[0].mxu0
  %v670 = vadd.f32 %v79, %v669
  %v671 = vpop.f32.mrb[0].mxu0
  %672 = vmatprep.mubr.f32.mxu0 0.0
  %v673 = vand.u32 %v188, 4294901760
  %v674 = vsub.f32 %v188, %v673
  %v675 = vand.u32 %v674, 4294901760
  %v676 = vsub.f32 %v674, %v675
  %v677 = vand.u32 %v676, 4294901760
  %678 = vmatmul.mubr.f32.gmra.mrb[0].mxu0 %v677
  %v679 = vpop.f32.mrb[0].mxu0
  %v680 = vadd.f32 %v79, %v679
  %v681 = vpop.f32.mrb[0].mxu0
  %682 = vmatprep.mubr.f32.mxu0 0.0
  %v683 = vand.u32 %v191, 4294901760
  %v684 = vsub.f32 %v191, %v683
  %v685 = vand.u32 %v684, 4294901760
  %v686 = vsub.f32 %v684, %v685
  %v687 = vand.u32 %v686, 4294901760
  %688 = vmatmul.mubr.f32.gmra.mrb[0].mxu0 %v687
  %v689 = vpop.f32.mrb[0].mxu0
  %v690 = vadd.f32 %v79, %v689
  %v691 = vpop.f32.mrb[0].mxu0
  %692 = vmatprep.mubr.f32.mxu0 0.0
  %v693 = vand.u32 %v194, 4294901760
  %v694 = vsub.f32 %v194, %v693
  %v695 = vand.u32 %v694, 4294901760
  %v696 = vsub.f32 %v694, %v695
  %v697 = vand.u32 %v696, 4294901760
  %698 = vmatmul.mubr.f32.gmra.mrb[0].mxu0 %v697
  %v699 = vpop.f32.mrb[0].mxu0
  %v700 = vadd.f32 %v79, %v699
  %v701 = vpop.f32.mrb[0].mxu0
  %702 = vmatprep.mubr.f32.mxu0 0.0
  %v703 = vand.u32 %v197, 4294901760
  %v704 = vsub.f32 %v197, %v703
  %v705 = vand.u32 %v704, 4294901760
  %v706 = vsub.f32 %v704, %v705
  %v707 = vand.u32 %v706, 4294901760
  %708 = vmatmul.mubr.f32.gmra.mrb[0].mxu0 %v707
  %v709 = vpop.f32.mrb[0].mxu0
  %v710 = vadd.f32 %v79, %v709
  %v711 = vpop.f32.mrb[0].mxu0
  %712 = vmatprep.mubr.f32.mxu0 0.0
  %v713 = vand.u32 %v200, 4294901760
  %v714 = vsub.f32 %v200, %v713
  %v715 = vand.u32 %v714, 4294901760
  %v716 = vsub.f32 %v714, %v715
  %v717 = vand.u32 %v716, 4294901760
  %718 = vmatmul.mubr.f32.gmra.mrb[0].mxu0 %v717
  %v719 = vpop.f32.mrb[0].mxu0
  %v720 = vadd.f32 %v79, %v719
  %v721 = vpop.f32.mrb[0].mxu0
  %722 = vmatprep.mubr.f32.mxu0 0.0
  %v723 = vand.u32 %v203, 4294901760
  %v724 = vsub.f32 %v203, %v723
  %v725 = vand.u32 %v724, 4294901760
  %v726 = vsub.f32 %v724, %v725
  %v727 = vand.u32 %v726, 4294901760
  %728 = vmatmul.mubr.f32.gmra.mrb[0].mxu0 %v727
  %v729 = vpop.f32.mrb[0].mxu0
  %v730 = vadd.f32 %v79, %v729
  %v731 = vpop.f32.mrb[0].mxu0
  %732 = vmatprep.mubr.f32.mxu0 0.0
  %v733 = vand.u32 %v206, 4294901760
  %v734 = vsub.f32 %v206, %v733
  %v735 = vand.u32 %v734, 4294901760
  %v736 = vsub.f32 %v734, %v735
  %v737 = vand.u32 %v736, 4294901760
  %738 = vmatmul.mubr.f32.gmra.mrb[0].mxu0 %v737
  %v739 = vpop.f32.mrb[0].mxu0
  %v740 = vadd.f32 %v79, %v739
  %v741 = vpop.f32.mrb[0].mxu0
  %742 = vmatprep.mubr.f32.mxu0 0.0
  %v743 = vand.u32 %v209, 4294901760
  %v744 = vsub.f32 %v209, %v743
  %v745 = vand.u32 %v744, 4294901760
  %v746 = vsub.f32 %v744, %v745
  %v747 = vand.u32 %v746, 4294901760
  %748 = vmatmul.mubr.f32.gmra.mrb[0].mxu0 %v747
  %v749 = vpop.f32.mrb[0].mxu0
  %v750 = vadd.f32 %v79, %v749
  %v751 = vpop.f32.mrb[0].mxu0
  %752 = vmatprep.mubr.f32.mxu0 0.0
  %v753 = vand.u32 %v212, 4294901760
  %v754 = vsub.f32 %v212, %v753
  %v755 = vand.u32 %v754, 4294901760
  %v756 = vsub.f32 %v754, %v755
  %v757 = vand.u32 %v756, 4294901760
  %758 = vmatmul.mubr.f32.gmra.mrb[0].mxu0 %v757
  %v759 = vpop.f32.mrb[0].mxu0
  %v760 = vadd.f32 %v79, %v759
  %v761 = vpop.f32.mrb[0].mxu0
  %762 = vmatprep.mubr.f32.mxu0 0.0
  %v763 = vand.u32 %v215, 4294901760
  %v764 = vsub.f32 %v215, %v763
  %v765 = vand.u32 %v764, 4294901760
  %v766 = vsub.f32 %v764, %v765
  %v767 = vand.u32 %v766, 4294901760
  %768 = vmatmul.mubr.f32.gmra.mrb[0].mxu0 %v767
  %v769 = vpop.f32.mrb[0].mxu0
  %v770 = vadd.f32 %v79, %v769
  %v771 = vpop.f32.mrb[0].mxu0
  %772 = vmatprep.mubr.f32.mxu0 0.0
  %v773 = vand.u32 %v218, 4294901760
  %v774 = vsub.f32 %v218, %v773
  %v775 = vand.u32 %v774, 4294901760
  %v776 = vsub.f32 %v774, %v775
  %v777 = vand.u32 %v776, 4294901760
  %778 = vmatmul.mubr.f32.gmra.mrb[0].mxu0 %v777
  %v779 = vpop.f32.mrb[0].mxu0
  %v780 = vadd.f32 %v79, %v779
  %v781 = vpop.f32.mrb[0].mxu0
  %782 = vmatprep.mubr.f32.mxu0 0.0
  %v783 = vand.u32 %v221, 4294901760
  %v784 = vsub.f32 %v221, %v783
  %v785 = vand.u32 %v784, 4294901760
  %v786 = vsub.f32 %v784, %v785
  %v787 = vand.u32 %v786, 4294901760
  %788 = vmatmul.mubr.f32.gmra.mrb[0].mxu0 %v787
  %v789 = vpop.f32.mrb[0].mxu0
  %v790 = vadd.f32 %v79, %v789
  %v791 = vpop.f32.mrb[0].mxu0
  %792 = vmatprep.mubr.f32.mxu0 0.0
  %v793 = vand.u32 %v224, 4294901760
  %v794 = vsub.f32 %v224, %v793
  %v795 = vand.u32 %v794, 4294901760
  %v796 = vsub.f32 %v794, %v795
  %v797 = vand.u32 %v796, 4294901760
  %798 = vmatmul.mubr.f32.gmra.mrb[0].mxu0 %v797
  %v799 = vpop.f32.mrb[0].mxu0
  %v800 = vadd.f32 %v79, %v799
  %v801 = vpop.f32.mrb[0].mxu0
  %802 = vmatprep.mubr.f32.mxu0 0.0
  %v803 = vand.u32 %v227, 4294901760
  %v804 = vsub.f32 %v227, %v803
  %v805 = vand.u32 %v804, 4294901760
  %v806 = vsub.f32 %v804, %v805
  %v807 = vand.u32 %v806, 4294901760
  %808 = vmatmul.mubr.f32.gmra.mrb[0].mxu0 %v807
  %v809 = vpop.f32.mrb[0].mxu0
  %v810 = vadd.f32 %v79, %v809
  %v811 = vpop.f32.mrb[0].mxu0
  %812 = vmatprep.mubr.f32.mxu0 0.0
  %v813 = vand.u32 %v230, 4294901760
  %v814 = vsub.f32 %v230, %v813
  %v815 = vand.u32 %v814, 4294901760
  %v816 = vsub.f32 %v814, %v815
  %v817 = vand.u32 %v816, 4294901760
  %818 = vmatmul.mubr.f32.gmra.mrb[0].mxu0 %v817
  %v819 = vpop.f32.mrb[0].mxu0
  %v820 = vadd.f32 %v79, %v819
  %v821 = vpop.f32.mrb[0].mxu0
  %822 = vmatprep.mubr.f32.mxu0 0.0
  %v823 = vand.u32 %v233, 4294901760
  %v824 = vsub.f32 %v233, %v823
  %v825 = vand.u32 %v824, 4294901760
  %v826 = vsub.f32 %v824, %v825
  %v827 = vand.u32 %v826, 4294901760
  %828 = vmatmul.mubr.f32.gmra.mrb[0].mxu0 %v827
  %v829 = vpop.f32.mrb[0].mxu0
  %v830 = vadd.f32 %v79, %v829
  %v831 = vpop.f32.mrb[0].mxu0
  %832 = vmatprep.mubr.f32.mxu0 0.0
  %v833 = vand.u32 %v236, 4294901760
  %v834 = vsub.f32 %v236, %v833
  %v835 = vand.u32 %v834, 4294901760
  %v836 = vsub.f32 %v834, %v835
  %v837 = vand.u32 %v836, 4294901760
  %838 = vmatmul.mubr.f32.gmra.mrb[0].mxu0 %v837
  %v839 = vpop.f32.mrb[0].mxu0
  %v840 = vadd.f32 %v79, %v839
  %v841 = vpop.f32.mrb[0].mxu0
  %842 = vmatprep.mubr.f32.mxu0 0.0
  %v843 = vand.u32 %v239, 4294901760
  %v844 = vsub.f32 %v239, %v843
  %v845 = vand.u32 %v844, 4294901760
  %v846 = vsub.f32 %v844, %v845
  %v847 = vand.u32 %v846, 4294901760
  %848 = vmatmul.mubr.f32.gmra.mrb[0].mxu0 %v847
  %v849 = vpop.f32.mrb[0].mxu0
  %v850 = vadd.f32 %v79, %v849
  %v851 = vpop.f32.mrb[0].mxu0
  %852 = vmatprep.mubr.f32.mxu0 0.0
  %v853 = vand.u32 %v242, 4294901760
  %v854 = vsub.f32 %v242, %v853
  %v855 = vand.u32 %v854, 4294901760
  %v856 = vsub.f32 %v854, %v855
  %v857 = vand.u32 %v856, 4294901760
  %858 = vmatmul.mubr.f32.gmra.mrb[0].mxu0 %v857
  %v859 = vpop.f32.mrb[0].mxu0
  %v860 = vadd.f32 %v79, %v859
  %v861 = vpop.f32.mrb[0].mxu0
  %862 = vmatprep.mubr.f32.mxu0 0.0
  %v863 = vand.u32 %v245, 4294901760
  %v864 = vsub.f32 %v245, %v863
  %v865 = vand.u32 %v864, 4294901760
  %v866 = vsub.f32 %v864, %v865
  %v867 = vand.u32 %v866, 4294901760
  %868 = vmatmul.mubr.f32.gmra.mrb[0].mxu0 %v867
  %v869 = vpop.f32.mrb[0].mxu0
  %v870 = vadd.f32 %v79, %v869
  %v871 = vpop.f32.mrb[0].mxu0
  %872 = vmatprep.mubr.f32.mxu0 0.0
  %v873 = vand.u32 %v248, 4294901760
  %v874 = vsub.f32 %v248, %v873
  %v875 = vand.u32 %v874, 4294901760
  %v876 = vsub.f32 %v874, %v875
  %v877 = vand.u32 %v876, 4294901760
  %878 = vmatmul.mubr.f32.gmra.mrb[0].mxu0 %v877
  %v879 = vpop.f32.mrb[0].mxu0
  %v880 = vadd.f32 %v79, %v879
  %v881 = vpop.f32.mrb[0].mxu0
  %882 = vdwg.mxu0
  %883 = vmatprep.subr.mxu0 0.0
  %v884 = vand.u32 %v70, 4294901760
  %v885 = vsub.f32 %v70, %v884
  %v886 = vand.u32 %v885, 4294901760
  %v887 = vsub.f32 %v885, %v886
  %v888 = vand.u32 %v887, 4294901760
  %889 = vmatpush1.msra.mxu0 %v888
  %890 = vmatprep.subr.mxu0 0.0
  %v891 = vand.u32 %v71, 4294901760
  %v892 = vsub.f32 %v71, %v891
  %v893 = vand.u32 %v892, 4294901760
  %v894 = vsub.f32 %v892, %v893
  %v895 = vand.u32 %v894, 4294901760
  %896 = vmatpush1.msra.mxu0 %v895
  %897 = vmatprep.subr.mxu0 0.0
  %v898 = vand.u32 %v72, 4294901760
  %v899 = vsub.f32 %v72, %v898
  %v900 = vand.u32 %v899, 4294901760
  %v901 = vsub.f32 %v899, %v900
  %v902 = vand.u32 %v901, 4294901760
  %903 = vmatpush1.msra.mxu0 %v902
  %904 = vmatprep.subr.mxu0 0.0
  %v905 = vand.u32 %v252, 4294901760
  %v906 = vsub.f32 %v252, %v905
  %v907 = vand.u32 %v906, 4294901760
  %v908 = vsub.f32 %v906, %v907
  %v909 = vand.u32 %v908, 4294901760
  %910 = vmatpush1.msra.mxu0 %v909
  %911 = vmatprep.subr.mxu0 0.0
  %912 = vmatpush1.msra.mxu0 0.0
  %913 = vmatprep.subr.mxu0 0.0
  %914 = vmatpush1.msra.mxu0 0.0
  %915 = vmatprep.subr.mxu0 0.0
  %916 = vmatpush1.msra.mxu0 0.0
  %917 = vmatprep.subr.mxu0 0.0
  %918 = vmatpush1.msra.mxu0 0.0
  %919 = vmatprep.subr.mxu0 0.0
  %920 = vmatpush1.msra.mxu0 0.0
  %921 = vmatprep.subr.mxu0 0.0
  %922 = vmatpush1.msra.mxu0 0.0
  %923 = vmatprep.subr.mxu0 0.0
  %924 = vmatpush1.msra.mxu0 0.0
  %925 = vmatprep.subr.mxu0 0.0
  %926 = vmatpush1.msra.mxu0 0.0
  %927 = vmatprep.subr.mxu0 0.0
  %928 = vmatpush1.msra.mxu0 0.0
  %929 = vmatprep.subr.mxu0 0.0
  %930 = vmatpush1.msra.mxu0 0.0
  %931 = vmatprep.subr.mxu0 0.0
  %932 = vmatpush1.msra.mxu0 0.0
  %933 = vmatprep.subr.mxu0 0.0
  %934 = vmatpush1.msra.mxu0 0.0
  %935 = vmatprep.subr.mxu0 0.0
  %936 = vmatpush1.msra.mxu0 0.0
  %937 = vmatprep.subr.mxu0 0.0
  %938 = vmatpush1.msra.mxu0 0.0
  %939 = vmatprep.subr.mxu0 0.0
  %940 = vmatpush1.msra.mxu0 0.0
  %941 = vmatprep.subr.mxu0 0.0
  %942 = vmatpush1.msra.mxu0 0.0
  %943 = vmatprep.subr.mxu0 0.0
  %944 = vmatpush1.msra.mxu0 0.0
  %945 = vmatprep.subr.mxu0 0.0
  %946 = vmatpush1.msra.mxu0 0.0
  %947 = vmatprep.subr.mxu0 0.0
  %948 = vmatpush1.msra.mxu0 0.0
  %949 = vmatprep.subr.mxu0 0.0
  %950 = vmatpush1.msra.mxu0 0.0
  %951 = vmatprep.subr.mxu0 0.0
  %952 = vmatpush1.msra.mxu0 0.0
  %953 = vmatprep.subr.mxu0 0.0
  %954 = vmatpush1.msra.mxu0 0.0
  %955 = vmatprep.subr.mxu0 0.0
  %956 = vmatpush1.msra.mxu0 0.0
  %957 = vmatprep.subr.mxu0 0.0
  %958 = vmatpush1.msra.mxu0 0.0
  %959 = vmatprep.subr.mxu0 0.0
  %960 = vmatpush1.msra.mxu0 0.0
  %961 = vmatprep.subr.mxu0 0.0
  %962 = vmatpush1.msra.mxu0 0.0
  %963 = vmatprep.subr.mxu0 0.0
  %964 = vmatpush1.msra.mxu0 0.0
  %965 = vmatprep.subr.mxu0 0.0
  %966 = vmatpush1.msra.mxu0 0.0
  %967 = vmatprep.mubr.f32.mxu0 0.0
  %v968 = vand.u32 %v83, 4294901760
  %969 = vmatmul.mubr.f32.gmra.mrb[0].mxu0 %v968
  %v970 = vpop.f32.mrb[0].mxu0
  %v971 = vadd.f32 %v330, %v970
  %v972 = vpop.f32.mrb[0].mxu0
  %973 = vmatprep.mubr.f32.mxu0 0.0
  %v974 = vand.u32 %v86, 4294901760
  %975 = vmatmul.mubr.f32.gmra.mrb[0].mxu0 %v974
  %v976 = vpop.f32.mrb[0].mxu0
  %v977 = vadd.f32 %v340, %v976
  %v978 = vpop.f32.mrb[0].mxu0
  %979 = vmatprep.mubr.f32.mxu0 0.0
  %v980 = vand.u32 %v89, 4294901760
  %981 = vmatmul.mubr.f32.gmra.mrb[0].mxu0 %v980
  %v982 = vpop.f32.mrb[0].mxu0
  %v983 = vadd.f32 %v350, %v982
  %v984 = vpop.f32.mrb[0].mxu0
  %985 = vmatprep.mubr.f32.mxu0 0.0
  %v986 = vand.u32 %v92, 4294901760
  %987 = vmatmul.mubr.f32.gmra.mrb[0].mxu0 %v986
  %v988 = vpop.f32.mrb[0].mxu0
  %v989 = vadd.f32 %v360, %v988
  %v990 = vpop.f32.mrb[0].mxu0
  %991 = vmatprep.mubr.f32.mxu0 0.0
  %v992 = vand.u32 %v95, 4294901760
  %993 = vmatmul.mubr.f32.gmra.mrb[0].mxu0 %v992
  %v994 = vpop.f32.mrb[0].mxu0
  %v995 = vadd.f32 %v370, %v994
  %v996 = vpop.f32.mrb[0].mxu0
  %997 = vmatprep.mubr.f32.mxu0 0.0
  %v998 = vand.u32 %v98, 4294901760
  %999 = vmatmul.mubr.f32.gmra.mrb[0].mxu0 %v998
  %v1000 = vpop.f32.mrb[0].mxu0
  %v1001 = vadd.f32 %v380, %v1000
  %v1002 = vpop.f32.mrb[0].mxu0
  %1003 = vmatprep.mubr.f32.mxu0 0.0
  %v1004 = vand.u32 %v101, 4294901760
  %1005 = vmatmul.mubr.f32.gmra.mrb[0].mxu0 %v1004
  %v1006 = vpop.f32.mrb[0].mxu0
  %v1007 = vadd.f32 %v390, %v1006
  %v1008 = vpop.f32.mrb[0].mxu0
  %1009 = vmatprep.mubr.f32.mxu0 0.0
  %v1010 = vand.u32 %v104, 4294901760
  %1011 = vmatmul.mubr.f32.gmra.mrb[0].mxu0 %v1010
  %v1012 = vpop.f32.mrb[0].mxu0
  %v1013 = vadd.f32 %v400, %v1012
  %v1014 = vpop.f32.mrb[0].mxu0
  %1015 = vmatprep.mubr.f32.mxu0 0.0
  %v1016 = vand.u32 %v107, 4294901760
  %1017 = vmatmul.mubr.f32.gmra.mrb[0].mxu0 %v1016
  %v1018 = vpop.f32.mrb[0].mxu0
  %v1019 = vadd.f32 %v410, %v1018
  %v1020 = vpop.f32.mrb[0].mxu0
  %1021 = vmatprep.mubr.f32.mxu0 0.0
  %v1022 = vand.u32 %v110, 4294901760
  %1023 = vmatmul.mubr.f32.gmra.mrb[0].mxu0 %v1022
  %v1024 = vpop.f32.mrb[0].mxu0
  %v1025 = vadd.f32 %v420, %v1024
  %v1026 = vpop.f32.mrb[0].mxu0
  %1027 = vmatprep.mubr.f32.mxu0 0.0
  %v1028 = vand.u32 %v113, 4294901760
  %1029 = vmatmul.mubr.f32.gmra.mrb[0].mxu0 %v1028
  %v1030 = vpop.f32.mrb[0].mxu0
  %v1031 = vadd.f32 %v430, %v1030
  %v1032 = vpop.f32.mrb[0].mxu0
  %1033 = vmatprep.mubr.f32.mxu0 0.0
  %v1034 = vand.u32 %v116, 4294901760
  %1035 = vmatmul.mubr.f32.gmra.mrb[0].mxu0 %v1034
  %v1036 = vpop.f32.mrb[0].mxu0
  %v1037 = vadd.f32 %v440, %v1036
  %v1038 = vpop.f32.mrb[0].mxu0
  %1039 = vmatprep.mubr.f32.mxu0 0.0
  %v1040 = vand.u32 %v119, 4294901760
  %1041 = vmatmul.mubr.f32.gmra.mrb[0].mxu0 %v1040
  %v1042 = vpop.f32.mrb[0].mxu0
  %v1043 = vadd.f32 %v450, %v1042
  %v1044 = vpop.f32.mrb[0].mxu0
  %1045 = vmatprep.mubr.f32.mxu0 0.0
  %v1046 = vand.u32 %v122, 4294901760
  %1047 = vmatmul.mubr.f32.gmra.mrb[0].mxu0 %v1046
  %v1048 = vpop.f32.mrb[0].mxu0
  %v1049 = vadd.f32 %v460, %v1048
  %v1050 = vpop.f32.mrb[0].mxu0
  %1051 = vmatprep.mubr.f32.mxu0 0.0
  %v1052 = vand.u32 %v125, 4294901760
  %1053 = vmatmul.mubr.f32.gmra.mrb[0].mxu0 %v1052
  %v1054 = vpop.f32.mrb[0].mxu0
  %v1055 = vadd.f32 %v470, %v1054
  %v1056 = vpop.f32.mrb[0].mxu0
  %1057 = vmatprep.mubr.f32.mxu0 0.0
  %v1058 = vand.u32 %v128, 4294901760
  %1059 = vmatmul.mubr.f32.gmra.mrb[0].mxu0 %v1058
  %v1060 = vpop.f32.mrb[0].mxu0
  %v1061 = vadd.f32 %v480, %v1060
  %v1062 = vpop.f32.mrb[0].mxu0
  %1063 = vmatprep.mubr.f32.mxu0 0.0
  %v1064 = vand.u32 %v131, 4294901760
  %1065 = vmatmul.mubr.f32.gmra.mrb[0].mxu0 %v1064
  %v1066 = vpop.f32.mrb[0].mxu0
  %v1067 = vadd.f32 %v490, %v1066
  %v1068 = vpop.f32.mrb[0].mxu0
  %1069 = vmatprep.mubr.f32.mxu0 0.0
  %v1070 = vand.u32 %v134, 4294901760
  %1071 = vmatmul.mubr.f32.gmra.mrb[0].mxu0 %v1070
  %v1072 = vpop.f32.mrb[0].mxu0
  %v1073 = vadd.f32 %v500, %v1072
  %v1074 = vpop.f32.mrb[0].mxu0
  %1075 = vmatprep.mubr.f32.mxu0 0.0
  %v1076 = vand.u32 %v137, 4294901760
  %1077 = vmatmul.mubr.f32.gmra.mrb[0].mxu0 %v1076
  %v1078 = vpop.f32.mrb[0].mxu0
  %v1079 = vadd.f32 %v510, %v1078
  %v1080 = vpop.f32.mrb[0].mxu0
  %1081 = vmatprep.mubr.f32.mxu0 0.0
  %v1082 = vand.u32 %v140, 4294901760
  %1083 = vmatmul.mubr.f32.gmra.mrb[0].mxu0 %v1082
  %v1084 = vpop.f32.mrb[0].mxu0
  %v1085 = vadd.f32 %v520, %v1084
  %v1086 = vpop.f32.mrb[0].mxu0
  %1087 = vmatprep.mubr.f32.mxu0 0.0
  %v1088 = vand.u32 %v143, 4294901760
  %1089 = vmatmul.mubr.f32.gmra.mrb[0].mxu0 %v1088
  %v1090 = vpop.f32.mrb[0].mxu0
  %v1091 = vadd.f32 %v530, %v1090
  %v1092 = vpop.f32.mrb[0].mxu0
  %1093 = vmatprep.mubr.f32.mxu0 0.0
  %v1094 = vand.u32 %v146, 4294901760
  %1095 = vmatmul.mubr.f32.gmra.mrb[0].mxu0 %v1094
  %v1096 = vpop.f32.mrb[0].mxu0
  %v1097 = vadd.f32 %v540, %v1096
  %v1098 = vpop.f32.mrb[0].mxu0
  %1099 = vmatprep.mubr.f32.mxu0 0.0
  %v1100 = vand.u32 %v149, 4294901760
  %1101 = vmatmul.mubr.f32.gmra.mrb[0].mxu0 %v1100
  %v1102 = vpop.f32.mrb[0].mxu0
  %v1103 = vadd.f32 %v550, %v1102
  %v1104 = vpop.f32.mrb[0].mxu0
  %1105 = vmatprep.mubr.f32.mxu0 0.0
  %v1106 = vand.u32 %v152, 4294901760
  %1107 = vmatmul.mubr.f32.gmra.mrb[0].mxu0 %v1106
  %v1108 = vpop.f32.mrb[0].mxu0
  %v1109 = vadd.f32 %v560, %v1108
  %v1110 = vpop.f32.mrb[0].mxu0
  %1111 = vmatprep.mubr.f32.mxu0 0.0
  %v1112 = vand.u32 %v155, 4294901760
  %1113 = vmatmul.mubr.f32.gmra.mrb[0].mxu0 %v1112
  %v1114 = vpop.f32.mrb[0].mxu0
  %v1115 = vadd.f32 %v570, %v1114
  %v1116 = vpop.f32.mrb[0].mxu0
  %1117 = vmatprep.mubr.f32.mxu0 0.0
  %v1118 = vand.u32 %v158, 4294901760
  %1119 = vmatmul.mubr.f32.gmra.mrb[0].mxu0 %v1118
  %v1120 = vpop.f32.mrb[0].mxu0
  %v1121 = vadd.f32 %v580, %v1120
  %v1122 = vpop.f32.mrb[0].mxu0
  %1123 = vmatprep.mubr.f32.mxu0 0.0
  %v1124 = vand.u32 %v161, 4294901760
  %1125 = vmatmul.mubr.f32.gmra.mrb[0].mxu0 %v1124
  %v1126 = vpop.f32.mrb[0].mxu0
  %v1127 = vadd.f32 %v590, %v1126
  %v1128 = vpop.f32.mrb[0].mxu0
  %1129 = vmatprep.mubr.f32.mxu0 0.0
  %v1130 = vand.u32 %v164, 4294901760
  %1131 = vmatmul.mubr.f32.gmra.mrb[0].mxu0 %v1130
  %v1132 = vpop.f32.mrb[0].mxu0
  %v1133 = vadd.f32 %v600, %v1132
  %v1134 = vpop.f32.mrb[0].mxu0
  %1135 = vmatprep.mubr.f32.mxu0 0.0
  %v1136 = vand.u32 %v167, 4294901760
  %1137 = vmatmul.mubr.f32.gmra.mrb[0].mxu0 %v1136
  %v1138 = vpop.f32.mrb[0].mxu0
  %v1139 = vadd.f32 %v610, %v1138
  %v1140 = vpop.f32.mrb[0].mxu0
  %1141 = vmatprep.mubr.f32.mxu0 0.0
  %v1142 = vand.u32 %v170, 4294901760
  %1143 = vmatmul.mubr.f32.gmra.mrb[0].mxu0 %v1142
  %v1144 = vpop.f32.mrb[0].mxu0
  %v1145 = vadd.f32 %v620, %v1144
  %v1146 = vpop.f32.mrb[0].mxu0
  %1147 = vmatprep.mubr.f32.mxu0 0.0
  %v1148 = vand.u32 %v173, 4294901760
  %1149 = vmatmul.mubr.f32.gmra.mrb[0].mxu0 %v1148
  %v1150 = vpop.f32.mrb[0].mxu0
  %v1151 = vadd.f32 %v630, %v1150
  %v1152 = vpop.f32.mrb[0].mxu0
  %1153 = vmatprep.mubr.f32.mxu0 0.0
  %v1154 = vand.u32 %v176, 4294901760
  %1155 = vmatmul.mubr.f32.gmra.mrb[0].mxu0 %v1154
  %v1156 = vpop.f32.mrb[0].mxu0
  %v1157 = vadd.f32 %v640, %v1156
  %v1158 = vpop.f32.mrb[0].mxu0
  %1159 = vmatprep.mubr.f32.mxu0 0.0
  %v1160 = vand.u32 %v179, 4294901760
  %1161 = vmatmul.mubr.f32.gmra.mrb[0].mxu0 %v1160
  %v1162 = vpop.f32.mrb[0].mxu0
  %v1163 = vadd.f32 %v650, %v1162
  %v1164 = vpop.f32.mrb[0].mxu0
  %1165 = vmatprep.mubr.f32.mxu0 0.0
  %v1166 = vand.u32 %v182, 4294901760
  %1167 = vmatmul.mubr.f32.gmra.mrb[0].mxu0 %v1166
  %v1168 = vpop.f32.mrb[0].mxu0
  %v1169 = vadd.f32 %v660, %v1168
  %v1170 = vpop.f32.mrb[0].mxu0
  %1171 = vmatprep.mubr.f32.mxu0 0.0
  %v1172 = vand.u32 %v185, 4294901760
  %1173 = vmatmul.mubr.f32.gmra.mrb[0].mxu0 %v1172
  %v1174 = vpop.f32.mrb[0].mxu0
  %v1175 = vadd.f32 %v670, %v1174
  %v1176 = vpop.f32.mrb[0].mxu0
  %1177 = vmatprep.mubr.f32.mxu0 0.0
  %v1178 = vand.u32 %v188, 4294901760
  %1179 = vmatmul.mubr.f32.gmra.mrb[0].mxu0 %v1178
  %v1180 = vpop.f32.mrb[0].mxu0
  %v1181 = vadd.f32 %v680, %v1180
  %v1182 = vpop.f32.mrb[0].mxu0
  %1183 = vmatprep.mubr.f32.mxu0 0.0
  %v1184 = vand.u32 %v191, 4294901760
  %1185 = vmatmul.mubr.f32.gmra.mrb[0].mxu0 %v1184
  %v1186 = vpop.f32.mrb[0].mxu0
  %v1187 = vadd.f32 %v690, %v1186
  %v1188 = vpop.f32.mrb[0].mxu0
  %1189 = vmatprep.mubr.f32.mxu0 0.0
  %v1190 = vand.u32 %v194, 4294901760
  %1191 = vmatmul.mubr.f32.gmra.mrb[0].mxu0 %v1190
  %v1192 = vpop.f32.mrb[0].mxu0
  %v1193 = vadd.f32 %v700, %v1192
  %v1194 = vpop.f32.mrb[0].mxu0
  %1195 = vmatprep.mubr.f32.mxu0 0.0
  %v1196 = vand.u32 %v197, 4294901760
  %1197 = vmatmul.mubr.f32.gmra.mrb[0].mxu0 %v1196
  %v1198 = vpop.f32.mrb[0].mxu0
  %v1199 = vadd.f32 %v710, %v1198
  %v1200 = vpop.f32.mrb[0].mxu0
  %1201 = vmatprep.mubr.f32.mxu0 0.0
  %v1202 = vand.u32 %v200, 4294901760
  %1203 = vmatmul.mubr.f32.gmra.mrb[0].mxu0 %v1202
  %v1204 = vpop.f32.mrb[0].mxu0
  %v1205 = vadd.f32 %v720, %v1204
  %v1206 = vpop.f32.mrb[0].mxu0
  %1207 = vmatprep.mubr.f32.mxu0 0.0
  %v1208 = vand.u32 %v203, 4294901760
  %1209 = vmatmul.mubr.f32.gmra.mrb[0].mxu0 %v1208
  %v1210 = vpop.f32.mrb[0].mxu0
  %v1211 = vadd.f32 %v730, %v1210
  %v1212 = vpop.f32.mrb[0].mxu0
  %1213 = vmatprep.mubr.f32.mxu0 0.0
  %v1214 = vand.u32 %v206, 4294901760
  %1215 = vmatmul.mubr.f32.gmra.mrb[0].mxu0 %v1214
  %v1216 = vpop.f32.mrb[0].mxu0
  %v1217 = vadd.f32 %v740, %v1216
  %v1218 = vpop.f32.mrb[0].mxu0
  %1219 = vmatprep.mubr.f32.mxu0 0.0
  %v1220 = vand.u32 %v209, 4294901760
  %1221 = vmatmul.mubr.f32.gmra.mrb[0].mxu0 %v1220
  %v1222 = vpop.f32.mrb[0].mxu0
  %v1223 = vadd.f32 %v750, %v1222
  %v1224 = vpop.f32.mrb[0].mxu0
  %1225 = vmatprep.mubr.f32.mxu0 0.0
  %v1226 = vand.u32 %v212, 4294901760
  %1227 = vmatmul.mubr.f32.gmra.mrb[0].mxu0 %v1226
  %v1228 = vpop.f32.mrb[0].mxu0
  %v1229 = vadd.f32 %v760, %v1228
  %v1230 = vpop.f32.mrb[0].mxu0
  %1231 = vmatprep.mubr.f32.mxu0 0.0
  %v1232 = vand.u32 %v215, 4294901760
  %1233 = vmatmul.mubr.f32.gmra.mrb[0].mxu0 %v1232
  %v1234 = vpop.f32.mrb[0].mxu0
  %v1235 = vadd.f32 %v770, %v1234
  %v1236 = vpop.f32.mrb[0].mxu0
  %1237 = vmatprep.mubr.f32.mxu0 0.0
  %v1238 = vand.u32 %v218, 4294901760
  %1239 = vmatmul.mubr.f32.gmra.mrb[0].mxu0 %v1238
  %v1240 = vpop.f32.mrb[0].mxu0
  %v1241 = vadd.f32 %v780, %v1240
  %v1242 = vpop.f32.mrb[0].mxu0
  %1243 = vmatprep.mubr.f32.mxu0 0.0
  %v1244 = vand.u32 %v221, 4294901760
  %1245 = vmatmul.mubr.f32.gmra.mrb[0].mxu0 %v1244
  %v1246 = vpop.f32.mrb[0].mxu0
  %v1247 = vadd.f32 %v790, %v1246
  %v1248 = vpop.f32.mrb[0].mxu0
  %1249 = vmatprep.mubr.f32.mxu0 0.0
  %v1250 = vand.u32 %v224, 4294901760
  %1251 = vmatmul.mubr.f32.gmra.mrb[0].mxu0 %v1250
  %v1252 = vpop.f32.mrb[0].mxu0
  %v1253 = vadd.f32 %v800, %v1252
  %v1254 = vpop.f32.mrb[0].mxu0
  %1255 = vmatprep.mubr.f32.mxu0 0.0
  %v1256 = vand.u32 %v227, 4294901760
  %1257 = vmatmul.mubr.f32.gmra.mrb[0].mxu0 %v1256
  %v1258 = vpop.f32.mrb[0].mxu0
  %v1259 = vadd.f32 %v810, %v1258
  %v1260 = vpop.f32.mrb[0].mxu0
  %1261 = vmatprep.mubr.f32.mxu0 0.0
  %v1262 = vand.u32 %v230, 4294901760
  %1263 = vmatmul.mubr.f32.gmra.mrb[0].mxu0 %v1262
  %v1264 = vpop.f32.mrb[0].mxu0
  %v1265 = vadd.f32 %v820, %v1264
  %v1266 = vpop.f32.mrb[0].mxu0
  %1267 = vmatprep.mubr.f32.mxu0 0.0
  %v1268 = vand.u32 %v233, 4294901760
  %1269 = vmatmul.mubr.f32.gmra.mrb[0].mxu0 %v1268
  %v1270 = vpop.f32.mrb[0].mxu0
  %v1271 = vadd.f32 %v830, %v1270
  %v1272 = vpop.f32.mrb[0].mxu0
  %1273 = vmatprep.mubr.f32.mxu0 0.0
  %v1274 = vand.u32 %v236, 4294901760
  %1275 = vmatmul.mubr.f32.gmra.mrb[0].mxu0 %v1274
  %v1276 = vpop.f32.mrb[0].mxu0
  %v1277 = vadd.f32 %v840, %v1276
  %v1278 = vpop.f32.mrb[0].mxu0
  %1279 = vmatprep.mubr.f32.mxu0 0.0
  %v1280 = vand.u32 %v239, 4294901760
  %1281 = vmatmul.mubr.f32.gmra.mrb[0].mxu0 %v1280
  %v1282 = vpop.f32.mrb[0].mxu0
  %v1283 = vadd.f32 %v850, %v1282
  %v1284 = vpop.f32.mrb[0].mxu0
  %1285 = vmatprep.mubr.f32.mxu0 0.0
  %v1286 = vand.u32 %v242, 4294901760
  %1287 = vmatmul.mubr.f32.gmra.mrb[0].mxu0 %v1286
  %v1288 = vpop.f32.mrb[0].mxu0
  %v1289 = vadd.f32 %v860, %v1288
  %v1290 = vpop.f32.mrb[0].mxu0
  %1291 = vmatprep.mubr.f32.mxu0 0.0
  %v1292 = vand.u32 %v245, 4294901760
  %1293 = vmatmul.mubr.f32.gmra.mrb[0].mxu0 %v1292
  %v1294 = vpop.f32.mrb[0].mxu0
  %v1295 = vadd.f32 %v870, %v1294
  %v1296 = vpop.f32.mrb[0].mxu0
  %1297 = vmatprep.mubr.f32.mxu0 0.0
  %v1298 = vand.u32 %v248, 4294901760
  %1299 = vmatmul.mubr.f32.gmra.mrb[0].mxu0 %v1298
  %v1300 = vpop.f32.mrb[0].mxu0
  %v1301 = vadd.f32 %v880, %v1300
  %v1302 = vpop.f32.mrb[0].mxu0
  %1303 = vdwg.mxu0
  %1304 = vmatprep.subr.mxu0 0.0
  %v1305 = vand.u32 %v70, 4294901760
  %v1306 = vsub.f32 %v70, %v1305
  %1307 = vmatpush1.msra.mxu0 %v1306
  %1308 = vmatprep.subr.mxu0 0.0
  %v1309 = vand.u32 %v71, 4294901760
  %v1310 = vsub.f32 %v71, %v1309
  %1311 = vmatpush1.msra.mxu0 %v1310
  %1312 = vmatprep.subr.mxu0 0.0
  %v1313 = vand.u32 %v72, 4294901760
  %v1314 = vsub.f32 %v72, %v1313
  %1315 = vmatpush1.msra.mxu0 %v1314
  %1316 = vmatprep.subr.mxu0 0.0
  %v1317 = vand.u32 %v252, 4294901760
  %v1318 = vsub.f32 %v252, %v1317
  %1319 = vmatpush1.msra.mxu0 %v1318
  %1320 = vmatprep.subr.mxu0 0.0
  %1321 = vmatpush1.msra.mxu0 0.0
  %1322 = vmatprep.subr.mxu0 0.0
  %1323 = vmatpush1.msra.mxu0 0.0
  %1324 = vmatprep.subr.mxu0 0.0
  %1325 = vmatpush1.msra.mxu0 0.0
  %1326 = vmatprep.subr.mxu0 0.0
  %1327 = vmatpush1.msra.mxu0 0.0
  %1328 = vmatprep.subr.mxu0 0.0
  %1329 = vmatpush1.msra.mxu0 0.0
  %1330 = vmatprep.subr.mxu0 0.0
  %1331 = vmatpush1.msra.mxu0 0.0
  %1332 = vmatprep.subr.mxu0 0.0
  %1333 = vmatpush1.msra.mxu0 0.0
  %1334 = vmatprep.subr.mxu0 0.0
  %1335 = vmatpush1.msra.mxu0 0.0
  %1336 = vmatprep.subr.mxu0 0.0
  %1337 = vmatpush1.msra.mxu0 0.0
  %1338 = vmatprep.subr.mxu0 0.0
  %1339 = vmatpush1.msra.mxu0 0.0
  %1340 = vmatprep.subr.mxu0 0.0
  %1341 = vmatpush1.msra.mxu0 0.0
  %1342 = vmatprep.subr.mxu0 0.0
  %1343 = vmatpush1.msra.mxu0 0.0
  %1344 = vmatprep.subr.mxu0 0.0
  %1345 = vmatpush1.msra.mxu0 0.0
  %1346 = vmatprep.subr.mxu0 0.0
  %1347 = vmatpush1.msra.mxu0 0.0
  %1348 = vmatprep.subr.mxu0 0.0
  %1349 = vmatpush1.msra.mxu0 0.0
  %1350 = vmatprep.subr.mxu0 0.0
  %1351 = vmatpush1.msra.mxu0 0.0
  %1352 = vmatprep.subr.mxu0 0.0
  %1353 = vmatpush1.msra.mxu0 0.0
  %1354 = vmatprep.subr.mxu0 0.0
  %1355 = vmatpush1.msra.mxu0 0.0
  %1356 = vmatprep.subr.mxu0 0.0
  %1357 = vmatpush1.msra.mxu0 0.0
  %1358 = vmatprep.subr.mxu0 0.0
  %1359 = vmatpush1.msra.mxu0 0.0
  %1360 = vmatprep.subr.mxu0 0.0
  %1361 = vmatpush1.msra.mxu0 0.0
  %1362 = vmatprep.subr.mxu0 0.0
  %1363 = vmatpush1.msra.mxu0 0.0
  %1364 = vmatprep.subr.mxu0 0.0
  %1365 = vmatpush1.msra.mxu0 0.0
  %1366 = vmatprep.subr.mxu0 0.0
  %1367 = vmatpush1.msra.mxu0 0.0
  %1368 = vmatprep.subr.mxu0 0.0
  %1369 = vmatpush1.msra.mxu0 0.0
  %1370 = vmatprep.subr.mxu0 0.0
  %1371 = vmatpush1.msra.mxu0 0.0
  %1372 = vmatprep.subr.mxu0 0.0
  %1373 = vmatpush1.msra.mxu0 0.0
  %1374 = vmatprep.subr.mxu0 0.0
  %1375 = vmatpush1.msra.mxu0 0.0
  %1376 = vmatprep.mubr.f32.mxu0 0.0
  %v1377 = vand.u32 %v83, 4294901760
  %v1378 = vsub.f32 %v83, %v1377
  %1379 = vmatmul.mubr.f32.gmra.mrb[0].mxu0 %v1378
  %v1380 = vpop.f32.mrb[0].mxu0
  %v1381 = vadd.f32 %v971, %v1380
  %v1382 = vpop.f32.mrb[0].mxu0
  %1383 = vmatprep.mubr.f32.mxu0 0.0
  %v1384 = vand.u32 %v86, 4294901760
  %v1385 = vsub.f32 %v86, %v1384
  %1386 = vmatmul.mubr.f32.gmra.mrb[0].mxu0 %v1385
  %v1387 = vpop.f32.mrb[0].mxu0
  %v1388 = vadd.f32 %v977, %v1387
  %v1389 = vpop.f32.mrb[0].mxu0
  %1390 = vmatprep.mubr.f32.mxu0 0.0
  %v1391 = vand.u32 %v89, 4294901760
  %v1392 = vsub.f32 %v89, %v1391
  %1393 = vmatmul.mubr.f32.gmra.mrb[0].mxu0 %v1392
  %v1394 = vpop.f32.mrb[0].mxu0
  %v1395 = vadd.f32 %v983, %v1394
  %v1396 = vpop.f32.mrb[0].mxu0
  %1397 = vmatprep.mubr.f32.mxu0 0.0
  %v1398 = vand.u32 %v92, 4294901760
  %v1399 = vsub.f32 %v92, %v1398
  %1400 = vmatmul.mubr.f32.gmra.mrb[0].mxu0 %v1399
  %v1401 = vpop.f32.mrb[0].mxu0
  %v1402 = vadd.f32 %v989, %v1401
  %v1403 = vpop.f32.mrb[0].mxu0
  %1404 = vmatprep.mubr.f32.mxu0 0.0
  %v1405 = vand.u32 %v95, 4294901760
  %v1406 = vsub.f32 %v95, %v1405
  %1407 = vmatmul.mubr.f32.gmra.mrb[0].mxu0 %v1406
  %v1408 = vpop.f32.mrb[0].mxu0
  %v1409 = vadd.f32 %v995, %v1408
  %v1410 = vpop.f32.mrb[0].mxu0
  %1411 = vmatprep.mubr.f32.mxu0 0.0
  %v1412 = vand.u32 %v98, 4294901760
  %v1413 = vsub.f32 %v98, %v1412
  %1414 = vmatmul.mubr.f32.gmra.mrb[0].mxu0 %v1413
  %v1415 = vpop.f32.mrb[0].mxu0
  %v1416 = vadd.f32 %v1001, %v1415
  %v1417 = vpop.f32.mrb[0].mxu0
  %1418 = vmatprep.mubr.f32.mxu0 0.0
  %v1419 = vand.u32 %v101, 4294901760
  %v1420 = vsub.f32 %v101, %v1419
  %1421 = vmatmul.mubr.f32.gmra.mrb[0].mxu0 %v1420
  %v1422 = vpop.f32.mrb[0].mxu0
  %v1423 = vadd.f32 %v1007, %v1422
  %v1424 = vpop.f32.mrb[0].mxu0
  %1425 = vmatprep.mubr.f32.mxu0 0.0
  %v1426 = vand.u32 %v104, 4294901760
  %v1427 = vsub.f32 %v104, %v1426
  %1428 = vmatmul.mubr.f32.gmra.mrb[0].mxu0 %v1427
  %v1429 = vpop.f32.mrb[0].mxu0
  %v1430 = vadd.f32 %v1013, %v1429
  %v1431 = vpop.f32.mrb[0].mxu0
  %1432 = vmatprep.mubr.f32.mxu0 0.0
  %v1433 = vand.u32 %v107, 4294901760
  %v1434 = vsub.f32 %v107, %v1433
  %1435 = vmatmul.mubr.f32.gmra.mrb[0].mxu0 %v1434
  %v1436 = vpop.f32.mrb[0].mxu0
  %v1437 = vadd.f32 %v1019, %v1436
  %v1438 = vpop.f32.mrb[0].mxu0
  %1439 = vmatprep.mubr.f32.mxu0 0.0
  %v1440 = vand.u32 %v110, 4294901760
  %v1441 = vsub.f32 %v110, %v1440
  %1442 = vmatmul.mubr.f32.gmra.mrb[0].mxu0 %v1441
  %v1443 = vpop.f32.mrb[0].mxu0
  %v1444 = vadd.f32 %v1025, %v1443
  %v1445 = vpop.f32.mrb[0].mxu0
  %1446 = vmatprep.mubr.f32.mxu0 0.0
  %v1447 = vand.u32 %v113, 4294901760
  %v1448 = vsub.f32 %v113, %v1447
  %1449 = vmatmul.mubr.f32.gmra.mrb[0].mxu0 %v1448
  %v1450 = vpop.f32.mrb[0].mxu0
  %v1451 = vadd.f32 %v1031, %v1450
  %v1452 = vpop.f32.mrb[0].mxu0
  %1453 = vmatprep.mubr.f32.mxu0 0.0
  %v1454 = vand.u32 %v116, 4294901760
  %v1455 = vsub.f32 %v116, %v1454
  %1456 = vmatmul.mubr.f32.gmra.mrb[0].mxu0 %v1455
  %v1457 = vpop.f32.mrb[0].mxu0
  %v1458 = vadd.f32 %v1037, %v1457
  %v1459 = vpop.f32.mrb[0].mxu0
  %1460 = vmatprep.mubr.f32.mxu0 0.0
  %v1461 = vand.u32 %v119, 4294901760
  %v1462 = vsub.f32 %v119, %v1461
  %1463 = vmatmul.mubr.f32.gmra.mrb[0].mxu0 %v1462
  %v1464 = vpop.f32.mrb[0].mxu0
  %v1465 = vadd.f32 %v1043, %v1464
  %v1466 = vpop.f32.mrb[0].mxu0
  %1467 = vmatprep.mubr.f32.mxu0 0.0
  %v1468 = vand.u32 %v122, 4294901760
  %v1469 = vsub.f32 %v122, %v1468
  %1470 = vmatmul.mubr.f32.gmra.mrb[0].mxu0 %v1469
  %v1471 = vpop.f32.mrb[0].mxu0
  %v1472 = vadd.f32 %v1049, %v1471
  %v1473 = vpop.f32.mrb[0].mxu0
  %1474 = vmatprep.mubr.f32.mxu0 0.0
  %v1475 = vand.u32 %v125, 4294901760
  %v1476 = vsub.f32 %v125, %v1475
  %1477 = vmatmul.mubr.f32.gmra.mrb[0].mxu0 %v1476
  %v1478 = vpop.f32.mrb[0].mxu0
  %v1479 = vadd.f32 %v1055, %v1478
  %v1480 = vpop.f32.mrb[0].mxu0
  %1481 = vmatprep.mubr.f32.mxu0 0.0
  %v1482 = vand.u32 %v128, 4294901760
  %v1483 = vsub.f32 %v128, %v1482
  %1484 = vmatmul.mubr.f32.gmra.mrb[0].mxu0 %v1483
  %v1485 = vpop.f32.mrb[0].mxu0
  %v1486 = vadd.f32 %v1061, %v1485
  %v1487 = vpop.f32.mrb[0].mxu0
  %1488 = vmatprep.mubr.f32.mxu0 0.0
  %v1489 = vand.u32 %v131, 4294901760
  %v1490 = vsub.f32 %v131, %v1489
  %1491 = vmatmul.mubr.f32.gmra.mrb[0].mxu0 %v1490
  %v1492 = vpop.f32.mrb[0].mxu0
  %v1493 = vadd.f32 %v1067, %v1492
  %v1494 = vpop.f32.mrb[0].mxu0
  %1495 = vmatprep.mubr.f32.mxu0 0.0
  %v1496 = vand.u32 %v134, 4294901760
  %v1497 = vsub.f32 %v134, %v1496
  %1498 = vmatmul.mubr.f32.gmra.mrb[0].mxu0 %v1497
  %v1499 = vpop.f32.mrb[0].mxu0
  %v1500 = vadd.f32 %v1073, %v1499
  %v1501 = vpop.f32.mrb[0].mxu0
  %1502 = vmatprep.mubr.f32.mxu0 0.0
  %v1503 = vand.u32 %v137, 4294901760
  %v1504 = vsub.f32 %v137, %v1503
  %1505 = vmatmul.mubr.f32.gmra.mrb[0].mxu0 %v1504
  %v1506 = vpop.f32.mrb[0].mxu0
  %v1507 = vadd.f32 %v1079, %v1506
  %v1508 = vpop.f32.mrb[0].mxu0
  %1509 = vmatprep.mubr.f32.mxu0 0.0
  %v1510 = vand.u32 %v140, 4294901760
  %v1511 = vsub.f32 %v140, %v1510
  %1512 = vmatmul.mubr.f32.gmra.mrb[0].mxu0 %v1511
  %v1513 = vpop.f32.mrb[0].mxu0
  %v1514 = vadd.f32 %v1085, %v1513
  %v1515 = vpop.f32.mrb[0].mxu0
  %1516 = vmatprep.mubr.f32.mxu0 0.0
  %v1517 = vand.u32 %v143, 4294901760
  %v1518 = vsub.f32 %v143, %v1517
  %1519 = vmatmul.mubr.f32.gmra.mrb[0].mxu0 %v1518
  %v1520 = vpop.f32.mrb[0].mxu0
  %v1521 = vadd.f32 %v1091, %v1520
  %v1522 = vpop.f32.mrb[0].mxu0
  %1523 = vmatprep.mubr.f32.mxu0 0.0
  %v1524 = vand.u32 %v146, 4294901760
  %v1525 = vsub.f32 %v146, %v1524
  %1526 = vmatmul.mubr.f32.gmra.mrb[0].mxu0 %v1525
  %v1527 = vpop.f32.mrb[0].mxu0
  %v1528 = vadd.f32 %v1097, %v1527
  %v1529 = vpop.f32.mrb[0].mxu0
  %1530 = vmatprep.mubr.f32.mxu0 0.0
  %v1531 = vand.u32 %v149, 4294901760
  %v1532 = vsub.f32 %v149, %v1531
  %1533 = vmatmul.mubr.f32.gmra.mrb[0].mxu0 %v1532
  %v1534 = vpop.f32.mrb[0].mxu0
  %v1535 = vadd.f32 %v1103, %v1534
  %v1536 = vpop.f32.mrb[0].mxu0
  %1537 = vmatprep.mubr.f32.mxu0 0.0
  %v1538 = vand.u32 %v152, 4294901760
  %v1539 = vsub.f32 %v152, %v1538
  %1540 = vmatmul.mubr.f32.gmra.mrb[0].mxu0 %v1539
  %v1541 = vpop.f32.mrb[0].mxu0
  %v1542 = vadd.f32 %v1109, %v1541
  %v1543 = vpop.f32.mrb[0].mxu0
  %1544 = vmatprep.mubr.f32.mxu0 0.0
  %v1545 = vand.u32 %v155, 4294901760
  %v1546 = vsub.f32 %v155, %v1545
  %1547 = vmatmul.mubr.f32.gmra.mrb[0].mxu0 %v1546
  %v1548 = vpop.f32.mrb[0].mxu0
  %v1549 = vadd.f32 %v1115, %v1548
  %v1550 = vpop.f32.mrb[0].mxu0
  %1551 = vmatprep.mubr.f32.mxu0 0.0
  %v1552 = vand.u32 %v158, 4294901760
  %v1553 = vsub.f32 %v158, %v1552
  %1554 = vmatmul.mubr.f32.gmra.mrb[0].mxu0 %v1553
  %v1555 = vpop.f32.mrb[0].mxu0
  %v1556 = vadd.f32 %v1121, %v1555
  %v1557 = vpop.f32.mrb[0].mxu0
  %1558 = vmatprep.mubr.f32.mxu0 0.0
  %v1559 = vand.u32 %v161, 4294901760
  %v1560 = vsub.f32 %v161, %v1559
  %1561 = vmatmul.mubr.f32.gmra.mrb[0].mxu0 %v1560
  %v1562 = vpop.f32.mrb[0].mxu0
  %v1563 = vadd.f32 %v1127, %v1562
  %v1564 = vpop.f32.mrb[0].mxu0
  %1565 = vmatprep.mubr.f32.mxu0 0.0
  %v1566 = vand.u32 %v164, 4294901760
  %v1567 = vsub.f32 %v164, %v1566
  %1568 = vmatmul.mubr.f32.gmra.mrb[0].mxu0 %v1567
  %v1569 = vpop.f32.mrb[0].mxu0
  %v1570 = vadd.f32 %v1133, %v1569
  %v1571 = vpop.f32.mrb[0].mxu0
  %1572 = vmatprep.mubr.f32.mxu0 0.0
  %v1573 = vand.u32 %v167, 4294901760
  %v1574 = vsub.f32 %v167, %v1573
  %1575 = vmatmul.mubr.f32.gmra.mrb[0].mxu0 %v1574
  %v1576 = vpop.f32.mrb[0].mxu0
  %v1577 = vadd.f32 %v1139, %v1576
  %v1578 = vpop.f32.mrb[0].mxu0
  %1579 = vmatprep.mubr.f32.mxu0 0.0
  %v1580 = vand.u32 %v170, 4294901760
  %v1581 = vsub.f32 %v170, %v1580
  %1582 = vmatmul.mubr.f32.gmra.mrb[0].mxu0 %v1581
  %v1583 = vpop.f32.mrb[0].mxu0
  %v1584 = vadd.f32 %v1145, %v1583
  %v1585 = vpop.f32.mrb[0].mxu0
  %1586 = vmatprep.mubr.f32.mxu0 0.0
  %v1587 = vand.u32 %v173, 4294901760
  %v1588 = vsub.f32 %v173, %v1587
  %1589 = vmatmul.mubr.f32.gmra.mrb[0].mxu0 %v1588
  %v1590 = vpop.f32.mrb[0].mxu0
  %v1591 = vadd.f32 %v1151, %v1590
  %v1592 = vpop.f32.mrb[0].mxu0
  %1593 = vmatprep.mubr.f32.mxu0 0.0
  %v1594 = vand.u32 %v176, 4294901760
  %v1595 = vsub.f32 %v176, %v1594
  %1596 = vmatmul.mubr.f32.gmra.mrb[0].mxu0 %v1595
  %v1597 = vpop.f32.mrb[0].mxu0
  %v1598 = vadd.f32 %v1157, %v1597
  %v1599 = vpop.f32.mrb[0].mxu0
  %1600 = vmatprep.mubr.f32.mxu0 0.0
  %v1601 = vand.u32 %v179, 4294901760
  %v1602 = vsub.f32 %v179, %v1601
  %1603 = vmatmul.mubr.f32.gmra.mrb[0].mxu0 %v1602
  %v1604 = vpop.f32.mrb[0].mxu0
  %v1605 = vadd.f32 %v1163, %v1604
  %v1606 = vpop.f32.mrb[0].mxu0
  %1607 = vmatprep.mubr.f32.mxu0 0.0
  %v1608 = vand.u32 %v182, 4294901760
  %v1609 = vsub.f32 %v182, %v1608
  %1610 = vmatmul.mubr.f32.gmra.mrb[0].mxu0 %v1609
  %v1611 = vpop.f32.mrb[0].mxu0
  %v1612 = vadd.f32 %v1169, %v1611
  %v1613 = vpop.f32.mrb[0].mxu0
  %1614 = vmatprep.mubr.f32.mxu0 0.0
  %v1615 = vand.u32 %v185, 4294901760
  %v1616 = vsub.f32 %v185, %v1615
  %1617 = vmatmul.mubr.f32.gmra.mrb[0].mxu0 %v1616
  %v1618 = vpop.f32.mrb[0].mxu0
  %v1619 = vadd.f32 %v1175, %v1618
  %v1620 = vpop.f32.mrb[0].mxu0
  %1621 = vmatprep.mubr.f32.mxu0 0.0
  %v1622 = vand.u32 %v188, 4294901760
  %v1623 = vsub.f32 %v188, %v1622
  %1624 = vmatmul.mubr.f32.gmra.mrb[0].mxu0 %v1623
  %v1625 = vpop.f32.mrb[0].mxu0
  %v1626 = vadd.f32 %v1181, %v1625
  %v1627 = vpop.f32.mrb[0].mxu0
  %1628 = vmatprep.mubr.f32.mxu0 0.0
  %v1629 = vand.u32 %v191, 4294901760
  %v1630 = vsub.f32 %v191, %v1629
  %1631 = vmatmul.mubr.f32.gmra.mrb[0].mxu0 %v1630
  %v1632 = vpop.f32.mrb[0].mxu0
  %v1633 = vadd.f32 %v1187, %v1632
  %v1634 = vpop.f32.mrb[0].mxu0
  %1635 = vmatprep.mubr.f32.mxu0 0.0
  %v1636 = vand.u32 %v194, 4294901760
  %v1637 = vsub.f32 %v194, %v1636
  %1638 = vmatmul.mubr.f32.gmra.mrb[0].mxu0 %v1637
  %v1639 = vpop.f32.mrb[0].mxu0
  %v1640 = vadd.f32 %v1193, %v1639
  %v1641 = vpop.f32.mrb[0].mxu0
  %1642 = vmatprep.mubr.f32.mxu0 0.0
  %v1643 = vand.u32 %v197, 4294901760
  %v1644 = vsub.f32 %v197, %v1643
  %1645 = vmatmul.mubr.f32.gmra.mrb[0].mxu0 %v1644
  %v1646 = vpop.f32.mrb[0].mxu0
  %v1647 = vadd.f32 %v1199, %v1646
  %v1648 = vpop.f32.mrb[0].mxu0
  %1649 = vmatprep.mubr.f32.mxu0 0.0
  %v1650 = vand.u32 %v200, 4294901760
  %v1651 = vsub.f32 %v200, %v1650
  %1652 = vmatmul.mubr.f32.gmra.mrb[0].mxu0 %v1651
  %v1653 = vpop.f32.mrb[0].mxu0
  %v1654 = vadd.f32 %v1205, %v1653
  %v1655 = vpop.f32.mrb[0].mxu0
  %1656 = vmatprep.mubr.f32.mxu0 0.0
  %v1657 = vand.u32 %v203, 4294901760
  %v1658 = vsub.f32 %v203, %v1657
  %1659 = vmatmul.mubr.f32.gmra.mrb[0].mxu0 %v1658
  %v1660 = vpop.f32.mrb[0].mxu0
  %v1661 = vadd.f32 %v1211, %v1660
  %v1662 = vpop.f32.mrb[0].mxu0
  %1663 = vmatprep.mubr.f32.mxu0 0.0
  %v1664 = vand.u32 %v206, 4294901760
  %v1665 = vsub.f32 %v206, %v1664
  %1666 = vmatmul.mubr.f32.gmra.mrb[0].mxu0 %v1665
  %v1667 = vpop.f32.mrb[0].mxu0
  %v1668 = vadd.f32 %v1217, %v1667
  %v1669 = vpop.f32.mrb[0].mxu0
  %1670 = vmatprep.mubr.f32.mxu0 0.0
  %v1671 = vand.u32 %v209, 4294901760
  %v1672 = vsub.f32 %v209, %v1671
  %1673 = vmatmul.mubr.f32.gmra.mrb[0].mxu0 %v1672
  %v1674 = vpop.f32.mrb[0].mxu0
  %v1675 = vadd.f32 %v1223, %v1674
  %v1676 = vpop.f32.mrb[0].mxu0
  %1677 = vmatprep.mubr.f32.mxu0 0.0
  %v1678 = vand.u32 %v212, 4294901760
  %v1679 = vsub.f32 %v212, %v1678
  %1680 = vmatmul.mubr.f32.gmra.mrb[0].mxu0 %v1679
  %v1681 = vpop.f32.mrb[0].mxu0
  %v1682 = vadd.f32 %v1229, %v1681
  %v1683 = vpop.f32.mrb[0].mxu0
  %1684 = vmatprep.mubr.f32.mxu0 0.0
  %v1685 = vand.u32 %v215, 4294901760
  %v1686 = vsub.f32 %v215, %v1685
  %1687 = vmatmul.mubr.f32.gmra.mrb[0].mxu0 %v1686
  %v1688 = vpop.f32.mrb[0].mxu0
  %v1689 = vadd.f32 %v1235, %v1688
  %v1690 = vpop.f32.mrb[0].mxu0
  %1691 = vmatprep.mubr.f32.mxu0 0.0
  %v1692 = vand.u32 %v218, 4294901760
  %v1693 = vsub.f32 %v218, %v1692
  %1694 = vmatmul.mubr.f32.gmra.mrb[0].mxu0 %v1693
  %v1695 = vpop.f32.mrb[0].mxu0
  %v1696 = vadd.f32 %v1241, %v1695
  %v1697 = vpop.f32.mrb[0].mxu0
  %1698 = vmatprep.mubr.f32.mxu0 0.0
  %v1699 = vand.u32 %v221, 4294901760
  %v1700 = vsub.f32 %v221, %v1699
  %1701 = vmatmul.mubr.f32.gmra.mrb[0].mxu0 %v1700
  %v1702 = vpop.f32.mrb[0].mxu0
  %v1703 = vadd.f32 %v1247, %v1702
  %v1704 = vpop.f32.mrb[0].mxu0
  %1705 = vmatprep.mubr.f32.mxu0 0.0
  %v1706 = vand.u32 %v224, 4294901760
  %v1707 = vsub.f32 %v224, %v1706
  %1708 = vmatmul.mubr.f32.gmra.mrb[0].mxu0 %v1707
  %v1709 = vpop.f32.mrb[0].mxu0
  %v1710 = vadd.f32 %v1253, %v1709
  %v1711 = vpop.f32.mrb[0].mxu0
  %1712 = vmatprep.mubr.f32.mxu0 0.0
  %v1713 = vand.u32 %v227, 4294901760
  %v1714 = vsub.f32 %v227, %v1713
  %1715 = vmatmul.mubr.f32.gmra.mrb[0].mxu0 %v1714
  %v1716 = vpop.f32.mrb[0].mxu0
  %v1717 = vadd.f32 %v1259, %v1716
  %v1718 = vpop.f32.mrb[0].mxu0
  %1719 = vmatprep.mubr.f32.mxu0 0.0
  %v1720 = vand.u32 %v230, 4294901760
  %v1721 = vsub.f32 %v230, %v1720
  %1722 = vmatmul.mubr.f32.gmra.mrb[0].mxu0 %v1721
  %v1723 = vpop.f32.mrb[0].mxu0
  %v1724 = vadd.f32 %v1265, %v1723
  %v1725 = vpop.f32.mrb[0].mxu0
  %1726 = vmatprep.mubr.f32.mxu0 0.0
  %v1727 = vand.u32 %v233, 4294901760
  %v1728 = vsub.f32 %v233, %v1727
  %1729 = vmatmul.mubr.f32.gmra.mrb[0].mxu0 %v1728
  %v1730 = vpop.f32.mrb[0].mxu0
  %v1731 = vadd.f32 %v1271, %v1730
  %v1732 = vpop.f32.mrb[0].mxu0
  %1733 = vmatprep.mubr.f32.mxu0 0.0
  %v1734 = vand.u32 %v236, 4294901760
  %v1735 = vsub.f32 %v236, %v1734
  %1736 = vmatmul.mubr.f32.gmra.mrb[0].mxu0 %v1735
  %v1737 = vpop.f32.mrb[0].mxu0
  %v1738 = vadd.f32 %v1277, %v1737
  %v1739 = vpop.f32.mrb[0].mxu0
  %1740 = vmatprep.mubr.f32.mxu0 0.0
  %v1741 = vand.u32 %v239, 4294901760
  %v1742 = vsub.f32 %v239, %v1741
  %1743 = vmatmul.mubr.f32.gmra.mrb[0].mxu0 %v1742
  %v1744 = vpop.f32.mrb[0].mxu0
  %v1745 = vadd.f32 %v1283, %v1744
  %v1746 = vpop.f32.mrb[0].mxu0
  %1747 = vmatprep.mubr.f32.mxu0 0.0
  %v1748 = vand.u32 %v242, 4294901760
  %v1749 = vsub.f32 %v242, %v1748
  %1750 = vmatmul.mubr.f32.gmra.mrb[0].mxu0 %v1749
  %v1751 = vpop.f32.mrb[0].mxu0
  %v1752 = vadd.f32 %v1289, %v1751
  %v1753 = vpop.f32.mrb[0].mxu0
  %1754 = vmatprep.mubr.f32.mxu0 0.0
  %v1755 = vand.u32 %v245, 4294901760
  %v1756 = vsub.f32 %v245, %v1755
  %1757 = vmatmul.mubr.f32.gmra.mrb[0].mxu0 %v1756
  %v1758 = vpop.f32.mrb[0].mxu0
  %v1759 = vadd.f32 %v1295, %v1758
  %v1760 = vpop.f32.mrb[0].mxu0
  %1761 = vmatprep.mubr.f32.mxu0 0.0
  %v1762 = vand.u32 %v248, 4294901760
  %v1763 = vsub.f32 %v248, %v1762
  %1764 = vmatmul.mubr.f32.gmra.mrb[0].mxu0 %v1763
  %v1765 = vpop.f32.mrb[0].mxu0
  %v1766 = vadd.f32 %v1301, %v1765
  %v1767 = vpop.f32.mrb[0].mxu0
  %1768 = vdwg.mxu0
  %1769 = vmatprep.subr.mxu0 0.0
  %v1770 = vand.u32 %v70, 4294901760
  %1771 = vmatpush1.msra.mxu0 %v1770
  %1772 = vmatprep.subr.mxu0 0.0
  %v1773 = vand.u32 %v71, 4294901760
  %1774 = vmatpush1.msra.mxu0 %v1773
  %1775 = vmatprep.subr.mxu0 0.0
  %v1776 = vand.u32 %v72, 4294901760
  %1777 = vmatpush1.msra.mxu0 %v1776
  %1778 = vmatprep.subr.mxu0 0.0
  %v1779 = vand.u32 %v252, 4294901760
  %1780 = vmatpush1.msra.mxu0 %v1779
  %1781 = vmatprep.subr.mxu0 0.0
  %1782 = vmatpush1.msra.mxu0 0.0
  %1783 = vmatprep.subr.mxu0 0.0
  %1784 = vmatpush1.msra.mxu0 0.0
  %1785 = vmatprep.subr.mxu0 0.0
  %1786 = vmatpush1.msra.mxu0 0.0
  %1787 = vmatprep.subr.mxu0 0.0
  %1788 = vmatpush1.msra.mxu0 0.0
  %1789 = vmatprep.subr.mxu0 0.0
  %1790 = vmatpush1.msra.mxu0 0.0
  %1791 = vmatprep.subr.mxu0 0.0
  %1792 = vmatpush1.msra.mxu0 0.0
  %1793 = vmatprep.subr.mxu0 0.0
  %1794 = vmatpush1.msra.mxu0 0.0
  %1795 = vmatprep.subr.mxu0 0.0
  %1796 = vmatpush1.msra.mxu0 0.0
  %1797 = vmatprep.subr.mxu0 0.0
  %1798 = vmatpush1.msra.mxu0 0.0
  %1799 = vmatprep.subr.mxu0 0.0
  %1800 = vmatpush1.msra.mxu0 0.0
  %1801 = vmatprep.subr.mxu0 0.0
  %1802 = vmatpush1.msra.mxu0 0.0
  %1803 = vmatprep.subr.mxu0 0.0
  %1804 = vmatpush1.msra.mxu0 0.0
  %1805 = vmatprep.subr.mxu0 0.0
  %1806 = vmatpush1.msra.mxu0 0.0
  %1807 = vmatprep.subr.mxu0 0.0
  %1808 = vmatpush1.msra.mxu0 0.0
  %1809 = vmatprep.subr.mxu0 0.0
  %1810 = vmatpush1.msra.mxu0 0.0
  %1811 = vmatprep.subr.mxu0 0.0
  %1812 = vmatpush1.msra.mxu0 0.0
  %1813 = vmatprep.subr.mxu0 0.0
  %1814 = vmatpush1.msra.mxu0 0.0
  %1815 = vmatprep.subr.mxu0 0.0
  %1816 = vmatpush1.msra.mxu0 0.0
  %1817 = vmatprep.subr.mxu0 0.0
  %1818 = vmatpush1.msra.mxu0 0.0
  %1819 = vmatprep.subr.mxu0 0.0
  %1820 = vmatpush1.msra.mxu0 0.0
  %1821 = vmatprep.subr.mxu0 0.0
  %1822 = vmatpush1.msra.mxu0 0.0
  %1823 = vmatprep.subr.mxu0 0.0
  %1824 = vmatpush1.msra.mxu0 0.0
  %1825 = vmatprep.subr.mxu0 0.0
  %1826 = vmatpush1.msra.mxu0 0.0
  %1827 = vmatprep.subr.mxu0 0.0
  %1828 = vmatpush1.msra.mxu0 0.0
  %1829 = vmatprep.subr.mxu0 0.0
  %1830 = vmatpush1.msra.mxu0 0.0
  %1831 = vmatprep.subr.mxu0 0.0
  %1832 = vmatpush1.msra.mxu0 0.0
  %1833 = vmatprep.subr.mxu0 0.0
  %1834 = vmatpush1.msra.mxu0 0.0
  %1835 = vmatprep.subr.mxu0 0.0
  %1836 = vmatpush1.msra.mxu0 0.0
  %1837 = vmatprep.mubr.f32.mxu0 0.0
  %v1838 = vand.u32 %v83, 4294901760
  %v1839 = vsub.f32 %v83, %v1838
  %v1840 = vand.u32 %v1839, 4294901760
  %1841 = vmatmul.mubr.f32.gmra.mrb[0].mxu0 %v1840
  %v1842 = vpop.f32.mrb[0].mxu0
  %v1843 = vadd.f32 %v1381, %v1842
  %v1844 = vpop.f32.mrb[0].mxu0
  %1845 = vmatprep.mubr.f32.mxu0 0.0
  %v1846 = vand.u32 %v86, 4294901760
  %v1847 = vsub.f32 %v86, %v1846
  %v1848 = vand.u32 %v1847, 4294901760
  %1849 = vmatmul.mubr.f32.gmra.mrb[0].mxu0 %v1848
  %v1850 = vpop.f32.mrb[0].mxu0
  %v1851 = vadd.f32 %v1388, %v1850
  %v1852 = vpop.f32.mrb[0].mxu0
  %1853 = vmatprep.mubr.f32.mxu0 0.0
  %v1854 = vand.u32 %v89, 4294901760
  %v1855 = vsub.f32 %v89, %v1854
  %v1856 = vand.u32 %v1855, 4294901760
  %1857 = vmatmul.mubr.f32.gmra.mrb[0].mxu0 %v1856
  %v1858 = vpop.f32.mrb[0].mxu0
  %v1859 = vadd.f32 %v1395, %v1858
  %v1860 = vpop.f32.mrb[0].mxu0
  %1861 = vmatprep.mubr.f32.mxu0 0.0
  %v1862 = vand.u32 %v92, 4294901760
  %v1863 = vsub.f32 %v92, %v1862
  %v1864 = vand.u32 %v1863, 4294901760
  %1865 = vmatmul.mubr.f32.gmra.mrb[0].mxu0 %v1864
  %v1866 = vpop.f32.mrb[0].mxu0
  %v1867 = vadd.f32 %v1402, %v1866
  %v1868 = vpop.f32.mrb[0].mxu0
  %1869 = vmatprep.mubr.f32.mxu0 0.0
  %v1870 = vand.u32 %v95, 4294901760
  %v1871 = vsub.f32 %v95, %v1870
  %v1872 = vand.u32 %v1871, 4294901760
  %1873 = vmatmul.mubr.f32.gmra.mrb[0].mxu0 %v1872
  %v1874 = vpop.f32.mrb[0].mxu0
  %v1875 = vadd.f32 %v1409, %v1874
  %v1876 = vpop.f32.mrb[0].mxu0
  %1877 = vmatprep.mubr.f32.mxu0 0.0
  %v1878 = vand.u32 %v98, 4294901760
  %v1879 = vsub.f32 %v98, %v1878
  %v1880 = vand.u32 %v1879, 4294901760
  %1881 = vmatmul.mubr.f32.gmra.mrb[0].mxu0 %v1880
  %v1882 = vpop.f32.mrb[0].mxu0
  %v1883 = vadd.f32 %v1416, %v1882
  %v1884 = vpop.f32.mrb[0].mxu0
  %1885 = vmatprep.mubr.f32.mxu0 0.0
  %v1886 = vand.u32 %v101, 4294901760
  %v1887 = vsub.f32 %v101, %v1886
  %v1888 = vand.u32 %v1887, 4294901760
  %1889 = vmatmul.mubr.f32.gmra.mrb[0].mxu0 %v1888
  %v1890 = vpop.f32.mrb[0].mxu0
  %v1891 = vadd.f32 %v1423, %v1890
  %v1892 = vpop.f32.mrb[0].mxu0
  %1893 = vmatprep.mubr.f32.mxu0 0.0
  %v1894 = vand.u32 %v104, 4294901760
  %v1895 = vsub.f32 %v104, %v1894
  %v1896 = vand.u32 %v1895, 4294901760
  %1897 = vmatmul.mubr.f32.gmra.mrb[0].mxu0 %v1896
  %v1898 = vpop.f32.mrb[0].mxu0
  %v1899 = vadd.f32 %v1430, %v1898
  %v1900 = vpop.f32.mrb[0].mxu0
  %1901 = vmatprep.mubr.f32.mxu0 0.0
  %v1902 = vand.u32 %v107, 4294901760
  %v1903 = vsub.f32 %v107, %v1902
  %v1904 = vand.u32 %v1903, 4294901760
  %1905 = vmatmul.mubr.f32.gmra.mrb[0].mxu0 %v1904
  %v1906 = vpop.f32.mrb[0].mxu0
  %v1907 = vadd.f32 %v1437, %v1906
  %v1908 = vpop.f32.mrb[0].mxu0
  %1909 = vmatprep.mubr.f32.mxu0 0.0
  %v1910 = vand.u32 %v110, 4294901760
  %v1911 = vsub.f32 %v110, %v1910
  %v1912 = vand.u32 %v1911, 4294901760
  %1913 = vmatmul.mubr.f32.gmra.mrb[0].mxu0 %v1912
  %v1914 = vpop.f32.mrb[0].mxu0
  %v1915 = vadd.f32 %v1444, %v1914
  %v1916 = vpop.f32.mrb[0].mxu0
  %1917 = vmatprep.mubr.f32.mxu0 0.0
  %v1918 = vand.u32 %v113, 4294901760
  %v1919 = vsub.f32 %v113, %v1918
  %v1920 = vand.u32 %v1919, 4294901760
  %1921 = vmatmul.mubr.f32.gmra.mrb[0].mxu0 %v1920
  %v1922 = vpop.f32.mrb[0].mxu0
  %v1923 = vadd.f32 %v1451, %v1922
  %v1924 = vpop.f32.mrb[0].mxu0
  %1925 = vmatprep.mubr.f32.mxu0 0.0
  %v1926 = vand.u32 %v116, 4294901760
  %v1927 = vsub.f32 %v116, %v1926
  %v1928 = vand.u32 %v1927, 4294901760
  %1929 = vmatmul.mubr.f32.gmra.mrb[0].mxu0 %v1928
  %v1930 = vpop.f32.mrb[0].mxu0
  %v1931 = vadd.f32 %v1458, %v1930
  %v1932 = vpop.f32.mrb[0].mxu0
  %1933 = vmatprep.mubr.f32.mxu0 0.0
  %v1934 = vand.u32 %v119, 4294901760
  %v1935 = vsub.f32 %v119, %v1934
  %v1936 = vand.u32 %v1935, 4294901760
  %1937 = vmatmul.mubr.f32.gmra.mrb[0].mxu0 %v1936
  %v1938 = vpop.f32.mrb[0].mxu0
  %v1939 = vadd.f32 %v1465, %v1938
  %v1940 = vpop.f32.mrb[0].mxu0
  %1941 = vmatprep.mubr.f32.mxu0 0.0
  %v1942 = vand.u32 %v122, 4294901760
  %v1943 = vsub.f32 %v122, %v1942
  %v1944 = vand.u32 %v1943, 4294901760
  %1945 = vmatmul.mubr.f32.gmra.mrb[0].mxu0 %v1944
  %v1946 = vpop.f32.mrb[0].mxu0
  %v1947 = vadd.f32 %v1472, %v1946
  %v1948 = vpop.f32.mrb[0].mxu0
  %1949 = vmatprep.mubr.f32.mxu0 0.0
  %v1950 = vand.u32 %v125, 4294901760
  %v1951 = vsub.f32 %v125, %v1950
  %v1952 = vand.u32 %v1951, 4294901760
  %1953 = vmatmul.mubr.f32.gmra.mrb[0].mxu0 %v1952
  %v1954 = vpop.f32.mrb[0].mxu0
  %v1955 = vadd.f32 %v1479, %v1954
  %v1956 = vpop.f32.mrb[0].mxu0
  %1957 = vmatprep.mubr.f32.mxu0 0.0
  %v1958 = vand.u32 %v128, 4294901760
  %v1959 = vsub.f32 %v128, %v1958
  %v1960 = vand.u32 %v1959, 4294901760
  %1961 = vmatmul.mubr.f32.gmra.mrb[0].mxu0 %v1960
  %v1962 = vpop.f32.mrb[0].mxu0
  %v1963 = vadd.f32 %v1486, %v1962
  %v1964 = vpop.f32.mrb[0].mxu0
  %1965 = vmatprep.mubr.f32.mxu0 0.0
  %v1966 = vand.u32 %v131, 4294901760
  %v1967 = vsub.f32 %v131, %v1966
  %v1968 = vand.u32 %v1967, 4294901760
  %1969 = vmatmul.mubr.f32.gmra.mrb[0].mxu0 %v1968
  %v1970 = vpop.f32.mrb[0].mxu0
  %v1971 = vadd.f32 %v1493, %v1970
  %v1972 = vpop.f32.mrb[0].mxu0
  %1973 = vmatprep.mubr.f32.mxu0 0.0
  %v1974 = vand.u32 %v134, 4294901760
  %v1975 = vsub.f32 %v134, %v1974
  %v1976 = vand.u32 %v1975, 4294901760
  %1977 = vmatmul.mubr.f32.gmra.mrb[0].mxu0 %v1976
  %v1978 = vpop.f32.mrb[0].mxu0
  %v1979 = vadd.f32 %v1500, %v1978
  %v1980 = vpop.f32.mrb[0].mxu0
  %1981 = vmatprep.mubr.f32.mxu0 0.0
  %v1982 = vand.u32 %v137, 4294901760
  %v1983 = vsub.f32 %v137, %v1982
  %v1984 = vand.u32 %v1983, 4294901760
  %1985 = vmatmul.mubr.f32.gmra.mrb[0].mxu0 %v1984
  %v1986 = vpop.f32.mrb[0].mxu0
  %v1987 = vadd.f32 %v1507, %v1986
  %v1988 = vpop.f32.mrb[0].mxu0
  %1989 = vmatprep.mubr.f32.mxu0 0.0
  %v1990 = vand.u32 %v140, 4294901760
  %v1991 = vsub.f32 %v140, %v1990
  %v1992 = vand.u32 %v1991, 4294901760
  %1993 = vmatmul.mubr.f32.gmra.mrb[0].mxu0 %v1992
  %v1994 = vpop.f32.mrb[0].mxu0
  %v1995 = vadd.f32 %v1514, %v1994
  %v1996 = vpop.f32.mrb[0].mxu0
  %1997 = vmatprep.mubr.f32.mxu0 0.0
  %v1998 = vand.u32 %v143, 4294901760
  %v1999 = vsub.f32 %v143, %v1998
  %v2000 = vand.u32 %v1999, 4294901760
  %2001 = vmatmul.mubr.f32.gmra.mrb[0].mxu0 %v2000
  %v2002 = vpop.f32.mrb[0].mxu0
  %v2003 = vadd.f32 %v1521, %v2002
  %v2004 = vpop.f32.mrb[0].mxu0
  %2005 = vmatprep.mubr.f32.mxu0 0.0
  %v2006 = vand.u32 %v146, 4294901760
  %v2007 = vsub.f32 %v146, %v2006
  %v2008 = vand.u32 %v2007, 4294901760
  %2009 = vmatmul.mubr.f32.gmra.mrb[0].mxu0 %v2008
  %v2010 = vpop.f32.mrb[0].mxu0
  %v2011 = vadd.f32 %v1528, %v2010
  %v2012 = vpop.f32.mrb[0].mxu0
  %2013 = vmatprep.mubr.f32.mxu0 0.0
  %v2014 = vand.u32 %v149, 4294901760
  %v2015 = vsub.f32 %v149, %v2014
  %v2016 = vand.u32 %v2015, 4294901760
  %2017 = vmatmul.mubr.f32.gmra.mrb[0].mxu0 %v2016
  %v2018 = vpop.f32.mrb[0].mxu0
  %v2019 = vadd.f32 %v1535, %v2018
  %v2020 = vpop.f32.mrb[0].mxu0
  %2021 = vmatprep.mubr.f32.mxu0 0.0
  %v2022 = vand.u32 %v152, 4294901760
  %v2023 = vsub.f32 %v152, %v2022
  %v2024 = vand.u32 %v2023, 4294901760
  %2025 = vmatmul.mubr.f32.gmra.mrb[0].mxu0 %v2024
  %v2026 = vpop.f32.mrb[0].mxu0
  %v2027 = vadd.f32 %v1542, %v2026
  %v2028 = vpop.f32.mrb[0].mxu0
  %2029 = vmatprep.mubr.f32.mxu0 0.0
  %v2030 = vand.u32 %v155, 4294901760
  %v2031 = vsub.f32 %v155, %v2030
  %v2032 = vand.u32 %v2031, 4294901760
  %2033 = vmatmul.mubr.f32.gmra.mrb[0].mxu0 %v2032
  %v2034 = vpop.f32.mrb[0].mxu0
  %v2035 = vadd.f32 %v1549, %v2034
  %v2036 = vpop.f32.mrb[0].mxu0
  %2037 = vmatprep.mubr.f32.mxu0 0.0
  %v2038 = vand.u32 %v158, 4294901760
  %v2039 = vsub.f32 %v158, %v2038
  %v2040 = vand.u32 %v2039, 4294901760
  %2041 = vmatmul.mubr.f32.gmra.mrb[0].mxu0 %v2040
  %v2042 = vpop.f32.mrb[0].mxu0
  %v2043 = vadd.f32 %v1556, %v2042
  %v2044 = vpop.f32.mrb[0].mxu0
  %2045 = vmatprep.mubr.f32.mxu0 0.0
  %v2046 = vand.u32 %v161, 4294901760
  %v2047 = vsub.f32 %v161, %v2046
  %v2048 = vand.u32 %v2047, 4294901760
  %2049 = vmatmul.mubr.f32.gmra.mrb[0].mxu0 %v2048
  %v2050 = vpop.f32.mrb[0].mxu0
  %v2051 = vadd.f32 %v1563, %v2050
  %v2052 = vpop.f32.mrb[0].mxu0
  %2053 = vmatprep.mubr.f32.mxu0 0.0
  %v2054 = vand.u32 %v164, 4294901760
  %v2055 = vsub.f32 %v164, %v2054
  %v2056 = vand.u32 %v2055, 4294901760
  %2057 = vmatmul.mubr.f32.gmra.mrb[0].mxu0 %v2056
  %v2058 = vpop.f32.mrb[0].mxu0
  %v2059 = vadd.f32 %v1570, %v2058
  %v2060 = vpop.f32.mrb[0].mxu0
  %2061 = vmatprep.mubr.f32.mxu0 0.0
  %v2062 = vand.u32 %v167, 4294901760
  %v2063 = vsub.f32 %v167, %v2062
  %v2064 = vand.u32 %v2063, 4294901760
  %2065 = vmatmul.mubr.f32.gmra.mrb[0].mxu0 %v2064
  %v2066 = vpop.f32.mrb[0].mxu0
  %v2067 = vadd.f32 %v1577, %v2066
  %v2068 = vpop.f32.mrb[0].mxu0
  %2069 = vmatprep.mubr.f32.mxu0 0.0
  %v2070 = vand.u32 %v170, 4294901760
  %v2071 = vsub.f32 %v170, %v2070
  %v2072 = vand.u32 %v2071, 4294901760
  %2073 = vmatmul.mubr.f32.gmra.mrb[0].mxu0 %v2072
  %v2074 = vpop.f32.mrb[0].mxu0
  %v2075 = vadd.f32 %v1584, %v2074
  %v2076 = vpop.f32.mrb[0].mxu0
  %2077 = vmatprep.mubr.f32.mxu0 0.0
  %v2078 = vand.u32 %v173, 4294901760
  %v2079 = vsub.f32 %v173, %v2078
  %v2080 = vand.u32 %v2079, 4294901760
  %2081 = vmatmul.mubr.f32.gmra.mrb[0].mxu0 %v2080
  %v2082 = vpop.f32.mrb[0].mxu0
  %v2083 = vadd.f32 %v1591, %v2082
  %v2084 = vpop.f32.mrb[0].mxu0
  %2085 = vmatprep.mubr.f32.mxu0 0.0
  %v2086 = vand.u32 %v176, 4294901760
  %v2087 = vsub.f32 %v176, %v2086
  %v2088 = vand.u32 %v2087, 4294901760
  %2089 = vmatmul.mubr.f32.gmra.mrb[0].mxu0 %v2088
  %v2090 = vpop.f32.mrb[0].mxu0
  %v2091 = vadd.f32 %v1598, %v2090
  %v2092 = vpop.f32.mrb[0].mxu0
  %2093 = vmatprep.mubr.f32.mxu0 0.0
  %v2094 = vand.u32 %v179, 4294901760
  %v2095 = vsub.f32 %v179, %v2094
  %v2096 = vand.u32 %v2095, 4294901760
  %2097 = vmatmul.mubr.f32.gmra.mrb[0].mxu0 %v2096
  %v2098 = vpop.f32.mrb[0].mxu0
  %v2099 = vadd.f32 %v1605, %v2098
  %v2100 = vpop.f32.mrb[0].mxu0
  %2101 = vmatprep.mubr.f32.mxu0 0.0
  %v2102 = vand.u32 %v182, 4294901760
  %v2103 = vsub.f32 %v182, %v2102
  %v2104 = vand.u32 %v2103, 4294901760
  %2105 = vmatmul.mubr.f32.gmra.mrb[0].mxu0 %v2104
  %v2106 = vpop.f32.mrb[0].mxu0
  %v2107 = vadd.f32 %v1612, %v2106
  %v2108 = vpop.f32.mrb[0].mxu0
  %2109 = vmatprep.mubr.f32.mxu0 0.0
  %v2110 = vand.u32 %v185, 4294901760
  %v2111 = vsub.f32 %v185, %v2110
  %v2112 = vand.u32 %v2111, 4294901760
  %2113 = vmatmul.mubr.f32.gmra.mrb[0].mxu0 %v2112
  %v2114 = vpop.f32.mrb[0].mxu0
  %v2115 = vadd.f32 %v1619, %v2114
  %v2116 = vpop.f32.mrb[0].mxu0
  %2117 = vmatprep.mubr.f32.mxu0 0.0
  %v2118 = vand.u32 %v188, 4294901760
  %v2119 = vsub.f32 %v188, %v2118
  %v2120 = vand.u32 %v2119, 4294901760
  %2121 = vmatmul.mubr.f32.gmra.mrb[0].mxu0 %v2120
  %v2122 = vpop.f32.mrb[0].mxu0
  %v2123 = vadd.f32 %v1626, %v2122
  %v2124 = vpop.f32.mrb[0].mxu0
  %2125 = vmatprep.mubr.f32.mxu0 0.0
  %v2126 = vand.u32 %v191, 4294901760
  %v2127 = vsub.f32 %v191, %v2126
  %v2128 = vand.u32 %v2127, 4294901760
  %2129 = vmatmul.mubr.f32.gmra.mrb[0].mxu0 %v2128
  %v2130 = vpop.f32.mrb[0].mxu0
  %v2131 = vadd.f32 %v1633, %v2130
  %v2132 = vpop.f32.mrb[0].mxu0
  %2133 = vmatprep.mubr.f32.mxu0 0.0
  %v2134 = vand.u32 %v194, 4294901760
  %v2135 = vsub.f32 %v194, %v2134
  %v2136 = vand.u32 %v2135, 4294901760
  %2137 = vmatmul.mubr.f32.gmra.mrb[0].mxu0 %v2136
  %v2138 = vpop.f32.mrb[0].mxu0
  %v2139 = vadd.f32 %v1640, %v2138
  %v2140 = vpop.f32.mrb[0].mxu0
  %2141 = vmatprep.mubr.f32.mxu0 0.0
  %v2142 = vand.u32 %v197, 4294901760
  %v2143 = vsub.f32 %v197, %v2142
  %v2144 = vand.u32 %v2143, 4294901760
  %2145 = vmatmul.mubr.f32.gmra.mrb[0].mxu0 %v2144
  %v2146 = vpop.f32.mrb[0].mxu0
  %v2147 = vadd.f32 %v1647, %v2146
  %v2148 = vpop.f32.mrb[0].mxu0
  %2149 = vmatprep.mubr.f32.mxu0 0.0
  %v2150 = vand.u32 %v200, 4294901760
  %v2151 = vsub.f32 %v200, %v2150
  %v2152 = vand.u32 %v2151, 4294901760
  %2153 = vmatmul.mubr.f32.gmra.mrb[0].mxu0 %v2152
  %v2154 = vpop.f32.mrb[0].mxu0
  %v2155 = vadd.f32 %v1654, %v2154
  %v2156 = vpop.f32.mrb[0].mxu0
  %2157 = vmatprep.mubr.f32.mxu0 0.0
  %v2158 = vand.u32 %v203, 4294901760
  %v2159 = vsub.f32 %v203, %v2158
  %v2160 = vand.u32 %v2159, 4294901760
  %2161 = vmatmul.mubr.f32.gmra.mrb[0].mxu0 %v2160
  %v2162 = vpop.f32.mrb[0].mxu0
  %v2163 = vadd.f32 %v1661, %v2162
  %v2164 = vpop.f32.mrb[0].mxu0
  %2165 = vmatprep.mubr.f32.mxu0 0.0
  %v2166 = vand.u32 %v206, 4294901760
  %v2167 = vsub.f32 %v206, %v2166
  %v2168 = vand.u32 %v2167, 4294901760
  %2169 = vmatmul.mubr.f32.gmra.mrb[0].mxu0 %v2168
  %v2170 = vpop.f32.mrb[0].mxu0
  %v2171 = vadd.f32 %v1668, %v2170
  %v2172 = vpop.f32.mrb[0].mxu0
  %2173 = vmatprep.mubr.f32.mxu0 0.0
  %v2174 = vand.u32 %v209, 4294901760
  %v2175 = vsub.f32 %v209, %v2174
  %v2176 = vand.u32 %v2175, 4294901760
  %2177 = vmatmul.mubr.f32.gmra.mrb[0].mxu0 %v2176
  %v2178 = vpop.f32.mrb[0].mxu0
  %v2179 = vadd.f32 %v1675, %v2178
  %v2180 = vpop.f32.mrb[0].mxu0
  %2181 = vmatprep.mubr.f32.mxu0 0.0
  %v2182 = vand.u32 %v212, 4294901760
  %v2183 = vsub.f32 %v212, %v2182
  %v2184 = vand.u32 %v2183, 4294901760
  %2185 = vmatmul.mubr.f32.gmra.mrb[0].mxu0 %v2184
  %v2186 = vpop.f32.mrb[0].mxu0
  %v2187 = vadd.f32 %v1682, %v2186
  %v2188 = vpop.f32.mrb[0].mxu0
  %2189 = vmatprep.mubr.f32.mxu0 0.0
  %v2190 = vand.u32 %v215, 4294901760
  %v2191 = vsub.f32 %v215, %v2190
  %v2192 = vand.u32 %v2191, 4294901760
  %2193 = vmatmul.mubr.f32.gmra.mrb[0].mxu0 %v2192
  %v2194 = vpop.f32.mrb[0].mxu0
  %v2195 = vadd.f32 %v1689, %v2194
  %v2196 = vpop.f32.mrb[0].mxu0
  %2197 = vmatprep.mubr.f32.mxu0 0.0
  %v2198 = vand.u32 %v218, 4294901760
  %v2199 = vsub.f32 %v218, %v2198
  %v2200 = vand.u32 %v2199, 4294901760
  %2201 = vmatmul.mubr.f32.gmra.mrb[0].mxu0 %v2200
  %v2202 = vpop.f32.mrb[0].mxu0
  %v2203 = vadd.f32 %v1696, %v2202
  %v2204 = vpop.f32.mrb[0].mxu0
  %2205 = vmatprep.mubr.f32.mxu0 0.0
  %v2206 = vand.u32 %v221, 4294901760
  %v2207 = vsub.f32 %v221, %v2206
  %v2208 = vand.u32 %v2207, 4294901760
  %2209 = vmatmul.mubr.f32.gmra.mrb[0].mxu0 %v2208
  %v2210 = vpop.f32.mrb[0].mxu0
  %v2211 = vadd.f32 %v1703, %v2210
  %v2212 = vpop.f32.mrb[0].mxu0
  %2213 = vmatprep.mubr.f32.mxu0 0.0
  %v2214 = vand.u32 %v224, 4294901760
  %v2215 = vsub.f32 %v224, %v2214
  %v2216 = vand.u32 %v2215, 4294901760
  %2217 = vmatmul.mubr.f32.gmra.mrb[0].mxu0 %v2216
  %v2218 = vpop.f32.mrb[0].mxu0
  %v2219 = vadd.f32 %v1710, %v2218
  %v2220 = vpop.f32.mrb[0].mxu0
  %2221 = vmatprep.mubr.f32.mxu0 0.0
  %v2222 = vand.u32 %v227, 4294901760
  %v2223 = vsub.f32 %v227, %v2222
  %v2224 = vand.u32 %v2223, 4294901760
  %2225 = vmatmul.mubr.f32.gmra.mrb[0].mxu0 %v2224
  %v2226 = vpop.f32.mrb[0].mxu0
  %v2227 = vadd.f32 %v1717, %v2226
  %v2228 = vpop.f32.mrb[0].mxu0
  %2229 = vmatprep.mubr.f32.mxu0 0.0
  %v2230 = vand.u32 %v230, 4294901760
  %v2231 = vsub.f32 %v230, %v2230
  %v2232 = vand.u32 %v2231, 4294901760
  %2233 = vmatmul.mubr.f32.gmra.mrb[0].mxu0 %v2232
  %v2234 = vpop.f32.mrb[0].mxu0
  %v2235 = vadd.f32 %v1724, %v2234
  %v2236 = vpop.f32.mrb[0].mxu0
  %2237 = vmatprep.mubr.f32.mxu0 0.0
  %v2238 = vand.u32 %v233, 4294901760
  %v2239 = vsub.f32 %v233, %v2238
  %v2240 = vand.u32 %v2239, 4294901760
  %2241 = vmatmul.mubr.f32.gmra.mrb[0].mxu0 %v2240
  %v2242 = vpop.f32.mrb[0].mxu0
  %v2243 = vadd.f32 %v1731, %v2242
  %v2244 = vpop.f32.mrb[0].mxu0
  %2245 = vmatprep.mubr.f32.mxu0 0.0
  %v2246 = vand.u32 %v236, 4294901760
  %v2247 = vsub.f32 %v236, %v2246
  %v2248 = vand.u32 %v2247, 4294901760
  %2249 = vmatmul.mubr.f32.gmra.mrb[0].mxu0 %v2248
  %v2250 = vpop.f32.mrb[0].mxu0
  %v2251 = vadd.f32 %v1738, %v2250
  %v2252 = vpop.f32.mrb[0].mxu0
  %2253 = vmatprep.mubr.f32.mxu0 0.0
  %v2254 = vand.u32 %v239, 4294901760
  %v2255 = vsub.f32 %v239, %v2254
  %v2256 = vand.u32 %v2255, 4294901760
  %2257 = vmatmul.mubr.f32.gmra.mrb[0].mxu0 %v2256
  %v2258 = vpop.f32.mrb[0].mxu0
  %v2259 = vadd.f32 %v1745, %v2258
  %v2260 = vpop.f32.mrb[0].mxu0
  %2261 = vmatprep.mubr.f32.mxu0 0.0
  %v2262 = vand.u32 %v242, 4294901760
  %v2263 = vsub.f32 %v242, %v2262
  %v2264 = vand.u32 %v2263, 4294901760
  %2265 = vmatmul.mubr.f32.gmra.mrb[0].mxu0 %v2264
  %v2266 = vpop.f32.mrb[0].mxu0
  %v2267 = vadd.f32 %v1752, %v2266
  %v2268 = vpop.f32.mrb[0].mxu0
  %2269 = vmatprep.mubr.f32.mxu0 0.0
  %v2270 = vand.u32 %v245, 4294901760
  %v2271 = vsub.f32 %v245, %v2270
  %v2272 = vand.u32 %v2271, 4294901760
  %2273 = vmatmul.mubr.f32.gmra.mrb[0].mxu0 %v2272
  %v2274 = vpop.f32.mrb[0].mxu0
  %v2275 = vadd.f32 %v1759, %v2274
  %v2276 = vpop.f32.mrb[0].mxu0
  %2277 = vmatprep.mubr.f32.mxu0 0.0
  %v2278 = vand.u32 %v248, 4294901760
  %v2279 = vsub.f32 %v248, %v2278
  %v2280 = vand.u32 %v2279, 4294901760
  %2281 = vmatmul.mubr.f32.gmra.mrb[0].mxu0 %v2280
  %v2282 = vpop.f32.mrb[0].mxu0
  %v2283 = vadd.f32 %v1766, %v2282
  %v2284 = vpop.f32.mrb[0].mxu0
  %2285 = vdwg.mxu0
  %2286 = vmatprep.subr.mxu0 0.0
  %v2287 = vand.u32 %v70, 4294901760
  %v2288 = vsub.f32 %v70, %v2287
  %v2289 = vand.u32 %v2288, 4294901760
  %2290 = vmatpush1.msra.mxu0 %v2289
  %2291 = vmatprep.subr.mxu0 0.0
  %v2292 = vand.u32 %v71, 4294901760
  %v2293 = vsub.f32 %v71, %v2292
  %v2294 = vand.u32 %v2293, 4294901760
  %2295 = vmatpush1.msra.mxu0 %v2294
  %2296 = vmatprep.subr.mxu0 0.0
  %v2297 = vand.u32 %v72, 4294901760
  %v2298 = vsub.f32 %v72, %v2297
  %v2299 = vand.u32 %v2298, 4294901760
  %2300 = vmatpush1.msra.mxu0 %v2299
  %2301 = vmatprep.subr.mxu0 0.0
  %v2302 = vand.u32 %v252, 4294901760
  %v2303 = vsub.f32 %v252, %v2302
  %v2304 = vand.u32 %v2303, 4294901760
  %2305 = vmatpush1.msra.mxu0 %v2304
  %2306 = vmatprep.subr.mxu0 0.0
  %2307 = vmatpush1.msra.mxu0 0.0
  %2308 = vmatprep.subr.mxu0 0.0
  %2309 = vmatpush1.msra.mxu0 0.0
  %2310 = vmatprep.subr.mxu0 0.0
  %2311 = vmatpush1.msra.mxu0 0.0
  %2312 = vmatprep.subr.mxu0 0.0
  %2313 = vmatpush1.msra.mxu0 0.0
  %2314 = vmatprep.subr.mxu0 0.0
  %2315 = vmatpush1.msra.mxu0 0.0
  %2316 = vmatprep.subr.mxu0 0.0
  %2317 = vmatpush1.msra.mxu0 0.0
  %2318 = vmatprep.subr.mxu0 0.0
  %2319 = vmatpush1.msra.mxu0 0.0
  %2320 = vmatprep.subr.mxu0 0.0
  %2321 = vmatpush1.msra.mxu0 0.0
  %2322 = vmatprep.subr.mxu0 0.0
  %2323 = vmatpush1.msra.mxu0 0.0
  %2324 = vmatprep.subr.mxu0 0.0
  %2325 = vmatpush1.msra.mxu0 0.0
  %2326 = vmatprep.subr.mxu0 0.0
  %2327 = vmatpush1.msra.mxu0 0.0
  %2328 = vmatprep.subr.mxu0 0.0
  %2329 = vmatpush1.msra.mxu0 0.0
  %2330 = vmatprep.subr.mxu0 0.0
  %2331 = vmatpush1.msra.mxu0 0.0
  %2332 = vmatprep.subr.mxu0 0.0
  %2333 = vmatpush1.msra.mxu0 0.0
  %2334 = vmatprep.subr.mxu0 0.0
  %2335 = vmatpush1.msra.mxu0 0.0
  %2336 = vmatprep.subr.mxu0 0.0
  %2337 = vmatpush1.msra.mxu0 0.0
  %2338 = vmatprep.subr.mxu0 0.0
  %2339 = vmatpush1.msra.mxu0 0.0
  %2340 = vmatprep.subr.mxu0 0.0
  %2341 = vmatpush1.msra.mxu0 0.0
  %2342 = vmatprep.subr.mxu0 0.0
  %2343 = vmatpush1.msra.mxu0 0.0
  %2344 = vmatprep.subr.mxu0 0.0
  %2345 = vmatpush1.msra.mxu0 0.0
  %2346 = vmatprep.subr.mxu0 0.0
  %2347 = vmatpush1.msra.mxu0 0.0
  %2348 = vmatprep.subr.mxu0 0.0
  %2349 = vmatpush1.msra.mxu0 0.0
  %2350 = vmatprep.subr.mxu0 0.0
  %2351 = vmatpush1.msra.mxu0 0.0
  %2352 = vmatprep.subr.mxu0 0.0
  %2353 = vmatpush1.msra.mxu0 0.0
  %2354 = vmatprep.subr.mxu0 0.0
  %2355 = vmatpush1.msra.mxu0 0.0
  %2356 = vmatprep.subr.mxu0 0.0
  %2357 = vmatpush1.msra.mxu0 0.0
  %2358 = vmatprep.subr.mxu0 0.0
  %2359 = vmatpush1.msra.mxu0 0.0
  %2360 = vmatprep.subr.mxu0 0.0
  %2361 = vmatpush1.msra.mxu0 0.0
  %2362 = vmatprep.mubr.f32.mxu0 0.0
  %v2363 = vand.u32 %v83, 4294901760
  %2364 = vmatmul.mubr.f32.gmra.mrb[0].mxu0 %v2363
  %v2365 = vpop.f32.mrb[0].mxu0
  %v2366 = vadd.f32 %v1843, %v2365
  %v2367 = vpop.f32.mrb[0].mxu0
  %2368 = vmatprep.mubr.f32.mxu0 0.0
  %v2369 = vand.u32 %v86, 4294901760
  %2370 = vmatmul.mubr.f32.gmra.mrb[0].mxu0 %v2369
  %v2371 = vpop.f32.mrb[0].mxu0
  %v2372 = vadd.f32 %v1851, %v2371
  %v2373 = vpop.f32.mrb[0].mxu0
  %2374 = vmatprep.mubr.f32.mxu0 0.0
  %v2375 = vand.u32 %v89, 4294901760
  %2376 = vmatmul.mubr.f32.gmra.mrb[0].mxu0 %v2375
  %v2377 = vpop.f32.mrb[0].mxu0
  %v2378 = vadd.f32 %v1859, %v2377
  %v2379 = vpop.f32.mrb[0].mxu0
  %2380 = vmatprep.mubr.f32.mxu0 0.0
  %v2381 = vand.u32 %v92, 4294901760
  %2382 = vmatmul.mubr.f32.gmra.mrb[0].mxu0 %v2381
  %v2383 = vpop.f32.mrb[0].mxu0
  %v2384 = vadd.f32 %v1867, %v2383
  %v2385 = vpop.f32.mrb[0].mxu0
  %2386 = vmatprep.mubr.f32.mxu0 0.0
  %v2387 = vand.u32 %v95, 4294901760
  %2388 = vmatmul.mubr.f32.gmra.mrb[0].mxu0 %v2387
  %v2389 = vpop.f32.mrb[0].mxu0
  %v2390 = vadd.f32 %v1875, %v2389
  %v2391 = vpop.f32.mrb[0].mxu0
  %2392 = vmatprep.mubr.f32.mxu0 0.0
  %v2393 = vand.u32 %v98, 4294901760
  %2394 = vmatmul.mubr.f32.gmra.mrb[0].mxu0 %v2393
  %v2395 = vpop.f32.mrb[0].mxu0
  %v2396 = vadd.f32 %v1883, %v2395
  %v2397 = vpop.f32.mrb[0].mxu0
  %2398 = vmatprep.mubr.f32.mxu0 0.0
  %v2399 = vand.u32 %v101, 4294901760
  %2400 = vmatmul.mubr.f32.gmra.mrb[0].mxu0 %v2399
  %v2401 = vpop.f32.mrb[0].mxu0
  %v2402 = vadd.f32 %v1891, %v2401
  %v2403 = vpop.f32.mrb[0].mxu0
  %2404 = vmatprep.mubr.f32.mxu0 0.0
  %v2405 = vand.u32 %v104, 4294901760
  %2406 = vmatmul.mubr.f32.gmra.mrb[0].mxu0 %v2405
  %v2407 = vpop.f32.mrb[0].mxu0
  %v2408 = vadd.f32 %v1899, %v2407
  %v2409 = vpop.f32.mrb[0].mxu0
  %2410 = vmatprep.mubr.f32.mxu0 0.0
  %v2411 = vand.u32 %v107, 4294901760
  %2412 = vmatmul.mubr.f32.gmra.mrb[0].mxu0 %v2411
  %v2413 = vpop.f32.mrb[0].mxu0
  %v2414 = vadd.f32 %v1907, %v2413
  %v2415 = vpop.f32.mrb[0].mxu0
  %2416 = vmatprep.mubr.f32.mxu0 0.0
  %v2417 = vand.u32 %v110, 4294901760
  %2418 = vmatmul.mubr.f32.gmra.mrb[0].mxu0 %v2417
  %v2419 = vpop.f32.mrb[0].mxu0
  %v2420 = vadd.f32 %v1915, %v2419
  %v2421 = vpop.f32.mrb[0].mxu0
  %2422 = vmatprep.mubr.f32.mxu0 0.0
  %v2423 = vand.u32 %v113, 4294901760
  %2424 = vmatmul.mubr.f32.gmra.mrb[0].mxu0 %v2423
  %v2425 = vpop.f32.mrb[0].mxu0
  %v2426 = vadd.f32 %v1923, %v2425
  %v2427 = vpop.f32.mrb[0].mxu0
  %2428 = vmatprep.mubr.f32.mxu0 0.0
  %v2429 = vand.u32 %v116, 4294901760
  %2430 = vmatmul.mubr.f32.gmra.mrb[0].mxu0 %v2429
  %v2431 = vpop.f32.mrb[0].mxu0
  %v2432 = vadd.f32 %v1931, %v2431
  %v2433 = vpop.f32.mrb[0].mxu0
  %2434 = vmatprep.mubr.f32.mxu0 0.0
  %v2435 = vand.u32 %v119, 4294901760
  %2436 = vmatmul.mubr.f32.gmra.mrb[0].mxu0 %v2435
  %v2437 = vpop.f32.mrb[0].mxu0
  %v2438 = vadd.f32 %v1939, %v2437
  %v2439 = vpop.f32.mrb[0].mxu0
  %2440 = vmatprep.mubr.f32.mxu0 0.0
  %v2441 = vand.u32 %v122, 4294901760
  %2442 = vmatmul.mubr.f32.gmra.mrb[0].mxu0 %v2441
  %v2443 = vpop.f32.mrb[0].mxu0
  %v2444 = vadd.f32 %v1947, %v2443
  %v2445 = vpop.f32.mrb[0].mxu0
  %2446 = vmatprep.mubr.f32.mxu0 0.0
  %v2447 = vand.u32 %v125, 4294901760
  %2448 = vmatmul.mubr.f32.gmra.mrb[0].mxu0 %v2447
  %v2449 = vpop.f32.mrb[0].mxu0
  %v2450 = vadd.f32 %v1955, %v2449
  %v2451 = vpop.f32.mrb[0].mxu0
  %2452 = vmatprep.mubr.f32.mxu0 0.0
  %v2453 = vand.u32 %v128, 4294901760
  %2454 = vmatmul.mubr.f32.gmra.mrb[0].mxu0 %v2453
  %v2455 = vpop.f32.mrb[0].mxu0
  %v2456 = vadd.f32 %v1963, %v2455
  %v2457 = vpop.f32.mrb[0].mxu0
  %2458 = vmatprep.mubr.f32.mxu0 0.0
  %v2459 = vand.u32 %v131, 4294901760
  %2460 = vmatmul.mubr.f32.gmra.mrb[0].mxu0 %v2459
  %v2461 = vpop.f32.mrb[0].mxu0
  %v2462 = vadd.f32 %v1971, %v2461
  %v2463 = vpop.f32.mrb[0].mxu0
  %2464 = vmatprep.mubr.f32.mxu0 0.0
  %v2465 = vand.u32 %v134, 4294901760
  %2466 = vmatmul.mubr.f32.gmra.mrb[0].mxu0 %v2465
  %v2467 = vpop.f32.mrb[0].mxu0
  %v2468 = vadd.f32 %v1979, %v2467
  %v2469 = vpop.f32.mrb[0].mxu0
  %2470 = vmatprep.mubr.f32.mxu0 0.0
  %v2471 = vand.u32 %v137, 4294901760
  %2472 = vmatmul.mubr.f32.gmra.mrb[0].mxu0 %v2471
  %v2473 = vpop.f32.mrb[0].mxu0
  %v2474 = vadd.f32 %v1987, %v2473
  %v2475 = vpop.f32.mrb[0].mxu0
  %2476 = vmatprep.mubr.f32.mxu0 0.0
  %v2477 = vand.u32 %v140, 4294901760
  %2478 = vmatmul.mubr.f32.gmra.mrb[0].mxu0 %v2477
  %v2479 = vpop.f32.mrb[0].mxu0
  %v2480 = vadd.f32 %v1995, %v2479
  %v2481 = vpop.f32.mrb[0].mxu0
  %2482 = vmatprep.mubr.f32.mxu0 0.0
  %v2483 = vand.u32 %v143, 4294901760
  %2484 = vmatmul.mubr.f32.gmra.mrb[0].mxu0 %v2483
  %v2485 = vpop.f32.mrb[0].mxu0
  %v2486 = vadd.f32 %v2003, %v2485
  %v2487 = vpop.f32.mrb[0].mxu0
  %2488 = vmatprep.mubr.f32.mxu0 0.0
  %v2489 = vand.u32 %v146, 4294901760
  %2490 = vmatmul.mubr.f32.gmra.mrb[0].mxu0 %v2489
  %v2491 = vpop.f32.mrb[0].mxu0
  %v2492 = vadd.f32 %v2011, %v2491
  %v2493 = vpop.f32.mrb[0].mxu0
  %2494 = vmatprep.mubr.f32.mxu0 0.0
  %v2495 = vand.u32 %v149, 4294901760
  %2496 = vmatmul.mubr.f32.gmra.mrb[0].mxu0 %v2495
  %v2497 = vpop.f32.mrb[0].mxu0
  %v2498 = vadd.f32 %v2019, %v2497
  %v2499 = vpop.f32.mrb[0].mxu0
  %2500 = vmatprep.mubr.f32.mxu0 0.0
  %v2501 = vand.u32 %v152, 4294901760
  %2502 = vmatmul.mubr.f32.gmra.mrb[0].mxu0 %v2501
  %v2503 = vpop.f32.mrb[0].mxu0
  %v2504 = vadd.f32 %v2027, %v2503
  %v2505 = vpop.f32.mrb[0].mxu0
  %2506 = vmatprep.mubr.f32.mxu0 0.0
  %v2507 = vand.u32 %v155, 4294901760
  %2508 = vmatmul.mubr.f32.gmra.mrb[0].mxu0 %v2507
  %v2509 = vpop.f32.mrb[0].mxu0
  %v2510 = vadd.f32 %v2035, %v2509
  %v2511 = vpop.f32.mrb[0].mxu0
  %2512 = vmatprep.mubr.f32.mxu0 0.0
  %v2513 = vand.u32 %v158, 4294901760
  %2514 = vmatmul.mubr.f32.gmra.mrb[0].mxu0 %v2513
  %v2515 = vpop.f32.mrb[0].mxu0
  %v2516 = vadd.f32 %v2043, %v2515
  %v2517 = vpop.f32.mrb[0].mxu0
  %2518 = vmatprep.mubr.f32.mxu0 0.0
  %v2519 = vand.u32 %v161, 4294901760
  %2520 = vmatmul.mubr.f32.gmra.mrb[0].mxu0 %v2519
  %v2521 = vpop.f32.mrb[0].mxu0
  %v2522 = vadd.f32 %v2051, %v2521
  %v2523 = vpop.f32.mrb[0].mxu0
  %2524 = vmatprep.mubr.f32.mxu0 0.0
  %v2525 = vand.u32 %v164, 4294901760
  %2526 = vmatmul.mubr.f32.gmra.mrb[0].mxu0 %v2525
  %v2527 = vpop.f32.mrb[0].mxu0
  %v2528 = vadd.f32 %v2059, %v2527
  %v2529 = vpop.f32.mrb[0].mxu0
  %2530 = vmatprep.mubr.f32.mxu0 0.0
  %v2531 = vand.u32 %v167, 4294901760
  %2532 = vmatmul.mubr.f32.gmra.mrb[0].mxu0 %v2531
  %v2533 = vpop.f32.mrb[0].mxu0
  %v2534 = vadd.f32 %v2067, %v2533
  %v2535 = vpop.f32.mrb[0].mxu0
  %2536 = vmatprep.mubr.f32.mxu0 0.0
  %v2537 = vand.u32 %v170, 4294901760
  %2538 = vmatmul.mubr.f32.gmra.mrb[0].mxu0 %v2537
  %v2539 = vpop.f32.mrb[0].mxu0
  %v2540 = vadd.f32 %v2075, %v2539
  %v2541 = vpop.f32.mrb[0].mxu0
  %2542 = vmatprep.mubr.f32.mxu0 0.0
  %v2543 = vand.u32 %v173, 4294901760
  %2544 = vmatmul.mubr.f32.gmra.mrb[0].mxu0 %v2543
  %v2545 = vpop.f32.mrb[0].mxu0
  %v2546 = vadd.f32 %v2083, %v2545
  %v2547 = vpop.f32.mrb[0].mxu0
  %2548 = vmatprep.mubr.f32.mxu0 0.0
  %v2549 = vand.u32 %v176, 4294901760
  %2550 = vmatmul.mubr.f32.gmra.mrb[0].mxu0 %v2549
  %v2551 = vpop.f32.mrb[0].mxu0
  %v2552 = vadd.f32 %v2091, %v2551
  %v2553 = vpop.f32.mrb[0].mxu0
  %2554 = vmatprep.mubr.f32.mxu0 0.0
  %v2555 = vand.u32 %v179, 4294901760
  %2556 = vmatmul.mubr.f32.gmra.mrb[0].mxu0 %v2555
  %v2557 = vpop.f32.mrb[0].mxu0
  %v2558 = vadd.f32 %v2099, %v2557
  %v2559 = vpop.f32.mrb[0].mxu0
  %2560 = vmatprep.mubr.f32.mxu0 0.0
  %v2561 = vand.u32 %v182, 4294901760
  %2562 = vmatmul.mubr.f32.gmra.mrb[0].mxu0 %v2561
  %v2563 = vpop.f32.mrb[0].mxu0
  %v2564 = vadd.f32 %v2107, %v2563
  %v2565 = vpop.f32.mrb[0].mxu0
  %2566 = vmatprep.mubr.f32.mxu0 0.0
  %v2567 = vand.u32 %v185, 4294901760
  %2568 = vmatmul.mubr.f32.gmra.mrb[0].mxu0 %v2567
  %v2569 = vpop.f32.mrb[0].mxu0
  %v2570 = vadd.f32 %v2115, %v2569
  %v2571 = vpop.f32.mrb[0].mxu0
  %2572 = vmatprep.mubr.f32.mxu0 0.0
  %v2573 = vand.u32 %v188, 4294901760
  %2574 = vmatmul.mubr.f32.gmra.mrb[0].mxu0 %v2573
  %v2575 = vpop.f32.mrb[0].mxu0
  %v2576 = vadd.f32 %v2123, %v2575
  %v2577 = vpop.f32.mrb[0].mxu0
  %2578 = vmatprep.mubr.f32.mxu0 0.0
  %v2579 = vand.u32 %v191, 4294901760
  %2580 = vmatmul.mubr.f32.gmra.mrb[0].mxu0 %v2579
  %v2581 = vpop.f32.mrb[0].mxu0
  %v2582 = vadd.f32 %v2131, %v2581
  %v2583 = vpop.f32.mrb[0].mxu0
  %2584 = vmatprep.mubr.f32.mxu0 0.0
  %v2585 = vand.u32 %v194, 4294901760
  %2586 = vmatmul.mubr.f32.gmra.mrb[0].mxu0 %v2585
  %v2587 = vpop.f32.mrb[0].mxu0
  %v2588 = vadd.f32 %v2139, %v2587
  %v2589 = vpop.f32.mrb[0].mxu0
  %2590 = vmatprep.mubr.f32.mxu0 0.0
  %v2591 = vand.u32 %v197, 4294901760
  %2592 = vmatmul.mubr.f32.gmra.mrb[0].mxu0 %v2591
  %v2593 = vpop.f32.mrb[0].mxu0
  %v2594 = vadd.f32 %v2147, %v2593
  %v2595 = vpop.f32.mrb[0].mxu0
  %2596 = vmatprep.mubr.f32.mxu0 0.0
  %v2597 = vand.u32 %v200, 4294901760
  %2598 = vmatmul.mubr.f32.gmra.mrb[0].mxu0 %v2597
  %v2599 = vpop.f32.mrb[0].mxu0
  %v2600 = vadd.f32 %v2155, %v2599
  %v2601 = vpop.f32.mrb[0].mxu0
  %2602 = vmatprep.mubr.f32.mxu0 0.0
  %v2603 = vand.u32 %v203, 4294901760
  %2604 = vmatmul.mubr.f32.gmra.mrb[0].mxu0 %v2603
  %v2605 = vpop.f32.mrb[0].mxu0
  %v2606 = vadd.f32 %v2163, %v2605
  %v2607 = vpop.f32.mrb[0].mxu0
  %2608 = vmatprep.mubr.f32.mxu0 0.0
  %v2609 = vand.u32 %v206, 4294901760
  %2610 = vmatmul.mubr.f32.gmra.mrb[0].mxu0 %v2609
  %v2611 = vpop.f32.mrb[0].mxu0
  %v2612 = vadd.f32 %v2171, %v2611
  %v2613 = vpop.f32.mrb[0].mxu0
  %2614 = vmatprep.mubr.f32.mxu0 0.0
  %v2615 = vand.u32 %v209, 4294901760
  %2616 = vmatmul.mubr.f32.gmra.mrb[0].mxu0 %v2615
  %v2617 = vpop.f32.mrb[0].mxu0
  %v2618 = vadd.f32 %v2179, %v2617
  %v2619 = vpop.f32.mrb[0].mxu0
  %2620 = vmatprep.mubr.f32.mxu0 0.0
  %v2621 = vand.u32 %v212, 4294901760
  %2622 = vmatmul.mubr.f32.gmra.mrb[0].mxu0 %v2621
  %v2623 = vpop.f32.mrb[0].mxu0
  %v2624 = vadd.f32 %v2187, %v2623
  %v2625 = vpop.f32.mrb[0].mxu0
  %2626 = vmatprep.mubr.f32.mxu0 0.0
  %v2627 = vand.u32 %v215, 4294901760
  %2628 = vmatmul.mubr.f32.gmra.mrb[0].mxu0 %v2627
  %v2629 = vpop.f32.mrb[0].mxu0
  %v2630 = vadd.f32 %v2195, %v2629
  %v2631 = vpop.f32.mrb[0].mxu0
  %2632 = vmatprep.mubr.f32.mxu0 0.0
  %v2633 = vand.u32 %v218, 4294901760
  %2634 = vmatmul.mubr.f32.gmra.mrb[0].mxu0 %v2633
  %v2635 = vpop.f32.mrb[0].mxu0
  %v2636 = vadd.f32 %v2203, %v2635
  %v2637 = vpop.f32.mrb[0].mxu0
  %2638 = vmatprep.mubr.f32.mxu0 0.0
  %v2639 = vand.u32 %v221, 4294901760
  %2640 = vmatmul.mubr.f32.gmra.mrb[0].mxu0 %v2639
  %v2641 = vpop.f32.mrb[0].mxu0
  %v2642 = vadd.f32 %v2211, %v2641
  %v2643 = vpop.f32.mrb[0].mxu0
  %2644 = vmatprep.mubr.f32.mxu0 0.0
  %v2645 = vand.u32 %v224, 4294901760
  %2646 = vmatmul.mubr.f32.gmra.mrb[0].mxu0 %v2645
  %v2647 = vpop.f32.mrb[0].mxu0
  %v2648 = vadd.f32 %v2219, %v2647
  %v2649 = vpop.f32.mrb[0].mxu0
  %2650 = vmatprep.mubr.f32.mxu0 0.0
  %v2651 = vand.u32 %v227, 4294901760
  %2652 = vmatmul.mubr.f32.gmra.mrb[0].mxu0 %v2651
  %v2653 = vpop.f32.mrb[0].mxu0
  %v2654 = vadd.f32 %v2227, %v2653
  %v2655 = vpop.f32.mrb[0].mxu0
  %2656 = vmatprep.mubr.f32.mxu0 0.0
  %v2657 = vand.u32 %v230, 4294901760
  %2658 = vmatmul.mubr.f32.gmra.mrb[0].mxu0 %v2657
  %v2659 = vpop.f32.mrb[0].mxu0
  %v2660 = vadd.f32 %v2235, %v2659
  %v2661 = vpop.f32.mrb[0].mxu0
  %2662 = vmatprep.mubr.f32.mxu0 0.0
  %v2663 = vand.u32 %v233, 4294901760
  %2664 = vmatmul.mubr.f32.gmra.mrb[0].mxu0 %v2663
  %v2665 = vpop.f32.mrb[0].mxu0
  %v2666 = vadd.f32 %v2243, %v2665
  %v2667 = vpop.f32.mrb[0].mxu0
  %2668 = vmatprep.mubr.f32.mxu0 0.0
  %v2669 = vand.u32 %v236, 4294901760
  %2670 = vmatmul.mubr.f32.gmra.mrb[0].mxu0 %v2669
  %v2671 = vpop.f32.mrb[0].mxu0
  %v2672 = vadd.f32 %v2251, %v2671
  %v2673 = vpop.f32.mrb[0].mxu0
  %2674 = vmatprep.mubr.f32.mxu0 0.0
  %v2675 = vand.u32 %v239, 4294901760
  %2676 = vmatmul.mubr.f32.gmra.mrb[0].mxu0 %v2675
  %v2677 = vpop.f32.mrb[0].mxu0
  %v2678 = vadd.f32 %v2259, %v2677
  %v2679 = vpop.f32.mrb[0].mxu0
  %2680 = vmatprep.mubr.f32.mxu0 0.0
  %v2681 = vand.u32 %v242, 4294901760
  %2682 = vmatmul.mubr.f32.gmra.mrb[0].mxu0 %v2681
  %v2683 = vpop.f32.mrb[0].mxu0
  %v2684 = vadd.f32 %v2267, %v2683
  %v2685 = vpop.f32.mrb[0].mxu0
  %2686 = vmatprep.mubr.f32.mxu0 0.0
  %v2687 = vand.u32 %v245, 4294901760
  %2688 = vmatmul.mubr.f32.gmra.mrb[0].mxu0 %v2687
  %v2689 = vpop.f32.mrb[0].mxu0
  %v2690 = vadd.f32 %v2275, %v2689
  %v2691 = vpop.f32.mrb[0].mxu0
  %2692 = vmatprep.mubr.f32.mxu0 0.0
  %v2693 = vand.u32 %v248, 4294901760
  %2694 = vmatmul.mubr.f32.gmra.mrb[0].mxu0 %v2693
  %v2695 = vpop.f32.mrb[0].mxu0
  %v2696 = vadd.f32 %v2283, %v2695
  %v2697 = vpop.f32.mrb[0].mxu0
  %2698 = vdwg.mxu0
  %2699 = vmatprep.subr.mxu0 0.0
  %v2700 = vand.u32 %v70, 4294901760
  %2701 = vmatpush1.msra.mxu0 %v2700
  %2702 = vmatprep.subr.mxu0 0.0
  %v2703 = vand.u32 %v71, 4294901760
  %2704 = vmatpush1.msra.mxu0 %v2703
  %2705 = vmatprep.subr.mxu0 0.0
  %v2706 = vand.u32 %v72, 4294901760
  %2707 = vmatpush1.msra.mxu0 %v2706
  %2708 = vmatprep.subr.mxu0 0.0
  %v2709 = vand.u32 %v252, 4294901760
  %2710 = vmatpush1.msra.mxu0 %v2709
  %2711 = vmatprep.subr.mxu0 0.0
  %2712 = vmatpush1.msra.mxu0 0.0
  %2713 = vmatprep.subr.mxu0 0.0
  %2714 = vmatpush1.msra.mxu0 0.0
  %2715 = vmatprep.subr.mxu0 0.0
  %2716 = vmatpush1.msra.mxu0 0.0
  %2717 = vmatprep.subr.mxu0 0.0
  %2718 = vmatpush1.msra.mxu0 0.0
  %2719 = vmatprep.subr.mxu0 0.0
  %2720 = vmatpush1.msra.mxu0 0.0
  %2721 = vmatprep.subr.mxu0 0.0
  %2722 = vmatpush1.msra.mxu0 0.0
  %2723 = vmatprep.subr.mxu0 0.0
  %2724 = vmatpush1.msra.mxu0 0.0
  %2725 = vmatprep.subr.mxu0 0.0
  %2726 = vmatpush1.msra.mxu0 0.0
  %2727 = vmatprep.subr.mxu0 0.0
  %2728 = vmatpush1.msra.mxu0 0.0
  %2729 = vmatprep.subr.mxu0 0.0
  %2730 = vmatpush1.msra.mxu0 0.0
  %2731 = vmatprep.subr.mxu0 0.0
  %2732 = vmatpush1.msra.mxu0 0.0
  %2733 = vmatprep.subr.mxu0 0.0
  %2734 = vmatpush1.msra.mxu0 0.0
  %2735 = vmatprep.subr.mxu0 0.0
  %2736 = vmatpush1.msra.mxu0 0.0
  %2737 = vmatprep.subr.mxu0 0.0
  %2738 = vmatpush1.msra.mxu0 0.0
  %2739 = vmatprep.subr.mxu0 0.0
  %2740 = vmatpush1.msra.mxu0 0.0
  %2741 = vmatprep.subr.mxu0 0.0
  %2742 = vmatpush1.msra.mxu0 0.0
  %2743 = vmatprep.subr.mxu0 0.0
  %2744 = vmatpush1.msra.mxu0 0.0
  %2745 = vmatprep.subr.mxu0 0.0
  %2746 = vmatpush1.msra.mxu0 0.0
  %2747 = vmatprep.subr.mxu0 0.0
  %2748 = vmatpush1.msra.mxu0 0.0
  %2749 = vmatprep.subr.mxu0 0.0
  %2750 = vmatpush1.msra.mxu0 0.0
  %2751 = vmatprep.subr.mxu0 0.0
  %2752 = vmatpush1.msra.mxu0 0.0
  %2753 = vmatprep.subr.mxu0 0.0
  %2754 = vmatpush1.msra.mxu0 0.0
  %2755 = vmatprep.subr.mxu0 0.0
  %2756 = vmatpush1.msra.mxu0 0.0
  %2757 = vmatprep.subr.mxu0 0.0
  %2758 = vmatpush1.msra.mxu0 0.0
  %2759 = vmatprep.subr.mxu0 0.0
  %2760 = vmatpush1.msra.mxu0 0.0
  %2761 = vmatprep.subr.mxu0 0.0
  %2762 = vmatpush1.msra.mxu0 0.0
  %2763 = vmatprep.subr.mxu0 0.0
  %2764 = vmatpush1.msra.mxu0 0.0
  %2765 = vmatprep.subr.mxu0 0.0
  %2766 = vmatpush1.msra.mxu0 0.0
  %2767 = vmatprep.mubr.f32.mxu0 0.0
  %v2768 = vand.u32 %v83, 4294901760
  %2769 = vmatmul.mubr.f32.gmra.mrb[0].mxu0 %v2768
  %v2770 = vpop.f32.mrb[0].mxu0
  %v2771 = vadd.f32 %v2366, %v2770
  %v2772 = vpop.f32.mrb[0].mxu0
  %2773 = vmatprep.mubr.f32.mxu0 0.0
  %v2774 = vand.u32 %v86, 4294901760
  %2775 = vmatmul.mubr.f32.gmra.mrb[0].mxu0 %v2774
  %v2776 = vpop.f32.mrb[0].mxu0
  %v2777 = vadd.f32 %v2372, %v2776
  %v2778 = vpop.f32.mrb[0].mxu0
  %2779 = vmatprep.mubr.f32.mxu0 0.0
  %v2780 = vand.u32 %v89, 4294901760
  %2781 = vmatmul.mubr.f32.gmra.mrb[0].mxu0 %v2780
  %v2782 = vpop.f32.mrb[0].mxu0
  %v2783 = vadd.f32 %v2378, %v2782
  %v2784 = vpop.f32.mrb[0].mxu0
  %2785 = vmatprep.mubr.f32.mxu0 0.0
  %v2786 = vand.u32 %v92, 4294901760
  %2787 = vmatmul.mubr.f32.gmra.mrb[0].mxu0 %v2786
  %v2788 = vpop.f32.mrb[0].mxu0
  %v2789 = vadd.f32 %v2384, %v2788
  %v2790 = vpop.f32.mrb[0].mxu0
  %2791 = vmatprep.mubr.f32.mxu0 0.0
  %v2792 = vand.u32 %v95, 4294901760
  %2793 = vmatmul.mubr.f32.gmra.mrb[0].mxu0 %v2792
  %v2794 = vpop.f32.mrb[0].mxu0
  %v2795 = vadd.f32 %v2390, %v2794
  %v2796 = vpop.f32.mrb[0].mxu0
  %2797 = vmatprep.mubr.f32.mxu0 0.0
  %v2798 = vand.u32 %v98, 4294901760
  %2799 = vmatmul.mubr.f32.gmra.mrb[0].mxu0 %v2798
  %v2800 = vpop.f32.mrb[0].mxu0
  %v2801 = vadd.f32 %v2396, %v2800
  %v2802 = vpop.f32.mrb[0].mxu0
  %2803 = vmatprep.mubr.f32.mxu0 0.0
  %v2804 = vand.u32 %v101, 4294901760
  %2805 = vmatmul.mubr.f32.gmra.mrb[0].mxu0 %v2804
  %v2806 = vpop.f32.mrb[0].mxu0
  %v2807 = vadd.f32 %v2402, %v2806
  %v2808 = vpop.f32.mrb[0].mxu0
  %2809 = vmatprep.mubr.f32.mxu0 0.0
  %v2810 = vand.u32 %v104, 4294901760
  %2811 = vmatmul.mubr.f32.gmra.mrb[0].mxu0 %v2810
  %v2812 = vpop.f32.mrb[0].mxu0
  %v2813 = vadd.f32 %v2408, %v2812
  %v2814 = vpop.f32.mrb[0].mxu0
  %2815 = vmatprep.mubr.f32.mxu0 0.0
  %v2816 = vand.u32 %v107, 4294901760
  %2817 = vmatmul.mubr.f32.gmra.mrb[0].mxu0 %v2816
  %v2818 = vpop.f32.mrb[0].mxu0
  %v2819 = vadd.f32 %v2414, %v2818
  %v2820 = vpop.f32.mrb[0].mxu0
  %2821 = vmatprep.mubr.f32.mxu0 0.0
  %v2822 = vand.u32 %v110, 4294901760
  %2823 = vmatmul.mubr.f32.gmra.mrb[0].mxu0 %v2822
  %v2824 = vpop.f32.mrb[0].mxu0
  %v2825 = vadd.f32 %v2420, %v2824
  %v2826 = vpop.f32.mrb[0].mxu0
  %2827 = vmatprep.mubr.f32.mxu0 0.0
  %v2828 = vand.u32 %v113, 4294901760
  %2829 = vmatmul.mubr.f32.gmra.mrb[0].mxu0 %v2828
  %v2830 = vpop.f32.mrb[0].mxu0
  %v2831 = vadd.f32 %v2426, %v2830
  %v2832 = vpop.f32.mrb[0].mxu0
  %2833 = vmatprep.mubr.f32.mxu0 0.0
  %v2834 = vand.u32 %v116, 4294901760
  %2835 = vmatmul.mubr.f32.gmra.mrb[0].mxu0 %v2834
  %v2836 = vpop.f32.mrb[0].mxu0
  %v2837 = vadd.f32 %v2432, %v2836
  %v2838 = vpop.f32.mrb[0].mxu0
  %2839 = vmatprep.mubr.f32.mxu0 0.0
  %v2840 = vand.u32 %v119, 4294901760
  %2841 = vmatmul.mubr.f32.gmra.mrb[0].mxu0 %v2840
  %v2842 = vpop.f32.mrb[0].mxu0
  %v2843 = vadd.f32 %v2438, %v2842
  %v2844 = vpop.f32.mrb[0].mxu0
  %2845 = vmatprep.mubr.f32.mxu0 0.0
  %v2846 = vand.u32 %v122, 4294901760
  %2847 = vmatmul.mubr.f32.gmra.mrb[0].mxu0 %v2846
  %v2848 = vpop.f32.mrb[0].mxu0
  %v2849 = vadd.f32 %v2444, %v2848
  %v2850 = vpop.f32.mrb[0].mxu0
  %2851 = vmatprep.mubr.f32.mxu0 0.0
  %v2852 = vand.u32 %v125, 4294901760
  %2853 = vmatmul.mubr.f32.gmra.mrb[0].mxu0 %v2852
  %v2854 = vpop.f32.mrb[0].mxu0
  %v2855 = vadd.f32 %v2450, %v2854
  %v2856 = vpop.f32.mrb[0].mxu0
  %2857 = vmatprep.mubr.f32.mxu0 0.0
  %v2858 = vand.u32 %v128, 4294901760
  %2859 = vmatmul.mubr.f32.gmra.mrb[0].mxu0 %v2858
  %v2860 = vpop.f32.mrb[0].mxu0
  %v2861 = vadd.f32 %v2456, %v2860
  %v2862 = vpop.f32.mrb[0].mxu0
  %2863 = vmatprep.mubr.f32.mxu0 0.0
  %v2864 = vand.u32 %v131, 4294901760
  %2865 = vmatmul.mubr.f32.gmra.mrb[0].mxu0 %v2864
  %v2866 = vpop.f32.mrb[0].mxu0
  %v2867 = vadd.f32 %v2462, %v2866
  %v2868 = vpop.f32.mrb[0].mxu0
  %2869 = vmatprep.mubr.f32.mxu0 0.0
  %v2870 = vand.u32 %v134, 4294901760
  %2871 = vmatmul.mubr.f32.gmra.mrb[0].mxu0 %v2870
  %v2872 = vpop.f32.mrb[0].mxu0
  %v2873 = vadd.f32 %v2468, %v2872
  %v2874 = vpop.f32.mrb[0].mxu0
  %2875 = vmatprep.mubr.f32.mxu0 0.0
  %v2876 = vand.u32 %v137, 4294901760
  %2877 = vmatmul.mubr.f32.gmra.mrb[0].mxu0 %v2876
  %v2878 = vpop.f32.mrb[0].mxu0
  %v2879 = vadd.f32 %v2474, %v2878
  %v2880 = vpop.f32.mrb[0].mxu0
  %2881 = vmatprep.mubr.f32.mxu0 0.0
  %v2882 = vand.u32 %v140, 4294901760
  %2883 = vmatmul.mubr.f32.gmra.mrb[0].mxu0 %v2882
  %v2884 = vpop.f32.mrb[0].mxu0
  %v2885 = vadd.f32 %v2480, %v2884
  %v2886 = vpop.f32.mrb[0].mxu0
  %2887 = vmatprep.mubr.f32.mxu0 0.0
  %v2888 = vand.u32 %v143, 4294901760
  %2889 = vmatmul.mubr.f32.gmra.mrb[0].mxu0 %v2888
  %v2890 = vpop.f32.mrb[0].mxu0
  %v2891 = vadd.f32 %v2486, %v2890
  %v2892 = vpop.f32.mrb[0].mxu0
  %2893 = vmatprep.mubr.f32.mxu0 0.0
  %v2894 = vand.u32 %v146, 4294901760
  %2895 = vmatmul.mubr.f32.gmra.mrb[0].mxu0 %v2894
  %v2896 = vpop.f32.mrb[0].mxu0
  %v2897 = vadd.f32 %v2492, %v2896
  %v2898 = vpop.f32.mrb[0].mxu0
  %2899 = vmatprep.mubr.f32.mxu0 0.0
  %v2900 = vand.u32 %v149, 4294901760
  %2901 = vmatmul.mubr.f32.gmra.mrb[0].mxu0 %v2900
  %v2902 = vpop.f32.mrb[0].mxu0
  %v2903 = vadd.f32 %v2498, %v2902
  %v2904 = vpop.f32.mrb[0].mxu0
  %2905 = vmatprep.mubr.f32.mxu0 0.0
  %v2906 = vand.u32 %v152, 4294901760
  %2907 = vmatmul.mubr.f32.gmra.mrb[0].mxu0 %v2906
  %v2908 = vpop.f32.mrb[0].mxu0
  %v2909 = vadd.f32 %v2504, %v2908
  %v2910 = vpop.f32.mrb[0].mxu0
  %2911 = vmatprep.mubr.f32.mxu0 0.0
  %v2912 = vand.u32 %v155, 4294901760
  %2913 = vmatmul.mubr.f32.gmra.mrb[0].mxu0 %v2912
  %v2914 = vpop.f32.mrb[0].mxu0
  %v2915 = vadd.f32 %v2510, %v2914
  %v2916 = vpop.f32.mrb[0].mxu0
  %2917 = vmatprep.mubr.f32.mxu0 0.0
  %v2918 = vand.u32 %v158, 4294901760
  %2919 = vmatmul.mubr.f32.gmra.mrb[0].mxu0 %v2918
  %v2920 = vpop.f32.mrb[0].mxu0
  %v2921 = vadd.f32 %v2516, %v2920
  %v2922 = vpop.f32.mrb[0].mxu0
  %2923 = vmatprep.mubr.f32.mxu0 0.0
  %v2924 = vand.u32 %v161, 4294901760
  %2925 = vmatmul.mubr.f32.gmra.mrb[0].mxu0 %v2924
  %v2926 = vpop.f32.mrb[0].mxu0
  %v2927 = vadd.f32 %v2522, %v2926
  %v2928 = vpop.f32.mrb[0].mxu0
  %2929 = vmatprep.mubr.f32.mxu0 0.0
  %v2930 = vand.u32 %v164, 4294901760
  %2931 = vmatmul.mubr.f32.gmra.mrb[0].mxu0 %v2930
  %v2932 = vpop.f32.mrb[0].mxu0
  %v2933 = vadd.f32 %v2528, %v2932
  %v2934 = vpop.f32.mrb[0].mxu0
  %2935 = vmatprep.mubr.f32.mxu0 0.0
  %v2936 = vand.u32 %v167, 4294901760
  %2937 = vmatmul.mubr.f32.gmra.mrb[0].mxu0 %v2936
  %v2938 = vpop.f32.mrb[0].mxu0
  %v2939 = vadd.f32 %v2534, %v2938
  %v2940 = vpop.f32.mrb[0].mxu0
  %2941 = vmatprep.mubr.f32.mxu0 0.0
  %v2942 = vand.u32 %v170, 4294901760
  %2943 = vmatmul.mubr.f32.gmra.mrb[0].mxu0 %v2942
  %v2944 = vpop.f32.mrb[0].mxu0
  %v2945 = vadd.f32 %v2540, %v2944
  %v2946 = vpop.f32.mrb[0].mxu0
  %2947 = vmatprep.mubr.f32.mxu0 0.0
  %v2948 = vand.u32 %v173, 4294901760
  %2949 = vmatmul.mubr.f32.gmra.mrb[0].mxu0 %v2948
  %v2950 = vpop.f32.mrb[0].mxu0
  %v2951 = vadd.f32 %v2546, %v2950
  %v2952 = vpop.f32.mrb[0].mxu0
  %2953 = vmatprep.mubr.f32.mxu0 0.0
  %v2954 = vand.u32 %v176, 4294901760
  %2955 = vmatmul.mubr.f32.gmra.mrb[0].mxu0 %v2954
  %v2956 = vpop.f32.mrb[0].mxu0
  %v2957 = vadd.f32 %v2552, %v2956
  %v2958 = vpop.f32.mrb[0].mxu0
  %2959 = vmatprep.mubr.f32.mxu0 0.0
  %v2960 = vand.u32 %v179, 4294901760
  %2961 = vmatmul.mubr.f32.gmra.mrb[0].mxu0 %v2960
  %v2962 = vpop.f32.mrb[0].mxu0
  %v2963 = vadd.f32 %v2558, %v2962
  %v2964 = vpop.f32.mrb[0].mxu0
  %2965 = vmatprep.mubr.f32.mxu0 0.0
  %v2966 = vand.u32 %v182, 4294901760
  %2967 = vmatmul.mubr.f32.gmra.mrb[0].mxu0 %v2966
  %v2968 = vpop.f32.mrb[0].mxu0
  %v2969 = vadd.f32 %v2564, %v2968
  %v2970 = vpop.f32.mrb[0].mxu0
  %2971 = vmatprep.mubr.f32.mxu0 0.0
  %v2972 = vand.u32 %v185, 4294901760
  %2973 = vmatmul.mubr.f32.gmra.mrb[0].mxu0 %v2972
  %v2974 = vpop.f32.mrb[0].mxu0
  %v2975 = vadd.f32 %v2570, %v2974
  %v2976 = vpop.f32.mrb[0].mxu0
  %2977 = vmatprep.mubr.f32.mxu0 0.0
  %v2978 = vand.u32 %v188, 4294901760
  %2979 = vmatmul.mubr.f32.gmra.mrb[0].mxu0 %v2978
  %v2980 = vpop.f32.mrb[0].mxu0
  %v2981 = vadd.f32 %v2576, %v2980
  %v2982 = vpop.f32.mrb[0].mxu0
  %2983 = vmatprep.mubr.f32.mxu0 0.0
  %v2984 = vand.u32 %v191, 4294901760
  %2985 = vmatmul.mubr.f32.gmra.mrb[0].mxu0 %v2984
  %v2986 = vpop.f32.mrb[0].mxu0
  %v2987 = vadd.f32 %v2582, %v2986
  %v2988 = vpop.f32.mrb[0].mxu0
  %2989 = vmatprep.mubr.f32.mxu0 0.0
  %v2990 = vand.u32 %v194, 4294901760
  %2991 = vmatmul.mubr.f32.gmra.mrb[0].mxu0 %v2990
  %v2992 = vpop.f32.mrb[0].mxu0
  %v2993 = vadd.f32 %v2588, %v2992
  %v2994 = vpop.f32.mrb[0].mxu0
  %2995 = vmatprep.mubr.f32.mxu0 0.0
  %v2996 = vand.u32 %v197, 4294901760
  %2997 = vmatmul.mubr.f32.gmra.mrb[0].mxu0 %v2996
  %v2998 = vpop.f32.mrb[0].mxu0
  %v2999 = vadd.f32 %v2594, %v2998
  %v3000 = vpop.f32.mrb[0].mxu0
  %3001 = vmatprep.mubr.f32.mxu0 0.0
  %v3002 = vand.u32 %v200, 4294901760
  %3003 = vmatmul.mubr.f32.gmra.mrb[0].mxu0 %v3002
  %v3004 = vpop.f32.mrb[0].mxu0
  %v3005 = vadd.f32 %v2600, %v3004
  %v3006 = vpop.f32.mrb[0].mxu0
  %3007 = vmatprep.mubr.f32.mxu0 0.0
  %v3008 = vand.u32 %v203, 4294901760
  %3009 = vmatmul.mubr.f32.gmra.mrb[0].mxu0 %v3008
  %v3010 = vpop.f32.mrb[0].mxu0
  %v3011 = vadd.f32 %v2606, %v3010
  %v3012 = vpop.f32.mrb[0].mxu0
  %3013 = vmatprep.mubr.f32.mxu0 0.0
  %v3014 = vand.u32 %v206, 4294901760
  %3015 = vmatmul.mubr.f32.gmra.mrb[0].mxu0 %v3014
  %v3016 = vpop.f32.mrb[0].mxu0
  %v3017 = vadd.f32 %v2612, %v3016
  %v3018 = vpop.f32.mrb[0].mxu0
  %3019 = vmatprep.mubr.f32.mxu0 0.0
  %v3020 = vand.u32 %v209, 4294901760
  %3021 = vmatmul.mubr.f32.gmra.mrb[0].mxu0 %v3020
  %v3022 = vpop.f32.mrb[0].mxu0
  %v3023 = vadd.f32 %v2618, %v3022
  %v3024 = vpop.f32.mrb[0].mxu0
  %3025 = vmatprep.mubr.f32.mxu0 0.0
  %v3026 = vand.u32 %v212, 4294901760
  %3027 = vmatmul.mubr.f32.gmra.mrb[0].mxu0 %v3026
  %v3028 = vpop.f32.mrb[0].mxu0
  %v3029 = vadd.f32 %v2624, %v3028
  %v3030 = vpop.f32.mrb[0].mxu0
  %3031 = vmatprep.mubr.f32.mxu0 0.0
  %v3032 = vand.u32 %v215, 4294901760
  %3033 = vmatmul.mubr.f32.gmra.mrb[0].mxu0 %v3032
  %v3034 = vpop.f32.mrb[0].mxu0
  %v3035 = vadd.f32 %v2630, %v3034
  %v3036 = vpop.f32.mrb[0].mxu0
  %3037 = vmatprep.mubr.f32.mxu0 0.0
  %v3038 = vand.u32 %v218, 4294901760
  %3039 = vmatmul.mubr.f32.gmra.mrb[0].mxu0 %v3038
  %v3040 = vpop.f32.mrb[0].mxu0
  %v3041 = vadd.f32 %v2636, %v3040
  %v3042 = vpop.f32.mrb[0].mxu0
  %3043 = vmatprep.mubr.f32.mxu0 0.0
  %v3044 = vand.u32 %v221, 4294901760
  %3045 = vmatmul.mubr.f32.gmra.mrb[0].mxu0 %v3044
  %v3046 = vpop.f32.mrb[0].mxu0
  %v3047 = vadd.f32 %v2642, %v3046
  %v3048 = vpop.f32.mrb[0].mxu0
  %3049 = vmatprep.mubr.f32.mxu0 0.0
  %v3050 = vand.u32 %v224, 4294901760
  %3051 = vmatmul.mubr.f32.gmra.mrb[0].mxu0 %v3050
  %v3052 = vpop.f32.mrb[0].mxu0
  %v3053 = vadd.f32 %v2648, %v3052
  %v3054 = vpop.f32.mrb[0].mxu0
  %3055 = vmatprep.mubr.f32.mxu0 0.0
  %v3056 = vand.u32 %v227, 4294901760
  %3057 = vmatmul.mubr.f32.gmra.mrb[0].mxu0 %v3056
  %v3058 = vpop.f32.mrb[0].mxu0
  %v3059 = vadd.f32 %v2654, %v3058
  %v3060 = vpop.f32.mrb[0].mxu0
  %3061 = vmatprep.mubr.f32.mxu0 0.0
  %v3062 = vand.u32 %v230, 4294901760
  %3063 = vmatmul.mubr.f32.gmra.mrb[0].mxu0 %v3062
  %v3064 = vpop.f32.mrb[0].mxu0
  %v3065 = vadd.f32 %v2660, %v3064
  %v3066 = vpop.f32.mrb[0].mxu0
  %3067 = vmatprep.mubr.f32.mxu0 0.0
  %v3068 = vand.u32 %v233, 4294901760
  %3069 = vmatmul.mubr.f32.gmra.mrb[0].mxu0 %v3068
  %v3070 = vpop.f32.mrb[0].mxu0
  %v3071 = vadd.f32 %v2666, %v3070
  %v3072 = vpop.f32.mrb[0].mxu0
  %3073 = vmatprep.mubr.f32.mxu0 0.0
  %v3074 = vand.u32 %v236, 4294901760
  %3075 = vmatmul.mubr.f32.gmra.mrb[0].mxu0 %v3074
  %v3076 = vpop.f32.mrb[0].mxu0
  %v3077 = vadd.f32 %v2672, %v3076
  %v3078 = vpop.f32.mrb[0].mxu0
  %3079 = vmatprep.mubr.f32.mxu0 0.0
  %v3080 = vand.u32 %v239, 4294901760
  %3081 = vmatmul.mubr.f32.gmra.mrb[0].mxu0 %v3080
  %v3082 = vpop.f32.mrb[0].mxu0
  %v3083 = vadd.f32 %v2678, %v3082
  %v3084 = vpop.f32.mrb[0].mxu0
  %3085 = vmatprep.mubr.f32.mxu0 0.0
  %v3086 = vand.u32 %v242, 4294901760
  %3087 = vmatmul.mubr.f32.gmra.mrb[0].mxu0 %v3086
  %v3088 = vpop.f32.mrb[0].mxu0
  %v3089 = vadd.f32 %v2684, %v3088
  %v3090 = vpop.f32.mrb[0].mxu0
  %3091 = vmatprep.mubr.f32.mxu0 0.0
  %v3092 = vand.u32 %v245, 4294901760
  %3093 = vmatmul.mubr.f32.gmra.mrb[0].mxu0 %v3092
  %v3094 = vpop.f32.mrb[0].mxu0
  %v3095 = vadd.f32 %v2690, %v3094
  %v3096 = vpop.f32.mrb[0].mxu0
  %3097 = vmatprep.mubr.f32.mxu0 0.0
  %v3098 = vand.u32 %v248, 4294901760
  %3099 = vmatmul.mubr.f32.gmra.mrb[0].mxu0 %v3098
  %v3100 = vpop.f32.mrb[0].mxu0
  %v3101 = vadd.f32 %v2696, %v3100
  %v3102 = vpop.f32.mrb[0].mxu0
  %3103 = vdwg.mxu0
  %v3104 = vmax.f32 %v2771, 0.0
  %v3105 = vmax.f32 %v2777, 0.0
  %v3106 = vmax.f32 %v2783, 0.0
  %v3107 = vmax.f32 %v2789, 0.0
  %v3108 = vmax.f32 %v2795, 0.0
  %v3109 = vmax.f32 %v2801, 0.0
  %v3110 = vmax.f32 %v2807, 0.0
  %v3111 = vmax.f32 %v2813, 0.0
  %v3112 = vmax.f32 %v2819, 0.0
  %v3113 = vmax.f32 %v2825, 0.0
  %v3114 = vmax.f32 %v2831, 0.0
  %v3115 = vmax.f32 %v2837, 0.0
  %v3116 = vmax.f32 %v2843, 0.0
  %v3117 = vmax.f32 %v2849, 0.0
  %v3118 = vmax.f32 %v2855, 0.0
  %v3119 = vmax.f32 %v2861, 0.0
  %v3120 = vmax.f32 %v2867, 0.0
  %v3121 = vmax.f32 %v2873, 0.0
  %v3122 = vmax.f32 %v2879, 0.0
  %v3123 = vmax.f32 %v2885, 0.0
  %v3124 = vmax.f32 %v2891, 0.0
  %v3125 = vmax.f32 %v2897, 0.0
  %v3126 = vmax.f32 %v2903, 0.0
  %v3127 = vmax.f32 %v2909, 0.0
  %v3128 = vmax.f32 %v2915, 0.0
  %v3129 = vmax.f32 %v2921, 0.0
  %v3130 = vmax.f32 %v2927, 0.0
  %v3131 = vmax.f32 %v2933, 0.0
  %v3132 = vmax.f32 %v2939, 0.0
  %v3133 = vmax.f32 %v2945, 0.0
  %v3134 = vmax.f32 %v2951, 0.0
  %v3135 = vmax.f32 %v2957, 0.0
  %v3136 = vmax.f32 %v2963, 0.0
  %v3137 = vmax.f32 %v2969, 0.0
  %v3138 = vmax.f32 %v2975, 0.0
  %v3139 = vmax.f32 %v2981, 0.0
  %v3140 = vmax.f32 %v2987, 0.0
  %v3141 = vmax.f32 %v2993, 0.0
  %v3142 = vmax.f32 %v2999, 0.0
  %v3143 = vmax.f32 %v3005, 0.0
  %v3144 = vmax.f32 %v3011, 0.0
  %v3145 = vmax.f32 %v3017, 0.0
  %v3146 = vmax.f32 %v3023, 0.0
  %v3147 = vmax.f32 %v3029, 0.0
  %v3148 = vmax.f32 %v3035, 0.0
  %v3149 = vmax.f32 %v3041, 0.0
  %v3150 = vmax.f32 %v3047, 0.0
  %v3151 = vmax.f32 %v3053, 0.0
  %v3152 = vmax.f32 %v3059, 0.0
  %v3153 = vmax.f32 %v3065, 0.0
  %v3154 = vmax.f32 %v3071, 0.0
  %v3155 = vmax.f32 %v3077, 0.0
  %v3156 = vmax.f32 %v3083, 0.0
  %v3157 = vmax.f32 %v3089, 0.0
  %v3158 = vmax.f32 %v3095, 0.0
  %v3159 = vmax.f32 %v3101, 0.0
  %vm3160 = vcmask 64512
  %3161 = vst.msk [vmem:[%s3] sm:$0xff] %vm3160, %v3104
  %3162 = vst.msk [vmem:[%s3 + $0x8] sm:$0xff] %vm3160, %v3105
  %3163 = vst.msk [vmem:[%s3 + $0x10] sm:$0xff] %vm3160, %v3106
  %3164 = vst.msk [vmem:[%s3 + $0x18] sm:$0xff] %vm3160, %v3107
  %3165 = vst.msk [vmem:[%s3 + $0x20] sm:$0xff] %vm3160, %v3108
  %3166 = vst.msk [vmem:[%s3 + $0x28] sm:$0xff] %vm3160, %v3109
  %3167 = vst.msk [vmem:[%s3 + $0x30] sm:$0xff] %vm3160, %v3110
  %3168 = vst.msk [vmem:[%s3 + $0x38] sm:$0xff] %vm3160, %v3111
  %3169 = vst.msk [vmem:[%s3 + $0x40] sm:$0xff] %vm3160, %v3112
  %3170 = vst.msk [vmem:[%s3 + $0x48] sm:$0xff] %vm3160, %v3113
  %3171 = vst.msk [vmem:[%s3 + $0x50] sm:$0xff] %vm3160, %v3114
  %3172 = vst.msk [vmem:[%s3 + $0x58] sm:$0xff] %vm3160, %v3115
  %3173 = vst.msk [vmem:[%s3 + $0x60] sm:$0xff] %vm3160, %v3116
  %3174 = vst.msk [vmem:[%s3 + $0x68] sm:$0xff] %vm3160, %v3117
  %3175 = vst.msk [vmem:[%s3 + $0x70] sm:$0xff] %vm3160, %v3118
  %3176 = vst.msk [vmem:[%s3 + $0x78] sm:$0xff] %vm3160, %v3119
  %3177 = vst.msk [vmem:[%s3 + $0x80] sm:$0xff] %vm3160, %v3120
  %3178 = vst.msk [vmem:[%s3 + $0x88] sm:$0xff] %vm3160, %v3121
  %3179 = vst.msk [vmem:[%s3 + $0x90] sm:$0xff] %vm3160, %v3122
  %3180 = vst.msk [vmem:[%s3 + $0x98] sm:$0xff] %vm3160, %v3123
  %3181 = vst.msk [vmem:[%s3 + $0xa0] sm:$0xff] %vm3160, %v3124
  %3182 = vst.msk [vmem:[%s3 + $0xa8] sm:$0xff] %vm3160, %v3125
  %3183 = vst.msk [vmem:[%s3 + $0xb0] sm:$0xff] %vm3160, %v3126
  %3184 = vst.msk [vmem:[%s3 + $0xb8] sm:$0xff] %vm3160, %v3127
  %3185 = vst.msk [vmem:[%s3 + $0xc0] sm:$0xff] %vm3160, %v3128
  %3186 = vst.msk [vmem:[%s3 + $0xc8] sm:$0xff] %vm3160, %v3129
  %3187 = vst.msk [vmem:[%s3 + $0xd0] sm:$0xff] %vm3160, %v3130
  %3188 = vst.msk [vmem:[%s3 + $0xd8] sm:$0xff] %vm3160, %v3131
  %3189 = vst.msk [vmem:[%s3 + $0xe0] sm:$0xff] %vm3160, %v3132
  %3190 = vst.msk [vmem:[%s3 + $0xe8] sm:$0xff] %vm3160, %v3133
  %3191 = vst.msk [vmem:[%s3 + $0xf0] sm:$0xff] %vm3160, %v3134
  %3192 = vst.msk [vmem:[%s3 + $0xf8] sm:$0xff] %vm3160, %v3135
  %3193 = vst.msk [vmem:[%s3 + $0x100] sm:$0xff] %vm3160, %v3136
  %3194 = vst.msk [vmem:[%s3 + $0x108] sm:$0xff] %vm3160, %v3137
  %3195 = vst.msk [vmem:[%s3 + $0x110] sm:$0xff] %vm3160, %v3138
  %3196 = vst.msk [vmem:[%s3 + $0x118] sm:$0xff] %vm3160, %v3139
  %3197 = vst.msk [vmem:[%s3 + $0x120] sm:$0xff] %vm3160, %v3140
  %3198 = vst.msk [vmem:[%s3 + $0x128] sm:$0xff] %vm3160, %v3141
  %3199 = vst.msk [vmem:[%s3 + $0x130] sm:$0xff] %vm3160, %v3142
  %3200 = vst.msk [vmem:[%s3 + $0x138] sm:$0xff] %vm3160, %v3143
  %3201 = vst.msk [vmem:[%s3 + $0x140] sm:$0xff] %vm3160, %v3144
  %3202 = vst.msk [vmem:[%s3 + $0x148] sm:$0xff] %vm3160, %v3145
  %3203 = vst.msk [vmem:[%s3 + $0x150] sm:$0xff] %vm3160, %v3146
  %3204 = vst.msk [vmem:[%s3 + $0x158] sm:$0xff] %vm3160, %v3147
  %3205 = vst.msk [vmem:[%s3 + $0x160] sm:$0xff] %vm3160, %v3148
  %3206 = vst.msk [vmem:[%s3 + $0x168] sm:$0xff] %vm3160, %v3149
  %3207 = vst.msk [vmem:[%s3 + $0x170] sm:$0xff] %vm3160, %v3150
  %3208 = vst.msk [vmem:[%s3 + $0x178] sm:$0xff] %vm3160, %v3151
  %3209 = vst.msk [vmem:[%s3 + $0x180] sm:$0xff] %vm3160, %v3152
  %3210 = vst.msk [vmem:[%s3 + $0x188] sm:$0xff] %vm3160, %v3153
  %3211 = vst.msk [vmem:[%s3 + $0x190] sm:$0xff] %vm3160, %v3154
  %3212 = vst.msk [vmem:[%s3 + $0x198] sm:$0xff] %vm3160, %v3155
  %3213 = vst.msk [vmem:[%s3 + $0x1a0] sm:$0xff] %vm3160, %v3156
  %3214 = vst.msk [vmem:[%s3 + $0x1a8] sm:$0xff] %vm3160, %v3157
  %3215 = vst.msk [vmem:[%s3 + $0x1b0] sm:$0xff] %vm3160, %v3158
  %3216 = vst.msk [vmem:[%s3 + $0x1b8] sm:$0xff] %vm3160, %v3159
  // Predicated region
  $region14: #{embnet_forward.2} parent=0 // pred_check
    _
  $region15: #{embnet_forward.2} parent=0 // pred_check_branch
    %3218 = sbr.rel (0) target = $region17
  $region16: #{embnet_forward.2} parent=0 // pred_region
    _
  $region17: #{embnet_forward.2} parent=0 // pred_fallthru
    _
  // Predicated region
  $region18: #{embnet_forward.2} parent=0 // pred_check
    _
  $region19: #{embnet_forward.2} parent=0 // pred_check_branch
    %3220 = sbr.rel (0) target = $region21
  $region20: #{embnet_forward.2} parent=0 // pred_region
    _
  $region21: #{embnet_forward.2} parent=0 // pred_fallthru
    _

// kernel: embnet_forward.3
$region0: #{embnet_forward.3}
  #allocation0 [shape = 'u32[]', space=smem, size = 0x4, offset = 0x4, fixed_abs, tag = 'smem constant byte address 0x4 - core index']
  #allocation1 [shape = 'u32[144,128]{1,0:T(1,128)}', space=vmem, size = 0x12000, scoped, tag = 'internal scratch']
  #allocation2 [shape = 'f32[1,1]{1,0:T(1,128)S(1)}', space=vmem, size = 0x200, scoped, tag = 'scoped memory for embnet_forward.3']
  %s0 = inlined_call_operand.vmem [shape: f32[7,512], index: 0, kind: input, shape index: {}]
  %s1 = inlined_call_operand.vmem [shape: f32[7,4], index: 1, kind: input, shape index: {}]
  %s2 = inlined_call_operand.vmem [shape: f32[512,128], index: 2, kind: input, shape index: {}]
  %s3 = inlined_call_operand.vmem [shape: f32[1,128], index: 3, kind: input, shape index: {}]
  %s4 = inlined_call_operand.vmem [shape: f32[4,16], index: 4, kind: input, shape index: {}]
  %s5 = inlined_call_operand.vmem [shape: f32[1,16], index: 5, kind: input, shape index: {}]
  %s6 = inlined_call_operand.vmem [shape: f32[128,64], index: 6, kind: input, shape index: {}]
  %s7 = inlined_call_operand.vmem [shape: f32[16,64], index: 7, kind: input, shape index: {}]
  %s8 = inlined_call_operand.vmem [shape: f32[128,64], index: 8, kind: input, shape index: {}]
  %s9 = inlined_call_operand.vmem [shape: f32[16,64], index: 9, kind: input, shape index: {}]
  %s10 = inlined_call_operand.vmem [shape: f32[1,64], index: 10, kind: input, shape index: {}]
  %s11 = inlined_call_operand.vmem [shape: f32[1,64], index: 11, kind: input, shape index: {}]
  %s12 = inlined_call_operand.<no memory space> [shape: f32[1,1], index: 12, kind: input, shape index: {}]
  %s13 = inlined_call_operand.hbm [shape: f32[3,4], index: 13, kind: output, shape index: {0}]
  %s14 = inlined_call_operand.hbm [shape: f32[3,144], index: 14, kind: output, shape index: {1}]
  %s15 = inlined_call_operand.hbm [shape: f32[4,144], index: 15, kind: output, shape index: {2}]
  %16 = xla_tuple %s13, %s14, %s15
  %s17 = sld [smem:[#allocation0]]
  $region78: #{embnet_forward.3} parent=0
    _
  %s19 = ssub.s32 1, %s17
  %s20 = scalar_select 0, %s19, %s17
  %v21 = vstv %s12
  %22 = vst [vmem:[#allocation2] sm:$0x1] %v21
  $region1: #{embnet_forward.3} parent=0
    #allocation3 [shape = 'u8[2048]{0}', space=vmem, size = 0x800, scoped, tag = 'output window, operand 0, single buffered']
    #allocation4 [shape = 's32[1]{0}', space=sflag, size = 0x4, scoped, tag = 'scoped memory for embnet_forward.3']
    #allocation5 [shape = 'u8[4096]{0}', space=vmem, size = 0x1000, scoped, tag = 'output window, operand 1, single buffered']
    #allocation6 [shape = 's32[1]{0}', space=sflag, size = 0x4, scoped, tag = 'scoped memory for embnet_forward.3']
    #allocation7 [shape = 'u8[4096]{0}', space=vmem, size = 0x1000, scoped, tag = 'output window, operand 2, single buffered']
    %23 = vsyncpa [#allocation4], 0
    %24 = vsyncpa [#allocation6], 0
    // Predicated region
    $region2: #{embnet_forward.3} parent=1 // pred_check
      _
    $region3: #{embnet_forward.3} parent=1 // pred_check_branch
      %26 = sbr.rel (0) target = $region5
    $region4: #{embnet_forward.3} parent=1 // pred_region
      _
    $region5: #{embnet_forward.3} parent=1 // pred_fallthru
      _
    // Predicated region
    $region6: #{embnet_forward.3} parent=1 // pred_check
      _
    $region7: #{embnet_forward.3} parent=1 // pred_check_branch
      %28 = sbr.rel (0) target = $region9
    $region8: #{embnet_forward.3} parent=1 // pred_region
      _
    $region9: #{embnet_forward.3} parent=1 // pred_fallthru
      _
    // Predicated region
    $region10: #{embnet_forward.3} parent=1 // pred_check
      _
    $region11: #{embnet_forward.3} parent=1 // pred_check_branch
      %30 = sbr.rel (0) target = $region13
    $region12: #{embnet_forward.3} parent=1 // pred_region
      _
    $region13: #{embnet_forward.3} parent=1 // pred_fallthru
      _
    // Predicated region
    $region14: #{embnet_forward.3} parent=1 // pred_check
      _
    $region15: #{embnet_forward.3} parent=1 // pred_check_branch
      %32 = sbr.rel (0) target = $region17
    $region16: #{embnet_forward.3} parent=1 // pred_region
      _
    $region17: #{embnet_forward.3} parent=1 // pred_fallthru
      _
    // Predicated region
    $region18: #{embnet_forward.3} parent=1 // pred_check
      _
    $region19: #{embnet_forward.3} parent=1 // pred_check_branch
      %34 = sbr.rel (0) target = $region21
    $region20: #{embnet_forward.3} parent=1 // pred_region
      _
    $region21: #{embnet_forward.3} parent=1 // pred_fallthru
      _
    // Predicated region
    $region22: #{embnet_forward.3} parent=1 // pred_check
      _
    $region23: #{embnet_forward.3} parent=1 // pred_check_branch
      %36 = sbr.rel (0) target = $region25
    $region24: #{embnet_forward.3} parent=1 // pred_region
      _
    $region25: #{embnet_forward.3} parent=1 // pred_fallthru
      _
    // Predicated region
    $region26: #{embnet_forward.3} parent=1 // pred_check
      _
    $region27: #{embnet_forward.3} parent=1 // pred_check_branch
      %38 = sbr.rel (0) target = $region29
    $region28: #{embnet_forward.3} parent=1 // pred_region
      _
    $region29: #{embnet_forward.3} parent=1 // pred_fallthru
      _
    // Predicated region
    $region30: #{embnet_forward.3} parent=1 // pred_check
      _
    $region31: #{embnet_forward.3} parent=1 // pred_check_branch
      %40 = sbr.rel (0) target = $region33
    $region32: #{embnet_forward.3} parent=1 // pred_region
      _
    $region33: #{embnet_forward.3} parent=1 // pred_fallthru
      _
    // Predicated region
    $region34: #{embnet_forward.3} parent=1 // pred_check
      _
    $region35: #{embnet_forward.3} parent=1 // pred_check_branch
      %42 = sbr.rel (0) target = $region37
    $region36: #{embnet_forward.3} parent=1 // pred_region
      _
    $region37: #{embnet_forward.3} parent=1 // pred_fallthru
      _
    // Predicated region
    $region38: #{embnet_forward.3} parent=1 // pred_check
      _
    $region39: #{embnet_forward.3} parent=1 // pred_check_branch
      %44 = sbr.rel (0) target = $region41
    $region40: #{embnet_forward.3} parent=1 // pred_region
      _
    $region41: #{embnet_forward.3} parent=1 // pred_fallthru
      _
    // Predicated region
    $region42: #{embnet_forward.3} parent=1 // pred_check
      _
    $region43: #{embnet_forward.3} parent=1 // pred_check_branch
      %46 = sbr.rel (0) target = $region45
    $region44: #{embnet_forward.3} parent=1 // pred_region
      _
    $region45: #{embnet_forward.3} parent=1 // pred_fallthru
      _
    // Predicated region
    $region46: #{embnet_forward.3} parent=1 // pred_check
      _
    $region47: #{embnet_forward.3} parent=1 // pred_check_branch
      %48 = sbr.rel (0) target = $region49
    $region48: #{embnet_forward.3} parent=1 // pred_region
      _
    $region49: #{embnet_forward.3} parent=1 // pred_fallthru
      _
    // Predicated region
    $region50: #{embnet_forward.3} parent=1 // pred_check
      _
    $region51: #{embnet_forward.3} parent=1 // pred_check_branch
      %50 = sbr.rel (0) target = $region53
    $region52: #{embnet_forward.3} parent=1 // pred_region
      _
    $region53: #{embnet_forward.3} parent=1 // pred_fallthru
      _
    %v51 = vld [vmem:[%s0] sm:$0x7f]
    %v52 = vld [vmem:[%s0 + $0x8] sm:$0x7f]
    %v53 = vld [vmem:[%s0 + $0x10] sm:$0x7f]
    %v54 = vld [vmem:[%s0 + $0x18] sm:$0x7f]
    %v55 = vld [vmem:[%s2] sm:$0xff]
    %v56 = vld [vmem:[%s2 + $0x8] sm:$0xff]
    %v57 = vld [vmem:[%s2 + $0x10] sm:$0xff]
    %v58 = vld [vmem:[%s2 + $0x18] sm:$0xff]
    %v59 = vld [vmem:[%s2 + $0x20] sm:$0xff]
    %v60 = vld [vmem:[%s2 + $0x28] sm:$0xff]
    %v61 = vld [vmem:[%s2 + $0x30] sm:$0xff]
    %v62 = vld [vmem:[%s2 + $0x38] sm:$0xff]
    %v63 = vld [vmem:[%s2 + $0x40] sm:$0xff]
    %v64 = vld [vmem:[%s2 + $0x48] sm:$0xff]
    %v65 = vld [vmem:[%s2 + $0x50] sm:$0xff]
    %v66 = vld [vmem:[%s2 + $0x58] sm:$0xff]
    %v67 = vld [vmem:[%s2 + $0x60] sm:$0xff]
    %v68 = vld [vmem:[%s2 + $0x68] sm:$0xff]
    %v69 = vld [vmem:[%s2 + $0x70] sm:$0xff]
    %v70 = vld [vmem:[%s2 + $0x78] sm:$0xff]
    %v71 = vld [vmem:[%s2 + $0x80] sm:$0xff]
    %v72 = vld [vmem:[%s2 + $0x88] sm:$0xff]
    %v73 = vld [vmem:[%s2 + $0x90] sm:$0xff]
    %v74 = vld [vmem:[%s2 + $0x98] sm:$0xff]
    %v75 = vld [vmem:[%s2 + $0xa0] sm:$0xff]
    %v76 = vld [vmem:[%s2 + $0xa8] sm:$0xff]
    %v77 = vld [vmem:[%s2 + $0xb0] sm:$0xff]
    %v78 = vld [vmem:[%s2 + $0xb8] sm:$0xff]
    %v79 = vld [vmem:[%s2 + $0xc0] sm:$0xff]
    %v80 = vld [vmem:[%s2 + $0xc8] sm:$0xff]
    %v81 = vld [vmem:[%s2 + $0xd0] sm:$0xff]
    %v82 = vld [vmem:[%s2 + $0xd8] sm:$0xff]
    %v83 = vld [vmem:[%s2 + $0xe0] sm:$0xff]
    %v84 = vld [vmem:[%s2 + $0xe8] sm:$0xff]
    %v85 = vld [vmem:[%s2 + $0xf0] sm:$0xff]
    %v86 = vld [vmem:[%s2 + $0xf8] sm:$0xff]
    %v87 = vld [vmem:[%s2 + $0x100] sm:$0xff]
    %v88 = vld [vmem:[%s2 + $0x108] sm:$0xff]
    %v89 = vld [vmem:[%s2 + $0x110] sm:$0xff]
    %v90 = vld [vmem:[%s2 + $0x118] sm:$0xff]
    %v91 = vld [vmem:[%s2 + $0x120] sm:$0xff]
    %v92 = vld [vmem:[%s2 + $0x128] sm:$0xff]
    %v93 = vld [vmem:[%s2 + $0x130] sm:$0xff]
    %v94 = vld [vmem:[%s2 + $0x138] sm:$0xff]
    %v95 = vld [vmem:[%s2 + $0x140] sm:$0xff]
    %v96 = vld [vmem:[%s2 + $0x148] sm:$0xff]
    %v97 = vld [vmem:[%s2 + $0x150] sm:$0xff]
    %v98 = vld [vmem:[%s2 + $0x158] sm:$0xff]
    %v99 = vld [vmem:[%s2 + $0x160] sm:$0xff]
    %v100 = vld [vmem:[%s2 + $0x168] sm:$0xff]
    %v101 = vld [vmem:[%s2 + $0x170] sm:$0xff]
    %v102 = vld [vmem:[%s2 + $0x178] sm:$0xff]
    %v103 = vld [vmem:[%s2 + $0x180] sm:$0xff]
    %v104 = vld [vmem:[%s2 + $0x188] sm:$0xff]
    %v105 = vld [vmem:[%s2 + $0x190] sm:$0xff]
    %v106 = vld [vmem:[%s2 + $0x198] sm:$0xff]
    %v107 = vld [vmem:[%s2 + $0x1a0] sm:$0xff]
    %v108 = vld [vmem:[%s2 + $0x1a8] sm:$0xff]
    %v109 = vld [vmem:[%s2 + $0x1b0] sm:$0xff]
    %v110 = vld [vmem:[%s2 + $0x1b8] sm:$0xff]
    %v111 = vld [vmem:[%s2 + $0x1c0] sm:$0xff]
    %v112 = vld [vmem:[%s2 + $0x1c8] sm:$0xff]
    %v113 = vld [vmem:[%s2 + $0x1d0] sm:$0xff]
    %v114 = vld [vmem:[%s2 + $0x1d8] sm:$0xff]
    %v115 = vld [vmem:[%s2 + $0x1e0] sm:$0xff]
    %v116 = vld [vmem:[%s2 + $0x1e8] sm:$0xff]
    %v117 = vld [vmem:[%s2 + $0x1f0] sm:$0xff]
    %v118 = vld [vmem:[%s2 + $0x1f8] sm:$0xff]
    %v119 = vld [vmem:[%s3] sm:$0x1]
    %v121 = vlaneseq
    %v122 = vshrl.u32 %v121, 7
    %v123 = vsub.s32 0, %v122
    %v124 = vrot.slane %v119, %v123
    %126 = vmatprep.subr.mxu0 0.0
    %v127 = vand.u32 %v55, 4294901760
    %128 = vmatpush1.msra.mxu0 %v127
    %129 = vmatprep.subr.mxu0 0.0
    %v130 = vand.u32 %v56, 4294901760
    %131 = vmatpush1.msra.mxu0 %v130
    %132 = vmatprep.subr.mxu0 0.0
    %v133 = vand.u32 %v57, 4294901760
    %134 = vmatpush1.msra.mxu0 %v133
    %135 = vmatprep.subr.mxu0 0.0
    %v136 = vand.u32 %v58, 4294901760
    %137 = vmatpush1.msra.mxu0 %v136
    %138 = vmatprep.subr.mxu0 0.0
    %v139 = vand.u32 %v59, 4294901760
    %140 = vmatpush1.msra.mxu0 %v139
    %141 = vmatprep.subr.mxu0 0.0
    %v142 = vand.u32 %v60, 4294901760
    %143 = vmatpush1.msra.mxu0 %v142
    %144 = vmatprep.subr.mxu0 0.0
    %v145 = vand.u32 %v61, 4294901760
    %146 = vmatpush1.msra.mxu0 %v145
    %147 = vmatprep.subr.mxu0 0.0
    %v148 = vand.u32 %v62, 4294901760
    %149 = vmatpush1.msra.mxu0 %v148
    %150 = vmatprep.subr.mxu0 0.0
    %v151 = vand.u32 %v63, 4294901760
    %152 = vmatpush1.msra.mxu0 %v151
    %153 = vmatprep.subr.mxu0 0.0
    %v154 = vand.u32 %v64, 4294901760
    %155 = vmatpush1.msra.mxu0 %v154
    %156 = vmatprep.subr.mxu0 0.0
    %v157 = vand.u32 %v65, 4294901760
    %158 = vmatpush1.msra.mxu0 %v157
    %159 = vmatprep.subr.mxu0 0.0
    %v160 = vand.u32 %v66, 4294901760
    %161 = vmatpush1.msra.mxu0 %v160
    %162 = vmatprep.subr.mxu0 0.0
    %v163 = vand.u32 %v67, 4294901760
    %164 = vmatpush1.msra.mxu0 %v163
    %165 = vmatprep.subr.mxu0 0.0
    %v166 = vand.u32 %v68, 4294901760
    %167 = vmatpush1.msra.mxu0 %v166
    %168 = vmatprep.subr.mxu0 0.0
    %v169 = vand.u32 %v69, 4294901760
    %170 = vmatpush1.msra.mxu0 %v169
    %171 = vmatprep.subr.mxu0 0.0
    %v172 = vand.u32 %v70, 4294901760
    %173 = vmatpush1.msra.mxu0 %v172
    %174 = vmatprep.subr.mxu0 0.0
    %v175 = vand.u32 %v71, 4294901760
    %176 = vmatpush1.msra.mxu0 %v175
    %177 = vmatprep.subr.mxu0 0.0
    %v178 = vand.u32 %v72, 4294901760
    %179 = vmatpush1.msra.mxu0 %v178
    %180 = vmatprep.subr.mxu0 0.0
    %v181 = vand.u32 %v73, 4294901760
    %182 = vmatpush1.msra.mxu0 %v181
    %183 = vmatprep.subr.mxu0 0.0
    %v184 = vand.u32 %v74, 4294901760
    %185 = vmatpush1.msra.mxu0 %v184
    %186 = vmatprep.subr.mxu0 0.0
    %v187 = vand.u32 %v75, 4294901760
    %188 = vmatpush1.msra.mxu0 %v187
    %189 = vmatprep.subr.mxu0 0.0
    %v190 = vand.u32 %v76, 4294901760
    %191 = vmatpush1.msra.mxu0 %v190
    %192 = vmatprep.subr.mxu0 0.0
    %v193 = vand.u32 %v77, 4294901760
    %194 = vmatpush1.msra.mxu0 %v193
    %195 = vmatprep.subr.mxu0 0.0
    %v196 = vand.u32 %v78, 4294901760
    %197 = vmatpush1.msra.mxu0 %v196
    %198 = vmatprep.subr.mxu0 0.0
    %v199 = vand.u32 %v79, 4294901760
    %200 = vmatpush1.msra.mxu0 %v199
    %201 = vmatprep.subr.mxu0 0.0
    %v202 = vand.u32 %v80, 4294901760
    %203 = vmatpush1.msra.mxu0 %v202
    %204 = vmatprep.subr.mxu0 0.0
    %v205 = vand.u32 %v81, 4294901760
    %206 = vmatpush1.msra.mxu0 %v205
    %207 = vmatprep.subr.mxu0 0.0
    %v208 = vand.u32 %v82, 4294901760
    %209 = vmatpush1.msra.mxu0 %v208
    %210 = vmatprep.subr.mxu0 0.0
    %v211 = vand.u32 %v83, 4294901760
    %212 = vmatpush1.msra.mxu0 %v211
    %213 = vmatprep.subr.mxu0 0.0
    %v214 = vand.u32 %v84, 4294901760
    %215 = vmatpush1.msra.mxu0 %v214
    %216 = vmatprep.subr.mxu0 0.0
    %v217 = vand.u32 %v85, 4294901760
    %218 = vmatpush1.msra.mxu0 %v217
    %219 = vmatprep.subr.mxu0 0.0
    %v220 = vand.u32 %v86, 4294901760
    %221 = vmatpush1.msra.mxu0 %v220
    %v222 = vand.u32 %v52, 4294901760
    %v223 = vsub.f32 %v52, %v222
    %v224 = vand.u32 %v223, 4294901760
    %v225 = vsub.f32 %v223, %v224
    %v226 = vand.u32 %v225, 4294901760
    %227 = vmatprep.mubr.f32.mxu0 %v226
    %v228 = vand.u32 %v51, 4294901760
    %v229 = vsub.f32 %v51, %v228
    %v230 = vand.u32 %v229, 4294901760
    %v231 = vsub.f32 %v229, %v230
    %v232 = vand.u32 %v231, 4294901760
    %233 = vmatmul.mubr.f32.gmra.mrb[0].mxu0 %v232
    %v234 = vpop.f32.mrb[0].mxu0
    %v235 = vadd.f32 %v124, %v234
    %v236 = vpop.f32.mrb[0].mxu0
    %237 = vdwg.mxu0
    %238 = vmatprep.subr.mxu0 0.0
    %v239 = vand.u32 %v55, 4294901760
    %v240 = vsub.f32 %v55, %v239
    %v241 = vand.u32 %v240, 4294901760
    %v242 = vsub.f32 %v240, %v241
    %v243 = vand.u32 %v242, 4294901760
    %244 = vmatpush1.msra.mxu0 %v243
    %245 = vmatprep.subr.mxu0 0.0
    %v246 = vand.u32 %v56, 4294901760
    %v247 = vsub.f32 %v56, %v246
    %v248 = vand.u32 %v247, 4294901760
    %v249 = vsub.f32 %v247, %v248
    %v250 = vand.u32 %v249, 4294901760
    %251 = vmatpush1.msra.mxu0 %v250
    %252 = vmatprep.subr.mxu0 0.0
    %v253 = vand.u32 %v57, 4294901760
    %v254 = vsub.f32 %v57, %v253
    %v255 = vand.u32 %v254, 4294901760
    %v256 = vsub.f32 %v254, %v255
    %v257 = vand.u32 %v256, 4294901760
    %258 = vmatpush1.msra.mxu0 %v257
    %259 = vmatprep.subr.mxu0 0.0
    %v260 = vand.u32 %v58, 4294901760
    %v261 = vsub.f32 %v58, %v260
    %v262 = vand.u32 %v261, 4294901760
    %v263 = vsub.f32 %v261, %v262
    %v264 = vand.u32 %v263, 4294901760
    %265 = vmatpush1.msra.mxu0 %v264
    %266 = vmatprep.subr.mxu0 0.0
    %v267 = vand.u32 %v59, 4294901760
    %v268 = vsub.f32 %v59, %v267
    %v269 = vand.u32 %v268, 4294901760
    %v270 = vsub.f32 %v268, %v269
    %v271 = vand.u32 %v270, 4294901760
    %272 = vmatpush1.msra.mxu0 %v271
    %273 = vmatprep.subr.mxu0 0.0
    %v274 = vand.u32 %v60, 4294901760
    %v275 = vsub.f32 %v60, %v274
    %v276 = vand.u32 %v275, 4294901760
    %v277 = vsub.f32 %v275, %v276
    %v278 = vand.u32 %v277, 4294901760
    %279 = vmatpush1.msra.mxu0 %v278
    %280 = vmatprep.subr.mxu0 0.0
    %v281 = vand.u32 %v61, 4294901760
    %v282 = vsub.f32 %v61, %v281
    %v283 = vand.u32 %v282, 4294901760
    %v284 = vsub.f32 %v282, %v283
    %v285 = vand.u32 %v284, 4294901760
    %286 = vmatpush1.msra.mxu0 %v285
    %287 = vmatprep.subr.mxu0 0.0
    %v288 = vand.u32 %v62, 4294901760
    %v289 = vsub.f32 %v62, %v288
    %v290 = vand.u32 %v289, 4294901760
    %v291 = vsub.f32 %v289, %v290
    %v292 = vand.u32 %v291, 4294901760
    %293 = vmatpush1.msra.mxu0 %v292
    %294 = vmatprep.subr.mxu0 0.0
    %v295 = vand.u32 %v63, 4294901760
    %v296 = vsub.f32 %v63, %v295
    %v297 = vand.u32 %v296, 4294901760
    %v298 = vsub.f32 %v296, %v297
    %v299 = vand.u32 %v298, 4294901760
    %300 = vmatpush1.msra.mxu0 %v299
    %301 = vmatprep.subr.mxu0 0.0
    %v302 = vand.u32 %v64, 4294901760
    %v303 = vsub.f32 %v64, %v302
    %v304 = vand.u32 %v303, 4294901760
    %v305 = vsub.f32 %v303, %v304
    %v306 = vand.u32 %v305, 4294901760
    %307 = vmatpush1.msra.mxu0 %v306
    %308 = vmatprep.subr.mxu0 0.0
    %v309 = vand.u32 %v65, 4294901760
    %v310 = vsub.f32 %v65, %v309
    %v311 = vand.u32 %v310, 4294901760
    %v312 = vsub.f32 %v310, %v311
    %v313 = vand.u32 %v312, 4294901760
    %314 = vmatpush1.msra.mxu0 %v313
    %315 = vmatprep.subr.mxu0 0.0
    %v316 = vand.u32 %v66, 4294901760
    %v317 = vsub.f32 %v66, %v316
    %v318 = vand.u32 %v317, 4294901760
    %v319 = vsub.f32 %v317, %v318
    %v320 = vand.u32 %v319, 4294901760
    %321 = vmatpush1.msra.mxu0 %v320
    %322 = vmatprep.subr.mxu0 0.0
    %v323 = vand.u32 %v67, 4294901760
    %v324 = vsub.f32 %v67, %v323
    %v325 = vand.u32 %v324, 4294901760
    %v326 = vsub.f32 %v324, %v325
    %v327 = vand.u32 %v326, 4294901760
    %328 = vmatpush1.msra.mxu0 %v327
    %329 = vmatprep.subr.mxu0 0.0
    %v330 = vand.u32 %v68, 4294901760
    %v331 = vsub.f32 %v68, %v330
    %v332 = vand.u32 %v331, 4294901760
    %v333 = vsub.f32 %v331, %v332
    %v334 = vand.u32 %v333, 4294901760
    %335 = vmatpush1.msra.mxu0 %v334
    %336 = vmatprep.subr.mxu0 0.0
    %v337 = vand.u32 %v69, 4294901760
    %v338 = vsub.f32 %v69, %v337
    %v339 = vand.u32 %v338, 4294901760
    %v340 = vsub.f32 %v338, %v339
    %v341 = vand.u32 %v340, 4294901760
    %342 = vmatpush1.msra.mxu0 %v341
    %343 = vmatprep.subr.mxu0 0.0
    %v344 = vand.u32 %v70, 4294901760
    %v345 = vsub.f32 %v70, %v344
    %v346 = vand.u32 %v345, 4294901760
    %v347 = vsub.f32 %v345, %v346
    %v348 = vand.u32 %v347, 4294901760
    %349 = vmatpush1.msra.mxu0 %v348
    %350 = vmatprep.subr.mxu0 0.0
    %v351 = vand.u32 %v71, 4294901760
    %v352 = vsub.f32 %v71, %v351
    %v353 = vand.u32 %v352, 4294901760
    %v354 = vsub.f32 %v352, %v353
    %v355 = vand.u32 %v354, 4294901760
    %356 = vmatpush1.msra.mxu0 %v355
    %357 = vmatprep.subr.mxu0 0.0
    %v358 = vand.u32 %v72, 4294901760
    %v359 = vsub.f32 %v72, %v358
    %v360 = vand.u32 %v359, 4294901760
    %v361 = vsub.f32 %v359, %v360
    %v362 = vand.u32 %v361, 4294901760
    %363 = vmatpush1.msra.mxu0 %v362
    %364 = vmatprep.subr.mxu0 0.0
    %v365 = vand.u32 %v73, 4294901760
    %v366 = vsub.f32 %v73, %v365
    %v367 = vand.u32 %v366, 4294901760
    %v368 = vsub.f32 %v366, %v367
    %v369 = vand.u32 %v368, 4294901760
    %370 = vmatpush1.msra.mxu0 %v369
    %371 = vmatprep.subr.mxu0 0.0
    %v372 = vand.u32 %v74, 4294901760
    %v373 = vsub.f32 %v74, %v372
    %v374 = vand.u32 %v373, 4294901760
    %v375 = vsub.f32 %v373, %v374
    %v376 = vand.u32 %v375, 4294901760
    %377 = vmatpush1.msra.mxu0 %v376
    %378 = vmatprep.subr.mxu0 0.0
    %v379 = vand.u32 %v75, 4294901760
    %v380 = vsub.f32 %v75, %v379
    %v381 = vand.u32 %v380, 4294901760
    %v382 = vsub.f32 %v380, %v381
    %v383 = vand.u32 %v382, 4294901760
    %384 = vmatpush1.msra.mxu0 %v383
    %385 = vmatprep.subr.mxu0 0.0
    %v386 = vand.u32 %v76, 4294901760
    %v387 = vsub.f32 %v76, %v386
    %v388 = vand.u32 %v387, 4294901760
    %v389 = vsub.f32 %v387, %v388
    %v390 = vand.u32 %v389, 4294901760
    %391 = vmatpush1.msra.mxu0 %v390
    %392 = vmatprep.subr.mxu0 0.0
    %v393 = vand.u32 %v77, 4294901760
    %v394 = vsub.f32 %v77, %v393
    %v395 = vand.u32 %v394, 4294901760
    %v396 = vsub.f32 %v394, %v395
    %v397 = vand.u32 %v396, 4294901760
    %398 = vmatpush1.msra.mxu0 %v397
    %399 = vmatprep.subr.mxu0 0.0
    %v400 = vand.u32 %v78, 4294901760
    %v401 = vsub.f32 %v78, %v400
    %v402 = vand.u32 %v401, 4294901760
    %v403 = vsub.f32 %v401, %v402
    %v404 = vand.u32 %v403, 4294901760
    %405 = vmatpush1.msra.mxu0 %v404
    %406 = vmatprep.subr.mxu0 0.0
    %v407 = vand.u32 %v79, 4294901760
    %v408 = vsub.f32 %v79, %v407
    %v409 = vand.u32 %v408, 4294901760
    %v410 = vsub.f32 %v408, %v409
    %v411 = vand.u32 %v410, 4294901760
    %412 = vmatpush1.msra.mxu0 %v411
    %413 = vmatprep.subr.mxu0 0.0
    %v414 = vand.u32 %v80, 4294901760
    %v415 = vsub.f32 %v80, %v414
    %v416 = vand.u32 %v415, 4294901760
    %v417 = vsub.f32 %v415, %v416
    %v418 = vand.u32 %v417, 4294901760
    %419 = vmatpush1.msra.mxu0 %v418
    %420 = vmatprep.subr.mxu0 0.0
    %v421 = vand.u32 %v81, 4294901760
    %v422 = vsub.f32 %v81, %v421
    %v423 = vand.u32 %v422, 4294901760
    %v424 = vsub.f32 %v422, %v423
    %v425 = vand.u32 %v424, 4294901760
    %426 = vmatpush1.msra.mxu0 %v425
    %427 = vmatprep.subr.mxu0 0.0
    %v428 = vand.u32 %v82, 4294901760
    %v429 = vsub.f32 %v82, %v428
    %v430 = vand.u32 %v429, 4294901760
    %v431 = vsub.f32 %v429, %v430
    %v432 = vand.u32 %v431, 4294901760
    %433 = vmatpush1.msra.mxu0 %v432
    %434 = vmatprep.subr.mxu0 0.0
    %v435 = vand.u32 %v83, 4294901760
    %v436 = vsub.f32 %v83, %v435
    %v437 = vand.u32 %v436, 4294901760
    %v438 = vsub.f32 %v436, %v437
    %v439 = vand.u32 %v438, 4294901760
    %440 = vmatpush1.msra.mxu0 %v439
    %441 = vmatprep.subr.mxu0 0.0
    %v442 = vand.u32 %v84, 4294901760
    %v443 = vsub.f32 %v84, %v442
    %v444 = vand.u32 %v443, 4294901760
    %v445 = vsub.f32 %v443, %v444
    %v446 = vand.u32 %v445, 4294901760
    %447 = vmatpush1.msra.mxu0 %v446
    %448 = vmatprep.subr.mxu0 0.0
    %v449 = vand.u32 %v85, 4294901760
    %v450 = vsub.f32 %v85, %v449
    %v451 = vand.u32 %v450, 4294901760
    %v452 = vsub.f32 %v450, %v451
    %v453 = vand.u32 %v452, 4294901760
    %454 = vmatpush1.msra.mxu0 %v453
    %455 = vmatprep.subr.mxu0 0.0
    %v456 = vand.u32 %v86, 4294901760
    %v457 = vsub.f32 %v86, %v456
    %v458 = vand.u32 %v457, 4294901760
    %v459 = vsub.f32 %v457, %v458
    %v460 = vand.u32 %v459, 4294901760
    %461 = vmatpush1.msra.mxu0 %v460
    %v462 = vand.u32 %v52, 4294901760
    %463 = vmatprep.mubr.f32.mxu0 %v462
    %v464 = vand.u32 %v51, 4294901760
    %465 = vmatmul.mubr.f32.gmra.mrb[0].mxu0 %v464
    %v466 = vpop.f32.mrb[0].mxu0
    %v467 = vadd.f32 %v235, %v466
    %v468 = vpop.f32.mrb[0].mxu0
    %469 = vdwg.mxu0
    %470 = vmatprep.subr.mxu0 0.0
    %v471 = vand.u32 %v55, 4294901760
    %v472 = vsub.f32 %v55, %v471
    %473 = vmatpush1.msra.mxu0 %v472
    %474 = vmatprep.subr.mxu0 0.0
    %v475 = vand.u32 %v56, 4294901760
    %v476 = vsub.f32 %v56, %v475
    %477 = vmatpush1.msra.mxu0 %v476
    %478 = vmatprep.subr.mxu0 0.0
    %v479 = vand.u32 %v57, 4294901760
    %v480 = vsub.f32 %v57, %v479
    %481 = vmatpush1.msra.mxu0 %v480
    %482 = vmatprep.subr.mxu0 0.0
    %v483 = vand.u32 %v58, 4294901760
    %v484 = vsub.f32 %v58, %v483
    %485 = vmatpush1.msra.mxu0 %v484
    %486 = vmatprep.subr.mxu0 0.0
    %v487 = vand.u32 %v59, 4294901760
    %v488 = vsub.f32 %v59, %v487
    %489 = vmatpush1.msra.mxu0 %v488
    %490 = vmatprep.subr.mxu0 0.0
    %v491 = vand.u32 %v60, 4294901760
    %v492 = vsub.f32 %v60, %v491
    %493 = vmatpush1.msra.mxu0 %v492
    %494 = vmatprep.subr.mxu0 0.0
    %v495 = vand.u32 %v61, 4294901760
    %v496 = vsub.f32 %v61, %v495
    %497 = vmatpush1.msra.mxu0 %v496
    %498 = vmatprep.subr.mxu0 0.0
    %v499 = vand.u32 %v62, 4294901760
    %v500 = vsub.f32 %v62, %v499
    %501 = vmatpush1.msra.mxu0 %v500
    %502 = vmatprep.subr.mxu0 0.0
    %v503 = vand.u32 %v63, 4294901760
    %v504 = vsub.f32 %v63, %v503
    %505 = vmatpush1.msra.mxu0 %v504
    %506 = vmatprep.subr.mxu0 0.0
    %v507 = vand.u32 %v64, 4294901760
    %v508 = vsub.f32 %v64, %v507
    %509 = vmatpush1.msra.mxu0 %v508
    %510 = vmatprep.subr.mxu0 0.0
    %v511 = vand.u32 %v65, 4294901760
    %v512 = vsub.f32 %v65, %v511
    %513 = vmatpush1.msra.mxu0 %v512
    %514 = vmatprep.subr.mxu0 0.0
    %v515 = vand.u32 %v66, 4294901760
    %v516 = vsub.f32 %v66, %v515
    %517 = vmatpush1.msra.mxu0 %v516
    %518 = vmatprep.subr.mxu0 0.0
    %v519 = vand.u32 %v67, 4294901760
    %v520 = vsub.f32 %v67, %v519
    %521 = vmatpush1.msra.mxu0 %v520
    %522 = vmatprep.subr.mxu0 0.0
    %v523 = vand.u32 %v68, 4294901760
    %v524 = vsub.f32 %v68, %v523
    %525 = vmatpush1.msra.mxu0 %v524
    %526 = vmatprep.subr.mxu0 0.0
    %v527 = vand.u32 %v69, 4294901760
    %v528 = vsub.f32 %v69, %v527
    %529 = vmatpush1.msra.mxu0 %v528
    %530 = vmatprep.subr.mxu0 0.0
    %v531 = vand.u32 %v70, 4294901760
    %v532 = vsub.f32 %v70, %v531
    %533 = vmatpush1.msra.mxu0 %v532
    %534 = vmatprep.subr.mxu0 0.0
    %v535 = vand.u32 %v71, 4294901760
    %v536 = vsub.f32 %v71, %v535
    %537 = vmatpush1.msra.mxu0 %v536
    %538 = vmatprep.subr.mxu0 0.0
    %v539 = vand.u32 %v72, 4294901760
    %v540 = vsub.f32 %v72, %v539
    %541 = vmatpush1.msra.mxu0 %v540
    %542 = vmatprep.subr.mxu0 0.0
    %v543 = vand.u32 %v73, 4294901760
    %v544 = vsub.f32 %v73, %v543
    %545 = vmatpush1.msra.mxu0 %v544
    %546 = vmatprep.subr.mxu0 0.0
    %v547 = vand.u32 %v74, 4294901760
    %v548 = vsub.f32 %v74, %v547
    %549 = vmatpush1.msra.mxu0 %v548
    %550 = vmatprep.subr.mxu0 0.0
    %v551 = vand.u32 %v75, 4294901760
    %v552 = vsub.f32 %v75, %v551
    %553 = vmatpush1.msra.mxu0 %v552
    %554 = vmatprep.subr.mxu0 0.0
    %v555 = vand.u32 %v76, 4294901760
    %v556 = vsub.f32 %v76, %v555
    %557 = vmatpush1.msra.mxu0 %v556
    %558 = vmatprep.subr.mxu0 0.0
    %v559 = vand.u32 %v77, 4294901760
    %v560 = vsub.f32 %v77, %v559
    %561 = vmatpush1.msra.mxu0 %v560
    %562 = vmatprep.subr.mxu0 0.0
    %v563 = vand.u32 %v78, 4294901760
    %v564 = vsub.f32 %v78, %v563
    %565 = vmatpush1.msra.mxu0 %v564
    %566 = vmatprep.subr.mxu0 0.0
    %v567 = vand.u32 %v79, 4294901760
    %v568 = vsub.f32 %v79, %v567
    %569 = vmatpush1.msra.mxu0 %v568
    %570 = vmatprep.subr.mxu0 0.0
    %v571 = vand.u32 %v80, 4294901760
    %v572 = vsub.f32 %v80, %v571
    %573 = vmatpush1.msra.mxu0 %v572
    %574 = vmatprep.subr.mxu0 0.0
    %v575 = vand.u32 %v81, 4294901760
    %v576 = vsub.f32 %v81, %v575
    %577 = vmatpush1.msra.mxu0 %v576
    %578 = vmatprep.subr.mxu0 0.0
    %v579 = vand.u32 %v82, 4294901760
    %v580 = vsub.f32 %v82, %v579
    %581 = vmatpush1.msra.mxu0 %v580
    %582 = vmatprep.subr.mxu0 0.0
    %v583 = vand.u32 %v83, 4294901760
    %v584 = vsub.f32 %v83, %v583
    %585 = vmatpush1.msra.mxu0 %v584
    %586 = vmatprep.subr.mxu0 0.0
    %v587 = vand.u32 %v84, 4294901760
    %v588 = vsub.f32 %v84, %v587
    %589 = vmatpush1.msra.mxu0 %v588
    %590 = vmatprep.subr.mxu0 0.0
    %v591 = vand.u32 %v85, 4294901760
    %v592 = vsub.f32 %v85, %v591
    %593 = vmatpush1.msra.mxu0 %v592
    %594 = vmatprep.subr.mxu0 0.0
    %v595 = vand.u32 %v86, 4294901760
    %v596 = vsub.f32 %v86, %v595
    %597 = vmatpush1.msra.mxu0 %v596
    %v598 = vand.u32 %v52, 4294901760
    %v599 = vsub.f32 %v52, %v598
    %600 = vmatprep.mubr.f32.mxu0 %v599
    %v601 = vand.u32 %v51, 4294901760
    %v602 = vsub.f32 %v51, %v601
    %603 = vmatmul.mubr.f32.gmra.mrb[0].mxu0 %v602
    %v604 = vpop.f32.mrb[0].mxu0
    %v605 = vadd.f32 %v467, %v604
    %v606 = vpop.f32.mrb[0].mxu0
    %607 = vdwg.mxu0
    %608 = vmatprep.subr.mxu0 0.0
    %v609 = vand.u32 %v55, 4294901760
    %610 = vmatpush1.msra.mxu0 %v609
    %611 = vmatprep.subr.mxu0 0.0
    %v612 = vand.u32 %v56, 4294901760
    %613 = vmatpush1.msra.mxu0 %v612
    %614 = vmatprep.subr.mxu0 0.0
    %v615 = vand.u32 %v57, 4294901760
    %616 = vmatpush1.msra.mxu0 %v615
    %617 = vmatprep.subr.mxu0 0.0
    %v618 = vand.u32 %v58, 4294901760
    %619 = vmatpush1.msra.mxu0 %v618
    %620 = vmatprep.subr.mxu0 0.0
    %v621 = vand.u32 %v59, 4294901760
    %622 = vmatpush1.msra.mxu0 %v621
    %623 = vmatprep.subr.mxu0 0.0
    %v624 = vand.u32 %v60, 4294901760
    %625 = vmatpush1.msra.mxu0 %v624
    %626 = vmatprep.subr.mxu0 0.0
    %v627 = vand.u32 %v61, 4294901760
    %628 = vmatpush1.msra.mxu0 %v627
    %629 = vmatprep.subr.mxu0 0.0
    %v630 = vand.u32 %v62, 4294901760
    %631 = vmatpush1.msra.mxu0 %v630
    %632 = vmatprep.subr.mxu0 0.0
    %v633 = vand.u32 %v63, 4294901760
    %634 = vmatpush1.msra.mxu0 %v633
    %635 = vmatprep.subr.mxu0 0.0
    %v636 = vand.u32 %v64, 4294901760
    %637 = vmatpush1.msra.mxu0 %v636
    %638 = vmatprep.subr.mxu0 0.0
    %v639 = vand.u32 %v65, 4294901760
    %640 = vmatpush1.msra.mxu0 %v639
    %641 = vmatprep.subr.mxu0 0.0
    %v642 = vand.u32 %v66, 4294901760
    %643 = vmatpush1.msra.mxu0 %v642
    %644 = vmatprep.subr.mxu0 0.0
    %v645 = vand.u32 %v67, 4294901760
    %646 = vmatpush1.msra.mxu0 %v645
    %647 = vmatprep.subr.mxu0 0.0
    %v648 = vand.u32 %v68, 4294901760
    %649 = vmatpush1.msra.mxu0 %v648
    %650 = vmatprep.subr.mxu0 0.0
    %v651 = vand.u32 %v69, 4294901760
    %652 = vmatpush1.msra.mxu0 %v651
    %653 = vmatprep.subr.mxu0 0.0
    %v654 = vand.u32 %v70, 4294901760
    %655 = vmatpush1.msra.mxu0 %v654
    %656 = vmatprep.subr.mxu0 0.0
    %v657 = vand.u32 %v71, 4294901760
    %658 = vmatpush1.msra.mxu0 %v657
    %659 = vmatprep.subr.mxu0 0.0
    %v660 = vand.u32 %v72, 4294901760
    %661 = vmatpush1.msra.mxu0 %v660
    %662 = vmatprep.subr.mxu0 0.0
    %v663 = vand.u32 %v73, 4294901760
    %664 = vmatpush1.msra.mxu0 %v663
    %665 = vmatprep.subr.mxu0 0.0
    %v666 = vand.u32 %v74, 4294901760
    %667 = vmatpush1.msra.mxu0 %v666
    %668 = vmatprep.subr.mxu0 0.0
    %v669 = vand.u32 %v75, 4294901760
    %670 = vmatpush1.msra.mxu0 %v669
    %671 = vmatprep.subr.mxu0 0.0
    %v672 = vand.u32 %v76, 4294901760
    %673 = vmatpush1.msra.mxu0 %v672
    %674 = vmatprep.subr.mxu0 0.0
    %v675 = vand.u32 %v77, 4294901760
    %676 = vmatpush1.msra.mxu0 %v675
    %677 = vmatprep.subr.mxu0 0.0
    %v678 = vand.u32 %v78, 4294901760
    %679 = vmatpush1.msra.mxu0 %v678
    %680 = vmatprep.subr.mxu0 0.0
    %v681 = vand.u32 %v79, 4294901760
    %682 = vmatpush1.msra.mxu0 %v681
    %683 = vmatprep.subr.mxu0 0.0
    %v684 = vand.u32 %v80, 4294901760
    %685 = vmatpush1.msra.mxu0 %v684
    %686 = vmatprep.subr.mxu0 0.0
    %v687 = vand.u32 %v81, 4294901760
    %688 = vmatpush1.msra.mxu0 %v687
    %689 = vmatprep.subr.mxu0 0.0
    %v690 = vand.u32 %v82, 4294901760
    %691 = vmatpush1.msra.mxu0 %v690
    %692 = vmatprep.subr.mxu0 0.0
    %v693 = vand.u32 %v83, 4294901760
    %694 = vmatpush1.msra.mxu0 %v693
    %695 = vmatprep.subr.mxu0 0.0
    %v696 = vand.u32 %v84, 4294901760
    %697 = vmatpush1.msra.mxu0 %v696
    %698 = vmatprep.subr.mxu0 0.0
    %v699 = vand.u32 %v85, 4294901760
    %700 = vmatpush1.msra.mxu0 %v699
    %701 = vmatprep.subr.mxu0 0.0
    %v702 = vand.u32 %v86, 4294901760
    %703 = vmatpush1.msra.mxu0 %v702
    %v704 = vand.u32 %v52, 4294901760
    %v705 = vsub.f32 %v52, %v704
    %v706 = vand.u32 %v705, 4294901760
    %707 = vmatprep.mubr.f32.mxu0 %v706
    %v708 = vand.u32 %v51, 4294901760
    %v709 = vsub.f32 %v51, %v708
    %v710 = vand.u32 %v709, 4294901760
    %711 = vmatmul.mubr.f32.gmra.mrb[0].mxu0 %v710
    %v712 = vpop.f32.mrb[0].mxu0
    %v713 = vadd.f32 %v605, %v712
    %v714 = vpop.f32.mrb[0].mxu0
    %715 = vdwg.mxu0
    %716 = vmatprep.subr.mxu0 0.0
    %v717 = vand.u32 %v55, 4294901760
    %v718 = vsub.f32 %v55, %v717
    %v719 = vand.u32 %v718, 4294901760
    %720 = vmatpush1.msra.mxu0 %v719
    %721 = vmatprep.subr.mxu0 0.0
    %v722 = vand.u32 %v56, 4294901760
    %v723 = vsub.f32 %v56, %v722
    %v724 = vand.u32 %v723, 4294901760
    %725 = vmatpush1.msra.mxu0 %v724
    %726 = vmatprep.subr.mxu0 0.0
    %v727 = vand.u32 %v57, 4294901760
    %v728 = vsub.f32 %v57, %v727
    %v729 = vand.u32 %v728, 4294901760
    %730 = vmatpush1.msra.mxu0 %v729
    %731 = vmatprep.subr.mxu0 0.0
    %v732 = vand.u32 %v58, 4294901760
    %v733 = vsub.f32 %v58, %v732
    %v734 = vand.u32 %v733, 4294901760
    %735 = vmatpush1.msra.mxu0 %v734
    %736 = vmatprep.subr.mxu0 0.0
    %v737 = vand.u32 %v59, 4294901760
    %v738 = vsub.f32 %v59, %v737
    %v739 = vand.u32 %v738, 4294901760
    %740 = vmatpush1.msra.mxu0 %v739
    %741 = vmatprep.subr.mxu0 0.0
    %v742 = vand.u32 %v60, 4294901760
    %v743 = vsub.f32 %v60, %v742
    %v744 = vand.u32 %v743, 4294901760
    %745 = vmatpush1.msra.mxu0 %v744
    %746 = vmatprep.subr.mxu0 0.0
    %v747 = vand.u32 %v61, 4294901760
    %v748 = vsub.f32 %v61, %v747
    %v749 = vand.u32 %v748, 4294901760
    %750 = vmatpush1.msra.mxu0 %v749
    %751 = vmatprep.subr.mxu0 0.0
    %v752 = vand.u32 %v62, 4294901760
    %v753 = vsub.f32 %v62, %v752
    %v754 = vand.u32 %v753, 4294901760
    %755 = vmatpush1.msra.mxu0 %v754
    %756 = vmatprep.subr.mxu0 0.0
    %v757 = vand.u32 %v63, 4294901760
    %v758 = vsub.f32 %v63, %v757
    %v759 = vand.u32 %v758, 4294901760
    %760 = vmatpush1.msra.mxu0 %v759
    %761 = vmatprep.subr.mxu0 0.0
    %v762 = vand.u32 %v64, 4294901760
    %v763 = vsub.f32 %v64, %v762
    %v764 = vand.u32 %v763, 4294901760
    %765 = vmatpush1.msra.mxu0 %v764
    %766 = vmatprep.subr.mxu0 0.0
    %v767 = vand.u32 %v65, 4294901760
    %v768 = vsub.f32 %v65, %v767
    %v769 = vand.u32 %v768, 4294901760
    %770 = vmatpush1.msra.mxu0 %v769
    %771 = vmatprep.subr.mxu0 0.0
    %v772 = vand.u32 %v66, 4294901760
    %v773 = vsub.f32 %v66, %v772
    %v774 = vand.u32 %v773, 4294901760
    %775 = vmatpush1.msra.mxu0 %v774
    %776 = vmatprep.subr.mxu0 0.0
    %v777 = vand.u32 %v67, 4294901760
    %v778 = vsub.f32 %v67, %v777
    %v779 = vand.u32 %v778, 4294901760
    %780 = vmatpush1.msra.mxu0 %v779
    %781 = vmatprep.subr.mxu0 0.0
    %v782 = vand.u32 %v68, 4294901760
    %v783 = vsub.f32 %v68, %v782
    %v784 = vand.u32 %v783, 4294901760
    %785 = vmatpush1.msra.mxu0 %v784
    %786 = vmatprep.subr.mxu0 0.0
    %v787 = vand.u32 %v69, 4294901760
    %v788 = vsub.f32 %v69, %v787
    %v789 = vand.u32 %v788, 4294901760
    %790 = vmatpush1.msra.mxu0 %v789
    %791 = vmatprep.subr.mxu0 0.0
    %v792 = vand.u32 %v70, 4294901760
    %v793 = vsub.f32 %v70, %v792
    %v794 = vand.u32 %v793, 4294901760
    %795 = vmatpush1.msra.mxu0 %v794
    %796 = vmatprep.subr.mxu0 0.0
    %v797 = vand.u32 %v71, 4294901760
    %v798 = vsub.f32 %v71, %v797
    %v799 = vand.u32 %v798, 4294901760
    %800 = vmatpush1.msra.mxu0 %v799
    %801 = vmatprep.subr.mxu0 0.0
    %v802 = vand.u32 %v72, 4294901760
    %v803 = vsub.f32 %v72, %v802
    %v804 = vand.u32 %v803, 4294901760
    %805 = vmatpush1.msra.mxu0 %v804
    %806 = vmatprep.subr.mxu0 0.0
    %v807 = vand.u32 %v73, 4294901760
    %v808 = vsub.f32 %v73, %v807
    %v809 = vand.u32 %v808, 4294901760
    %810 = vmatpush1.msra.mxu0 %v809
    %811 = vmatprep.subr.mxu0 0.0
    %v812 = vand.u32 %v74, 4294901760
    %v813 = vsub.f32 %v74, %v812
    %v814 = vand.u32 %v813, 4294901760
    %815 = vmatpush1.msra.mxu0 %v814
    %816 = vmatprep.subr.mxu0 0.0
    %v817 = vand.u32 %v75, 4294901760
    %v818 = vsub.f32 %v75, %v817
    %v819 = vand.u32 %v818, 4294901760
    %820 = vmatpush1.msra.mxu0 %v819
    %821 = vmatprep.subr.mxu0 0.0
    %v822 = vand.u32 %v76, 4294901760
    %v823 = vsub.f32 %v76, %v822
    %v824 = vand.u32 %v823, 4294901760
    %825 = vmatpush1.msra.mxu0 %v824
    %826 = vmatprep.subr.mxu0 0.0
    %v827 = vand.u32 %v77, 4294901760
    %v828 = vsub.f32 %v77, %v827
    %v829 = vand.u32 %v828, 4294901760
    %830 = vmatpush1.msra.mxu0 %v829
    %831 = vmatprep.subr.mxu0 0.0
    %v832 = vand.u32 %v78, 4294901760
    %v833 = vsub.f32 %v78, %v832
    %v834 = vand.u32 %v833, 4294901760
    %835 = vmatpush1.msra.mxu0 %v834
    %836 = vmatprep.subr.mxu0 0.0
    %v837 = vand.u32 %v79, 4294901760
    %v838 = vsub.f32 %v79, %v837
    %v839 = vand.u32 %v838, 4294901760
    %840 = vmatpush1.msra.mxu0 %v839
    %841 = vmatprep.subr.mxu0 0.0
    %v842 = vand.u32 %v80, 4294901760
    %v843 = vsub.f32 %v80, %v842
    %v844 = vand.u32 %v843, 4294901760
    %845 = vmatpush1.msra.mxu0 %v844
    %846 = vmatprep.subr.mxu0 0.0
    %v847 = vand.u32 %v81, 4294901760
    %v848 = vsub.f32 %v81, %v847
    %v849 = vand.u32 %v848, 4294901760
    %850 = vmatpush1.msra.mxu0 %v849
    %851 = vmatprep.subr.mxu0 0.0
    %v852 = vand.u32 %v82, 4294901760
    %v853 = vsub.f32 %v82, %v852
    %v854 = vand.u32 %v853, 4294901760
    %855 = vmatpush1.msra.mxu0 %v854
    %856 = vmatprep.subr.mxu0 0.0
    %v857 = vand.u32 %v83, 4294901760
    %v858 = vsub.f32 %v83, %v857
    %v859 = vand.u32 %v858, 4294901760
    %860 = vmatpush1.msra.mxu0 %v859
    %861 = vmatprep.subr.mxu0 0.0
    %v862 = vand.u32 %v84, 4294901760
    %v863 = vsub.f32 %v84, %v862
    %v864 = vand.u32 %v863, 4294901760
    %865 = vmatpush1.msra.mxu0 %v864
    %866 = vmatprep.subr.mxu0 0.0
    %v867 = vand.u32 %v85, 4294901760
    %v868 = vsub.f32 %v85, %v867
    %v869 = vand.u32 %v868, 4294901760
    %870 = vmatpush1.msra.mxu0 %v869
    %871 = vmatprep.subr.mxu0 0.0
    %v872 = vand.u32 %v86, 4294901760
    %v873 = vsub.f32 %v86, %v872
    %v874 = vand.u32 %v873, 4294901760
    %875 = vmatpush1.msra.mxu0 %v874
    %v876 = vand.u32 %v52, 4294901760
    %877 = vmatprep.mubr.f32.mxu0 %v876
    %v878 = vand.u32 %v51, 4294901760
    %879 = vmatmul.mubr.f32.gmra.mrb[0].mxu0 %v878
    %v880 = vpop.f32.mrb[0].mxu0
    %v881 = vadd.f32 %v713, %v880
    %v882 = vpop.f32.mrb[0].mxu0
    %883 = vdwg.mxu0
    %884 = vmatprep.subr.mxu0 0.0
    %v885 = vand.u32 %v55, 4294901760
    %886 = vmatpush1.msra.mxu0 %v885
    %887 = vmatprep.subr.mxu0 0.0
    %v888 = vand.u32 %v56, 4294901760
    %889 = vmatpush1.msra.mxu0 %v888
    %890 = vmatprep.subr.mxu0 0.0
    %v891 = vand.u32 %v57, 4294901760
    %892 = vmatpush1.msra.mxu0 %v891
    %893 = vmatprep.subr.mxu0 0.0
    %v894 = vand.u32 %v58, 4294901760
    %895 = vmatpush1.msra.mxu0 %v894
    %896 = vmatprep.subr.mxu0 0.0
    %v897 = vand.u32 %v59, 4294901760
    %898 = vmatpush1.msra.mxu0 %v897
    %899 = vmatprep.subr.mxu0 0.0
    %v900 = vand.u32 %v60, 4294901760
    %901 = vmatpush1.msra.mxu0 %v900
    %902 = vmatprep.subr.mxu0 0.0
    %v903 = vand.u32 %v61, 4294901760
    %904 = vmatpush1.msra.mxu0 %v903
    %905 = vmatprep.subr.mxu0 0.0
    %v906 = vand.u32 %v62, 4294901760
    %907 = vmatpush1.msra.mxu0 %v906
    %908 = vmatprep.subr.mxu0 0.0
    %v909 = vand.u32 %v63, 4294901760
    %910 = vmatpush1.msra.mxu0 %v909
    %911 = vmatprep.subr.mxu0 0.0
    %v912 = vand.u32 %v64, 4294901760
    %913 = vmatpush1.msra.mxu0 %v912
    %914 = vmatprep.subr.mxu0 0.0
    %v915 = vand.u32 %v65, 4294901760
    %916 = vmatpush1.msra.mxu0 %v915
    %917 = vmatprep.subr.mxu0 0.0
    %v918 = vand.u32 %v66, 4294901760
    %919 = vmatpush1.msra.mxu0 %v918
    %920 = vmatprep.subr.mxu0 0.0
    %v921 = vand.u32 %v67, 4294901760
    %922 = vmatpush1.msra.mxu0 %v921
    %923 = vmatprep.subr.mxu0 0.0
    %v924 = vand.u32 %v68, 4294901760
    %925 = vmatpush1.msra.mxu0 %v924
    %926 = vmatprep.subr.mxu0 0.0
    %v927 = vand.u32 %v69, 4294901760
    %928 = vmatpush1.msra.mxu0 %v927
    %929 = vmatprep.subr.mxu0 0.0
    %v930 = vand.u32 %v70, 4294901760
    %931 = vmatpush1.msra.mxu0 %v930
    %932 = vmatprep.subr.mxu0 0.0
    %v933 = vand.u32 %v71, 4294901760
    %934 = vmatpush1.msra.mxu0 %v933
    %935 = vmatprep.subr.mxu0 0.0
    %v936 = vand.u32 %v72, 4294901760
    %937 = vmatpush1.msra.mxu0 %v936
    %938 = vmatprep.subr.mxu0 0.0
    %v939 = vand.u32 %v73, 4294901760
    %940 = vmatpush1.msra.mxu0 %v939
    %941 = vmatprep.subr.mxu0 0.0
    %v942 = vand.u32 %v74, 4294901760
    %943 = vmatpush1.msra.mxu0 %v942
    %944 = vmatprep.subr.mxu0 0.0
    %v945 = vand.u32 %v75, 4294901760
    %946 = vmatpush1.msra.mxu0 %v945
    %947 = vmatprep.subr.mxu0 0.0
    %v948 = vand.u32 %v76, 4294901760
    %949 = vmatpush1.msra.mxu0 %v948
    %950 = vmatprep.subr.mxu0 0.0
    %v951 = vand.u32 %v77, 4294901760
    %952 = vmatpush1.msra.mxu0 %v951
    %953 = vmatprep.subr.mxu0 0.0
    %v954 = vand.u32 %v78, 4294901760
    %955 = vmatpush1.msra.mxu0 %v954
    %956 = vmatprep.subr.mxu0 0.0
    %v957 = vand.u32 %v79, 4294901760
    %958 = vmatpush1.msra.mxu0 %v957
    %959 = vmatprep.subr.mxu0 0.0
    %v960 = vand.u32 %v80, 4294901760
    %961 = vmatpush1.msra.mxu0 %v960
    %962 = vmatprep.subr.mxu0 0.0
    %v963 = vand.u32 %v81, 4294901760
    %964 = vmatpush1.msra.mxu0 %v963
    %965 = vmatprep.subr.mxu0 0.0
    %v966 = vand.u32 %v82, 4294901760
    %967 = vmatpush1.msra.mxu0 %v966
    %968 = vmatprep.subr.mxu0 0.0
    %v969 = vand.u32 %v83, 4294901760
    %970 = vmatpush1.msra.mxu0 %v969
    %971 = vmatprep.subr.mxu0 0.0
    %v972 = vand.u32 %v84, 4294901760
    %973 = vmatpush1.msra.mxu0 %v972
    %974 = vmatprep.subr.mxu0 0.0
    %v975 = vand.u32 %v85, 4294901760
    %976 = vmatpush1.msra.mxu0 %v975
    %977 = vmatprep.subr.mxu0 0.0
    %v978 = vand.u32 %v86, 4294901760
    %979 = vmatpush1.msra.mxu0 %v978
    %v980 = vand.u32 %v52, 4294901760
    %981 = vmatprep.mubr.f32.mxu0 %v980
    %v982 = vand.u32 %v51, 4294901760
    %983 = vmatmul.mubr.f32.gmra.mrb[0].mxu0 %v982
    %v984 = vpop.f32.mrb[0].mxu0
    %v985 = vadd.f32 %v881, %v984
    %v986 = vpop.f32.mrb[0].mxu0
    %987 = vdwg.mxu0
    %988 = vmatprep.subr.mxu0 0.0
    %v989 = vand.u32 %v87, 4294901760
    %990 = vmatpush1.msra.mxu0 %v989
    %991 = vmatprep.subr.mxu0 0.0
    %v992 = vand.u32 %v88, 4294901760
    %993 = vmatpush1.msra.mxu0 %v992
    %994 = vmatprep.subr.mxu0 0.0
    %v995 = vand.u32 %v89, 4294901760
    %996 = vmatpush1.msra.mxu0 %v995
    %997 = vmatprep.subr.mxu0 0.0
    %v998 = vand.u32 %v90, 4294901760
    %999 = vmatpush1.msra.mxu0 %v998
    %1000 = vmatprep.subr.mxu0 0.0
    %v1001 = vand.u32 %v91, 4294901760
    %1002 = vmatpush1.msra.mxu0 %v1001
    %1003 = vmatprep.subr.mxu0 0.0
    %v1004 = vand.u32 %v92, 4294901760
    %1005 = vmatpush1.msra.mxu0 %v1004
    %1006 = vmatprep.subr.mxu0 0.0
    %v1007 = vand.u32 %v93, 4294901760
    %1008 = vmatpush1.msra.mxu0 %v1007
    %1009 = vmatprep.subr.mxu0 0.0
    %v1010 = vand.u32 %v94, 4294901760
    %1011 = vmatpush1.msra.mxu0 %v1010
    %1012 = vmatprep.subr.mxu0 0.0
    %v1013 = vand.u32 %v95, 4294901760
    %1014 = vmatpush1.msra.mxu0 %v1013
    %1015 = vmatprep.subr.mxu0 0.0
    %v1016 = vand.u32 %v96, 4294901760
    %1017 = vmatpush1.msra.mxu0 %v1016
    %1018 = vmatprep.subr.mxu0 0.0
    %v1019 = vand.u32 %v97, 4294901760
    %1020 = vmatpush1.msra.mxu0 %v1019
    %1021 = vmatprep.subr.mxu0 0.0
    %v1022 = vand.u32 %v98, 4294901760
    %1023 = vmatpush1.msra.mxu0 %v1022
    %1024 = vmatprep.subr.mxu0 0.0
    %v1025 = vand.u32 %v99, 4294901760
    %1026 = vmatpush1.msra.mxu0 %v1025
    %1027 = vmatprep.subr.mxu0 0.0
    %v1028 = vand.u32 %v100, 4294901760
    %1029 = vmatpush1.msra.mxu0 %v1028
    %1030 = vmatprep.subr.mxu0 0.0
    %v1031 = vand.u32 %v101, 4294901760
    %1032 = vmatpush1.msra.mxu0 %v1031
    %1033 = vmatprep.subr.mxu0 0.0
    %v1034 = vand.u32 %v102, 4294901760
    %1035 = vmatpush1.msra.mxu0 %v1034
    %1036 = vmatprep.subr.mxu0 0.0
    %v1037 = vand.u32 %v103, 4294901760
    %1038 = vmatpush1.msra.mxu0 %v1037
    %1039 = vmatprep.subr.mxu0 0.0
    %v1040 = vand.u32 %v104, 4294901760
    %1041 = vmatpush1.msra.mxu0 %v1040
    %1042 = vmatprep.subr.mxu0 0.0
    %v1043 = vand.u32 %v105, 4294901760
    %1044 = vmatpush1.msra.mxu0 %v1043
    %1045 = vmatprep.subr.mxu0 0.0
    %v1046 = vand.u32 %v106, 4294901760
    %1047 = vmatpush1.msra.mxu0 %v1046
    %1048 = vmatprep.subr.mxu0 0.0
    %v1049 = vand.u32 %v107, 4294901760
    %1050 = vmatpush1.msra.mxu0 %v1049
    %1051 = vmatprep.subr.mxu0 0.0
    %v1052 = vand.u32 %v108, 4294901760
    %1053 = vmatpush1.msra.mxu0 %v1052
    %1054 = vmatprep.subr.mxu0 0.0
    %v1055 = vand.u32 %v109, 4294901760
    %1056 = vmatpush1.msra.mxu0 %v1055
    %1057 = vmatprep.subr.mxu0 0.0
    %v1058 = vand.u32 %v110, 4294901760
    %1059 = vmatpush1.msra.mxu0 %v1058
    %1060 = vmatprep.subr.mxu0 0.0
    %v1061 = vand.u32 %v111, 4294901760
    %1062 = vmatpush1.msra.mxu0 %v1061
    %1063 = vmatprep.subr.mxu0 0.0
    %v1064 = vand.u32 %v112, 4294901760
    %1065 = vmatpush1.msra.mxu0 %v1064
    %1066 = vmatprep.subr.mxu0 0.0
    %v1067 = vand.u32 %v113, 4294901760
    %1068 = vmatpush1.msra.mxu0 %v1067
    %1069 = vmatprep.subr.mxu0 0.0
    %v1070 = vand.u32 %v114, 4294901760
    %1071 = vmatpush1.msra.mxu0 %v1070
    %1072 = vmatprep.subr.mxu0 0.0
    %v1073 = vand.u32 %v115, 4294901760
    %1074 = vmatpush1.msra.mxu0 %v1073
    %1075 = vmatprep.subr.mxu0 0.0
    %v1076 = vand.u32 %v116, 4294901760
    %1077 = vmatpush1.msra.mxu0 %v1076
    %1078 = vmatprep.subr.mxu0 0.0
    %v1079 = vand.u32 %v117, 4294901760
    %1080 = vmatpush1.msra.mxu0 %v1079
    %1081 = vmatprep.subr.mxu0 0.0
    %v1082 = vand.u32 %v118, 4294901760
    %1083 = vmatpush1.msra.mxu0 %v1082
    %v1084 = vand.u32 %v54, 4294901760
    %v1085 = vsub.f32 %v54, %v1084
    %v1086 = vand.u32 %v1085, 4294901760
    %v1087 = vsub.f32 %v1085, %v1086
    %v1088 = vand.u32 %v1087, 4294901760
    %1089 = vmatprep.mubr.f32.mxu0 %v1088
    %v1090 = vand.u32 %v53, 4294901760
    %v1091 = vsub.f32 %v53, %v1090
    %v1092 = vand.u32 %v1091, 4294901760
    %v1093 = vsub.f32 %v1091, %v1092
    %v1094 = vand.u32 %v1093, 4294901760
    %1095 = vmatmul.mubr.f32.gmra.mrb[0].mxu0 %v1094
    %v1096 = vpop.f32.mrb[0].mxu0
    %v1097 = vadd.f32 %v985, %v1096
    %v1098 = vpop.f32.mrb[0].mxu0
    %1099 = vdwg.mxu0
    %1100 = vmatprep.subr.mxu0 0.0
    %v1101 = vand.u32 %v87, 4294901760
    %v1102 = vsub.f32 %v87, %v1101
    %v1103 = vand.u32 %v1102, 4294901760
    %v1104 = vsub.f32 %v1102, %v1103
    %v1105 = vand.u32 %v1104, 4294901760
    %1106 = vmatpush1.msra.mxu0 %v1105
    %1107 = vmatprep.subr.mxu0 0.0
    %v1108 = vand.u32 %v88, 4294901760
    %v1109 = vsub.f32 %v88, %v1108
    %v1110 = vand.u32 %v1109, 4294901760
    %v1111 = vsub.f32 %v1109, %v1110
    %v1112 = vand.u32 %v1111, 4294901760
    %1113 = vmatpush1.msra.mxu0 %v1112
    %1114 = vmatprep.subr.mxu0 0.0
    %v1115 = vand.u32 %v89, 4294901760
    %v1116 = vsub.f32 %v89, %v1115
    %v1117 = vand.u32 %v1116, 4294901760
    %v1118 = vsub.f32 %v1116, %v1117
    %v1119 = vand.u32 %v1118, 4294901760
    %1120 = vmatpush1.msra.mxu0 %v1119
    %1121 = vmatprep.subr.mxu0 0.0
    %v1122 = vand.u32 %v90, 4294901760
    %v1123 = vsub.f32 %v90, %v1122
    %v1124 = vand.u32 %v1123, 4294901760
    %v1125 = vsub.f32 %v1123, %v1124
    %v1126 = vand.u32 %v1125, 4294901760
    %1127 = vmatpush1.msra.mxu0 %v1126
    %1128 = vmatprep.subr.mxu0 0.0
    %v1129 = vand.u32 %v91, 4294901760
    %v1130 = vsub.f32 %v91, %v1129
    %v1131 = vand.u32 %v1130, 4294901760
    %v1132 = vsub.f32 %v1130, %v1131
    %v1133 = vand.u32 %v1132, 4294901760
    %1134 = vmatpush1.msra.mxu0 %v1133
    %1135 = vmatprep.subr.mxu0 0.0
    %v1136 = vand.u32 %v92, 4294901760
    %v1137 = vsub.f32 %v92, %v1136
    %v1138 = vand.u32 %v1137, 4294901760
    %v1139 = vsub.f32 %v1137, %v1138
    %v1140 = vand.u32 %v1139, 4294901760
    %1141 = vmatpush1.msra.mxu0 %v1140
    %1142 = vmatprep.subr.mxu0 0.0
    %v1143 = vand.u32 %v93, 4294901760
    %v1144 = vsub.f32 %v93, %v1143
    %v1145 = vand.u32 %v1144, 4294901760
    %v1146 = vsub.f32 %v1144, %v1145
    %v1147 = vand.u32 %v1146, 4294901760
    %1148 = vmatpush1.msra.mxu0 %v1147
    %1149 = vmatprep.subr.mxu0 0.0
    %v1150 = vand.u32 %v94, 4294901760
    %v1151 = vsub.f32 %v94, %v1150
    %v1152 = vand.u32 %v1151, 4294901760
    %v1153 = vsub.f32 %v1151, %v1152
    %v1154 = vand.u32 %v1153, 4294901760
    %1155 = vmatpush1.msra.mxu0 %v1154
    %1156 = vmatprep.subr.mxu0 0.0
    %v1157 = vand.u32 %v95, 4294901760
    %v1158 = vsub.f32 %v95, %v1157
    %v1159 = vand.u32 %v1158, 4294901760
    %v1160 = vsub.f32 %v1158, %v1159
    %v1161 = vand.u32 %v1160, 4294901760
    %1162 = vmatpush1.msra.mxu0 %v1161
    %1163 = vmatprep.subr.mxu0 0.0
    %v1164 = vand.u32 %v96, 4294901760
    %v1165 = vsub.f32 %v96, %v1164
    %v1166 = vand.u32 %v1165, 4294901760
    %v1167 = vsub.f32 %v1165, %v1166
    %v1168 = vand.u32 %v1167, 4294901760
    %1169 = vmatpush1.msra.mxu0 %v1168
    %1170 = vmatprep.subr.mxu0 0.0
    %v1171 = vand.u32 %v97, 4294901760
    %v1172 = vsub.f32 %v97, %v1171
    %v1173 = vand.u32 %v1172, 4294901760
    %v1174 = vsub.f32 %v1172, %v1173
    %v1175 = vand.u32 %v1174, 4294901760
    %1176 = vmatpush1.msra.mxu0 %v1175
    %1177 = vmatprep.subr.mxu0 0.0
    %v1178 = vand.u32 %v98, 4294901760
    %v1179 = vsub.f32 %v98, %v1178
    %v1180 = vand.u32 %v1179, 4294901760
    %v1181 = vsub.f32 %v1179, %v1180
    %v1182 = vand.u32 %v1181, 4294901760
    %1183 = vmatpush1.msra.mxu0 %v1182
    %1184 = vmatprep.subr.mxu0 0.0
    %v1185 = vand.u32 %v99, 4294901760
    %v1186 = vsub.f32 %v99, %v1185
    %v1187 = vand.u32 %v1186, 4294901760
    %v1188 = vsub.f32 %v1186, %v1187
    %v1189 = vand.u32 %v1188, 4294901760
    %1190 = vmatpush1.msra.mxu0 %v1189
    %1191 = vmatprep.subr.mxu0 0.0
    %v1192 = vand.u32 %v100, 4294901760
    %v1193 = vsub.f32 %v100, %v1192
    %v1194 = vand.u32 %v1193, 4294901760
    %v1195 = vsub.f32 %v1193, %v1194
    %v1196 = vand.u32 %v1195, 4294901760
    %1197 = vmatpush1.msra.mxu0 %v1196
    %1198 = vmatprep.subr.mxu0 0.0
    %v1199 = vand.u32 %v101, 4294901760
    %v1200 = vsub.f32 %v101, %v1199
    %v1201 = vand.u32 %v1200, 4294901760
    %v1202 = vsub.f32 %v1200, %v1201
    %v1203 = vand.u32 %v1202, 4294901760
    %1204 = vmatpush1.msra.mxu0 %v1203
    %1205 = vmatprep.subr.mxu0 0.0
    %v1206 = vand.u32 %v102, 4294901760
    %v1207 = vsub.f32 %v102, %v1206
    %v1208 = vand.u32 %v1207, 4294901760
    %v1209 = vsub.f32 %v1207, %v1208
    %v1210 = vand.u32 %v1209, 4294901760
    %1211 = vmatpush1.msra.mxu0 %v1210
    %1212 = vmatprep.subr.mxu0 0.0
    %v1213 = vand.u32 %v103, 4294901760
    %v1214 = vsub.f32 %v103, %v1213
    %v1215 = vand.u32 %v1214, 4294901760
    %v1216 = vsub.f32 %v1214, %v1215
    %v1217 = vand.u32 %v1216, 4294901760
    %1218 = vmatpush1.msra.mxu0 %v1217
    %1219 = vmatprep.subr.mxu0 0.0
    %v1220 = vand.u32 %v104, 4294901760
    %v1221 = vsub.f32 %v104, %v1220
    %v1222 = vand.u32 %v1221, 4294901760
    %v1223 = vsub.f32 %v1221, %v1222
    %v1224 = vand.u32 %v1223, 4294901760
    %1225 = vmatpush1.msra.mxu0 %v1224
    %1226 = vmatprep.subr.mxu0 0.0
    %v1227 = vand.u32 %v105, 4294901760
    %v1228 = vsub.f32 %v105, %v1227
    %v1229 = vand.u32 %v1228, 4294901760
    %v1230 = vsub.f32 %v1228, %v1229
    %v1231 = vand.u32 %v1230, 4294901760
    %1232 = vmatpush1.msra.mxu0 %v1231
    %1233 = vmatprep.subr.mxu0 0.0
    %v1234 = vand.u32 %v106, 4294901760
    %v1235 = vsub.f32 %v106, %v1234
    %v1236 = vand.u32 %v1235, 4294901760
    %v1237 = vsub.f32 %v1235, %v1236
    %v1238 = vand.u32 %v1237, 4294901760
    %1239 = vmatpush1.msra.mxu0 %v1238
    %1240 = vmatprep.subr.mxu0 0.0
    %v1241 = vand.u32 %v107, 4294901760
    %v1242 = vsub.f32 %v107, %v1241
    %v1243 = vand.u32 %v1242, 4294901760
    %v1244 = vsub.f32 %v1242, %v1243
    %v1245 = vand.u32 %v1244, 4294901760
    %1246 = vmatpush1.msra.mxu0 %v1245
    %1247 = vmatprep.subr.mxu0 0.0
    %v1248 = vand.u32 %v108, 4294901760
    %v1249 = vsub.f32 %v108, %v1248
    %v1250 = vand.u32 %v1249, 4294901760
    %v1251 = vsub.f32 %v1249, %v1250
    %v1252 = vand.u32 %v1251, 4294901760
    %1253 = vmatpush1.msra.mxu0 %v1252
    %1254 = vmatprep.subr.mxu0 0.0
    %v1255 = vand.u32 %v109, 4294901760
    %v1256 = vsub.f32 %v109, %v1255
    %v1257 = vand.u32 %v1256, 4294901760
    %v1258 = vsub.f32 %v1256, %v1257
    %v1259 = vand.u32 %v1258, 4294901760
    %1260 = vmatpush1.msra.mxu0 %v1259
    %1261 = vmatprep.subr.mxu0 0.0
    %v1262 = vand.u32 %v110, 4294901760
    %v1263 = vsub.f32 %v110, %v1262
    %v1264 = vand.u32 %v1263, 4294901760
    %v1265 = vsub.f32 %v1263, %v1264
    %v1266 = vand.u32 %v1265, 4294901760
    %1267 = vmatpush1.msra.mxu0 %v1266
    %1268 = vmatprep.subr.mxu0 0.0
    %v1269 = vand.u32 %v111, 4294901760
    %v1270 = vsub.f32 %v111, %v1269
    %v1271 = vand.u32 %v1270, 4294901760
    %v1272 = vsub.f32 %v1270, %v1271
    %v1273 = vand.u32 %v1272, 4294901760
    %1274 = vmatpush1.msra.mxu0 %v1273
    %1275 = vmatprep.subr.mxu0 0.0
    %v1276 = vand.u32 %v112, 4294901760
    %v1277 = vsub.f32 %v112, %v1276
    %v1278 = vand.u32 %v1277, 4294901760
    %v1279 = vsub.f32 %v1277, %v1278
    %v1280 = vand.u32 %v1279, 4294901760
    %1281 = vmatpush1.msra.mxu0 %v1280
    %1282 = vmatprep.subr.mxu0 0.0
    %v1283 = vand.u32 %v113, 4294901760
    %v1284 = vsub.f32 %v113, %v1283
    %v1285 = vand.u32 %v1284, 4294901760
    %v1286 = vsub.f32 %v1284, %v1285
    %v1287 = vand.u32 %v1286, 4294901760
    %1288 = vmatpush1.msra.mxu0 %v1287
    %1289 = vmatprep.subr.mxu0 0.0
    %v1290 = vand.u32 %v114, 4294901760
    %v1291 = vsub.f32 %v114, %v1290
    %v1292 = vand.u32 %v1291, 4294901760
    %v1293 = vsub.f32 %v1291, %v1292
    %v1294 = vand.u32 %v1293, 4294901760
    %1295 = vmatpush1.msra.mxu0 %v1294
    %1296 = vmatprep.subr.mxu0 0.0
    %v1297 = vand.u32 %v115, 4294901760
    %v1298 = vsub.f32 %v115, %v1297
    %v1299 = vand.u32 %v1298, 4294901760
    %v1300 = vsub.f32 %v1298, %v1299
    %v1301 = vand.u32 %v1300, 4294901760
    %1302 = vmatpush1.msra.mxu0 %v1301
    %1303 = vmatprep.subr.mxu0 0.0
    %v1304 = vand.u32 %v116, 4294901760
    %v1305 = vsub.f32 %v116, %v1304
    %v1306 = vand.u32 %v1305, 4294901760
    %v1307 = vsub.f32 %v1305, %v1306
    %v1308 = vand.u32 %v1307, 4294901760
    %1309 = vmatpush1.msra.mxu0 %v1308
    %1310 = vmatprep.subr.mxu0 0.0
    %v1311 = vand.u32 %v117, 4294901760
    %v1312 = vsub.f32 %v117, %v1311
    %v1313 = vand.u32 %v1312, 4294901760
    %v1314 = vsub.f32 %v1312, %v1313
    %v1315 = vand.u32 %v1314, 4294901760
    %1316 = vmatpush1.msra.mxu0 %v1315
    %1317 = vmatprep.subr.mxu0 0.0
    %v1318 = vand.u32 %v118, 4294901760
    %v1319 = vsub.f32 %v118, %v1318
    %v1320 = vand.u32 %v1319, 4294901760
    %v1321 = vsub.f32 %v1319, %v1320
    %v1322 = vand.u32 %v1321, 4294901760
    %1323 = vmatpush1.msra.mxu0 %v1322
    %v1324 = vand.u32 %v54, 4294901760
    %1325 = vmatprep.mubr.f32.mxu0 %v1324
    %v1326 = vand.u32 %v53, 4294901760
    %1327 = vmatmul.mubr.f32.gmra.mrb[0].mxu0 %v1326
    %v1328 = vpop.f32.mrb[0].mxu0
    %v1329 = vadd.f32 %v1097, %v1328
    %v1330 = vpop.f32.mrb[0].mxu0
    %1331 = vdwg.mxu0
    %1332 = vmatprep.subr.mxu0 0.0
    %v1333 = vand.u32 %v87, 4294901760
    %v1334 = vsub.f32 %v87, %v1333
    %1335 = vmatpush1.msra.mxu0 %v1334
    %1336 = vmatprep.subr.mxu0 0.0
    %v1337 = vand.u32 %v88, 4294901760
    %v1338 = vsub.f32 %v88, %v1337
    %1339 = vmatpush1.msra.mxu0 %v1338
    %1340 = vmatprep.subr.mxu0 0.0
    %v1341 = vand.u32 %v89, 4294901760
    %v1342 = vsub.f32 %v89, %v1341
    %1343 = vmatpush1.msra.mxu0 %v1342
    %1344 = vmatprep.subr.mxu0 0.0
    %v1345 = vand.u32 %v90, 4294901760
    %v1346 = vsub.f32 %v90, %v1345
    %1347 = vmatpush1.msra.mxu0 %v1346
    %1348 = vmatprep.subr.mxu0 0.0
    %v1349 = vand.u32 %v91, 4294901760
    %v1350 = vsub.f32 %v91, %v1349
    %1351 = vmatpush1.msra.mxu0 %v1350
    %1352 = vmatprep.subr.mxu0 0.0
    %v1353 = vand.u32 %v92, 4294901760
    %v1354 = vsub.f32 %v92, %v1353
    %1355 = vmatpush1.msra.mxu0 %v1354
    %1356 = vmatprep.subr.mxu0 0.0
    %v1357 = vand.u32 %v93, 4294901760
    %v1358 = vsub.f32 %v93, %v1357
    %1359 = vmatpush1.msra.mxu0 %v1358
    %1360 = vmatprep.subr.mxu0 0.0
    %v1361 = vand.u32 %v94, 4294901760
    %v1362 = vsub.f32 %v94, %v1361
    %1363 = vmatpush1.msra.mxu0 %v1362
    %1364 = vmatprep.subr.mxu0 0.0
    %v1365 = vand.u32 %v95, 4294901760
    %v1366 = vsub.f32 %v95, %v1365
    %1367 = vmatpush1.msra.mxu0 %v1366
    %1368 = vmatprep.subr.mxu0 0.0
    %v1369 = vand.u32 %v96, 4294901760
    %v1370 = vsub.f32 %v96, %v1369
    %1371 = vmatpush1.msra.mxu0 %v1370
    %1372 = vmatprep.subr.mxu0 0.0
    %v1373 = vand.u32 %v97, 4294901760
    %v1374 = vsub.f32 %v97, %v1373
    %1375 = vmatpush1.msra.mxu0 %v1374
    %1376 = vmatprep.subr.mxu0 0.0
    %v1377 = vand.u32 %v98, 4294901760
    %v1378 = vsub.f32 %v98, %v1377
    %1379 = vmatpush1.msra.mxu0 %v1378
    %1380 = vmatprep.subr.mxu0 0.0
    %v1381 = vand.u32 %v99, 4294901760
    %v1382 = vsub.f32 %v99, %v1381
    %1383 = vmatpush1.msra.mxu0 %v1382
    %1384 = vmatprep.subr.mxu0 0.0
    %v1385 = vand.u32 %v100, 4294901760
    %v1386 = vsub.f32 %v100, %v1385
    %1387 = vmatpush1.msra.mxu0 %v1386
    %1388 = vmatprep.subr.mxu0 0.0
    %v1389 = vand.u32 %v101, 4294901760
    %v1390 = vsub.f32 %v101, %v1389
    %1391 = vmatpush1.msra.mxu0 %v1390
    %1392 = vmatprep.subr.mxu0 0.0
    %v1393 = vand.u32 %v102, 4294901760
    %v1394 = vsub.f32 %v102, %v1393
    %1395 = vmatpush1.msra.mxu0 %v1394
    %1396 = vmatprep.subr.mxu0 0.0
    %v1397 = vand.u32 %v103, 4294901760
    %v1398 = vsub.f32 %v103, %v1397
    %1399 = vmatpush1.msra.mxu0 %v1398
    %1400 = vmatprep.subr.mxu0 0.0
    %v1401 = vand.u32 %v104, 4294901760
    %v1402 = vsub.f32 %v104, %v1401
    %1403 = vmatpush1.msra.mxu0 %v1402
    %1404 = vmatprep.subr.mxu0 0.0
    %v1405 = vand.u32 %v105, 4294901760
    %v1406 = vsub.f32 %v105, %v1405
    %1407 = vmatpush1.msra.mxu0 %v1406
    %1408 = vmatprep.subr.mxu0 0.0
    %v1409 = vand.u32 %v106, 4294901760
    %v1410 = vsub.f32 %v106, %v1409
    %1411 = vmatpush1.msra.mxu0 %v1410
    %1412 = vmatprep.subr.mxu0 0.0
    %v1413 = vand.u32 %v107, 4294901760
    %v1414 = vsub.f32 %v107, %v1413
    %1415 = vmatpush1.msra.mxu0 %v1414
    %1416 = vmatprep.subr.mxu0 0.0
    %v1417 = vand.u32 %v108, 4294901760
    %v1418 = vsub.f32 %v108, %v1417
    %1419 = vmatpush1.msra.mxu0 %v1418
    %1420 = vmatprep.subr.mxu0 0.0
    %v1421 = vand.u32 %v109, 4294901760
    %v1422 = vsub.f32 %v109, %v1421
    %1423 = vmatpush1.msra.mxu0 %v1422
    %1424 = vmatprep.subr.mxu0 0.0
    %v1425 = vand.u32 %v110, 4294901760
    %v1426 = vsub.f32 %v110, %v1425
    %1427 = vmatpush1.msra.mxu0 %v1426
    %1428 = vmatprep.subr.mxu0 0.0
    %v1429 = vand.u32 %v111, 4294901760
    %v1430 = vsub.f32 %v111, %v1429
    %1431 = vmatpush1.msra.mxu0 %v1430
    %1432 = vmatprep.subr.mxu0 0.0
    %v1433 = vand.u32 %v112, 4294901760
    %v1434 = vsub.f32 %v112, %v1433
    %1435 = vmatpush1.msra.mxu0 %v1434
    %1436 = vmatprep.subr.mxu0 0.0
    %v1437 = vand.u32 %v113, 4294901760
    %v1438 = vsub.f32 %v113, %v1437
    %1439 = vmatpush1.msra.mxu0 %v1438
    %1440 = vmatprep.subr.mxu0 0.0
    %v1441 = vand.u32 %v114, 4294901760
    %v1442 = vsub.f32 %v114, %v1441
    %1443 = vmatpush1.msra.mxu0 %v1442
    %1444 = vmatprep.subr.mxu0 0.0
    %v1445 = vand.u32 %v115, 4294901760
    %v1446 = vsub.f32 %v115, %v1445
    %1447 = vmatpush1.msra.mxu0 %v1446
    %1448 = vmatprep.subr.mxu0 0.0
    %v1449 = vand.u32 %v116, 4294901760
    %v1450 = vsub.f32 %v116, %v1449
    %1451 = vmatpush1.msra.mxu0 %v1450
    %1452 = vmatprep.subr.mxu0 0.0
    %v1453 = vand.u32 %v117, 4294901760
    %v1454 = vsub.f32 %v117, %v1453
    %1455 = vmatpush1.msra.mxu0 %v1454
    %1456 = vmatprep.subr.mxu0 0.0
    %v1457 = vand.u32 %v118, 4294901760
    %v1458 = vsub.f32 %v118, %v1457
    %1459 = vmatpush1.msra.mxu0 %v1458
    %v1460 = vand.u32 %v54, 4294901760
    %v1461 = vsub.f32 %v54, %v1460
    %1462 = vmatprep.mubr.f32.mxu0 %v1461
    %v1463 = vand.u32 %v53, 4294901760
    %v1464 = vsub.f32 %v53, %v1463
    %1465 = vmatmul.mubr.f32.gmra.mrb[0].mxu0 %v1464
    %v1466 = vpop.f32.mrb[0].mxu0
    %v1467 = vadd.f32 %v1329, %v1466
    %v1468 = vpop.f32.mrb[0].mxu0
    %1469 = vdwg.mxu0
    %1470 = vmatprep.subr.mxu0 0.0
    %v1471 = vand.u32 %v87, 4294901760
    %1472 = vmatpush1.msra.mxu0 %v1471
    %1473 = vmatprep.subr.mxu0 0.0
    %v1474 = vand.u32 %v88, 4294901760
    %1475 = vmatpush1.msra.mxu0 %v1474
    %1476 = vmatprep.subr.mxu0 0.0
    %v1477 = vand.u32 %v89, 4294901760
    %1478 = vmatpush1.msra.mxu0 %v1477
    %1479 = vmatprep.subr.mxu0 0.0
    %v1480 = vand.u32 %v90, 4294901760
    %1481 = vmatpush1.msra.mxu0 %v1480
    %1482 = vmatprep.subr.mxu0 0.0
    %v1483 = vand.u32 %v91, 4294901760
    %1484 = vmatpush1.msra.mxu0 %v1483
    %1485 = vmatprep.subr.mxu0 0.0
    %v1486 = vand.u32 %v92, 4294901760
    %1487 = vmatpush1.msra.mxu0 %v1486
    %1488 = vmatprep.subr.mxu0 0.0
    %v1489 = vand.u32 %v93, 4294901760
    %1490 = vmatpush1.msra.mxu0 %v1489
    %1491 = vmatprep.subr.mxu0 0.0
    %v1492 = vand.u32 %v94, 4294901760
    %1493 = vmatpush1.msra.mxu0 %v1492
    %1494 = vmatprep.subr.mxu0 0.0
    %v1495 = vand.u32 %v95, 4294901760
    %1496 = vmatpush1.msra.mxu0 %v1495
    %1497 = vmatprep.subr.mxu0 0.0
    %v1498 = vand.u32 %v96, 4294901760
    %1499 = vmatpush1.msra.mxu0 %v1498
    %1500 = vmatprep.subr.mxu0 0.0
    %v1501 = vand.u32 %v97, 4294901760
    %1502 = vmatpush1.msra.mxu0 %v1501
    %1503 = vmatprep.subr.mxu0 0.0
    %v1504 = vand.u32 %v98, 4294901760
    %1505 = vmatpush1.msra.mxu0 %v1504
    %1506 = vmatprep.subr.mxu0 0.0
    %v1507 = vand.u32 %v99, 4294901760
    %1508 = vmatpush1.msra.mxu0 %v1507
    %1509 = vmatprep.subr.mxu0 0.0
    %v1510 = vand.u32 %v100, 4294901760
    %1511 = vmatpush1.msra.mxu0 %v1510
    %1512 = vmatprep.subr.mxu0 0.0
    %v1513 = vand.u32 %v101, 4294901760
    %1514 = vmatpush1.msra.mxu0 %v1513
    %1515 = vmatprep.subr.mxu0 0.0
    %v1516 = vand.u32 %v102, 4294901760
    %1517 = vmatpush1.msra.mxu0 %v1516
    %1518 = vmatprep.subr.mxu0 0.0
    %v1519 = vand.u32 %v103, 4294901760
    %1520 = vmatpush1.msra.mxu0 %v1519
    %1521 = vmatprep.subr.mxu0 0.0
    %v1522 = vand.u32 %v104, 4294901760
    %1523 = vmatpush1.msra.mxu0 %v1522
    %1524 = vmatprep.subr.mxu0 0.0
    %v1525 = vand.u32 %v105, 4294901760
    %1526 = vmatpush1.msra.mxu0 %v1525
    %1527 = vmatprep.subr.mxu0 0.0
    %v1528 = vand.u32 %v106, 4294901760
    %1529 = vmatpush1.msra.mxu0 %v1528
    %1530 = vmatprep.subr.mxu0 0.0
    %v1531 = vand.u32 %v107, 4294901760
    %1532 = vmatpush1.msra.mxu0 %v1531
    %1533 = vmatprep.subr.mxu0 0.0
    %v1534 = vand.u32 %v108, 4294901760
    %1535 = vmatpush1.msra.mxu0 %v1534
    %1536 = vmatprep.subr.mxu0 0.0
    %v1537 = vand.u32 %v109, 4294901760
    %1538 = vmatpush1.msra.mxu0 %v1537
    %1539 = vmatprep.subr.mxu0 0.0
    %v1540 = vand.u32 %v110, 4294901760
    %1541 = vmatpush1.msra.mxu0 %v1540
    %1542 = vmatprep.subr.mxu0 0.0
    %v1543 = vand.u32 %v111, 4294901760
    %1544 = vmatpush1.msra.mxu0 %v1543
    %1545 = vmatprep.subr.mxu0 0.0
    %v1546 = vand.u32 %v112, 4294901760
    %1547 = vmatpush1.msra.mxu0 %v1546
    %1548 = vmatprep.subr.mxu0 0.0
    %v1549 = vand.u32 %v113, 4294901760
    %1550 = vmatpush1.msra.mxu0 %v1549
    %1551 = vmatprep.subr.mxu0 0.0
    %v1552 = vand.u32 %v114, 4294901760
    %1553 = vmatpush1.msra.mxu0 %v1552
    %1554 = vmatprep.subr.mxu0 0.0
    %v1555 = vand.u32 %v115, 4294901760
    %1556 = vmatpush1.msra.mxu0 %v1555
    %1557 = vmatprep.subr.mxu0 0.0
    %v1558 = vand.u32 %v116, 4294901760
    %1559 = vmatpush1.msra.mxu0 %v1558
    %1560 = vmatprep.subr.mxu0 0.0
    %v1561 = vand.u32 %v117, 4294901760
    %1562 = vmatpush1.msra.mxu0 %v1561
    %1563 = vmatprep.subr.mxu0 0.0
    %v1564 = vand.u32 %v118, 4294901760
    %1565 = vmatpush1.msra.mxu0 %v1564
    %v1566 = vand.u32 %v54, 4294901760
    %v1567 = vsub.f32 %v54, %v1566
    %v1568 = vand.u32 %v1567, 4294901760
    %1569 = vmatprep.mubr.f32.mxu0 %v1568
    %v1570 = vand.u32 %v53, 4294901760
    %v1571 = vsub.f32 %v53, %v1570
    %v1572 = vand.u32 %v1571, 4294901760
    %1573 = vmatmul.mubr.f32.gmra.mrb[0].mxu0 %v1572
    %v1574 = vpop.f32.mrb[0].mxu0
    %v1575 = vadd.f32 %v1467, %v1574
    %v1576 = vpop.f32.mrb[0].mxu0
    %1577 = vdwg.mxu0
    %1578 = vmatprep.subr.mxu0 0.0
    %v1579 = vand.u32 %v87, 4294901760
    %v1580 = vsub.f32 %v87, %v1579
    %v1581 = vand.u32 %v1580, 4294901760
    %1582 = vmatpush1.msra.mxu0 %v1581
    %1583 = vmatprep.subr.mxu0 0.0
    %v1584 = vand.u32 %v88, 4294901760
    %v1585 = vsub.f32 %v88, %v1584
    %v1586 = vand.u32 %v1585, 4294901760
    %1587 = vmatpush1.msra.mxu0 %v1586
    %1588 = vmatprep.subr.mxu0 0.0
    %v1589 = vand.u32 %v89, 4294901760
    %v1590 = vsub.f32 %v89, %v1589
    %v1591 = vand.u32 %v1590, 4294901760
    %1592 = vmatpush1.msra.mxu0 %v1591
    %1593 = vmatprep.subr.mxu0 0.0
    %v1594 = vand.u32 %v90, 4294901760
    %v1595 = vsub.f32 %v90, %v1594
    %v1596 = vand.u32 %v1595, 4294901760
    %1597 = vmatpush1.msra.mxu0 %v1596
    %1598 = vmatprep.subr.mxu0 0.0
    %v1599 = vand.u32 %v91, 4294901760
    %v1600 = vsub.f32 %v91, %v1599
    %v1601 = vand.u32 %v1600, 4294901760
    %1602 = vmatpush1.msra.mxu0 %v1601
    %1603 = vmatprep.subr.mxu0 0.0
    %v1604 = vand.u32 %v92, 4294901760
    %v1605 = vsub.f32 %v92, %v1604
    %v1606 = vand.u32 %v1605, 4294901760
    %1607 = vmatpush1.msra.mxu0 %v1606
    %1608 = vmatprep.subr.mxu0 0.0
    %v1609 = vand.u32 %v93, 4294901760
    %v1610 = vsub.f32 %v93, %v1609
    %v1611 = vand.u32 %v1610, 4294901760
    %1612 = vmatpush1.msra.mxu0 %v1611
    %1613 = vmatprep.subr.mxu0 0.0
    %v1614 = vand.u32 %v94, 4294901760
    %v1615 = vsub.f32 %v94, %v1614
    %v1616 = vand.u32 %v1615, 4294901760
    %1617 = vmatpush1.msra.mxu0 %v1616
    %1618 = vmatprep.subr.mxu0 0.0
    %v1619 = vand.u32 %v95, 4294901760
    %v1620 = vsub.f32 %v95, %v1619
    %v1621 = vand.u32 %v1620, 4294901760
    %1622 = vmatpush1.msra.mxu0 %v1621
    %1623 = vmatprep.subr.mxu0 0.0
    %v1624 = vand.u32 %v96, 4294901760
    %v1625 = vsub.f32 %v96, %v1624
    %v1626 = vand.u32 %v1625, 4294901760
    %1627 = vmatpush1.msra.mxu0 %v1626
    %1628 = vmatprep.subr.mxu0 0.0
    %v1629 = vand.u32 %v97, 4294901760
    %v1630 = vsub.f32 %v97, %v1629
    %v1631 = vand.u32 %v1630, 4294901760
    %1632 = vmatpush1.msra.mxu0 %v1631
    %1633 = vmatprep.subr.mxu0 0.0
    %v1634 = vand.u32 %v98, 4294901760
    %v1635 = vsub.f32 %v98, %v1634
    %v1636 = vand.u32 %v1635, 4294901760
    %1637 = vmatpush1.msra.mxu0 %v1636
    %1638 = vmatprep.subr.mxu0 0.0
    %v1639 = vand.u32 %v99, 4294901760
    %v1640 = vsub.f32 %v99, %v1639
    %v1641 = vand.u32 %v1640, 4294901760
    %1642 = vmatpush1.msra.mxu0 %v1641
    %1643 = vmatprep.subr.mxu0 0.0
    %v1644 = vand.u32 %v100, 4294901760
    %v1645 = vsub.f32 %v100, %v1644
    %v1646 = vand.u32 %v1645, 4294901760
    %1647 = vmatpush1.msra.mxu0 %v1646
    %1648 = vmatprep.subr.mxu0 0.0
    %v1649 = vand.u32 %v101, 4294901760
    %v1650 = vsub.f32 %v101, %v1649
    %v1651 = vand.u32 %v1650, 4294901760
    %1652 = vmatpush1.msra.mxu0 %v1651
    %1653 = vmatprep.subr.mxu0 0.0
    %v1654 = vand.u32 %v102, 4294901760
    %v1655 = vsub.f32 %v102, %v1654
    %v1656 = vand.u32 %v1655, 4294901760
    %1657 = vmatpush1.msra.mxu0 %v1656
    %1658 = vmatprep.subr.mxu0 0.0
    %v1659 = vand.u32 %v103, 4294901760
    %v1660 = vsub.f32 %v103, %v1659
    %v1661 = vand.u32 %v1660, 4294901760
    %1662 = vmatpush1.msra.mxu0 %v1661
    %1663 = vmatprep.subr.mxu0 0.0
    %v1664 = vand.u32 %v104, 4294901760
    %v1665 = vsub.f32 %v104, %v1664
    %v1666 = vand.u32 %v1665, 4294901760
    %1667 = vmatpush1.msra.mxu0 %v1666
    %1668 = vmatprep.subr.mxu0 0.0
    %v1669 = vand.u32 %v105, 4294901760
    %v1670 = vsub.f32 %v105, %v1669
    %v1671 = vand.u32 %v1670, 4294901760
    %1672 = vmatpush1.msra.mxu0 %v1671
    %1673 = vmatprep.subr.mxu0 0.0
    %v1674 = vand.u32 %v106, 4294901760
    %v1675 = vsub.f32 %v106, %v1674
    %v1676 = vand.u32 %v1675, 4294901760
    %1677 = vmatpush1.msra.mxu0 %v1676
    %1678 = vmatprep.subr.mxu0 0.0
    %v1679 = vand.u32 %v107, 4294901760
    %v1680 = vsub.f32 %v107, %v1679
    %v1681 = vand.u32 %v1680, 4294901760
    %1682 = vmatpush1.msra.mxu0 %v1681
    %1683 = vmatprep.subr.mxu0 0.0
    %v1684 = vand.u32 %v108, 4294901760
    %v1685 = vsub.f32 %v108, %v1684
    %v1686 = vand.u32 %v1685, 4294901760
    %1687 = vmatpush1.msra.mxu0 %v1686
    %1688 = vmatprep.subr.mxu0 0.0
    %v1689 = vand.u32 %v109, 4294901760
    %v1690 = vsub.f32 %v109, %v1689
    %v1691 = vand.u32 %v1690, 4294901760
    %1692 = vmatpush1.msra.mxu0 %v1691
    %1693 = vmatprep.subr.mxu0 0.0
    %v1694 = vand.u32 %v110, 4294901760
    %v1695 = vsub.f32 %v110, %v1694
    %v1696 = vand.u32 %v1695, 4294901760
    %1697 = vmatpush1.msra.mxu0 %v1696
    %1698 = vmatprep.subr.mxu0 0.0
    %v1699 = vand.u32 %v111, 4294901760
    %v1700 = vsub.f32 %v111, %v1699
    %v1701 = vand.u32 %v1700, 4294901760
    %1702 = vmatpush1.msra.mxu0 %v1701
    %1703 = vmatprep.subr.mxu0 0.0
    %v1704 = vand.u32 %v112, 4294901760
    %v1705 = vsub.f32 %v112, %v1704
    %v1706 = vand.u32 %v1705, 4294901760
    %1707 = vmatpush1.msra.mxu0 %v1706
    %1708 = vmatprep.subr.mxu0 0.0
    %v1709 = vand.u32 %v113, 4294901760
    %v1710 = vsub.f32 %v113, %v1709
    %v1711 = vand.u32 %v1710, 4294901760
    %1712 = vmatpush1.msra.mxu0 %v1711
    %1713 = vmatprep.subr.mxu0 0.0
    %v1714 = vand.u32 %v114, 4294901760
    %v1715 = vsub.f32 %v114, %v1714
    %v1716 = vand.u32 %v1715, 4294901760
    %1717 = vmatpush1.msra.mxu0 %v1716
    %1718 = vmatprep.subr.mxu0 0.0
    %v1719 = vand.u32 %v115, 4294901760
    %v1720 = vsub.f32 %v115, %v1719
    %v1721 = vand.u32 %v1720, 4294901760
    %1722 = vmatpush1.msra.mxu0 %v1721
    %1723 = vmatprep.subr.mxu0 0.0
    %v1724 = vand.u32 %v116, 4294901760
    %v1725 = vsub.f32 %v116, %v1724
    %v1726 = vand.u32 %v1725, 4294901760
    %1727 = vmatpush1.msra.mxu0 %v1726
    %1728 = vmatprep.subr.mxu0 0.0
    %v1729 = vand.u32 %v117, 4294901760
    %v1730 = vsub.f32 %v117, %v1729
    %v1731 = vand.u32 %v1730, 4294901760
    %1732 = vmatpush1.msra.mxu0 %v1731
    %1733 = vmatprep.subr.mxu0 0.0
    %v1734 = vand.u32 %v118, 4294901760
    %v1735 = vsub.f32 %v118, %v1734
    %v1736 = vand.u32 %v1735, 4294901760
    %1737 = vmatpush1.msra.mxu0 %v1736
    %v1738 = vand.u32 %v54, 4294901760
    %1739 = vmatprep.mubr.f32.mxu0 %v1738
    %v1740 = vand.u32 %v53, 4294901760
    %1741 = vmatmul.mubr.f32.gmra.mrb[0].mxu0 %v1740
    %v1742 = vpop.f32.mrb[0].mxu0
    %v1743 = vadd.f32 %v1575, %v1742
    %v1744 = vpop.f32.mrb[0].mxu0
    %1745 = vdwg.mxu0
    %1746 = vmatprep.subr.mxu0 0.0
    %v1747 = vand.u32 %v87, 4294901760
    %1748 = vmatpush1.msra.mxu0 %v1747
    %1749 = vmatprep.subr.mxu0 0.0
    %v1750 = vand.u32 %v88, 4294901760
    %1751 = vmatpush1.msra.mxu0 %v1750
    %1752 = vmatprep.subr.mxu0 0.0
    %v1753 = vand.u32 %v89, 4294901760
    %1754 = vmatpush1.msra.mxu0 %v1753
    %1755 = vmatprep.subr.mxu0 0.0
    %v1756 = vand.u32 %v90, 4294901760
    %1757 = vmatpush1.msra.mxu0 %v1756
    %1758 = vmatprep.subr.mxu0 0.0
    %v1759 = vand.u32 %v91, 4294901760
    %1760 = vmatpush1.msra.mxu0 %v1759
    %1761 = vmatprep.subr.mxu0 0.0
    %v1762 = vand.u32 %v92, 4294901760
    %1763 = vmatpush1.msra.mxu0 %v1762
    %1764 = vmatprep.subr.mxu0 0.0
    %v1765 = vand.u32 %v93, 4294901760
    %1766 = vmatpush1.msra.mxu0 %v1765
    %1767 = vmatprep.subr.mxu0 0.0
    %v1768 = vand.u32 %v94, 4294901760
    %1769 = vmatpush1.msra.mxu0 %v1768
    %1770 = vmatprep.subr.mxu0 0.0
    %v1771 = vand.u32 %v95, 4294901760
    %1772 = vmatpush1.msra.mxu0 %v1771
    %1773 = vmatprep.subr.mxu0 0.0
    %v1774 = vand.u32 %v96, 4294901760
    %1775 = vmatpush1.msra.mxu0 %v1774
    %1776 = vmatprep.subr.mxu0 0.0
    %v1777 = vand.u32 %v97, 4294901760
    %1778 = vmatpush1.msra.mxu0 %v1777
    %1779 = vmatprep.subr.mxu0 0.0
    %v1780 = vand.u32 %v98, 4294901760
    %1781 = vmatpush1.msra.mxu0 %v1780
    %1782 = vmatprep.subr.mxu0 0.0
    %v1783 = vand.u32 %v99, 4294901760
    %1784 = vmatpush1.msra.mxu0 %v1783
    %1785 = vmatprep.subr.mxu0 0.0
    %v1786 = vand.u32 %v100, 4294901760
    %1787 = vmatpush1.msra.mxu0 %v1786
    %1788 = vmatprep.subr.mxu0 0.0
    %v1789 = vand.u32 %v101, 4294901760
    %1790 = vmatpush1.msra.mxu0 %v1789
    %1791 = vmatprep.subr.mxu0 0.0
    %v1792 = vand.u32 %v102, 4294901760
    %1793 = vmatpush1.msra.mxu0 %v1792
    %1794 = vmatprep.subr.mxu0 0.0
    %v1795 = vand.u32 %v103, 4294901760
    %1796 = vmatpush1.msra.mxu0 %v1795
    %1797 = vmatprep.subr.mxu0 0.0
    %v1798 = vand.u32 %v104, 4294901760
    %1799 = vmatpush1.msra.mxu0 %v1798
    %1800 = vmatprep.subr.mxu0 0.0
    %v1801 = vand.u32 %v105, 4294901760
    %1802 = vmatpush1.msra.mxu0 %v1801
    %1803 = vmatprep.subr.mxu0 0.0
    %v1804 = vand.u32 %v106, 4294901760
    %1805 = vmatpush1.msra.mxu0 %v1804
    %1806 = vmatprep.subr.mxu0 0.0
    %v1807 = vand.u32 %v107, 4294901760
    %1808 = vmatpush1.msra.mxu0 %v1807
    %1809 = vmatprep.subr.mxu0 0.0
    %v1810 = vand.u32 %v108, 4294901760
    %1811 = vmatpush1.msra.mxu0 %v1810
    %1812 = vmatprep.subr.mxu0 0.0
    %v1813 = vand.u32 %v109, 4294901760
    %1814 = vmatpush1.msra.mxu0 %v1813
    %1815 = vmatprep.subr.mxu0 0.0
    %v1816 = vand.u32 %v110, 4294901760
    %1817 = vmatpush1.msra.mxu0 %v1816
    %1818 = vmatprep.subr.mxu0 0.0
    %v1819 = vand.u32 %v111, 4294901760
    %1820 = vmatpush1.msra.mxu0 %v1819
    %1821 = vmatprep.subr.mxu0 0.0
    %v1822 = vand.u32 %v112, 4294901760
    %1823 = vmatpush1.msra.mxu0 %v1822
    %1824 = vmatprep.subr.mxu0 0.0
    %v1825 = vand.u32 %v113, 4294901760
    %1826 = vmatpush1.msra.mxu0 %v1825
    %1827 = vmatprep.subr.mxu0 0.0
    %v1828 = vand.u32 %v114, 4294901760
    %1829 = vmatpush1.msra.mxu0 %v1828
    %1830 = vmatprep.subr.mxu0 0.0
    %v1831 = vand.u32 %v115, 4294901760
    %1832 = vmatpush1.msra.mxu0 %v1831
    %1833 = vmatprep.subr.mxu0 0.0
    %v1834 = vand.u32 %v116, 4294901760
    %1835 = vmatpush1.msra.mxu0 %v1834
    %1836 = vmatprep.subr.mxu0 0.0
    %v1837 = vand.u32 %v117, 4294901760
    %1838 = vmatpush1.msra.mxu0 %v1837
    %1839 = vmatprep.subr.mxu0 0.0
    %v1840 = vand.u32 %v118, 4294901760
    %1841 = vmatpush1.msra.mxu0 %v1840
    %v1842 = vand.u32 %v54, 4294901760
    %1843 = vmatprep.mubr.f32.mxu0 %v1842
    %v1844 = vand.u32 %v53, 4294901760
    %1845 = vmatmul.mubr.f32.gmra.mrb[0].mxu0 %v1844
    %v1846 = vpop.f32.mrb[0].mxu0
    %v1847 = vadd.f32 %v1743, %v1846
    %v1848 = vpop.f32.mrb[0].mxu0
    %1849 = vdwg.mxu0
    %v1850 = vmax.f32 %v1847, 0.0
    %v1851 = vld [vmem:[%s1] sm:$0x7f]
    %v1852 = vld [vmem:[%s4] sm:$0xf]
    %v1853 = vld [vmem:[%s5] sm:$0x1]
    %v1855 = vlaneseq
    %v1856 = vshrl.u32 %v1855, 7
    %v1857 = vsub.s32 0, %v1856
    %v1858 = vrot.slane %v1853, %v1857
    %vm1860 = vcmask 31744
    %v1862 = vsel %vm1860, %v1851, 0
    %vm1864 = vcmask 1043456
    %v1866 = vsel %vm1864, %v1852, 0
    %1868 = vmatprep.subr.mxu0 0.0
    %v1869 = vand.u32 %v1866, 4294901760
    %1870 = vmatpush1.msra.mxu0 %v1869
    %1871 = vmatprep.subr.mxu0 0.0
    %1872 = vmatpush1.msra.mxu0 0.0
    %1873 = vmatprep.subr.mxu0 0.0
    %1874 = vmatpush1.msra.mxu0 0.0
    %1875 = vmatprep.subr.mxu0 0.0
    %1876 = vmatpush1.msra.mxu0 0.0
    %1877 = vmatprep.subr.mxu0 0.0
    %1878 = vmatpush1.msra.mxu0 0.0
    %1879 = vmatprep.subr.mxu0 0.0
    %1880 = vmatpush1.msra.mxu0 0.0
    %1881 = vmatprep.subr.mxu0 0.0
    %1882 = vmatpush1.msra.mxu0 0.0
    %1883 = vmatprep.subr.mxu0 0.0
    %1884 = vmatpush1.msra.mxu0 0.0
    %1885 = vmatprep.subr.mxu0 0.0
    %1886 = vmatpush1.msra.mxu0 0.0
    %1887 = vmatprep.subr.mxu0 0.0
    %1888 = vmatpush1.msra.mxu0 0.0
    %1889 = vmatprep.subr.mxu0 0.0
    %1890 = vmatpush1.msra.mxu0 0.0
    %1891 = vmatprep.subr.mxu0 0.0
    %1892 = vmatpush1.msra.mxu0 0.0
    %1893 = vmatprep.subr.mxu0 0.0
    %1894 = vmatpush1.msra.mxu0 0.0
    %1895 = vmatprep.subr.mxu0 0.0
    %1896 = vmatpush1.msra.mxu0 0.0
    %1897 = vmatprep.subr.mxu0 0.0
    %1898 = vmatpush1.msra.mxu0 0.0
    %1899 = vmatprep.subr.mxu0 0.0
    %1900 = vmatpush1.msra.mxu0 0.0
    %1901 = vmatprep.subr.mxu0 0.0
    %1902 = vmatpush1.msra.mxu0 0.0
    %1903 = vmatprep.subr.mxu0 0.0
    %1904 = vmatpush1.msra.mxu0 0.0
    %1905 = vmatprep.subr.mxu0 0.0
    %1906 = vmatpush1.msra.mxu0 0.0
    %1907 = vmatprep.subr.mxu0 0.0
    %1908 = vmatpush1.msra.mxu0 0.0
    %1909 = vmatprep.subr.mxu0 0.0
    %1910 = vmatpush1.msra.mxu0 0.0
    %1911 = vmatprep.subr.mxu0 0.0
    %1912 = vmatpush1.msra.mxu0 0.0
    %1913 = vmatprep.subr.mxu0 0.0
    %1914 = vmatpush1.msra.mxu0 0.0
    %1915 = vmatprep.subr.mxu0 0.0
    %1916 = vmatpush1.msra.mxu0 0.0
    %1917 = vmatprep.subr.mxu0 0.0
    %1918 = vmatpush1.msra.mxu0 0.0
    %1919 = vmatprep.subr.mxu0 0.0
    %1920 = vmatpush1.msra.mxu0 0.0
    %1921 = vmatprep.subr.mxu0 0.0
    %1922 = vmatpush1.msra.mxu0 0.0
    %1923 = vmatprep.subr.mxu0 0.0
    %1924 = vmatpush1.msra.mxu0 0.0
    %1925 = vmatprep.subr.mxu0 0.0
    %1926 = vmatpush1.msra.mxu0 0.0
    %1927 = vmatprep.subr.mxu0 0.0
    %1928 = vmatpush1.msra.mxu0 0.0
    %1929 = vmatprep.subr.mxu0 0.0
    %1930 = vmatpush1.msra.mxu0 0.0
    %1931 = vmatprep.subr.mxu0 0.0
    %1932 = vmatpush1.msra.mxu0 0.0
    %1933 = vmatprep.mubr.f32.mxu0 0.0
    %v1934 = vand.u32 %v1862, 4294901760
    %v1935 = vsub.f32 %v1862, %v1934
    %v1936 = vand.u32 %v1935, 4294901760
    %v1937 = vsub.f32 %v1935, %v1936
    %v1938 = vand.u32 %v1937, 4294901760
    %1939 = vmatmul.mubr.f32.gmra.mrb[0].mxu0 %v1938
    %v1940 = vpop.f32.mrb[0].mxu0
    %v1941 = vadd.f32 %v1858, %v1940
    %v1942 = vpop.f32.mrb[0].mxu0
    %1943 = vdwg.mxu0
    %1944 = vmatprep.subr.mxu0 0.0
    %v1945 = vand.u32 %v1866, 4294901760
    %v1946 = vsub.f32 %v1866, %v1945
    %v1947 = vand.u32 %v1946, 4294901760
    %v1948 = vsub.f32 %v1946, %v1947
    %v1949 = vand.u32 %v1948, 4294901760
    %1950 = vmatpush1.msra.mxu0 %v1949
    %1951 = vmatprep.subr.mxu0 0.0
    %1952 = vmatpush1.msra.mxu0 0.0
    %1953 = vmatprep.subr.mxu0 0.0
    %1954 = vmatpush1.msra.mxu0 0.0
    %1955 = vmatprep.subr.mxu0 0.0
    %1956 = vmatpush1.msra.mxu0 0.0
    %1957 = vmatprep.subr.mxu0 0.0
    %1958 = vmatpush1.msra.mxu0 0.0
    %1959 = vmatprep.subr.mxu0 0.0
    %1960 = vmatpush1.msra.mxu0 0.0
    %1961 = vmatprep.subr.mxu0 0.0
    %1962 = vmatpush1.msra.mxu0 0.0
    %1963 = vmatprep.subr.mxu0 0.0
    %1964 = vmatpush1.msra.mxu0 0.0
    %1965 = vmatprep.subr.mxu0 0.0
    %1966 = vmatpush1.msra.mxu0 0.0
    %1967 = vmatprep.subr.mxu0 0.0
    %1968 = vmatpush1.msra.mxu0 0.0
    %1969 = vmatprep.subr.mxu0 0.0
    %1970 = vmatpush1.msra.mxu0 0.0
    %1971 = vmatprep.subr.mxu0 0.0
    %1972 = vmatpush1.msra.mxu0 0.0
    %1973 = vmatprep.subr.mxu0 0.0
    %1974 = vmatpush1.msra.mxu0 0.0
    %1975 = vmatprep.subr.mxu0 0.0
    %1976 = vmatpush1.msra.mxu0 0.0
    %1977 = vmatprep.subr.mxu0 0.0
    %1978 = vmatpush1.msra.mxu0 0.0
    %1979 = vmatprep.subr.mxu0 0.0
    %1980 = vmatpush1.msra.mxu0 0.0
    %1981 = vmatprep.subr.mxu0 0.0
    %1982 = vmatpush1.msra.mxu0 0.0
    %1983 = vmatprep.subr.mxu0 0.0
    %1984 = vmatpush1.msra.mxu0 0.0
    %1985 = vmatprep.subr.mxu0 0.0
    %1986 = vmatpush1.msra.mxu0 0.0
    %1987 = vmatprep.subr.mxu0 0.0
    %1988 = vmatpush1.msra.mxu0 0.0
    %1989 = vmatprep.subr.mxu0 0.0
    %1990 = vmatpush1.msra.mxu0 0.0
    %1991 = vmatprep.subr.mxu0 0.0
    %1992 = vmatpush1.msra.mxu0 0.0
    %1993 = vmatprep.subr.mxu0 0.0
    %1994 = vmatpush1.msra.mxu0 0.0
    %1995 = vmatprep.subr.mxu0 0.0
    %1996 = vmatpush1.msra.mxu0 0.0
    %1997 = vmatprep.subr.mxu0 0.0
    %1998 = vmatpush1.msra.mxu0 0.0
    %1999 = vmatprep.subr.mxu0 0.0
    %2000 = vmatpush1.msra.mxu0 0.0
    %2001 = vmatprep.subr.mxu0 0.0
    %2002 = vmatpush1.msra.mxu0 0.0
    %2003 = vmatprep.subr.mxu0 0.0
    %2004 = vmatpush1.msra.mxu0 0.0
    %2005 = vmatprep.subr.mxu0 0.0
    %2006 = vmatpush1.msra.mxu0 0.0
    %2007 = vmatprep.subr.mxu0 0.0
    %2008 = vmatpush1.msra.mxu0 0.0
    %2009 = vmatprep.subr.mxu0 0.0
    %2010 = vmatpush1.msra.mxu0 0.0
    %2011 = vmatprep.subr.mxu0 0.0
    %2012 = vmatpush1.msra.mxu0 0.0
    %2013 = vmatprep.mubr.f32.mxu0 0.0
    %v2014 = vand.u32 %v1862, 4294901760
    %2015 = vmatmul.mubr.f32.gmra.mrb[0].mxu0 %v2014
    %v2016 = vpop.f32.mrb[0].mxu0
    %v2017 = vadd.f32 %v1941, %v2016
    %v2018 = vpop.f32.mrb[0].mxu0
    %2019 = vdwg.mxu0
    %2020 = vmatprep.subr.mxu0 0.0
    %v2021 = vand.u32 %v1866, 4294901760
    %v2022 = vsub.f32 %v1866, %v2021
    %2023 = vmatpush1.msra.mxu0 %v2022
    %2024 = vmatprep.subr.mxu0 0.0
    %2025 = vmatpush1.msra.mxu0 0.0
    %2026 = vmatprep.subr.mxu0 0.0
    %2027 = vmatpush1.msra.mxu0 0.0
    %2028 = vmatprep.subr.mxu0 0.0
    %2029 = vmatpush1.msra.mxu0 0.0
    %2030 = vmatprep.subr.mxu0 0.0
    %2031 = vmatpush1.msra.mxu0 0.0
    %2032 = vmatprep.subr.mxu0 0.0
    %2033 = vmatpush1.msra.mxu0 0.0
    %2034 = vmatprep.subr.mxu0 0.0
    %2035 = vmatpush1.msra.mxu0 0.0
    %2036 = vmatprep.subr.mxu0 0.0
    %2037 = vmatpush1.msra.mxu0 0.0
    %2038 = vmatprep.subr.mxu0 0.0
    %2039 = vmatpush1.msra.mxu0 0.0
    %2040 = vmatprep.subr.mxu0 0.0
    %2041 = vmatpush1.msra.mxu0 0.0
    %2042 = vmatprep.subr.mxu0 0.0
    %2043 = vmatpush1.msra.mxu0 0.0
    %2044 = vmatprep.subr.mxu0 0.0
    %2045 = vmatpush1.msra.mxu0 0.0
    %2046 = vmatprep.subr.mxu0 0.0
    %2047 = vmatpush1.msra.mxu0 0.0
    %2048 = vmatprep.subr.mxu0 0.0
    %2049 = vmatpush1.msra.mxu0 0.0
    %2050 = vmatprep.subr.mxu0 0.0
    %2051 = vmatpush1.msra.mxu0 0.0
    %2052 = vmatprep.subr.mxu0 0.0
    %2053 = vmatpush1.msra.mxu0 0.0
    %2054 = vmatprep.subr.mxu0 0.0
    %2055 = vmatpush1.msra.mxu0 0.0
    %2056 = vmatprep.subr.mxu0 0.0
    %2057 = vmatpush1.msra.mxu0 0.0
    %2058 = vmatprep.subr.mxu0 0.0
    %2059 = vmatpush1.msra.mxu0 0.0
    %2060 = vmatprep.subr.mxu0 0.0
    %2061 = vmatpush1.msra.mxu0 0.0
    %2062 = vmatprep.subr.mxu0 0.0
    %2063 = vmatpush1.msra.mxu0 0.0
    %2064 = vmatprep.subr.mxu0 0.0
    %2065 = vmatpush1.msra.mxu0 0.0
    %2066 = vmatprep.subr.mxu0 0.0
    %2067 = vmatpush1.msra.mxu0 0.0
    %2068 = vmatprep.subr.mxu0 0.0
    %2069 = vmatpush1.msra.mxu0 0.0
    %2070 = vmatprep.subr.mxu0 0.0
    %2071 = vmatpush1.msra.mxu0 0.0
    %2072 = vmatprep.subr.mxu0 0.0
    %2073 = vmatpush1.msra.mxu0 0.0
    %2074 = vmatprep.subr.mxu0 0.0
    %2075 = vmatpush1.msra.mxu0 0.0
    %2076 = vmatprep.subr.mxu0 0.0
    %2077 = vmatpush1.msra.mxu0 0.0
    %2078 = vmatprep.subr.mxu0 0.0
    %2079 = vmatpush1.msra.mxu0 0.0
    %2080 = vmatprep.subr.mxu0 0.0
    %2081 = vmatpush1.msra.mxu0 0.0
    %2082 = vmatprep.subr.mxu0 0.0
    %2083 = vmatpush1.msra.mxu0 0.0
    %2084 = vmatprep.subr.mxu0 0.0
    %2085 = vmatpush1.msra.mxu0 0.0
    %2086 = vmatprep.mubr.f32.mxu0 0.0
    %v2087 = vand.u32 %v1862, 4294901760
    %v2088 = vsub.f32 %v1862, %v2087
    %2089 = vmatmul.mubr.f32.gmra.mrb[0].mxu0 %v2088
    %v2090 = vpop.f32.mrb[0].mxu0
    %v2091 = vadd.f32 %v2017, %v2090
    %v2092 = vpop.f32.mrb[0].mxu0
    %2093 = vdwg.mxu0
    %2094 = vmatprep.subr.mxu0 0.0
    %v2095 = vand.u32 %v1866, 4294901760
    %2096 = vmatpush1.msra.mxu0 %v2095
    %2097 = vmatprep.subr.mxu0 0.0
    %2098 = vmatpush1.msra.mxu0 0.0
    %2099 = vmatprep.subr.mxu0 0.0
    %2100 = vmatpush1.msra.mxu0 0.0
    %2101 = vmatprep.subr.mxu0 0.0
    %2102 = vmatpush1.msra.mxu0 0.0
    %2103 = vmatprep.subr.mxu0 0.0
    %2104 = vmatpush1.msra.mxu0 0.0
    %2105 = vmatprep.subr.mxu0 0.0
    %2106 = vmatpush1.msra.mxu0 0.0
    %2107 = vmatprep.subr.mxu0 0.0
    %2108 = vmatpush1.msra.mxu0 0.0
    %2109 = vmatprep.subr.mxu0 0.0
    %2110 = vmatpush1.msra.mxu0 0.0
    %2111 = vmatprep.subr.mxu0 0.0
    %2112 = vmatpush1.msra.mxu0 0.0
    %2113 = vmatprep.subr.mxu0 0.0
    %2114 = vmatpush1.msra.mxu0 0.0
    %2115 = vmatprep.subr.mxu0 0.0
    %2116 = vmatpush1.msra.mxu0 0.0
    %2117 = vmatprep.subr.mxu0 0.0
    %2118 = vmatpush1.msra.mxu0 0.0
    %2119 = vmatprep.subr.mxu0 0.0
    %2120 = vmatpush1.msra.mxu0 0.0
    %2121 = vmatprep.subr.mxu0 0.0
    %2122 = vmatpush1.msra.mxu0 0.0
    %2123 = vmatprep.subr.mxu0 0.0
    %2124 = vmatpush1.msra.mxu0 0.0
    %2125 = vmatprep.subr.mxu0 0.0
    %2126 = vmatpush1.msra.mxu0 0.0
    %2127 = vmatprep.subr.mxu0 0.0
    %2128 = vmatpush1.msra.mxu0 0.0
    %2129 = vmatprep.subr.mxu0 0.0
    %2130 = vmatpush1.msra.mxu0 0.0
    %2131 = vmatprep.subr.mxu0 0.0
    %2132 = vmatpush1.msra.mxu0 0.0
    %2133 = vmatprep.subr.mxu0 0.0
    %2134 = vmatpush1.msra.mxu0 0.0
    %2135 = vmatprep.subr.mxu0 0.0
    %2136 = vmatpush1.msra.mxu0 0.0
    %2137 = vmatprep.subr.mxu0 0.0
    %2138 = vmatpush1.msra.mxu0 0.0
    %2139 = vmatprep.subr.mxu0 0.0
    %2140 = vmatpush1.msra.mxu0 0.0
    %2141 = vmatprep.subr.mxu0 0.0
    %2142 = vmatpush1.msra.mxu0 0.0
    %2143 = vmatprep.subr.mxu0 0.0
    %2144 = vmatpush1.msra.mxu0 0.0
    %2145 = vmatprep.subr.mxu0 0.0
    %2146 = vmatpush1.msra.mxu0 0.0
    %2147 = vmatprep.subr.mxu0 0.0
    %2148 = vmatpush1.msra.mxu0 0.0
    %2149 = vmatprep.subr.mxu0 0.0
    %2150 = vmatpush1.msra.mxu0 0.0
    %2151 = vmatprep.subr.mxu0 0.0
    %2152 = vmatpush1.msra.mxu0 0.0
    %2153 = vmatprep.subr.mxu0 0.0
    %2154 = vmatpush1.msra.mxu0 0.0
    %2155 = vmatprep.subr.mxu0 0.0
    %2156 = vmatpush1.msra.mxu0 0.0
    %2157 = vmatprep.subr.mxu0 0.0
    %2158 = vmatpush1.msra.mxu0 0.0
    %2159 = vmatprep.mubr.f32.mxu0 0.0
    %v2160 = vand.u32 %v1862, 4294901760
    %v2161 = vsub.f32 %v1862, %v2160
    %v2162 = vand.u32 %v2161, 4294901760
    %2163 = vmatmul.mubr.f32.gmra.mrb[0].mxu0 %v2162
    %v2164 = vpop.f32.mrb[0].mxu0
    %v2165 = vadd.f32 %v2091, %v2164
    %v2166 = vpop.f32.mrb[0].mxu0
    %2167 = vdwg.mxu0
    %2168 = vmatprep.subr.mxu0 0.0
    %v2169 = vand.u32 %v1866, 4294901760
    %v2170 = vsub.f32 %v1866, %v2169
    %v2171 = vand.u32 %v2170, 4294901760
    %2172 = vmatpush1.msra.mxu0 %v2171
    %2173 = vmatprep.subr.mxu0 0.0
    %2174 = vmatpush1.msra.mxu0 0.0
    %2175 = vmatprep.subr.mxu0 0.0
    %2176 = vmatpush1.msra.mxu0 0.0
    %2177 = vmatprep.subr.mxu0 0.0
    %2178 = vmatpush1.msra.mxu0 0.0
    %2179 = vmatprep.subr.mxu0 0.0
    %2180 = vmatpush1.msra.mxu0 0.0
    %2181 = vmatprep.subr.mxu0 0.0
    %2182 = vmatpush1.msra.mxu0 0.0
    %2183 = vmatprep.subr.mxu0 0.0
    %2184 = vmatpush1.msra.mxu0 0.0
    %2185 = vmatprep.subr.mxu0 0.0
    %2186 = vmatpush1.msra.mxu0 0.0
    %2187 = vmatprep.subr.mxu0 0.0
    %2188 = vmatpush1.msra.mxu0 0.0
    %2189 = vmatprep.subr.mxu0 0.0
    %2190 = vmatpush1.msra.mxu0 0.0
    %2191 = vmatprep.subr.mxu0 0.0
    %2192 = vmatpush1.msra.mxu0 0.0
    %2193 = vmatprep.subr.mxu0 0.0
    %2194 = vmatpush1.msra.mxu0 0.0
    %2195 = vmatprep.subr.mxu0 0.0
    %2196 = vmatpush1.msra.mxu0 0.0
    %2197 = vmatprep.subr.mxu0 0.0
    %2198 = vmatpush1.msra.mxu0 0.0
    %2199 = vmatprep.subr.mxu0 0.0
    %2200 = vmatpush1.msra.mxu0 0.0
    %2201 = vmatprep.subr.mxu0 0.0
    %2202 = vmatpush1.msra.mxu0 0.0
    %2203 = vmatprep.subr.mxu0 0.0
    %2204 = vmatpush1.msra.mxu0 0.0
    %2205 = vmatprep.subr.mxu0 0.0
    %2206 = vmatpush1.msra.mxu0 0.0
    %2207 = vmatprep.subr.mxu0 0.0
    %2208 = vmatpush1.msra.mxu0 0.0
    %2209 = vmatprep.subr.mxu0 0.0
    %2210 = vmatpush1.msra.mxu0 0.0
    %2211 = vmatprep.subr.mxu0 0.0
    %2212 = vmatpush1.msra.mxu0 0.0
    %2213 = vmatprep.subr.mxu0 0.0
    %2214 = vmatpush1.msra.mxu0 0.0
    %2215 = vmatprep.subr.mxu0 0.0
    %2216 = vmatpush1.msra.mxu0 0.0
    %2217 = vmatprep.subr.mxu0 0.0
    %2218 = vmatpush1.msra.mxu0 0.0
    %2219 = vmatprep.subr.mxu0 0.0
    %2220 = vmatpush1.msra.mxu0 0.0
    %2221 = vmatprep.subr.mxu0 0.0
    %2222 = vmatpush1.msra.mxu0 0.0
    %2223 = vmatprep.subr.mxu0 0.0
    %2224 = vmatpush1.msra.mxu0 0.0
    %2225 = vmatprep.subr.mxu0 0.0
    %2226 = vmatpush1.msra.mxu0 0.0
    %2227 = vmatprep.subr.mxu0 0.0
    %2228 = vmatpush1.msra.mxu0 0.0
    %2229 = vmatprep.subr.mxu0 0.0
    %2230 = vmatpush1.msra.mxu0 0.0
    %2231 = vmatprep.subr.mxu0 0.0
    %2232 = vmatpush1.msra.mxu0 0.0
    %2233 = vmatprep.subr.mxu0 0.0
    %2234 = vmatpush1.msra.mxu0 0.0
    %2235 = vmatprep.mubr.f32.mxu0 0.0
    %v2236 = vand.u32 %v1862, 4294901760
    %2237 = vmatmul.mubr.f32.gmra.mrb[0].mxu0 %v2236
    %v2238 = vpop.f32.mrb[0].mxu0
    %v2239 = vadd.f32 %v2165, %v2238
    %v2240 = vpop.f32.mrb[0].mxu0
    %2241 = vdwg.mxu0
    %2242 = vmatprep.subr.mxu0 0.0
    %v2243 = vand.u32 %v1866, 4294901760
    %2244 = vmatpush1.msra.mxu0 %v2243
    %2245 = vmatprep.subr.mxu0 0.0
    %2246 = vmatpush1.msra.mxu0 0.0
    %2247 = vmatprep.subr.mxu0 0.0
    %2248 = vmatpush1.msra.mxu0 0.0
    %2249 = vmatprep.subr.mxu0 0.0
    %2250 = vmatpush1.msra.mxu0 0.0
    %2251 = vmatprep.subr.mxu0 0.0
    %2252 = vmatpush1.msra.mxu0 0.0
    %2253 = vmatprep.subr.mxu0 0.0
    %2254 = vmatpush1.msra.mxu0 0.0
    %2255 = vmatprep.subr.mxu0 0.0
    %2256 = vmatpush1.msra.mxu0 0.0
    %2257 = vmatprep.subr.mxu0 0.0
    %2258 = vmatpush1.msra.mxu0 0.0
    %2259 = vmatprep.subr.mxu0 0.0
    %2260 = vmatpush1.msra.mxu0 0.0
    %2261 = vmatprep.subr.mxu0 0.0
    %2262 = vmatpush1.msra.mxu0 0.0
    %2263 = vmatprep.subr.mxu0 0.0
    %2264 = vmatpush1.msra.mxu0 0.0
    %2265 = vmatprep.subr.mxu0 0.0
    %2266 = vmatpush1.msra.mxu0 0.0
    %2267 = vmatprep.subr.mxu0 0.0
    %2268 = vmatpush1.msra.mxu0 0.0
    %2269 = vmatprep.subr.mxu0 0.0
    %2270 = vmatpush1.msra.mxu0 0.0
    %2271 = vmatprep.subr.mxu0 0.0
    %2272 = vmatpush1.msra.mxu0 0.0
    %2273 = vmatprep.subr.mxu0 0.0
    %2274 = vmatpush1.msra.mxu0 0.0
    %2275 = vmatprep.subr.mxu0 0.0
    %2276 = vmatpush1.msra.mxu0 0.0
    %2277 = vmatprep.subr.mxu0 0.0
    %2278 = vmatpush1.msra.mxu0 0.0
    %2279 = vmatprep.subr.mxu0 0.0
    %2280 = vmatpush1.msra.mxu0 0.0
    %2281 = vmatprep.subr.mxu0 0.0
    %2282 = vmatpush1.msra.mxu0 0.0
    %2283 = vmatprep.subr.mxu0 0.0
    %2284 = vmatpush1.msra.mxu0 0.0
    %2285 = vmatprep.subr.mxu0 0.0
    %2286 = vmatpush1.msra.mxu0 0.0
    %2287 = vmatprep.subr.mxu0 0.0
    %2288 = vmatpush1.msra.mxu0 0.0
    %2289 = vmatprep.subr.mxu0 0.0
    %2290 = vmatpush1.msra.mxu0 0.0
    %2291 = vmatprep.subr.mxu0 0.0
    %2292 = vmatpush1.msra.mxu0 0.0
    %2293 = vmatprep.subr.mxu0 0.0
    %2294 = vmatpush1.msra.mxu0 0.0
    %2295 = vmatprep.subr.mxu0 0.0
    %2296 = vmatpush1.msra.mxu0 0.0
    %2297 = vmatprep.subr.mxu0 0.0
    %2298 = vmatpush1.msra.mxu0 0.0
    %2299 = vmatprep.subr.mxu0 0.0
    %2300 = vmatpush1.msra.mxu0 0.0
    %2301 = vmatprep.subr.mxu0 0.0
    %2302 = vmatpush1.msra.mxu0 0.0
    %2303 = vmatprep.subr.mxu0 0.0
    %2304 = vmatpush1.msra.mxu0 0.0
    %2305 = vmatprep.subr.mxu0 0.0
    %2306 = vmatpush1.msra.mxu0 0.0
    %2307 = vmatprep.mubr.f32.mxu0 0.0
    %v2308 = vand.u32 %v1862, 4294901760
    %2309 = vmatmul.mubr.f32.gmra.mrb[0].mxu0 %v2308
    %v2310 = vpop.f32.mrb[0].mxu0
    %v2311 = vadd.f32 %v2239, %v2310
    %v2312 = vpop.f32.mrb[0].mxu0
    %2313 = vdwg.mxu0
    %v2314 = vmax.f32 %v2311, 0.0
    %2315 = vst [vmem:[#allocation5] sm:$0x7] %v1850
    %vm2316 = vcmask 124928
    %2317 = vst.msk [vmem:[#allocation5 + $0x4] sm:$0x7] %vm2316, %v2314
    %v2319 = vcombine.high %v1850, %v1850
    %vm2320 = vcmask 1040384
    %vm2321 = vcmask 1044484
    %vm2322 = vmor %vm2320, %vm2321
    %v2323 = vrot.slane %v1850, 7
    %v2324 = vrot.slane %v2323, 4
    %v2325 = vrot.slane %v2319, 7
    %v2326 = vsel %vm2322, %v2324, %v2325
    %2328 = vst [vmem:[#allocation7] sm:$0xf] %v2326
    %v2330 = vcombine.high %v2314, %v2314
    %v2331 = vrot.slane %v2314, 7
    %v2332 = vrot.slane %v2331, 4
    %v2333 = vrot.slane %v2330, 7
    %v2334 = vsel %vm2322, %v2332, %v2333
    %vm2336 = vcmask 125952
    %2337 = vst.msk [vmem:[#allocation7 + $0x4] sm:$0xf] %vm2336, %v2334
    %v2338 = vld [vmem:[%s6] sm:$0xff]
    %v2339 = vld [vmem:[%s6 + $0x8] sm:$0xff]
    %v2340 = vld [vmem:[%s6 + $0x10] sm:$0xff]
    %v2341 = vld [vmem:[%s6 + $0x18] sm:$0xff]
    %v2342 = vld [vmem:[%s6 + $0x20] sm:$0xff]
    %v2343 = vld [vmem:[%s6 + $0x28] sm:$0xff]
    %v2344 = vld [vmem:[%s6 + $0x30] sm:$0xff]
    %v2345 = vld [vmem:[%s6 + $0x38] sm:$0xff]
    %v2346 = vld [vmem:[%s6 + $0x40] sm:$0xff]
    %v2347 = vld [vmem:[%s6 + $0x48] sm:$0xff]
    %v2348 = vld [vmem:[%s6 + $0x50] sm:$0xff]
    %v2349 = vld [vmem:[%s6 + $0x58] sm:$0xff]
    %v2350 = vld [vmem:[%s6 + $0x60] sm:$0xff]
    %v2351 = vld [vmem:[%s6 + $0x68] sm:$0xff]
    %v2352 = vld [vmem:[%s6 + $0x70] sm:$0xff]
    %v2353 = vld [vmem:[%s6 + $0x78] sm:$0xff]
    %v2354 = vld [vmem:[%s7] sm:$0xff]
    %v2355 = vld [vmem:[%s7 + $0x8] sm:$0xff]
    %vm2356 = vcmask 130048
    %v2357 = vsel %vm2356, %v2314, 0
    %2359 = vmatprep.subr.mxu0 0.0
    %v2360 = vand.u32 %v2354, 4294901760
    %2361 = vmatpush1.msra.mxu0 %v2360
    %2362 = vmatprep.subr.mxu0 0.0
    %v2363 = vand.u32 %v2355, 4294901760
    %2364 = vmatpush1.msra.mxu0 %v2363
    %2365 = vmatprep.subr.mxu0 0.0
    %2366 = vmatpush1.msra.mxu0 0.0
    %2367 = vmatprep.subr.mxu0 0.0
    %2368 = vmatpush1.msra.mxu0 0.0
    %2369 = vmatprep.subr.mxu0 0.0
    %2370 = vmatpush1.msra.mxu0 0.0
    %2371 = vmatprep.subr.mxu0 0.0
    %2372 = vmatpush1.msra.mxu0 0.0
    %2373 = vmatprep.subr.mxu0 0.0
    %2374 = vmatpush1.msra.mxu0 0.0
    %2375 = vmatprep.subr.mxu0 0.0
    %2376 = vmatpush1.msra.mxu0 0.0
    %2377 = vmatprep.subr.mxu0 0.0
    %2378 = vmatpush1.msra.mxu0 0.0
    %2379 = vmatprep.subr.mxu0 0.0
    %2380 = vmatpush1.msra.mxu0 0.0
    %2381 = vmatprep.subr.mxu0 0.0
    %2382 = vmatpush1.msra.mxu0 0.0
    %2383 = vmatprep.subr.mxu0 0.0
    %2384 = vmatpush1.msra.mxu0 0.0
    %2385 = vmatprep.subr.mxu0 0.0
    %2386 = vmatpush1.msra.mxu0 0.0
    %2387 = vmatprep.subr.mxu0 0.0
    %2388 = vmatpush1.msra.mxu0 0.0
    %2389 = vmatprep.subr.mxu0 0.0
    %2390 = vmatpush1.msra.mxu0 0.0
    %2391 = vmatprep.subr.mxu0 0.0
    %2392 = vmatpush1.msra.mxu0 0.0
    %2393 = vmatprep.subr.mxu0 0.0
    %2394 = vmatpush1.msra.mxu0 0.0
    %2395 = vmatprep.subr.mxu0 0.0
    %2396 = vmatpush1.msra.mxu0 0.0
    %2397 = vmatprep.subr.mxu0 0.0
    %2398 = vmatpush1.msra.mxu0 0.0
    %2399 = vmatprep.subr.mxu0 0.0
    %2400 = vmatpush1.msra.mxu0 0.0
    %2401 = vmatprep.subr.mxu0 0.0
    %2402 = vmatpush1.msra.mxu0 0.0
    %2403 = vmatprep.subr.mxu0 0.0
    %2404 = vmatpush1.msra.mxu0 0.0
    %2405 = vmatprep.subr.mxu0 0.0
    %2406 = vmatpush1.msra.mxu0 0.0
    %2407 = vmatprep.subr.mxu0 0.0
    %2408 = vmatpush1.msra.mxu0 0.0
    %2409 = vmatprep.subr.mxu0 0.0
    %2410 = vmatpush1.msra.mxu0 0.0
    %2411 = vmatprep.subr.mxu0 0.0
    %2412 = vmatpush1.msra.mxu0 0.0
    %2413 = vmatprep.subr.mxu0 0.0
    %2414 = vmatpush1.msra.mxu0 0.0
    %2415 = vmatprep.subr.mxu0 0.0
    %2416 = vmatpush1.msra.mxu0 0.0
    %2417 = vmatprep.subr.mxu0 0.0
    %2418 = vmatpush1.msra.mxu0 0.0
    %2419 = vmatprep.subr.mxu0 0.0
    %2420 = vmatpush1.msra.mxu0 0.0
    %2421 = vmatprep.subr.mxu0 0.0
    %2422 = vmatpush1.msra.mxu0 0.0
    %2423 = vmatprep.subr.mxu0 0.0
    %2424 = vmatpush1.msra.mxu0 0.0
    %2425 = vmatprep.mubr.f32.mxu0 0.0
    %v2426 = vand.u32 %v2357, 4294901760
    %v2427 = vsub.f32 %v2357, %v2426
    %v2428 = vand.u32 %v2427, 4294901760
    %v2429 = vsub.f32 %v2427, %v2428
    %v2430 = vand.u32 %v2429, 4294901760
    %2431 = vmatmul.mubr.f32.gmra.mrb[0].mxu0 %v2430
    %v2432 = vpop.f32.mrb[0].mxu0
    %v2433 = vadd.f32 0.0, %v2432
    %v2434 = vpop.f32.mrb[0].mxu0
    %2435 = vdwg.mxu0
    %2436 = vmatprep.subr.mxu0 0.0
    %v2437 = vand.u32 %v2354, 4294901760
    %v2438 = vsub.f32 %v2354, %v2437
    %v2439 = vand.u32 %v2438, 4294901760
    %v2440 = vsub.f32 %v2438, %v2439
    %v2441 = vand.u32 %v2440, 4294901760
    %2442 = vmatpush1.msra.mxu0 %v2441
    %2443 = vmatprep.subr.mxu0 0.0
    %v2444 = vand.u32 %v2355, 4294901760
    %v2445 = vsub.f32 %v2355, %v2444
    %v2446 = vand.u32 %v2445, 4294901760
    %v2447 = vsub.f32 %v2445, %v2446
    %v2448 = vand.u32 %v2447, 4294901760
    %2449 = vmatpush1.msra.mxu0 %v2448
    %2450 = vmatprep.subr.mxu0 0.0
    %2451 = vmatpush1.msra.mxu0 0.0
    %2452 = vmatprep.subr.mxu0 0.0
    %2453 = vmatpush1.msra.mxu0 0.0
    %2454 = vmatprep.subr.mxu0 0.0
    %2455 = vmatpush1.msra.mxu0 0.0
    %2456 = vmatprep.subr.mxu0 0.0
    %2457 = vmatpush1.msra.mxu0 0.0
    %2458 = vmatprep.subr.mxu0 0.0
    %2459 = vmatpush1.msra.mxu0 0.0
    %2460 = vmatprep.subr.mxu0 0.0
    %2461 = vmatpush1.msra.mxu0 0.0
    %2462 = vmatprep.subr.mxu0 0.0
    %2463 = vmatpush1.msra.mxu0 0.0
    %2464 = vmatprep.subr.mxu0 0.0
    %2465 = vmatpush1.msra.mxu0 0.0
    %2466 = vmatprep.subr.mxu0 0.0
    %2467 = vmatpush1.msra.mxu0 0.0
    %2468 = vmatprep.subr.mxu0 0.0
    %2469 = vmatpush1.msra.mxu0 0.0
    %2470 = vmatprep.subr.mxu0 0.0
    %2471 = vmatpush1.msra.mxu0 0.0
    %2472 = vmatprep.subr.mxu0 0.0
    %2473 = vmatpush1.msra.mxu0 0.0
    %2474 = vmatprep.subr.mxu0 0.0
    %2475 = vmatpush1.msra.mxu0 0.0
    %2476 = vmatprep.subr.mxu0 0.0
    %2477 = vmatpush1.msra.mxu0 0.0
    %2478 = vmatprep.subr.mxu0 0.0
    %2479 = vmatpush1.msra.mxu0 0.0
    %2480 = vmatprep.subr.mxu0 0.0
    %2481 = vmatpush1.msra.mxu0 0.0
    %2482 = vmatprep.subr.mxu0 0.0
    %2483 = vmatpush1.msra.mxu0 0.0
    %2484 = vmatprep.subr.mxu0 0.0
    %2485 = vmatpush1.msra.mxu0 0.0
    %2486 = vmatprep.subr.mxu0 0.0
    %2487 = vmatpush1.msra.mxu0 0.0
    %2488 = vmatprep.subr.mxu0 0.0
    %2489 = vmatpush1.msra.mxu0 0.0
    %2490 = vmatprep.subr.mxu0 0.0
    %2491 = vmatpush1.msra.mxu0 0.0
    %2492 = vmatprep.subr.mxu0 0.0
    %2493 = vmatpush1.msra.mxu0 0.0
    %2494 = vmatprep.subr.mxu0 0.0
    %2495 = vmatpush1.msra.mxu0 0.0
    %2496 = vmatprep.subr.mxu0 0.0
    %2497 = vmatpush1.msra.mxu0 0.0
    %2498 = vmatprep.subr.mxu0 0.0
    %2499 = vmatpush1.msra.mxu0 0.0
    %2500 = vmatprep.subr.mxu0 0.0
    %2501 = vmatpush1.msra.mxu0 0.0
    %2502 = vmatprep.subr.mxu0 0.0
    %2503 = vmatpush1.msra.mxu0 0.0
    %2504 = vmatprep.subr.mxu0 0.0
    %2505 = vmatpush1.msra.mxu0 0.0
    %2506 = vmatprep.subr.mxu0 0.0
    %2507 = vmatpush1.msra.mxu0 0.0
    %2508 = vmatprep.subr.mxu0 0.0
    %2509 = vmatpush1.msra.mxu0 0.0
    %2510 = vmatprep.mubr.f32.mxu0 0.0
    %v2511 = vand.u32 %v2357, 4294901760
    %2512 = vmatmul.mubr.f32.gmra.mrb[0].mxu0 %v2511
    %v2513 = vpop.f32.mrb[0].mxu0
    %v2514 = vadd.f32 %v2433, %v2513
    %v2515 = vpop.f32.mrb[0].mxu0
    %2516 = vdwg.mxu0
    %2517 = vmatprep.subr.mxu0 0.0
    %v2518 = vand.u32 %v2354, 4294901760
    %v2519 = vsub.f32 %v2354, %v2518
    %2520 = vmatpush1.msra.mxu0 %v2519
    %2521 = vmatprep.subr.mxu0 0.0
    %v2522 = vand.u32 %v2355, 4294901760
    %v2523 = vsub.f32 %v2355, %v2522
    %2524 = vmatpush1.msra.mxu0 %v2523
    %2525 = vmatprep.subr.mxu0 0.0
    %2526 = vmatpush1.msra.mxu0 0.0
    %2527 = vmatprep.subr.mxu0 0.0
    %2528 = vmatpush1.msra.mxu0 0.0
    %2529 = vmatprep.subr.mxu0 0.0
    %2530 = vmatpush1.msra.mxu0 0.0
    %2531 = vmatprep.subr.mxu0 0.0
    %2532 = vmatpush1.msra.mxu0 0.0
    %2533 = vmatprep.subr.mxu0 0.0
    %2534 = vmatpush1.msra.mxu0 0.0
    %2535 = vmatprep.subr.mxu0 0.0
    %2536 = vmatpush1.msra.mxu0 0.0
    %2537 = vmatprep.subr.mxu0 0.0
    %2538 = vmatpush1.msra.mxu0 0.0
    %2539 = vmatprep.subr.mxu0 0.0
    %2540 = vmatpush1.msra.mxu0 0.0
    %2541 = vmatprep.subr.mxu0 0.0
    %2542 = vmatpush1.msra.mxu0 0.0
    %2543 = vmatprep.subr.mxu0 0.0
    %2544 = vmatpush1.msra.mxu0 0.0
    %2545 = vmatprep.subr.mxu0 0.0
    %2546 = vmatpush1.msra.mxu0 0.0
    %2547 = vmatprep.subr.mxu0 0.0
    %2548 = vmatpush1.msra.mxu0 0.0
    %2549 = vmatprep.subr.mxu0 0.0
    %2550 = vmatpush1.msra.mxu0 0.0
    %2551 = vmatprep.subr.mxu0 0.0
    %2552 = vmatpush1.msra.mxu0 0.0
    %2553 = vmatprep.subr.mxu0 0.0
    %2554 = vmatpush1.msra.mxu0 0.0
    %2555 = vmatprep.subr.mxu0 0.0
    %2556 = vmatpush1.msra.mxu0 0.0
    %2557 = vmatprep.subr.mxu0 0.0
    %2558 = vmatpush1.msra.mxu0 0.0
    %2559 = vmatprep.subr.mxu0 0.0
    %2560 = vmatpush1.msra.mxu0 0.0
    %2561 = vmatprep.subr.mxu0 0.0
    %2562 = vmatpush1.msra.mxu0 0.0
    %2563 = vmatprep.subr.mxu0 0.0
    %2564 = vmatpush1.msra.mxu0 0.0
    %2565 = vmatprep.subr.mxu0 0.0
    %2566 = vmatpush1.msra.mxu0 0.0
    %2567 = vmatprep.subr.mxu0 0.0
    %2568 = vmatpush1.msra.mxu0 0.0
    %2569 = vmatprep.subr.mxu0 0.0
    %2570 = vmatpush1.msra.mxu0 0.0
    %2571 = vmatprep.subr.mxu0 0.0
    %2572 = vmatpush1.msra.mxu0 0.0
    %2573 = vmatprep.subr.mxu0 0.0
    %2574 = vmatpush1.msra.mxu0 0.0
    %2575 = vmatprep.subr.mxu0 0.0
    %2576 = vmatpush1.msra.mxu0 0.0
    %2577 = vmatprep.subr.mxu0 0.0
    %2578 = vmatpush1.msra.mxu0 0.0
    %2579 = vmatprep.subr.mxu0 0.0
    %2580 = vmatpush1.msra.mxu0 0.0
    %2581 = vmatprep.subr.mxu0 0.0
    %2582 = vmatpush1.msra.mxu0 0.0
    %2583 = vmatprep.subr.mxu0 0.0
    %2584 = vmatpush1.msra.mxu0 0.0
    %2585 = vmatprep.mubr.f32.mxu0 0.0
    %v2586 = vand.u32 %v2357, 4294901760
    %v2587 = vsub.f32 %v2357, %v2586
    %2588 = vmatmul.mubr.f32.gmra.mrb[0].mxu0 %v2587
    %v2589 = vpop.f32.mrb[0].mxu0
    %v2590 = vadd.f32 %v2514, %v2589
    %v2591 = vpop.f32.mrb[0].mxu0
    %2592 = vdwg.mxu0
    %2593 = vmatprep.subr.mxu0 0.0
    %v2594 = vand.u32 %v2354, 4294901760
    %2595 = vmatpush1.msra.mxu0 %v2594
    %2596 = vmatprep.subr.mxu0 0.0
    %v2597 = vand.u32 %v2355, 4294901760
    %2598 = vmatpush1.msra.mxu0 %v2597
    %2599 = vmatprep.subr.mxu0 0.0
    %2600 = vmatpush1.msra.mxu0 0.0
    %2601 = vmatprep.subr.mxu0 0.0
    %2602 = vmatpush1.msra.mxu0 0.0
    %2603 = vmatprep.subr.mxu0 0.0
    %2604 = vmatpush1.msra.mxu0 0.0
    %2605 = vmatprep.subr.mxu0 0.0
    %2606 = vmatpush1.msra.mxu0 0.0
    %2607 = vmatprep.subr.mxu0 0.0
    %2608 = vmatpush1.msra.mxu0 0.0
    %2609 = vmatprep.subr.mxu0 0.0
    %2610 = vmatpush1.msra.mxu0 0.0
    %2611 = vmatprep.subr.mxu0 0.0
    %2612 = vmatpush1.msra.mxu0 0.0
    %2613 = vmatprep.subr.mxu0 0.0
    %2614 = vmatpush1.msra.mxu0 0.0
    %2615 = vmatprep.subr.mxu0 0.0
    %2616 = vmatpush1.msra.mxu0 0.0
    %2617 = vmatprep.subr.mxu0 0.0
    %2618 = vmatpush1.msra.mxu0 0.0
    %2619 = vmatprep.subr.mxu0 0.0
    %2620 = vmatpush1.msra.mxu0 0.0
    %2621 = vmatprep.subr.mxu0 0.0
    %2622 = vmatpush1.msra.mxu0 0.0
    %2623 = vmatprep.subr.mxu0 0.0
    %2624 = vmatpush1.msra.mxu0 0.0
    %2625 = vmatprep.subr.mxu0 0.0
    %2626 = vmatpush1.msra.mxu0 0.0
    %2627 = vmatprep.subr.mxu0 0.0
    %2628 = vmatpush1.msra.mxu0 0.0
    %2629 = vmatprep.subr.mxu0 0.0
    %2630 = vmatpush1.msra.mxu0 0.0
    %2631 = vmatprep.subr.mxu0 0.0
    %2632 = vmatpush1.msra.mxu0 0.0
    %2633 = vmatprep.subr.mxu0 0.0
    %2634 = vmatpush1.msra.mxu0 0.0
    %2635 = vmatprep.subr.mxu0 0.0
    %2636 = vmatpush1.msra.mxu0 0.0
    %2637 = vmatprep.subr.mxu0 0.0
    %2638 = vmatpush1.msra.mxu0 0.0
    %2639 = vmatprep.subr.mxu0 0.0
    %2640 = vmatpush1.msra.mxu0 0.0
    %2641 = vmatprep.subr.mxu0 0.0
    %2642 = vmatpush1.msra.mxu0 0.0
    %2643 = vmatprep.subr.mxu0 0.0
    %2644 = vmatpush1.msra.mxu0 0.0
    %2645 = vmatprep.subr.mxu0 0.0
    %2646 = vmatpush1.msra.mxu0 0.0
    %2647 = vmatprep.subr.mxu0 0.0
    %2648 = vmatpush1.msra.mxu0 0.0
    %2649 = vmatprep.subr.mxu0 0.0
    %2650 = vmatpush1.msra.mxu0 0.0
    %2651 = vmatprep.subr.mxu0 0.0
    %2652 = vmatpush1.msra.mxu0 0.0
    %2653 = vmatprep.subr.mxu0 0.0
    %2654 = vmatpush1.msra.mxu0 0.0
    %2655 = vmatprep.subr.mxu0 0.0
    %2656 = vmatpush1.msra.mxu0 0.0
    %2657 = vmatprep.subr.mxu0 0.0
    %2658 = vmatpush1.msra.mxu0 0.0
    %2659 = vmatprep.mubr.f32.mxu0 0.0
    %v2660 = vand.u32 %v2357, 4294901760
    %v2661 = vsub.f32 %v2357, %v2660
    %v2662 = vand.u32 %v2661, 4294901760
    %2663 = vmatmul.mubr.f32.gmra.mrb[0].mxu0 %v2662
    %v2664 = vpop.f32.mrb[0].mxu0
    %v2665 = vadd.f32 %v2590, %v2664
    %v2666 = vpop.f32.mrb[0].mxu0
    %2667 = vdwg.mxu0
    %2668 = vmatprep.subr.mxu0 0.0
    %v2669 = vand.u32 %v2354, 4294901760
    %v2670 = vsub.f32 %v2354, %v2669
    %v2671 = vand.u32 %v2670, 4294901760
    %2672 = vmatpush1.msra.mxu0 %v2671
    %2673 = vmatprep.subr.mxu0 0.0
    %v2674 = vand.u32 %v2355, 4294901760
    %v2675 = vsub.f32 %v2355, %v2674
    %v2676 = vand.u32 %v2675, 4294901760
    %2677 = vmatpush1.msra.mxu0 %v2676
    %2678 = vmatprep.subr.mxu0 0.0
    %2679 = vmatpush1.msra.mxu0 0.0
    %2680 = vmatprep.subr.mxu0 0.0
    %2681 = vmatpush1.msra.mxu0 0.0
    %2682 = vmatprep.subr.mxu0 0.0
    %2683 = vmatpush1.msra.mxu0 0.0
    %2684 = vmatprep.subr.mxu0 0.0
    %2685 = vmatpush1.msra.mxu0 0.0
    %2686 = vmatprep.subr.mxu0 0.0
    %2687 = vmatpush1.msra.mxu0 0.0
    %2688 = vmatprep.subr.mxu0 0.0
    %2689 = vmatpush1.msra.mxu0 0.0
    %2690 = vmatprep.subr.mxu0 0.0
    %2691 = vmatpush1.msra.mxu0 0.0
    %2692 = vmatprep.subr.mxu0 0.0
    %2693 = vmatpush1.msra.mxu0 0.0
    %2694 = vmatprep.subr.mxu0 0.0
    %2695 = vmatpush1.msra.mxu0 0.0
    %2696 = vmatprep.subr.mxu0 0.0
    %2697 = vmatpush1.msra.mxu0 0.0
    %2698 = vmatprep.subr.mxu0 0.0
    %2699 = vmatpush1.msra.mxu0 0.0
    %2700 = vmatprep.subr.mxu0 0.0
    %2701 = vmatpush1.msra.mxu0 0.0
    %2702 = vmatprep.subr.mxu0 0.0
    %2703 = vmatpush1.msra.mxu0 0.0
    %2704 = vmatprep.subr.mxu0 0.0
    %2705 = vmatpush1.msra.mxu0 0.0
    %2706 = vmatprep.subr.mxu0 0.0
    %2707 = vmatpush1.msra.mxu0 0.0
    %2708 = vmatprep.subr.mxu0 0.0
    %2709 = vmatpush1.msra.mxu0 0.0
    %2710 = vmatprep.subr.mxu0 0.0
    %2711 = vmatpush1.msra.mxu0 0.0
    %2712 = vmatprep.subr.mxu0 0.0
    %2713 = vmatpush1.msra.mxu0 0.0
    %2714 = vmatprep.subr.mxu0 0.0
    %2715 = vmatpush1.msra.mxu0 0.0
    %2716 = vmatprep.subr.mxu0 0.0
    %2717 = vmatpush1.msra.mxu0 0.0
    %2718 = vmatprep.subr.mxu0 0.0
    %2719 = vmatpush1.msra.mxu0 0.0
    %2720 = vmatprep.subr.mxu0 0.0
    %2721 = vmatpush1.msra.mxu0 0.0
    %2722 = vmatprep.subr.mxu0 0.0
    %2723 = vmatpush1.msra.mxu0 0.0
    %2724 = vmatprep.subr.mxu0 0.0
    %2725 = vmatpush1.msra.mxu0 0.0
    %2726 = vmatprep.subr.mxu0 0.0
    %2727 = vmatpush1.msra.mxu0 0.0
    %2728 = vmatprep.subr.mxu0 0.0
    %2729 = vmatpush1.msra.mxu0 0.0
    %2730 = vmatprep.subr.mxu0 0.0
    %2731 = vmatpush1.msra.mxu0 0.0
    %2732 = vmatprep.subr.mxu0 0.0
    %2733 = vmatpush1.msra.mxu0 0.0
    %2734 = vmatprep.subr.mxu0 0.0
    %2735 = vmatpush1.msra.mxu0 0.0
    %2736 = vmatprep.subr.mxu0 0.0
    %2737 = vmatpush1.msra.mxu0 0.0
    %2738 = vmatprep.mubr.f32.mxu0 0.0
    %v2739 = vand.u32 %v2357, 4294901760
    %2740 = vmatmul.mubr.f32.gmra.mrb[0].mxu0 %v2739
    %v2741 = vpop.f32.mrb[0].mxu0
    %v2742 = vadd.f32 %v2665, %v2741
    %v2743 = vpop.f32.mrb[0].mxu0
    %2744 = vdwg.mxu0
    %2745 = vmatprep.subr.mxu0 0.0
    %v2746 = vand.u32 %v2354, 4294901760
    %2747 = vmatpush1.msra.mxu0 %v2746
    %2748 = vmatprep.subr.mxu0 0.0
    %v2749 = vand.u32 %v2355, 4294901760
    %2750 = vmatpush1.msra.mxu0 %v2749
    %2751 = vmatprep.subr.mxu0 0.0
    %2752 = vmatpush1.msra.mxu0 0.0
    %2753 = vmatprep.subr.mxu0 0.0
    %2754 = vmatpush1.msra.mxu0 0.0
    %2755 = vmatprep.subr.mxu0 0.0
    %2756 = vmatpush1.msra.mxu0 0.0
    %2757 = vmatprep.subr.mxu0 0.0
    %2758 = vmatpush1.msra.mxu0 0.0
    %2759 = vmatprep.subr.mxu0 0.0
    %2760 = vmatpush1.msra.mxu0 0.0
    %2761 = vmatprep.subr.mxu0 0.0
    %2762 = vmatpush1.msra.mxu0 0.0
    %2763 = vmatprep.subr.mxu0 0.0
    %2764 = vmatpush1.msra.mxu0 0.0
    %2765 = vmatprep.subr.mxu0 0.0
    %2766 = vmatpush1.msra.mxu0 0.0
    %2767 = vmatprep.subr.mxu0 0.0
    %2768 = vmatpush1.msra.mxu0 0.0
    %2769 = vmatprep.subr.mxu0 0.0
    %2770 = vmatpush1.msra.mxu0 0.0
    %2771 = vmatprep.subr.mxu0 0.0
    %2772 = vmatpush1.msra.mxu0 0.0
    %2773 = vmatprep.subr.mxu0 0.0
    %2774 = vmatpush1.msra.mxu0 0.0
    %2775 = vmatprep.subr.mxu0 0.0
    %2776 = vmatpush1.msra.mxu0 0.0
    %2777 = vmatprep.subr.mxu0 0.0
    %2778 = vmatpush1.msra.mxu0 0.0
    %2779 = vmatprep.subr.mxu0 0.0
    %2780 = vmatpush1.msra.mxu0 0.0
    %2781 = vmatprep.subr.mxu0 0.0
    %2782 = vmatpush1.msra.mxu0 0.0
    %2783 = vmatprep.subr.mxu0 0.0
    %2784 = vmatpush1.msra.mxu0 0.0
    %2785 = vmatprep.subr.mxu0 0.0
    %2786 = vmatpush1.msra.mxu0 0.0
    %2787 = vmatprep.subr.mxu0 0.0
    %2788 = vmatpush1.msra.mxu0 0.0
    %2789 = vmatprep.subr.mxu0 0.0
    %2790 = vmatpush1.msra.mxu0 0.0
    %2791 = vmatprep.subr.mxu0 0.0
    %2792 = vmatpush1.msra.mxu0 0.0
    %2793 = vmatprep.subr.mxu0 0.0
    %2794 = vmatpush1.msra.mxu0 0.0
    %2795 = vmatprep.subr.mxu0 0.0
    %2796 = vmatpush1.msra.mxu0 0.0
    %2797 = vmatprep.subr.mxu0 0.0
    %2798 = vmatpush1.msra.mxu0 0.0
    %2799 = vmatprep.subr.mxu0 0.0
    %2800 = vmatpush1.msra.mxu0 0.0
    %2801 = vmatprep.subr.mxu0 0.0
    %2802 = vmatpush1.msra.mxu0 0.0
    %2803 = vmatprep.subr.mxu0 0.0
    %2804 = vmatpush1.msra.mxu0 0.0
    %2805 = vmatprep.subr.mxu0 0.0
    %2806 = vmatpush1.msra.mxu0 0.0
    %2807 = vmatprep.subr.mxu0 0.0
    %2808 = vmatpush1.msra.mxu0 0.0
    %2809 = vmatprep.subr.mxu0 0.0
    %2810 = vmatpush1.msra.mxu0 0.0
    %2811 = vmatprep.mubr.f32.mxu0 0.0
    %v2812 = vand.u32 %v2357, 4294901760
    %2813 = vmatmul.mubr.f32.gmra.mrb[0].mxu0 %v2812
    %v2814 = vpop.f32.mrb[0].mxu0
    %v2815 = vadd.f32 %v2742, %v2814
    %v2816 = vpop.f32.mrb[0].mxu0
    %2817 = vdwg.mxu0
    %2818 = vmatprep.subr.mxu0 0.0
    %v2819 = vand.u32 %v2338, 4294901760
    %2820 = vmatpush1.msra.mxu0 %v2819
    %2821 = vmatprep.subr.mxu0 0.0
    %v2822 = vand.u32 %v2339, 4294901760
    %2823 = vmatpush1.msra.mxu0 %v2822
    %2824 = vmatprep.subr.mxu0 0.0
    %v2825 = vand.u32 %v2340, 4294901760
    %2826 = vmatpush1.msra.mxu0 %v2825
    %2827 = vmatprep.subr.mxu0 0.0
    %v2828 = vand.u32 %v2341, 4294901760
    %2829 = vmatpush1.msra.mxu0 %v2828
    %2830 = vmatprep.subr.mxu0 0.0
    %v2831 = vand.u32 %v2342, 4294901760
    %2832 = vmatpush1.msra.mxu0 %v2831
    %2833 = vmatprep.subr.mxu0 0.0
    %v2834 = vand.u32 %v2343, 4294901760
    %2835 = vmatpush1.msra.mxu0 %v2834
    %2836 = vmatprep.subr.mxu0 0.0
    %v2837 = vand.u32 %v2344, 4294901760
    %2838 = vmatpush1.msra.mxu0 %v2837
    %2839 = vmatprep.subr.mxu0 0.0
    %v2840 = vand.u32 %v2345, 4294901760
    %2841 = vmatpush1.msra.mxu0 %v2840
    %2842 = vmatprep.subr.mxu0 0.0
    %v2843 = vand.u32 %v2346, 4294901760
    %2844 = vmatpush1.msra.mxu0 %v2843
    %2845 = vmatprep.subr.mxu0 0.0
    %v2846 = vand.u32 %v2347, 4294901760
    %2847 = vmatpush1.msra.mxu0 %v2846
    %2848 = vmatprep.subr.mxu0 0.0
    %v2849 = vand.u32 %v2348, 4294901760
    %2850 = vmatpush1.msra.mxu0 %v2849
    %2851 = vmatprep.subr.mxu0 0.0
    %v2852 = vand.u32 %v2349, 4294901760
    %2853 = vmatpush1.msra.mxu0 %v2852
    %2854 = vmatprep.subr.mxu0 0.0
    %v2855 = vand.u32 %v2350, 4294901760
    %2856 = vmatpush1.msra.mxu0 %v2855
    %2857 = vmatprep.subr.mxu0 0.0
    %v2858 = vand.u32 %v2351, 4294901760
    %2859 = vmatpush1.msra.mxu0 %v2858
    %2860 = vmatprep.subr.mxu0 0.0
    %v2861 = vand.u32 %v2352, 4294901760
    %2862 = vmatpush1.msra.mxu0 %v2861
    %2863 = vmatprep.subr.mxu0 0.0
    %v2864 = vand.u32 %v2353, 4294901760
    %2865 = vmatpush1.msra.mxu0 %v2864
    %2866 = vmatprep.subr.mxu0 0.0
    %2867 = vmatpush1.msra.mxu0 0.0
    %2868 = vmatprep.subr.mxu0 0.0
    %2869 = vmatpush1.msra.mxu0 0.0
    %2870 = vmatprep.subr.mxu0 0.0
    %2871 = vmatpush1.msra.mxu0 0.0
    %2872 = vmatprep.subr.mxu0 0.0
    %2873 = vmatpush1.msra.mxu0 0.0
    %2874 = vmatprep.subr.mxu0 0.0
    %2875 = vmatpush1.msra.mxu0 0.0
    %2876 = vmatprep.subr.mxu0 0.0
    %2877 = vmatpush1.msra.mxu0 0.0
    %2878 = vmatprep.subr.mxu0 0.0
    %2879 = vmatpush1.msra.mxu0 0.0
    %2880 = vmatprep.subr.mxu0 0.0
    %2881 = vmatpush1.msra.mxu0 0.0
    %2882 = vmatprep.subr.mxu0 0.0
    %2883 = vmatpush1.msra.mxu0 0.0
    %2884 = vmatprep.subr.mxu0 0.0
    %2885 = vmatpush1.msra.mxu0 0.0
    %2886 = vmatprep.subr.mxu0 0.0
    %2887 = vmatpush1.msra.mxu0 0.0
    %2888 = vmatprep.subr.mxu0 0.0
    %2889 = vmatpush1.msra.mxu0 0.0
    %2890 = vmatprep.subr.mxu0 0.0
    %2891 = vmatpush1.msra.mxu0 0.0
    %2892 = vmatprep.subr.mxu0 0.0
    %2893 = vmatpush1.msra.mxu0 0.0
    %2894 = vmatprep.subr.mxu0 0.0
    %2895 = vmatpush1.msra.mxu0 0.0
    %2896 = vmatprep.subr.mxu0 0.0
    %2897 = vmatpush1.msra.mxu0 0.0
    %2898 = vmatprep.mubr.f32.mxu0 0.0
    %v2899 = vand.u32 %v1850, 4294901760
    %v2900 = vsub.f32 %v1850, %v2899
    %v2901 = vand.u32 %v2900, 4294901760
    %v2902 = vsub.f32 %v2900, %v2901
    %v2903 = vand.u32 %v2902, 4294901760
    %2904 = vmatmul.mubr.f32.gmra.mrb[0].mxu0 %v2903
    %v2905 = vpop.f32.mrb[0].mxu0
    %v2906 = vadd.f32 %v2815, %v2905
    %v2907 = vpop.f32.mrb[0].mxu0
    %2908 = vdwg.mxu0
    %2909 = vmatprep.subr.mxu0 0.0
    %v2910 = vand.u32 %v2338, 4294901760
    %v2911 = vsub.f32 %v2338, %v2910
    %v2912 = vand.u32 %v2911, 4294901760
    %v2913 = vsub.f32 %v2911, %v2912
    %v2914 = vand.u32 %v2913, 4294901760
    %2915 = vmatpush1.msra.mxu0 %v2914
    %2916 = vmatprep.subr.mxu0 0.0
    %v2917 = vand.u32 %v2339, 4294901760
    %v2918 = vsub.f32 %v2339, %v2917
    %v2919 = vand.u32 %v2918, 4294901760
    %v2920 = vsub.f32 %v2918, %v2919
    %v2921 = vand.u32 %v2920, 4294901760
    %2922 = vmatpush1.msra.mxu0 %v2921
    %2923 = vmatprep.subr.mxu0 0.0
    %v2924 = vand.u32 %v2340, 4294901760
    %v2925 = vsub.f32 %v2340, %v2924
    %v2926 = vand.u32 %v2925, 4294901760
    %v2927 = vsub.f32 %v2925, %v2926
    %v2928 = vand.u32 %v2927, 4294901760
    %2929 = vmatpush1.msra.mxu0 %v2928
    %2930 = vmatprep.subr.mxu0 0.0
    %v2931 = vand.u32 %v2341, 4294901760
    %v2932 = vsub.f32 %v2341, %v2931
    %v2933 = vand.u32 %v2932, 4294901760
    %v2934 = vsub.f32 %v2932, %v2933
    %v2935 = vand.u32 %v2934, 4294901760
    %2936 = vmatpush1.msra.mxu0 %v2935
    %2937 = vmatprep.subr.mxu0 0.0
    %v2938 = vand.u32 %v2342, 4294901760
    %v2939 = vsub.f32 %v2342, %v2938
    %v2940 = vand.u32 %v2939, 4294901760
    %v2941 = vsub.f32 %v2939, %v2940
    %v2942 = vand.u32 %v2941, 4294901760
    %2943 = vmatpush1.msra.mxu0 %v2942
    %2944 = vmatprep.subr.mxu0 0.0
    %v2945 = vand.u32 %v2343, 4294901760
    %v2946 = vsub.f32 %v2343, %v2945
    %v2947 = vand.u32 %v2946, 4294901760
    %v2948 = vsub.f32 %v2946, %v2947
    %v2949 = vand.u32 %v2948, 4294901760
    %2950 = vmatpush1.msra.mxu0 %v2949
    %2951 = vmatprep.subr.mxu0 0.0
    %v2952 = vand.u32 %v2344, 4294901760
    %v2953 = vsub.f32 %v2344, %v2952
    %v2954 = vand.u32 %v2953, 4294901760
    %v2955 = vsub.f32 %v2953, %v2954
    %v2956 = vand.u32 %v2955, 4294901760
    %2957 = vmatpush1.msra.mxu0 %v2956
    %2958 = vmatprep.subr.mxu0 0.0
    %v2959 = vand.u32 %v2345, 4294901760
    %v2960 = vsub.f32 %v2345, %v2959
    %v2961 = vand.u32 %v2960, 4294901760
    %v2962 = vsub.f32 %v2960, %v2961
    %v2963 = vand.u32 %v2962, 4294901760
    %2964 = vmatpush1.msra.mxu0 %v2963
    %2965 = vmatprep.subr.mxu0 0.0
    %v2966 = vand.u32 %v2346, 4294901760
    %v2967 = vsub.f32 %v2346, %v2966
    %v2968 = vand.u32 %v2967, 4294901760
    %v2969 = vsub.f32 %v2967, %v2968
    %v2970 = vand.u32 %v2969, 4294901760
    %2971 = vmatpush1.msra.mxu0 %v2970
    %2972 = vmatprep.subr.mxu0 0.0
    %v2973 = vand.u32 %v2347, 4294901760
    %v2974 = vsub.f32 %v2347, %v2973
    %v2975 = vand.u32 %v2974, 4294901760
    %v2976 = vsub.f32 %v2974, %v2975
    %v2977 = vand.u32 %v2976, 4294901760
    %2978 = vmatpush1.msra.mxu0 %v2977
    %2979 = vmatprep.subr.mxu0 0.0
    %v2980 = vand.u32 %v2348, 4294901760
    %v2981 = vsub.f32 %v2348, %v2980
    %v2982 = vand.u32 %v2981, 4294901760
    %v2983 = vsub.f32 %v2981, %v2982
    %v2984 = vand.u32 %v2983, 4294901760
    %2985 = vmatpush1.msra.mxu0 %v2984
    %2986 = vmatprep.subr.mxu0 0.0
    %v2987 = vand.u32 %v2349, 4294901760
    %v2988 = vsub.f32 %v2349, %v2987
    %v2989 = vand.u32 %v2988, 4294901760
    %v2990 = vsub.f32 %v2988, %v2989
    %v2991 = vand.u32 %v2990, 4294901760
    %2992 = vmatpush1.msra.mxu0 %v2991
    %2993 = vmatprep.subr.mxu0 0.0
    %v2994 = vand.u32 %v2350, 4294901760
    %v2995 = vsub.f32 %v2350, %v2994
    %v2996 = vand.u32 %v2995, 4294901760
    %v2997 = vsub.f32 %v2995, %v2996
    %v2998 = vand.u32 %v2997, 4294901760
    %2999 = vmatpush1.msra.mxu0 %v2998
    %3000 = vmatprep.subr.mxu0 0.0
    %v3001 = vand.u32 %v2351, 4294901760
    %v3002 = vsub.f32 %v2351, %v3001
    %v3003 = vand.u32 %v3002, 4294901760
    %v3004 = vsub.f32 %v3002, %v3003
    %v3005 = vand.u32 %v3004, 4294901760
    %3006 = vmatpush1.msra.mxu0 %v3005
    %3007 = vmatprep.subr.mxu0 0.0
    %v3008 = vand.u32 %v2352, 4294901760
    %v3009 = vsub.f32 %v2352, %v3008
    %v3010 = vand.u32 %v3009, 4294901760
    %v3011 = vsub.f32 %v3009, %v3010
    %v3012 = vand.u32 %v3011, 4294901760
    %3013 = vmatpush1.msra.mxu0 %v3012
    %3014 = vmatprep.subr.mxu0 0.0
    %v3015 = vand.u32 %v2353, 4294901760
    %v3016 = vsub.f32 %v2353, %v3015
    %v3017 = vand.u32 %v3016, 4294901760
    %v3018 = vsub.f32 %v3016, %v3017
    %v3019 = vand.u32 %v3018, 4294901760
    %3020 = vmatpush1.msra.mxu0 %v3019
    %3021 = vmatprep.subr.mxu0 0.0
    %3022 = vmatpush1.msra.mxu0 0.0
    %3023 = vmatprep.subr.mxu0 0.0
    %3024 = vmatpush1.msra.mxu0 0.0
    %3025 = vmatprep.subr.mxu0 0.0
    %3026 = vmatpush1.msra.mxu0 0.0
    %3027 = vmatprep.subr.mxu0 0.0
    %3028 = vmatpush1.msra.mxu0 0.0
    %3029 = vmatprep.subr.mxu0 0.0
    %3030 = vmatpush1.msra.mxu0 0.0
    %3031 = vmatprep.subr.mxu0 0.0
    %3032 = vmatpush1.msra.mxu0 0.0
    %3033 = vmatprep.subr.mxu0 0.0
    %3034 = vmatpush1.msra.mxu0 0.0
    %3035 = vmatprep.subr.mxu0 0.0
    %3036 = vmatpush1.msra.mxu0 0.0
    %3037 = vmatprep.subr.mxu0 0.0
    %3038 = vmatpush1.msra.mxu0 0.0
    %3039 = vmatprep.subr.mxu0 0.0
    %3040 = vmatpush1.msra.mxu0 0.0
    %3041 = vmatprep.subr.mxu0 0.0
    %3042 = vmatpush1.msra.mxu0 0.0
    %3043 = vmatprep.subr.mxu0 0.0
    %3044 = vmatpush1.msra.mxu0 0.0
    %3045 = vmatprep.subr.mxu0 0.0
    %3046 = vmatpush1.msra.mxu0 0.0
    %3047 = vmatprep.subr.mxu0 0.0
    %3048 = vmatpush1.msra.mxu0 0.0
    %3049 = vmatprep.subr.mxu0 0.0
    %3050 = vmatpush1.msra.mxu0 0.0
    %3051 = vmatprep.subr.mxu0 0.0
    %3052 = vmatpush1.msra.mxu0 0.0
    %3053 = vmatprep.mubr.f32.mxu0 0.0
    %v3054 = vand.u32 %v1850, 4294901760
    %3055 = vmatmul.mubr.f32.gmra.mrb[0].mxu0 %v3054
    %v3056 = vpop.f32.mrb[0].mxu0
    %v3057 = vadd.f32 %v2906, %v3056
    %v3058 = vpop.f32.mrb[0].mxu0
    %3059 = vdwg.mxu0
    %3060 = vmatprep.subr.mxu0 0.0
    %v3061 = vand.u32 %v2338, 4294901760
    %v3062 = vsub.f32 %v2338, %v3061
    %3063 = vmatpush1.msra.mxu0 %v3062
    %3064 = vmatprep.subr.mxu0 0.0
    %v3065 = vand.u32 %v2339, 4294901760
    %v3066 = vsub.f32 %v2339, %v3065
    %3067 = vmatpush1.msra.mxu0 %v3066
    %3068 = vmatprep.subr.mxu0 0.0
    %v3069 = vand.u32 %v2340, 4294901760
    %v3070 = vsub.f32 %v2340, %v3069
    %3071 = vmatpush1.msra.mxu0 %v3070
    %3072 = vmatprep.subr.mxu0 0.0
    %v3073 = vand.u32 %v2341, 4294901760
    %v3074 = vsub.f32 %v2341, %v3073
    %3075 = vmatpush1.msra.mxu0 %v3074
    %3076 = vmatprep.subr.mxu0 0.0
    %v3077 = vand.u32 %v2342, 4294901760
    %v3078 = vsub.f32 %v2342, %v3077
    %3079 = vmatpush1.msra.mxu0 %v3078
    %3080 = vmatprep.subr.mxu0 0.0
    %v3081 = vand.u32 %v2343, 4294901760
    %v3082 = vsub.f32 %v2343, %v3081
    %3083 = vmatpush1.msra.mxu0 %v3082
    %3084 = vmatprep.subr.mxu0 0.0
    %v3085 = vand.u32 %v2344, 4294901760
    %v3086 = vsub.f32 %v2344, %v3085
    %3087 = vmatpush1.msra.mxu0 %v3086
    %3088 = vmatprep.subr.mxu0 0.0
    %v3089 = vand.u32 %v2345, 4294901760
    %v3090 = vsub.f32 %v2345, %v3089
    %3091 = vmatpush1.msra.mxu0 %v3090
    %3092 = vmatprep.subr.mxu0 0.0
    %v3093 = vand.u32 %v2346, 4294901760
    %v3094 = vsub.f32 %v2346, %v3093
    %3095 = vmatpush1.msra.mxu0 %v3094
    %3096 = vmatprep.subr.mxu0 0.0
    %v3097 = vand.u32 %v2347, 4294901760
    %v3098 = vsub.f32 %v2347, %v3097
    %3099 = vmatpush1.msra.mxu0 %v3098
    %3100 = vmatprep.subr.mxu0 0.0
    %v3101 = vand.u32 %v2348, 4294901760
    %v3102 = vsub.f32 %v2348, %v3101
    %3103 = vmatpush1.msra.mxu0 %v3102
    %3104 = vmatprep.subr.mxu0 0.0
    %v3105 = vand.u32 %v2349, 4294901760
    %v3106 = vsub.f32 %v2349, %v3105
    %3107 = vmatpush1.msra.mxu0 %v3106
    %3108 = vmatprep.subr.mxu0 0.0
    %v3109 = vand.u32 %v2350, 4294901760
    %v3110 = vsub.f32 %v2350, %v3109
    %3111 = vmatpush1.msra.mxu0 %v3110
    %3112 = vmatprep.subr.mxu0 0.0
    %v3113 = vand.u32 %v2351, 4294901760
    %v3114 = vsub.f32 %v2351, %v3113
    %3115 = vmatpush1.msra.mxu0 %v3114
    %3116 = vmatprep.subr.mxu0 0.0
    %v3117 = vand.u32 %v2352, 4294901760
    %v3118 = vsub.f32 %v2352, %v3117
    %3119 = vmatpush1.msra.mxu0 %v3118
    %3120 = vmatprep.subr.mxu0 0.0
    %v3121 = vand.u32 %v2353, 4294901760
    %v3122 = vsub.f32 %v2353, %v3121
    %3123 = vmatpush1.msra.mxu0 %v3122
    %3124 = vmatprep.subr.mxu0 0.0
    %3125 = vmatpush1.msra.mxu0 0.0
    %3126 = vmatprep.subr.mxu0 0.0
    %3127 = vmatpush1.msra.mxu0 0.0
    %3128 = vmatprep.subr.mxu0 0.0
    %3129 = vmatpush1.msra.mxu0 0.0
    %3130 = vmatprep.subr.mxu0 0.0
    %3131 = vmatpush1.msra.mxu0 0.0
    %3132 = vmatprep.subr.mxu0 0.0
    %3133 = vmatpush1.msra.mxu0 0.0
    %3134 = vmatprep.subr.mxu0 0.0
    %3135 = vmatpush1.msra.mxu0 0.0
    %3136 = vmatprep.subr.mxu0 0.0
    %3137 = vmatpush1.msra.mxu0 0.0
    %3138 = vmatprep.subr.mxu0 0.0
    %3139 = vmatpush1.msra.mxu0 0.0
    %3140 = vmatprep.subr.mxu0 0.0
    %3141 = vmatpush1.msra.mxu0 0.0
    %3142 = vmatprep.subr.mxu0 0.0
    %3143 = vmatpush1.msra.mxu0 0.0
    %3144 = vmatprep.subr.mxu0 0.0
    %3145 = vmatpush1.msra.mxu0 0.0
    %3146 = vmatprep.subr.mxu0 0.0
    %3147 = vmatpush1.msra.mxu0 0.0
    %3148 = vmatprep.subr.mxu0 0.0
    %3149 = vmatpush1.msra.mxu0 0.0
    %3150 = vmatprep.subr.mxu0 0.0
    %3151 = vmatpush1.msra.mxu0 0.0
    %3152 = vmatprep.subr.mxu0 0.0
    %3153 = vmatpush1.msra.mxu0 0.0
    %3154 = vmatprep.subr.mxu0 0.0
    %3155 = vmatpush1.msra.mxu0 0.0
    %3156 = vmatprep.mubr.f32.mxu0 0.0
    %v3157 = vand.u32 %v1850, 4294901760
    %v3158 = vsub.f32 %v1850, %v3157
    %3159 = vmatmul.mubr.f32.gmra.mrb[0].mxu0 %v3158
    %v3160 = vpop.f32.mrb[0].mxu0
    %v3161 = vadd.f32 %v3057, %v3160
    %v3162 = vpop.f32.mrb[0].mxu0
    %3163 = vdwg.mxu0
    %3164 = vmatprep.subr.mxu0 0.0
    %v3165 = vand.u32 %v2338, 4294901760
    %3166 = vmatpush1.msra.mxu0 %v3165
    %3167 = vmatprep.subr.mxu0 0.0
    %v3168 = vand.u32 %v2339, 4294901760
    %3169 = vmatpush1.msra.mxu0 %v3168
    %3170 = vmatprep.subr.mxu0 0.0
    %v3171 = vand.u32 %v2340, 4294901760
    %3172 = vmatpush1.msra.mxu0 %v3171
    %3173 = vmatprep.subr.mxu0 0.0
    %v3174 = vand.u32 %v2341, 4294901760
    %3175 = vmatpush1.msra.mxu0 %v3174
    %3176 = vmatprep.subr.mxu0 0.0
    %v3177 = vand.u32 %v2342, 4294901760
    %3178 = vmatpush1.msra.mxu0 %v3177
    %3179 = vmatprep.subr.mxu0 0.0
    %v3180 = vand.u32 %v2343, 4294901760
    %3181 = vmatpush1.msra.mxu0 %v3180
    %3182 = vmatprep.subr.mxu0 0.0
    %v3183 = vand.u32 %v2344, 4294901760
    %3184 = vmatpush1.msra.mxu0 %v3183
    %3185 = vmatprep.subr.mxu0 0.0
    %v3186 = vand.u32 %v2345, 4294901760
    %3187 = vmatpush1.msra.mxu0 %v3186
    %3188 = vmatprep.subr.mxu0 0.0
    %v3189 = vand.u32 %v2346, 4294901760
    %3190 = vmatpush1.msra.mxu0 %v3189
    %3191 = vmatprep.subr.mxu0 0.0
    %v3192 = vand.u32 %v2347, 4294901760
    %3193 = vmatpush1.msra.mxu0 %v3192
    %3194 = vmatprep.subr.mxu0 0.0
    %v3195 = vand.u32 %v2348, 4294901760
    %3196 = vmatpush1.msra.mxu0 %v3195
    %3197 = vmatprep.subr.mxu0 0.0
    %v3198 = vand.u32 %v2349, 4294901760
    %3199 = vmatpush1.msra.mxu0 %v3198
    %3200 = vmatprep.subr.mxu0 0.0
    %v3201 = vand.u32 %v2350, 4294901760
    %3202 = vmatpush1.msra.mxu0 %v3201
    %3203 = vmatprep.subr.mxu0 0.0
    %v3204 = vand.u32 %v2351, 4294901760
    %3205 = vmatpush1.msra.mxu0 %v3204
    %3206 = vmatprep.subr.mxu0 0.0
    %v3207 = vand.u32 %v2352, 4294901760
    %3208 = vmatpush1.msra.mxu0 %v3207
    %3209 = vmatprep.subr.mxu0 0.0
    %v3210 = vand.u32 %v2353, 4294901760
    %3211 = vmatpush1.msra.mxu0 %v3210
    %3212 = vmatprep.subr.mxu0 0.0
    %3213 = vmatpush1.msra.mxu0 0.0
    %3214 = vmatprep.subr.mxu0 0.0
    %3215 = vmatpush1.msra.mxu0 0.0
    %3216 = vmatprep.subr.mxu0 0.0
    %3217 = vmatpush1.msra.mxu0 0.0
    %3218 = vmatprep.subr.mxu0 0.0
    %3219 = vmatpush1.msra.mxu0 0.0
    %3220 = vmatprep.subr.mxu0 0.0
    %3221 = vmatpush1.msra.mxu0 0.0
    %3222 = vmatprep.subr.mxu0 0.0
    %3223 = vmatpush1.msra.mxu0 0.0
    %3224 = vmatprep.subr.mxu0 0.0
    %3225 = vmatpush1.msra.mxu0 0.0
    %3226 = vmatprep.subr.mxu0 0.0
    %3227 = vmatpush1.msra.mxu0 0.0
    %3228 = vmatprep.subr.mxu0 0.0
    %3229 = vmatpush1.msra.mxu0 0.0
    %3230 = vmatprep.subr.mxu0 0.0
    %3231 = vmatpush1.msra.mxu0 0.0
    %3232 = vmatprep.subr.mxu0 0.0
    %3233 = vmatpush1.msra.mxu0 0.0
    %3234 = vmatprep.subr.mxu0 0.0
    %3235 = vmatpush1.msra.mxu0 0.0
    %3236 = vmatprep.subr.mxu0 0.0
    %3237 = vmatpush1.msra.mxu0 0.0
    %3238 = vmatprep.subr.mxu0 0.0
    %3239 = vmatpush1.msra.mxu0 0.0
    %3240 = vmatprep.subr.mxu0 0.0
    %3241 = vmatpush1.msra.mxu0 0.0
    %3242 = vmatprep.subr.mxu0 0.0
    %3243 = vmatpush1.msra.mxu0 0.0
    %3244 = vmatprep.mubr.f32.mxu0 0.0
    %v3245 = vand.u32 %v1850, 4294901760
    %v3246 = vsub.f32 %v1850, %v3245
    %v3247 = vand.u32 %v3246, 4294901760
    %3248 = vmatmul.mubr.f32.gmra.mrb[0].mxu0 %v3247
    %v3249 = vpop.f32.mrb[0].mxu0
    %v3250 = vadd.f32 %v3161, %v3249
    %v3251 = vpop.f32.mrb[0].mxu0
    %3252 = vdwg.mxu0
    %3253 = vmatprep.subr.mxu0 0.0
    %v3254 = vand.u32 %v2338, 4294901760
    %v3255 = vsub.f32 %v2338, %v3254
    %v3256 = vand.u32 %v3255, 4294901760
    %3257 = vmatpush1.msra.mxu0 %v3256
    %3258 = vmatprep.subr.mxu0 0.0
    %v3259 = vand.u32 %v2339, 4294901760
    %v3260 = vsub.f32 %v2339, %v3259
    %v3261 = vand.u32 %v3260, 4294901760
    %3262 = vmatpush1.msra.mxu0 %v3261
    %3263 = vmatprep.subr.mxu0 0.0
    %v3264 = vand.u32 %v2340, 4294901760
    %v3265 = vsub.f32 %v2340, %v3264
    %v3266 = vand.u32 %v3265, 4294901760
    %3267 = vmatpush1.msra.mxu0 %v3266
    %3268 = vmatprep.subr.mxu0 0.0
    %v3269 = vand.u32 %v2341, 4294901760
    %v3270 = vsub.f32 %v2341, %v3269
    %v3271 = vand.u32 %v3270, 4294901760
    %3272 = vmatpush1.msra.mxu0 %v3271
    %3273 = vmatprep.subr.mxu0 0.0
    %v3274 = vand.u32 %v2342, 4294901760
    %v3275 = vsub.f32 %v2342, %v3274
    %v3276 = vand.u32 %v3275, 4294901760
    %3277 = vmatpush1.msra.mxu0 %v3276
    %3278 = vmatprep.subr.mxu0 0.0
    %v3279 = vand.u32 %v2343, 4294901760
    %v3280 = vsub.f32 %v2343, %v3279
    %v3281 = vand.u32 %v3280, 4294901760
    %3282 = vmatpush1.msra.mxu0 %v3281
    %3283 = vmatprep.subr.mxu0 0.0
    %v3284 = vand.u32 %v2344, 4294901760
    %v3285 = vsub.f32 %v2344, %v3284
    %v3286 = vand.u32 %v3285, 4294901760
    %3287 = vmatpush1.msra.mxu0 %v3286
    %3288 = vmatprep.subr.mxu0 0.0
    %v3289 = vand.u32 %v2345, 4294901760
    %v3290 = vsub.f32 %v2345, %v3289
    %v3291 = vand.u32 %v3290, 4294901760
    %3292 = vmatpush1.msra.mxu0 %v3291
    %3293 = vmatprep.subr.mxu0 0.0
    %v3294 = vand.u32 %v2346, 4294901760
    %v3295 = vsub.f32 %v2346, %v3294
    %v3296 = vand.u32 %v3295, 4294901760
    %3297 = vmatpush1.msra.mxu0 %v3296
    %3298 = vmatprep.subr.mxu0 0.0
    %v3299 = vand.u32 %v2347, 4294901760
    %v3300 = vsub.f32 %v2347, %v3299
    %v3301 = vand.u32 %v3300, 4294901760
    %3302 = vmatpush1.msra.mxu0 %v3301
    %3303 = vmatprep.subr.mxu0 0.0
    %v3304 = vand.u32 %v2348, 4294901760
    %v3305 = vsub.f32 %v2348, %v3304
    %v3306 = vand.u32 %v3305, 4294901760
    %3307 = vmatpush1.msra.mxu0 %v3306
    %3308 = vmatprep.subr.mxu0 0.0
    %v3309 = vand.u32 %v2349, 4294901760
    %v3310 = vsub.f32 %v2349, %v3309
    %v3311 = vand.u32 %v3310, 4294901760
    %3312 = vmatpush1.msra.mxu0 %v3311
    %3313 = vmatprep.subr.mxu0 0.0
    %v3314 = vand.u32 %v2350, 4294901760
    %v3315 = vsub.f32 %v2350, %v3314
    %v3316 = vand.u32 %v3315, 4294901760
    %3317 = vmatpush1.msra.mxu0 %v3316
    %3318 = vmatprep.subr.mxu0 0.0
    %v3319 = vand.u32 %v2351, 4294901760
    %v3320 = vsub.f32 %v2351, %v3319
    %v3321 = vand.u32 %v3320, 4294901760
    %3322 = vmatpush1.msra.mxu0 %v3321
    %3323 = vmatprep.subr.mxu0 0.0
    %v3324 = vand.u32 %v2352, 4294901760
    %v3325 = vsub.f32 %v2352, %v3324
    %v3326 = vand.u32 %v3325, 4294901760
    %3327 = vmatpush1.msra.mxu0 %v3326
    %3328 = vmatprep.subr.mxu0 0.0
    %v3329 = vand.u32 %v2353, 4294901760
    %v3330 = vsub.f32 %v2353, %v3329
    %v3331 = vand.u32 %v3330, 4294901760
    %3332 = vmatpush1.msra.mxu0 %v3331
    %3333 = vmatprep.subr.mxu0 0.0
    %3334 = vmatpush1.msra.mxu0 0.0
    %3335 = vmatprep.subr.mxu0 0.0
    %3336 = vmatpush1.msra.mxu0 0.0
    %3337 = vmatprep.subr.mxu0 0.0
    %3338 = vmatpush1.msra.mxu0 0.0
    %3339 = vmatprep.subr.mxu0 0.0
    %3340 = vmatpush1.msra.mxu0 0.0
    %3341 = vmatprep.subr.mxu0 0.0
    %3342 = vmatpush1.msra.mxu0 0.0
    %3343 = vmatprep.subr.mxu0 0.0
    %3344 = vmatpush1.msra.mxu0 0.0
    %3345 = vmatprep.subr.mxu0 0.0
    %3346 = vmatpush1.msra.mxu0 0.0
    %3347 = vmatprep.subr.mxu0 0.0
    %3348 = vmatpush1.msra.mxu0 0.0
    %3349 = vmatprep.subr.mxu0 0.0
    %3350 = vmatpush1.msra.mxu0 0.0
    %3351 = vmatprep.subr.mxu0 0.0
    %3352 = vmatpush1.msra.mxu0 0.0
    %3353 = vmatprep.subr.mxu0 0.0
    %3354 = vmatpush1.msra.mxu0 0.0
    %3355 = vmatprep.subr.mxu0 0.0
    %3356 = vmatpush1.msra.mxu0 0.0
    %3357 = vmatprep.subr.mxu0 0.0
    %3358 = vmatpush1.msra.mxu0 0.0
    %3359 = vmatprep.subr.mxu0 0.0
    %3360 = vmatpush1.msra.mxu0 0.0
    %3361 = vmatprep.subr.mxu0 0.0
    %3362 = vmatpush1.msra.mxu0 0.0
    %3363 = vmatprep.subr.mxu0 0.0
    %3364 = vmatpush1.msra.mxu0 0.0
    %3365 = vmatprep.mubr.f32.mxu0 0.0
    %v3366 = vand.u32 %v1850, 4294901760
    %3367 = vmatmul.mubr.f32.gmra.mrb[0].mxu0 %v3366
    %v3368 = vpop.f32.mrb[0].mxu0
    %v3369 = vadd.f32 %v3250, %v3368
    %v3370 = vpop.f32.mrb[0].mxu0
    %3371 = vdwg.mxu0
    %3372 = vmatprep.subr.mxu0 0.0
    %v3373 = vand.u32 %v2338, 4294901760
    %3374 = vmatpush1.msra.mxu0 %v3373
    %3375 = vmatprep.subr.mxu0 0.0
    %v3376 = vand.u32 %v2339, 4294901760
    %3377 = vmatpush1.msra.mxu0 %v3376
    %3378 = vmatprep.subr.mxu0 0.0
    %v3379 = vand.u32 %v2340, 4294901760
    %3380 = vmatpush1.msra.mxu0 %v3379
    %3381 = vmatprep.subr.mxu0 0.0
    %v3382 = vand.u32 %v2341, 4294901760
    %3383 = vmatpush1.msra.mxu0 %v3382
    %3384 = vmatprep.subr.mxu0 0.0
    %v3385 = vand.u32 %v2342, 4294901760
    %3386 = vmatpush1.msra.mxu0 %v3385
    %3387 = vmatprep.subr.mxu0 0.0
    %v3388 = vand.u32 %v2343, 4294901760
    %3389 = vmatpush1.msra.mxu0 %v3388
    %3390 = vmatprep.subr.mxu0 0.0
    %v3391 = vand.u32 %v2344, 4294901760
    %3392 = vmatpush1.msra.mxu0 %v3391
    %3393 = vmatprep.subr.mxu0 0.0
    %v3394 = vand.u32 %v2345, 4294901760
    %3395 = vmatpush1.msra.mxu0 %v3394
    %3396 = vmatprep.subr.mxu0 0.0
    %v3397 = vand.u32 %v2346, 4294901760
    %3398 = vmatpush1.msra.mxu0 %v3397
    %3399 = vmatprep.subr.mxu0 0.0
    %v3400 = vand.u32 %v2347, 4294901760
    %3401 = vmatpush1.msra.mxu0 %v3400
    %3402 = vmatprep.subr.mxu0 0.0
    %v3403 = vand.u32 %v2348, 4294901760
    %3404 = vmatpush1.msra.mxu0 %v3403
    %3405 = vmatprep.subr.mxu0 0.0
    %v3406 = vand.u32 %v2349, 4294901760
    %3407 = vmatpush1.msra.mxu0 %v3406
    %3408 = vmatprep.subr.mxu0 0.0
    %v3409 = vand.u32 %v2350, 4294901760
    %3410 = vmatpush1.msra.mxu0 %v3409
    %3411 = vmatprep.subr.mxu0 0.0
    %v3412 = vand.u32 %v2351, 4294901760
    %3413 = vmatpush1.msra.mxu0 %v3412
    %3414 = vmatprep.subr.mxu0 0.0
    %v3415 = vand.u32 %v2352, 4294901760
    %3416 = vmatpush1.msra.mxu0 %v3415
    %3417 = vmatprep.subr.mxu0 0.0
    %v3418 = vand.u32 %v2353, 4294901760
    %3419 = vmatpush1.msra.mxu0 %v3418
    %3420 = vmatprep.subr.mxu0 0.0
    %3421 = vmatpush1.msra.mxu0 0.0
    %3422 = vmatprep.subr.mxu0 0.0
    %3423 = vmatpush1.msra.mxu0 0.0
    %3424 = vmatprep.subr.mxu0 0.0
    %3425 = vmatpush1.msra.mxu0 0.0
    %3426 = vmatprep.subr.mxu0 0.0
    %3427 = vmatpush1.msra.mxu0 0.0
    %3428 = vmatprep.subr.mxu0 0.0
    %3429 = vmatpush1.msra.mxu0 0.0
    %3430 = vmatprep.subr.mxu0 0.0
    %3431 = vmatpush1.msra.mxu0 0.0
    %3432 = vmatprep.subr.mxu0 0.0
    %3433 = vmatpush1.msra.mxu0 0.0
    %3434 = vmatprep.subr.mxu0 0.0
    %3435 = vmatpush1.msra.mxu0 0.0
    %3436 = vmatprep.subr.mxu0 0.0
    %3437 = vmatpush1.msra.mxu0 0.0
    %3438 = vmatprep.subr.mxu0 0.0
    %3439 = vmatpush1.msra.mxu0 0.0
    %3440 = vmatprep.subr.mxu0 0.0
    %3441 = vmatpush1.msra.mxu0 0.0
    %3442 = vmatprep.subr.mxu0 0.0
    %3443 = vmatpush1.msra.mxu0 0.0
    %3444 = vmatprep.subr.mxu0 0.0
    %3445 = vmatpush1.msra.mxu0 0.0
    %3446 = vmatprep.subr.mxu0 0.0
    %3447 = vmatpush1.msra.mxu0 0.0
    %3448 = vmatprep.subr.mxu0 0.0
    %3449 = vmatpush1.msra.mxu0 0.0
    %3450 = vmatprep.subr.mxu0 0.0
    %3451 = vmatpush1.msra.mxu0 0.0
    %3452 = vmatprep.mubr.f32.mxu0 0.0
    %v3453 = vand.u32 %v1850, 4294901760
    %3454 = vmatmul.mubr.f32.gmra.mrb[0].mxu0 %v3453
    %v3455 = vpop.f32.mrb[0].mxu0
    %v3456 = vadd.f32 %v3369, %v3455
    %v3457 = vpop.f32.mrb[0].mxu0
    %3458 = vdwg.mxu0
    %v3459 = vld [vmem:[%s10] sm:$0x1]
    %v3461 = vlaneseq
    %v3462 = vshrl.u32 %v3461, 7
    %v3463 = vsub.s32 0, %v3462
    %v3464 = vrot.slane %v3459, %v3463
    %v3466 = vadd.f32 %v3456, %v3464
    %v3467 = vld [vmem:[%s8] sm:$0xff]
    %v3468 = vld [vmem:[%s8 + $0x8] sm:$0xff]
    %v3469 = vld [vmem:[%s8 + $0x10] sm:$0xff]
    %v3470 = vld [vmem:[%s8 + $0x18] sm:$0xff]
    %v3471 = vld [vmem:[%s8 + $0x20] sm:$0xff]
    %v3472 = vld [vmem:[%s8 + $0x28] sm:$0xff]
    %v3473 = vld [vmem:[%s8 + $0x30] sm:$0xff]
    %v3474 = vld [vmem:[%s8 + $0x38] sm:$0xff]
    %v3475 = vld [vmem:[%s8 + $0x40] sm:$0xff]
    %v3476 = vld [vmem:[%s8 + $0x48] sm:$0xff]
    %v3477 = vld [vmem:[%s8 + $0x50] sm:$0xff]
    %v3478 = vld [vmem:[%s8 + $0x58] sm:$0xff]
    %v3479 = vld [vmem:[%s8 + $0x60] sm:$0xff]
    %v3480 = vld [vmem:[%s8 + $0x68] sm:$0xff]
    %v3481 = vld [vmem:[%s8 + $0x70] sm:$0xff]
    %v3482 = vld [vmem:[%s8 + $0x78] sm:$0xff]
    %v3483 = vld [vmem:[%s9] sm:$0xff]
    %v3484 = vld [vmem:[%s9 + $0x8] sm:$0xff]
    %v3485 = vrot.slane %v2314, 3
    %v3486 = vsel %vm2356, %v3485, 0
    %3488 = vmatprep.subr.mxu0 0.0
    %v3489 = vand.u32 %v3483, 4294901760
    %3490 = vmatpush1.msra.mxu0 %v3489
    %3491 = vmatprep.subr.mxu0 0.0
    %v3492 = vand.u32 %v3484, 4294901760
    %3493 = vmatpush1.msra.mxu0 %v3492
    %3494 = vmatprep.subr.mxu0 0.0
    %3495 = vmatpush1.msra.mxu0 0.0
    %3496 = vmatprep.subr.mxu0 0.0
    %3497 = vmatpush1.msra.mxu0 0.0
    %3498 = vmatprep.subr.mxu0 0.0
    %3499 = vmatpush1.msra.mxu0 0.0
    %3500 = vmatprep.subr.mxu0 0.0
    %3501 = vmatpush1.msra.mxu0 0.0
    %3502 = vmatprep.subr.mxu0 0.0
    %3503 = vmatpush1.msra.mxu0 0.0
    %3504 = vmatprep.subr.mxu0 0.0
    %3505 = vmatpush1.msra.mxu0 0.0
    %3506 = vmatprep.subr.mxu0 0.0
    %3507 = vmatpush1.msra.mxu0 0.0
    %3508 = vmatprep.subr.mxu0 0.0
    %3509 = vmatpush1.msra.mxu0 0.0
    %3510 = vmatprep.subr.mxu0 0.0
    %3511 = vmatpush1.msra.mxu0 0.0
    %3512 = vmatprep.subr.mxu0 0.0
    %3513 = vmatpush1.msra.mxu0 0.0
    %3514 = vmatprep.subr.mxu0 0.0
    %3515 = vmatpush1.msra.mxu0 0.0
    %3516 = vmatprep.subr.mxu0 0.0
    %3517 = vmatpush1.msra.mxu0 0.0
    %3518 = vmatprep.subr.mxu0 0.0
    %3519 = vmatpush1.msra.mxu0 0.0
    %3520 = vmatprep.subr.mxu0 0.0
    %3521 = vmatpush1.msra.mxu0 0.0
    %3522 = vmatprep.subr.mxu0 0.0
    %3523 = vmatpush1.msra.mxu0 0.0
    %3524 = vmatprep.subr.mxu0 0.0
    %3525 = vmatpush1.msra.mxu0 0.0
    %3526 = vmatprep.subr.mxu0 0.0
    %3527 = vmatpush1.msra.mxu0 0.0
    %3528 = vmatprep.subr.mxu0 0.0
    %3529 = vmatpush1.msra.mxu0 0.0
    %3530 = vmatprep.subr.mxu0 0.0
    %3531 = vmatpush1.msra.mxu0 0.0
    %3532 = vmatprep.subr.mxu0 0.0
    %3533 = vmatpush1.msra.mxu0 0.0
    %3534 = vmatprep.subr.mxu0 0.0
    %3535 = vmatpush1.msra.mxu0 0.0
    %3536 = vmatprep.subr.mxu0 0.0
    %3537 = vmatpush1.msra.mxu0 0.0
    %3538 = vmatprep.subr.mxu0 0.0
    %3539 = vmatpush1.msra.mxu0 0.0
    %3540 = vmatprep.subr.mxu0 0.0
    %3541 = vmatpush1.msra.mxu0 0.0
    %3542 = vmatprep.subr.mxu0 0.0
    %3543 = vmatpush1.msra.mxu0 0.0
    %3544 = vmatprep.subr.mxu0 0.0
    %3545 = vmatpush1.msra.mxu0 0.0
    %3546 = vmatprep.subr.mxu0 0.0
    %3547 = vmatpush1.msra.mxu0 0.0
    %3548 = vmatprep.subr.mxu0 0.0
    %3549 = vmatpush1.msra.mxu0 0.0
    %3550 = vmatprep.subr.mxu0 0.0
    %3551 = vmatpush1.msra.mxu0 0.0
    %3552 = vmatprep.subr.mxu0 0.0
    %3553 = vmatpush1.msra.mxu0 0.0
    %3554 = vmatprep.mubr.f32.mxu0 0.0
    %v3555 = vand.u32 %v3486, 4294901760
    %v3556 = vsub.f32 %v3486, %v3555
    %v3557 = vand.u32 %v3556, 4294901760
    %v3558 = vsub.f32 %v3556, %v3557
    %v3559 = vand.u32 %v3558, 4294901760
    %3560 = vmatmul.mubr.f32.gmra.mrb[0].mxu0 %v3559
    %v3561 = vpop.f32.mrb[0].mxu0
    %v3562 = vadd.f32 0.0, %v3561
    %v3563 = vpop.f32.mrb[0].mxu0
    %3564 = vdwg.mxu0
    %3565 = vmatprep.subr.mxu0 0.0
    %v3566 = vand.u32 %v3483, 4294901760
    %v3567 = vsub.f32 %v3483, %v3566
    %v3568 = vand.u32 %v3567, 4294901760
    %v3569 = vsub.f32 %v3567, %v3568
    %v3570 = vand.u32 %v3569, 4294901760
    %3571 = vmatpush1.msra.mxu0 %v3570
    %3572 = vmatprep.subr.mxu0 0.0
    %v3573 = vand.u32 %v3484, 4294901760
    %v3574 = vsub.f32 %v3484, %v3573
    %v3575 = vand.u32 %v3574, 4294901760
    %v3576 = vsub.f32 %v3574, %v3575
    %v3577 = vand.u32 %v3576, 4294901760
    %3578 = vmatpush1.msra.mxu0 %v3577
    %3579 = vmatprep.subr.mxu0 0.0
    %3580 = vmatpush1.msra.mxu0 0.0
    %3581 = vmatprep.subr.mxu0 0.0
    %3582 = vmatpush1.msra.mxu0 0.0
    %3583 = vmatprep.subr.mxu0 0.0
    %3584 = vmatpush1.msra.mxu0 0.0
    %3585 = vmatprep.subr.mxu0 0.0
    %3586 = vmatpush1.msra.mxu0 0.0
    %3587 = vmatprep.subr.mxu0 0.0
    %3588 = vmatpush1.msra.mxu0 0.0
    %3589 = vmatprep.subr.mxu0 0.0
    %3590 = vmatpush1.msra.mxu0 0.0
    %3591 = vmatprep.subr.mxu0 0.0
    %3592 = vmatpush1.msra.mxu0 0.0
    %3593 = vmatprep.subr.mxu0 0.0
    %3594 = vmatpush1.msra.mxu0 0.0
    %3595 = vmatprep.subr.mxu0 0.0
    %3596 = vmatpush1.msra.mxu0 0.0
    %3597 = vmatprep.subr.mxu0 0.0
    %3598 = vmatpush1.msra.mxu0 0.0
    %3599 = vmatprep.subr.mxu0 0.0
    %3600 = vmatpush1.msra.mxu0 0.0
    %3601 = vmatprep.subr.mxu0 0.0
    %3602 = vmatpush1.msra.mxu0 0.0
    %3603 = vmatprep.subr.mxu0 0.0
    %3604 = vmatpush1.msra.mxu0 0.0
    %3605 = vmatprep.subr.mxu0 0.0
    %3606 = vmatpush1.msra.mxu0 0.0
    %3607 = vmatprep.subr.mxu0 0.0
    %3608 = vmatpush1.msra.mxu0 0.0
    %3609 = vmatprep.subr.mxu0 0.0
    %3610 = vmatpush1.msra.mxu0 0.0
    %3611 = vmatprep.subr.mxu0 0.0
    %3612 = vmatpush1.msra.mxu0 0.0
    %3613 = vmatprep.subr.mxu0 0.0
    %3614 = vmatpush1.msra.mxu0 0.0
    %3615 = vmatprep.subr.mxu0 0.0
    %3616 = vmatpush1.msra.mxu0 0.0
    %3617 = vmatprep.subr.mxu0 0.0
    %3618 = vmatpush1.msra.mxu0 0.0
    %3619 = vmatprep.subr.mxu0 0.0
    %3620 = vmatpush1.msra.mxu0 0.0
    %3621 = vmatprep.subr.mxu0 0.0
    %3622 = vmatpush1.msra.mxu0 0.0
    %3623 = vmatprep.subr.mxu0 0.0
    %3624 = vmatpush1.msra.mxu0 0.0
    %3625 = vmatprep.subr.mxu0 0.0
    %3626 = vmatpush1.msra.mxu0 0.0
    %3627 = vmatprep.subr.mxu0 0.0
    %3628 = vmatpush1.msra.mxu0 0.0
    %3629 = vmatprep.subr.mxu0 0.0
    %3630 = vmatpush1.msra.mxu0 0.0
    %3631 = vmatprep.subr.mxu0 0.0
    %3632 = vmatpush1.msra.mxu0 0.0
    %3633 = vmatprep.subr.mxu0 0.0
    %3634 = vmatpush1.msra.mxu0 0.0
    %3635 = vmatprep.subr.mxu0 0.0
    %3636 = vmatpush1.msra.mxu0 0.0
    %3637 = vmatprep.subr.mxu0 0.0
    %3638 = vmatpush1.msra.mxu0 0.0
    %3639 = vmatprep.mubr.f32.mxu0 0.0
    %v3640 = vand.u32 %v3486, 4294901760
    %3641 = vmatmul.mubr.f32.gmra.mrb[0].mxu0 %v3640
    %v3642 = vpop.f32.mrb[0].mxu0
    %v3643 = vadd.f32 %v3562, %v3642
    %v3644 = vpop.f32.mrb[0].mxu0
    %3645 = vdwg.mxu0
    %3646 = vmatprep.subr.mxu0 0.0
    %v3647 = vand.u32 %v3483, 4294901760
    %v3648 = vsub.f32 %v3483, %v3647
    %3649 = vmatpush1.msra.mxu0 %v3648
    %3650 = vmatprep.subr.mxu0 0.0
    %v3651 = vand.u32 %v3484, 4294901760
    %v3652 = vsub.f32 %v3484, %v3651
    %3653 = vmatpush1.msra.mxu0 %v3652
    %3654 = vmatprep.subr.mxu0 0.0
    %3655 = vmatpush1.msra.mxu0 0.0
    %3656 = vmatprep.subr.mxu0 0.0
    %3657 = vmatpush1.msra.mxu0 0.0
    %3658 = vmatprep.subr.mxu0 0.0
    %3659 = vmatpush1.msra.mxu0 0.0
    %3660 = vmatprep.subr.mxu0 0.0
    %3661 = vmatpush1.msra.mxu0 0.0
    %3662 = vmatprep.subr.mxu0 0.0
    %3663 = vmatpush1.msra.mxu0 0.0
    %3664 = vmatprep.subr.mxu0 0.0
    %3665 = vmatpush1.msra.mxu0 0.0
    %3666 = vmatprep.subr.mxu0 0.0
    %3667 = vmatpush1.msra.mxu0 0.0
    %3668 = vmatprep.subr.mxu0 0.0
    %3669 = vmatpush1.msra.mxu0 0.0
    %3670 = vmatprep.subr.mxu0 0.0
    %3671 = vmatpush1.msra.mxu0 0.0
    %3672 = vmatprep.subr.mxu0 0.0
    %3673 = vmatpush1.msra.mxu0 0.0
    %3674 = vmatprep.subr.mxu0 0.0
    %3675 = vmatpush1.msra.mxu0 0.0
    %3676 = vmatprep.subr.mxu0 0.0
    %3677 = vmatpush1.msra.mxu0 0.0
    %3678 = vmatprep.subr.mxu0 0.0
    %3679 = vmatpush1.msra.mxu0 0.0
    %3680 = vmatprep.subr.mxu0 0.0
    %3681 = vmatpush1.msra.mxu0 0.0
    %3682 = vmatprep.subr.mxu0 0.0
    %3683 = vmatpush1.msra.mxu0 0.0
    %3684 = vmatprep.subr.mxu0 0.0
    %3685 = vmatpush1.msra.mxu0 0.0
    %3686 = vmatprep.subr.mxu0 0.0
    %3687 = vmatpush1.msra.mxu0 0.0
    %3688 = vmatprep.subr.mxu0 0.0
    %3689 = vmatpush1.msra.mxu0 0.0
    %3690 = vmatprep.subr.mxu0 0.0
    %3691 = vmatpush1.msra.mxu0 0.0
    %3692 = vmatprep.subr.mxu0 0.0
    %3693 = vmatpush1.msra.mxu0 0.0
    %3694 = vmatprep.subr.mxu0 0.0
    %3695 = vmatpush1.msra.mxu0 0.0
    %3696 = vmatprep.subr.mxu0 0.0
    %3697 = vmatpush1.msra.mxu0 0.0
    %3698 = vmatprep.subr.mxu0 0.0
    %3699 = vmatpush1.msra.mxu0 0.0
    %3700 = vmatprep.subr.mxu0 0.0
    %3701 = vmatpush1.msra.mxu0 0.0
    %3702 = vmatprep.subr.mxu0 0.0
    %3703 = vmatpush1.msra.mxu0 0.0
    %3704 = vmatprep.subr.mxu0 0.0
    %3705 = vmatpush1.msra.mxu0 0.0
    %3706 = vmatprep.subr.mxu0 0.0
    %3707 = vmatpush1.msra.mxu0 0.0
    %3708 = vmatprep.subr.mxu0 0.0
    %3709 = vmatpush1.msra.mxu0 0.0
    %3710 = vmatprep.subr.mxu0 0.0
    %3711 = vmatpush1.msra.mxu0 0.0
    %3712 = vmatprep.subr.mxu0 0.0
    %3713 = vmatpush1.msra.mxu0 0.0
    %3714 = vmatprep.mubr.f32.mxu0 0.0
    %v3715 = vand.u32 %v3486, 4294901760
    %v3716 = vsub.f32 %v3486, %v3715
    %3717 = vmatmul.mubr.f32.gmra.mrb[0].mxu0 %v3716
    %v3718 = vpop.f32.mrb[0].mxu0
    %v3719 = vadd.f32 %v3643, %v3718
    %v3720 = vpop.f32.mrb[0].mxu0
    %3721 = vdwg.mxu0
    %3722 = vmatprep.subr.mxu0 0.0
    %v3723 = vand.u32 %v3483, 4294901760
    %3724 = vmatpush1.msra.mxu0 %v3723
    %3725 = vmatprep.subr.mxu0 0.0
    %v3726 = vand.u32 %v3484, 4294901760
    %3727 = vmatpush1.msra.mxu0 %v3726
    %3728 = vmatprep.subr.mxu0 0.0
    %3729 = vmatpush1.msra.mxu0 0.0
    %3730 = vmatprep.subr.mxu0 0.0
    %3731 = vmatpush1.msra.mxu0 0.0
    %3732 = vmatprep.subr.mxu0 0.0
    %3733 = vmatpush1.msra.mxu0 0.0
    %3734 = vmatprep.subr.mxu0 0.0
    %3735 = vmatpush1.msra.mxu0 0.0
    %3736 = vmatprep.subr.mxu0 0.0
    %3737 = vmatpush1.msra.mxu0 0.0
    %3738 = vmatprep.subr.mxu0 0.0
    %3739 = vmatpush1.msra.mxu0 0.0
    %3740 = vmatprep.subr.mxu0 0.0
    %3741 = vmatpush1.msra.mxu0 0.0
    %3742 = vmatprep.subr.mxu0 0.0
    %3743 = vmatpush1.msra.mxu0 0.0
    %3744 = vmatprep.subr.mxu0 0.0
    %3745 = vmatpush1.msra.mxu0 0.0
    %3746 = vmatprep.subr.mxu0 0.0
    %3747 = vmatpush1.msra.mxu0 0.0
    %3748 = vmatprep.subr.mxu0 0.0
    %3749 = vmatpush1.msra.mxu0 0.0
    %3750 = vmatprep.subr.mxu0 0.0
    %3751 = vmatpush1.msra.mxu0 0.0
    %3752 = vmatprep.subr.mxu0 0.0
    %3753 = vmatpush1.msra.mxu0 0.0
    %3754 = vmatprep.subr.mxu0 0.0
    %3755 = vmatpush1.msra.mxu0 0.0
    %3756 = vmatprep.subr.mxu0 0.0
    %3757 = vmatpush1.msra.mxu0 0.0
    %3758 = vmatprep.subr.mxu0 0.0
    %3759 = vmatpush1.msra.mxu0 0.0
    %3760 = vmatprep.subr.mxu0 0.0
    %3761 = vmatpush1.msra.mxu0 0.0
    %3762 = vmatprep.subr.mxu0 0.0
    %3763 = vmatpush1.msra.mxu0 0.0
    %3764 = vmatprep.subr.mxu0 0.0
    %3765 = vmatpush1.msra.mxu0 0.0
    %3766 = vmatprep.subr.mxu0 0.0
    %3767 = vmatpush1.msra.mxu0 0.0
    %3768 = vmatprep.subr.mxu0 0.0
    %3769 = vmatpush1.msra.mxu0 0.0
    %3770 = vmatprep.subr.mxu0 0.0
    %3771 = vmatpush1.msra.mxu0 0.0
    %3772 = vmatprep.subr.mxu0 0.0
    %3773 = vmatpush1.msra.mxu0 0.0
    %3774 = vmatprep.subr.mxu0 0.0
    %3775 = vmatpush1.msra.mxu0 0.0
    %3776 = vmatprep.subr.mxu0 0.0
    %3777 = vmatpush1.msra.mxu0 0.0
    %3778 = vmatprep.subr.mxu0 0.0
    %3779 = vmatpush1.msra.mxu0 0.0
    %3780 = vmatprep.subr.mxu0 0.0
    %3781 = vmatpush1.msra.mxu0 0.0
    %3782 = vmatprep.subr.mxu0 0.0
    %3783 = vmatpush1.msra.mxu0 0.0
    %3784 = vmatprep.subr.mxu0 0.0
    %3785 = vmatpush1.msra.mxu0 0.0
    %3786 = vmatprep.subr.mxu0 0.0
    %3787 = vmatpush1.msra.mxu0 0.0
    %3788 = vmatprep.mubr.f32.mxu0 0.0
    %v3789 = vand.u32 %v3486, 4294901760
    %v3790 = vsub.f32 %v3486, %v3789
    %v3791 = vand.u32 %v3790, 4294901760
    %3792 = vmatmul.mubr.f32.gmra.mrb[0].mxu0 %v3791
    %v3793 = vpop.f32.mrb[0].mxu0
    %v3794 = vadd.f32 %v3719, %v3793
    %v3795 = vpop.f32.mrb[0].mxu0
    %3796 = vdwg.mxu0
    %3797 = vmatprep.subr.mxu0 0.0
    %v3798 = vand.u32 %v3483, 4294901760
    %v3799 = vsub.f32 %v3483, %v3798
    %v3800 = vand.u32 %v3799, 4294901760
    %3801 = vmatpush1.msra.mxu0 %v3800
    %3802 = vmatprep.subr.mxu0 0.0
    %v3803 = vand.u32 %v3484, 4294901760
    %v3804 = vsub.f32 %v3484, %v3803
    %v3805 = vand.u32 %v3804, 4294901760
    %3806 = vmatpush1.msra.mxu0 %v3805
    %3807 = vmatprep.subr.mxu0 0.0
    %3808 = vmatpush1.msra.mxu0 0.0
    %3809 = vmatprep.subr.mxu0 0.0
    %3810 = vmatpush1.msra.mxu0 0.0
    %3811 = vmatprep.subr.mxu0 0.0
    %3812 = vmatpush1.msra.mxu0 0.0
    %3813 = vmatprep.subr.mxu0 0.0
    %3814 = vmatpush1.msra.mxu0 0.0
    %3815 = vmatprep.subr.mxu0 0.0
    %3816 = vmatpush1.msra.mxu0 0.0
    %3817 = vmatprep.subr.mxu0 0.0
    %3818 = vmatpush1.msra.mxu0 0.0
    %3819 = vmatprep.subr.mxu0 0.0
    %3820 = vmatpush1.msra.mxu0 0.0
    %3821 = vmatprep.subr.mxu0 0.0
    %3822 = vmatpush1.msra.mxu0 0.0
    %3823 = vmatprep.subr.mxu0 0.0
    %3824 = vmatpush1.msra.mxu0 0.0
    %3825 = vmatprep.subr.mxu0 0.0
    %3826 = vmatpush1.msra.mxu0 0.0
    %3827 = vmatprep.subr.mxu0 0.0
    %3828 = vmatpush1.msra.mxu0 0.0
    %3829 = vmatprep.subr.mxu0 0.0
    %3830 = vmatpush1.msra.mxu0 0.0
    %3831 = vmatprep.subr.mxu0 0.0
    %3832 = vmatpush1.msra.mxu0 0.0
    %3833 = vmatprep.subr.mxu0 0.0
    %3834 = vmatpush1.msra.mxu0 0.0
    %3835 = vmatprep.subr.mxu0 0.0
    %3836 = vmatpush1.msra.mxu0 0.0
    %3837 = vmatprep.subr.mxu0 0.0
    %3838 = vmatpush1.msra.mxu0 0.0
    %3839 = vmatprep.subr.mxu0 0.0
    %3840 = vmatpush1.msra.mxu0 0.0
    %3841 = vmatprep.subr.mxu0 0.0
    %3842 = vmatpush1.msra.mxu0 0.0
    %3843 = vmatprep.subr.mxu0 0.0
    %3844 = vmatpush1.msra.mxu0 0.0
    %3845 = vmatprep.subr.mxu0 0.0
    %3846 = vmatpush1.msra.mxu0 0.0
    %3847 = vmatprep.subr.mxu0 0.0
    %3848 = vmatpush1.msra.mxu0 0.0
    %3849 = vmatprep.subr.mxu0 0.0
    %3850 = vmatpush1.msra.mxu0 0.0
    %3851 = vmatprep.subr.mxu0 0.0
    %3852 = vmatpush1.msra.mxu0 0.0
    %3853 = vmatprep.subr.mxu0 0.0
    %3854 = vmatpush1.msra.mxu0 0.0
    %3855 = vmatprep.subr.mxu0 0.0
    %3856 = vmatpush1.msra.mxu0 0.0
    %3857 = vmatprep.subr.mxu0 0.0
    %3858 = vmatpush1.msra.mxu0 0.0
    %3859 = vmatprep.subr.mxu0 0.0
    %3860 = vmatpush1.msra.mxu0 0.0
    %3861 = vmatprep.subr.mxu0 0.0
    %3862 = vmatpush1.msra.mxu0 0.0
    %3863 = vmatprep.subr.mxu0 0.0
    %3864 = vmatpush1.msra.mxu0 0.0
    %3865 = vmatprep.subr.mxu0 0.0
    %3866 = vmatpush1.msra.mxu0 0.0
    %3867 = vmatprep.mubr.f32.mxu0 0.0
    %v3868 = vand.u32 %v3486, 4294901760
    %3869 = vmatmul.mubr.f32.gmra.mrb[0].mxu0 %v3868
    %v3870 = vpop.f32.mrb[0].mxu0
    %v3871 = vadd.f32 %v3794, %v3870
    %v3872 = vpop.f32.mrb[0].mxu0
    %3873 = vdwg.mxu0
    %3874 = vmatprep.subr.mxu0 0.0
    %v3875 = vand.u32 %v3483, 4294901760
    %3876 = vmatpush1.msra.mxu0 %v3875
    %3877 = vmatprep.subr.mxu0 0.0
    %v3878 = vand.u32 %v3484, 4294901760
    %3879 = vmatpush1.msra.mxu0 %v3878
    %3880 = vmatprep.subr.mxu0 0.0
    %3881 = vmatpush1.msra.mxu0 0.0
    %3882 = vmatprep.subr.mxu0 0.0
    %3883 = vmatpush1.msra.mxu0 0.0
    %3884 = vmatprep.subr.mxu0 0.0
    %3885 = vmatpush1.msra.mxu0 0.0
    %3886 = vmatprep.subr.mxu0 0.0
    %3887 = vmatpush1.msra.mxu0 0.0
    %3888 = vmatprep.subr.mxu0 0.0
    %3889 = vmatpush1.msra.mxu0 0.0
    %3890 = vmatprep.subr.mxu0 0.0
    %3891 = vmatpush1.msra.mxu0 0.0
    %3892 = vmatprep.subr.mxu0 0.0
    %3893 = vmatpush1.msra.mxu0 0.0
    %3894 = vmatprep.subr.mxu0 0.0
    %3895 = vmatpush1.msra.mxu0 0.0
    %3896 = vmatprep.subr.mxu0 0.0
    %3897 = vmatpush1.msra.mxu0 0.0
    %3898 = vmatprep.subr.mxu0 0.0
    %3899 = vmatpush1.msra.mxu0 0.0
    %3900 = vmatprep.subr.mxu0 0.0
    %3901 = vmatpush1.msra.mxu0 0.0
    %3902 = vmatprep.subr.mxu0 0.0
    %3903 = vmatpush1.msra.mxu0 0.0
    %3904 = vmatprep.subr.mxu0 0.0
    %3905 = vmatpush1.msra.mxu0 0.0
    %3906 = vmatprep.subr.mxu0 0.0
    %3907 = vmatpush1.msra.mxu0 0.0
    %3908 = vmatprep.subr.mxu0 0.0
    %3909 = vmatpush1.msra.mxu0 0.0
    %3910 = vmatprep.subr.mxu0 0.0
    %3911 = vmatpush1.msra.mxu0 0.0
    %3912 = vmatprep.subr.mxu0 0.0
    %3913 = vmatpush1.msra.mxu0 0.0
    %3914 = vmatprep.subr.mxu0 0.0
    %3915 = vmatpush1.msra.mxu0 0.0
    %3916 = vmatprep.subr.mxu0 0.0
    %3917 = vmatpush1.msra.mxu0 0.0
    %3918 = vmatprep.subr.mxu0 0.0
    %3919 = vmatpush1.msra.mxu0 0.0
    %3920 = vmatprep.subr.mxu0 0.0
    %3921 = vmatpush1.msra.mxu0 0.0
    %3922 = vmatprep.subr.mxu0 0.0
    %3923 = vmatpush1.msra.mxu0 0.0
    %3924 = vmatprep.subr.mxu0 0.0
    %3925 = vmatpush1.msra.mxu0 0.0
    %3926 = vmatprep.subr.mxu0 0.0
    %3927 = vmatpush1.msra.mxu0 0.0
    %3928 = vmatprep.subr.mxu0 0.0
    %3929 = vmatpush1.msra.mxu0 0.0
    %3930 = vmatprep.subr.mxu0 0.0
    %3931 = vmatpush1.msra.mxu0 0.0
    %3932 = vmatprep.subr.mxu0 0.0
    %3933 = vmatpush1.msra.mxu0 0.0
    %3934 = vmatprep.subr.mxu0 0.0
    %3935 = vmatpush1.msra.mxu0 0.0
    %3936 = vmatprep.subr.mxu0 0.0
    %3937 = vmatpush1.msra.mxu0 0.0
    %3938 = vmatprep.subr.mxu0 0.0
    %3939 = vmatpush1.msra.mxu0 0.0
    %3940 = vmatprep.mubr.f32.mxu0 0.0
    %v3941 = vand.u32 %v3486, 4294901760
    %3942 = vmatmul.mubr.f32.gmra.mrb[0].mxu0 %v3941
    %v3943 = vpop.f32.mrb[0].mxu0
    %v3944 = vadd.f32 %v3871, %v3943
    %v3945 = vpop.f32.mrb[0].mxu0
    %3946 = vdwg.mxu0
    %v3947 = vrot.slane %v1850, 3
    %3949 = vmatprep.subr.mxu0 0.0
    %v3950 = vand.u32 %v3467, 4294901760
    %3951 = vmatpush1.msra.mxu0 %v3950
    %3952 = vmatprep.subr.mxu0 0.0
    %v3953 = vand.u32 %v3468, 4294901760
    %3954 = vmatpush1.msra.mxu0 %v3953
    %3955 = vmatprep.subr.mxu0 0.0
    %v3956 = vand.u32 %v3469, 4294901760
    %3957 = vmatpush1.msra.mxu0 %v3956
    %3958 = vmatprep.subr.mxu0 0.0
    %v3959 = vand.u32 %v3470, 4294901760
    %3960 = vmatpush1.msra.mxu0 %v3959
    %3961 = vmatprep.subr.mxu0 0.0
    %v3962 = vand.u32 %v3471, 4294901760
    %3963 = vmatpush1.msra.mxu0 %v3962
    %3964 = vmatprep.subr.mxu0 0.0
    %v3965 = vand.u32 %v3472, 4294901760
    %3966 = vmatpush1.msra.mxu0 %v3965
    %3967 = vmatprep.subr.mxu0 0.0
    %v3968 = vand.u32 %v3473, 4294901760
    %3969 = vmatpush1.msra.mxu0 %v3968
    %3970 = vmatprep.subr.mxu0 0.0
    %v3971 = vand.u32 %v3474, 4294901760
    %3972 = vmatpush1.msra.mxu0 %v3971
    %3973 = vmatprep.subr.mxu0 0.0
    %v3974 = vand.u32 %v3475, 4294901760
    %3975 = vmatpush1.msra.mxu0 %v3974
    %3976 = vmatprep.subr.mxu0 0.0
    %v3977 = vand.u32 %v3476, 4294901760
    %3978 = vmatpush1.msra.mxu0 %v3977
    %3979 = vmatprep.subr.mxu0 0.0
    %v3980 = vand.u32 %v3477, 4294901760
    %3981 = vmatpush1.msra.mxu0 %v3980
    %3982 = vmatprep.subr.mxu0 0.0
    %v3983 = vand.u32 %v3478, 4294901760
    %3984 = vmatpush1.msra.mxu0 %v3983
    %3985 = vmatprep.subr.mxu0 0.0
    %v3986 = vand.u32 %v3479, 4294901760
    %3987 = vmatpush1.msra.mxu0 %v3986
    %3988 = vmatprep.subr.mxu0 0.0
    %v3989 = vand.u32 %v3480, 4294901760
    %3990 = vmatpush1.msra.mxu0 %v3989
    %3991 = vmatprep.subr.mxu0 0.0
    %v3992 = vand.u32 %v3481, 4294901760
    %3993 = vmatpush1.msra.mxu0 %v3992
    %3994 = vmatprep.subr.mxu0 0.0
    %v3995 = vand.u32 %v3482, 4294901760
    %3996 = vmatpush1.msra.mxu0 %v3995
    %3997 = vmatprep.subr.mxu0 0.0
    %3998 = vmatpush1.msra.mxu0 0.0
    %3999 = vmatprep.subr.mxu0 0.0
    %4000 = vmatpush1.msra.mxu0 0.0
    %4001 = vmatprep.subr.mxu0 0.0
    %4002 = vmatpush1.msra.mxu0 0.0
    %4003 = vmatprep.subr.mxu0 0.0
    %4004 = vmatpush1.msra.mxu0 0.0
    %4005 = vmatprep.subr.mxu0 0.0
    %4006 = vmatpush1.msra.mxu0 0.0
    %4007 = vmatprep.subr.mxu0 0.0
    %4008 = vmatpush1.msra.mxu0 0.0
    %4009 = vmatprep.subr.mxu0 0.0
    %4010 = vmatpush1.msra.mxu0 0.0
    %4011 = vmatprep.subr.mxu0 0.0
    %4012 = vmatpush1.msra.mxu0 0.0
    %4013 = vmatprep.subr.mxu0 0.0
    %4014 = vmatpush1.msra.mxu0 0.0
    %4015 = vmatprep.subr.mxu0 0.0
    %4016 = vmatpush1.msra.mxu0 0.0
    %4017 = vmatprep.subr.mxu0 0.0
    %4018 = vmatpush1.msra.mxu0 0.0
    %4019 = vmatprep.subr.mxu0 0.0
    %4020 = vmatpush1.msra.mxu0 0.0
    %4021 = vmatprep.subr.mxu0 0.0
    %4022 = vmatpush1.msra.mxu0 0.0
    %4023 = vmatprep.subr.mxu0 0.0
    %4024 = vmatpush1.msra.mxu0 0.0
    %4025 = vmatprep.subr.mxu0 0.0
    %4026 = vmatpush1.msra.mxu0 0.0
    %4027 = vmatprep.subr.mxu0 0.0
    %4028 = vmatpush1.msra.mxu0 0.0
    %4029 = vmatprep.mubr.f32.mxu0 0.0
    %v4030 = vand.u32 %v3947, 4294901760
    %v4031 = vsub.f32 %v3947, %v4030
    %v4032 = vand.u32 %v4031, 4294901760
    %v4033 = vsub.f32 %v4031, %v4032
    %v4034 = vand.u32 %v4033, 4294901760
    %4035 = vmatmul.mubr.f32.gmra.mrb[0].mxu0 %v4034
    %v4036 = vpop.f32.mrb[0].mxu0
    %v4037 = vadd.f32 %v3944, %v4036
    %v4038 = vpop.f32.mrb[0].mxu0
    %4039 = vdwg.mxu0
    %4040 = vmatprep.subr.mxu0 0.0
    %v4041 = vand.u32 %v3467, 4294901760
    %v4042 = vsub.f32 %v3467, %v4041
    %v4043 = vand.u32 %v4042, 4294901760
    %v4044 = vsub.f32 %v4042, %v4043
    %v4045 = vand.u32 %v4044, 4294901760
    %4046 = vmatpush1.msra.mxu0 %v4045
    %4047 = vmatprep.subr.mxu0 0.0
    %v4048 = vand.u32 %v3468, 4294901760
    %v4049 = vsub.f32 %v3468, %v4048
    %v4050 = vand.u32 %v4049, 4294901760
    %v4051 = vsub.f32 %v4049, %v4050
    %v4052 = vand.u32 %v4051, 4294901760
    %4053 = vmatpush1.msra.mxu0 %v4052
    %4054 = vmatprep.subr.mxu0 0.0
    %v4055 = vand.u32 %v3469, 4294901760
    %v4056 = vsub.f32 %v3469, %v4055
    %v4057 = vand.u32 %v4056, 4294901760
    %v4058 = vsub.f32 %v4056, %v4057
    %v4059 = vand.u32 %v4058, 4294901760
    %4060 = vmatpush1.msra.mxu0 %v4059
    %4061 = vmatprep.subr.mxu0 0.0
    %v4062 = vand.u32 %v3470, 4294901760
    %v4063 = vsub.f32 %v3470, %v4062
    %v4064 = vand.u32 %v4063, 4294901760
    %v4065 = vsub.f32 %v4063, %v4064
    %v4066 = vand.u32 %v4065, 4294901760
    %4067 = vmatpush1.msra.mxu0 %v4066
    %4068 = vmatprep.subr.mxu0 0.0
    %v4069 = vand.u32 %v3471, 4294901760
    %v4070 = vsub.f32 %v3471, %v4069
    %v4071 = vand.u32 %v4070, 4294901760
    %v4072 = vsub.f32 %v4070, %v4071
    %v4073 = vand.u32 %v4072, 4294901760
    %4074 = vmatpush1.msra.mxu0 %v4073
    %4075 = vmatprep.subr.mxu0 0.0
    %v4076 = vand.u32 %v3472, 4294901760
    %v4077 = vsub.f32 %v3472, %v4076
    %v4078 = vand.u32 %v4077, 4294901760
    %v4079 = vsub.f32 %v4077, %v4078
    %v4080 = vand.u32 %v4079, 4294901760
    %4081 = vmatpush1.msra.mxu0 %v4080
    %4082 = vmatprep.subr.mxu0 0.0
    %v4083 = vand.u32 %v3473, 4294901760
    %v4084 = vsub.f32 %v3473, %v4083
    %v4085 = vand.u32 %v4084, 4294901760
    %v4086 = vsub.f32 %v4084, %v4085
    %v4087 = vand.u32 %v4086, 4294901760
    %4088 = vmatpush1.msra.mxu0 %v4087
    %4089 = vmatprep.subr.mxu0 0.0
    %v4090 = vand.u32 %v3474, 4294901760
    %v4091 = vsub.f32 %v3474, %v4090
    %v4092 = vand.u32 %v4091, 4294901760
    %v4093 = vsub.f32 %v4091, %v4092
    %v4094 = vand.u32 %v4093, 4294901760
    %4095 = vmatpush1.msra.mxu0 %v4094
    %4096 = vmatprep.subr.mxu0 0.0
    %v4097 = vand.u32 %v3475, 4294901760
    %v4098 = vsub.f32 %v3475, %v4097
    %v4099 = vand.u32 %v4098, 4294901760
    %v4100 = vsub.f32 %v4098, %v4099
    %v4101 = vand.u32 %v4100, 4294901760
    %4102 = vmatpush1.msra.mxu0 %v4101
    %4103 = vmatprep.subr.mxu0 0.0
    %v4104 = vand.u32 %v3476, 4294901760
    %v4105 = vsub.f32 %v3476, %v4104
    %v4106 = vand.u32 %v4105, 4294901760
    %v4107 = vsub.f32 %v4105, %v4106
    %v4108 = vand.u32 %v4107, 4294901760
    %4109 = vmatpush1.msra.mxu0 %v4108
    %4110 = vmatprep.subr.mxu0 0.0
    %v4111 = vand.u32 %v3477, 4294901760
    %v4112 = vsub.f32 %v3477, %v4111
    %v4113 = vand.u32 %v4112, 4294901760
    %v4114 = vsub.f32 %v4112, %v4113
    %v4115 = vand.u32 %v4114, 4294901760
    %4116 = vmatpush1.msra.mxu0 %v4115
    %4117 = vmatprep.subr.mxu0 0.0
    %v4118 = vand.u32 %v3478, 4294901760
    %v4119 = vsub.f32 %v3478, %v4118
    %v4120 = vand.u32 %v4119, 4294901760
    %v4121 = vsub.f32 %v4119, %v4120
    %v4122 = vand.u32 %v4121, 4294901760
    %4123 = vmatpush1.msra.mxu0 %v4122
    %4124 = vmatprep.subr.mxu0 0.0
    %v4125 = vand.u32 %v3479, 4294901760
    %v4126 = vsub.f32 %v3479, %v4125
    %v4127 = vand.u32 %v4126, 4294901760
    %v4128 = vsub.f32 %v4126, %v4127
    %v4129 = vand.u32 %v4128, 4294901760
    %4130 = vmatpush1.msra.mxu0 %v4129
    %4131 = vmatprep.subr.mxu0 0.0
    %v4132 = vand.u32 %v3480, 4294901760
    %v4133 = vsub.f32 %v3480, %v4132
    %v4134 = vand.u32 %v4133, 4294901760
    %v4135 = vsub.f32 %v4133, %v4134
    %v4136 = vand.u32 %v4135, 4294901760
    %4137 = vmatpush1.msra.mxu0 %v4136
    %4138 = vmatprep.subr.mxu0 0.0
    %v4139 = vand.u32 %v3481, 4294901760
    %v4140 = vsub.f32 %v3481, %v4139
    %v4141 = vand.u32 %v4140, 4294901760
    %v4142 = vsub.f32 %v4140, %v4141
    %v4143 = vand.u32 %v4142, 4294901760
    %4144 = vmatpush1.msra.mxu0 %v4143
    %4145 = vmatprep.subr.mxu0 0.0
    %v4146 = vand.u32 %v3482, 4294901760
    %v4147 = vsub.f32 %v3482, %v4146
    %v4148 = vand.u32 %v4147, 4294901760
    %v4149 = vsub.f32 %v4147, %v4148
    %v4150 = vand.u32 %v4149, 4294901760
    %4151 = vmatpush1.msra.mxu0 %v4150
    %4152 = vmatprep.subr.mxu0 0.0
    %4153 = vmatpush1.msra.mxu0 0.0
    %4154 = vmatprep.subr.mxu0 0.0
    %4155 = vmatpush1.msra.mxu0 0.0
    %4156 = vmatprep.subr.mxu0 0.0
    %4157 = vmatpush1.msra.mxu0 0.0
    %4158 = vmatprep.subr.mxu0 0.0
    %4159 = vmatpush1.msra.mxu0 0.0
    %4160 = vmatprep.subr.mxu0 0.0
    %4161 = vmatpush1.msra.mxu0 0.0
    %4162 = vmatprep.subr.mxu0 0.0
    %4163 = vmatpush1.msra.mxu0 0.0
    %4164 = vmatprep.subr.mxu0 0.0
    %4165 = vmatpush1.msra.mxu0 0.0
    %4166 = vmatprep.subr.mxu0 0.0
    %4167 = vmatpush1.msra.mxu0 0.0
    %4168 = vmatprep.subr.mxu0 0.0
    %4169 = vmatpush1.msra.mxu0 0.0
    %4170 = vmatprep.subr.mxu0 0.0
    %4171 = vmatpush1.msra.mxu0 0.0
    %4172 = vmatprep.subr.mxu0 0.0
    %4173 = vmatpush1.msra.mxu0 0.0
    %4174 = vmatprep.subr.mxu0 0.0
    %4175 = vmatpush1.msra.mxu0 0.0
    %4176 = vmatprep.subr.mxu0 0.0
    %4177 = vmatpush1.msra.mxu0 0.0
    %4178 = vmatprep.subr.mxu0 0.0
    %4179 = vmatpush1.msra.mxu0 0.0
    %4180 = vmatprep.subr.mxu0 0.0
    %4181 = vmatpush1.msra.mxu0 0.0
    %4182 = vmatprep.subr.mxu0 0.0
    %4183 = vmatpush1.msra.mxu0 0.0
    %4184 = vmatprep.mubr.f32.mxu0 0.0
    %v4185 = vand.u32 %v3947, 4294901760
    %4186 = vmatmul.mubr.f32.gmra.mrb[0].mxu0 %v4185
    %v4187 = vpop.f32.mrb[0].mxu0
    %v4188 = vadd.f32 %v4037, %v4187
    %v4189 = vpop.f32.mrb[0].mxu0
    %4190 = vdwg.mxu0
    %4191 = vmatprep.subr.mxu0 0.0
    %v4192 = vand.u32 %v3467, 4294901760
    %v4193 = vsub.f32 %v3467, %v4192
    %4194 = vmatpush1.msra.mxu0 %v4193
    %4195 = vmatprep.subr.mxu0 0.0
    %v4196 = vand.u32 %v3468, 4294901760
    %v4197 = vsub.f32 %v3468, %v4196
    %4198 = vmatpush1.msra.mxu0 %v4197
    %4199 = vmatprep.subr.mxu0 0.0
    %v4200 = vand.u32 %v3469, 4294901760
    %v4201 = vsub.f32 %v3469, %v4200
    %4202 = vmatpush1.msra.mxu0 %v4201
    %4203 = vmatprep.subr.mxu0 0.0
    %v4204 = vand.u32 %v3470, 4294901760
    %v4205 = vsub.f32 %v3470, %v4204
    %4206 = vmatpush1.msra.mxu0 %v4205
    %4207 = vmatprep.subr.mxu0 0.0
    %v4208 = vand.u32 %v3471, 4294901760
    %v4209 = vsub.f32 %v3471, %v4208
    %4210 = vmatpush1.msra.mxu0 %v4209
    %4211 = vmatprep.subr.mxu0 0.0
    %v4212 = vand.u32 %v3472, 4294901760
    %v4213 = vsub.f32 %v3472, %v4212
    %4214 = vmatpush1.msra.mxu0 %v4213
    %4215 = vmatprep.subr.mxu0 0.0
    %v4216 = vand.u32 %v3473, 4294901760
    %v4217 = vsub.f32 %v3473, %v4216
    %4218 = vmatpush1.msra.mxu0 %v4217
    %4219 = vmatprep.subr.mxu0 0.0
    %v4220 = vand.u32 %v3474, 4294901760
    %v4221 = vsub.f32 %v3474, %v4220
    %4222 = vmatpush1.msra.mxu0 %v4221
    %4223 = vmatprep.subr.mxu0 0.0
    %v4224 = vand.u32 %v3475, 4294901760
    %v4225 = vsub.f32 %v3475, %v4224
    %4226 = vmatpush1.msra.mxu0 %v4225
    %4227 = vmatprep.subr.mxu0 0.0
    %v4228 = vand.u32 %v3476, 4294901760
    %v4229 = vsub.f32 %v3476, %v4228
    %4230 = vmatpush1.msra.mxu0 %v4229
    %4231 = vmatprep.subr.mxu0 0.0
    %v4232 = vand.u32 %v3477, 4294901760
    %v4233 = vsub.f32 %v3477, %v4232
    %4234 = vmatpush1.msra.mxu0 %v4233
    %4235 = vmatprep.subr.mxu0 0.0
    %v4236 = vand.u32 %v3478, 4294901760
    %v4237 = vsub.f32 %v3478, %v4236
    %4238 = vmatpush1.msra.mxu0 %v4237
    %4239 = vmatprep.subr.mxu0 0.0
    %v4240 = vand.u32 %v3479, 4294901760
    %v4241 = vsub.f32 %v3479, %v4240
    %4242 = vmatpush1.msra.mxu0 %v4241
    %4243 = vmatprep.subr.mxu0 0.0
    %v4244 = vand.u32 %v3480, 4294901760
    %v4245 = vsub.f32 %v3480, %v4244
    %4246 = vmatpush1.msra.mxu0 %v4245
    %4247 = vmatprep.subr.mxu0 0.0
    %v4248 = vand.u32 %v3481, 4294901760
    %v4249 = vsub.f32 %v3481, %v4248
    %4250 = vmatpush1.msra.mxu0 %v4249
    %4251 = vmatprep.subr.mxu0 0.0
    %v4252 = vand.u32 %v3482, 4294901760
    %v4253 = vsub.f32 %v3482, %v4252
    %4254 = vmatpush1.msra.mxu0 %v4253
    %4255 = vmatprep.subr.mxu0 0.0
    %4256 = vmatpush1.msra.mxu0 0.0
    %4257 = vmatprep.subr.mxu0 0.0
    %4258 = vmatpush1.msra.mxu0 0.0
    %4259 = vmatprep.subr.mxu0 0.0
    %4260 = vmatpush1.msra.mxu0 0.0
    %4261 = vmatprep.subr.mxu0 0.0
    %4262 = vmatpush1.msra.mxu0 0.0
    %4263 = vmatprep.subr.mxu0 0.0
    %4264 = vmatpush1.msra.mxu0 0.0
    %4265 = vmatprep.subr.mxu0 0.0
    %4266 = vmatpush1.msra.mxu0 0.0
    %4267 = vmatprep.subr.mxu0 0.0
    %4268 = vmatpush1.msra.mxu0 0.0
    %4269 = vmatprep.subr.mxu0 0.0
    %4270 = vmatpush1.msra.mxu0 0.0
    %4271 = vmatprep.subr.mxu0 0.0
    %4272 = vmatpush1.msra.mxu0 0.0
    %4273 = vmatprep.subr.mxu0 0.0
    %4274 = vmatpush1.msra.mxu0 0.0
    %4275 = vmatprep.subr.mxu0 0.0
    %4276 = vmatpush1.msra.mxu0 0.0
    %4277 = vmatprep.subr.mxu0 0.0
    %4278 = vmatpush1.msra.mxu0 0.0
    %4279 = vmatprep.subr.mxu0 0.0
    %4280 = vmatpush1.msra.mxu0 0.0
    %4281 = vmatprep.subr.mxu0 0.0
    %4282 = vmatpush1.msra.mxu0 0.0
    %4283 = vmatprep.subr.mxu0 0.0
    %4284 = vmatpush1.msra.mxu0 0.0
    %4285 = vmatprep.subr.mxu0 0.0
    %4286 = vmatpush1.msra.mxu0 0.0
    %4287 = vmatprep.mubr.f32.mxu0 0.0
    %v4288 = vand.u32 %v3947, 4294901760
    %v4289 = vsub.f32 %v3947, %v4288
    %4290 = vmatmul.mubr.f32.gmra.mrb[0].mxu0 %v4289
    %v4291 = vpop.f32.mrb[0].mxu0
    %v4292 = vadd.f32 %v4188, %v4291
    %v4293 = vpop.f32.mrb[0].mxu0
    %4294 = vdwg.mxu0
    %4295 = vmatprep.subr.mxu0 0.0
    %v4296 = vand.u32 %v3467, 4294901760
    %4297 = vmatpush1.msra.mxu0 %v4296
    %4298 = vmatprep.subr.mxu0 0.0
    %v4299 = vand.u32 %v3468, 4294901760
    %4300 = vmatpush1.msra.mxu0 %v4299
    %4301 = vmatprep.subr.mxu0 0.0
    %v4302 = vand.u32 %v3469, 4294901760
    %4303 = vmatpush1.msra.mxu0 %v4302
    %4304 = vmatprep.subr.mxu0 0.0
    %v4305 = vand.u32 %v3470, 4294901760
    %4306 = vmatpush1.msra.mxu0 %v4305
    %4307 = vmatprep.subr.mxu0 0.0
    %v4308 = vand.u32 %v3471, 4294901760
    %4309 = vmatpush1.msra.mxu0 %v4308
    %4310 = vmatprep.subr.mxu0 0.0
    %v4311 = vand.u32 %v3472, 4294901760
    %4312 = vmatpush1.msra.mxu0 %v4311
    %4313 = vmatprep.subr.mxu0 0.0
    %v4314 = vand.u32 %v3473, 4294901760
    %4315 = vmatpush1.msra.mxu0 %v4314
    %4316 = vmatprep.subr.mxu0 0.0
    %v4317 = vand.u32 %v3474, 4294901760
    %4318 = vmatpush1.msra.mxu0 %v4317
    %4319 = vmatprep.subr.mxu0 0.0
    %v4320 = vand.u32 %v3475, 4294901760
    %4321 = vmatpush1.msra.mxu0 %v4320
    %4322 = vmatprep.subr.mxu0 0.0
    %v4323 = vand.u32 %v3476, 4294901760
    %4324 = vmatpush1.msra.mxu0 %v4323
    %4325 = vmatprep.subr.mxu0 0.0
    %v4326 = vand.u32 %v3477, 4294901760
    %4327 = vmatpush1.msra.mxu0 %v4326
    %4328 = vmatprep.subr.mxu0 0.0
    %v4329 = vand.u32 %v3478, 4294901760
    %4330 = vmatpush1.msra.mxu0 %v4329
    %4331 = vmatprep.subr.mxu0 0.0
    %v4332 = vand.u32 %v3479, 4294901760
    %4333 = vmatpush1.msra.mxu0 %v4332
    %4334 = vmatprep.subr.mxu0 0.0
    %v4335 = vand.u32 %v3480, 4294901760
    %4336 = vmatpush1.msra.mxu0 %v4335
    %4337 = vmatprep.subr.mxu0 0.0
    %v4338 = vand.u32 %v3481, 4294901760
    %4339 = vmatpush1.msra.mxu0 %v4338
    %4340 = vmatprep.subr.mxu0 0.0
    %v4341 = vand.u32 %v3482, 4294901760
    %4342 = vmatpush1.msra.mxu0 %v4341
    %4343 = vmatprep.subr.mxu0 0.0
    %4344 = vmatpush1.msra.mxu0 0.0
    %4345 = vmatprep.subr.mxu0 0.0
    %4346 = vmatpush1.msra.mxu0 0.0
    %4347 = vmatprep.subr.mxu0 0.0
    %4348 = vmatpush1.msra.mxu0 0.0
    %4349 = vmatprep.subr.mxu0 0.0
    %4350 = vmatpush1.msra.mxu0 0.0
    %4351 = vmatprep.subr.mxu0 0.0
    %4352 = vmatpush1.msra.mxu0 0.0
    %4353 = vmatprep.subr.mxu0 0.0
    %4354 = vmatpush1.msra.mxu0 0.0
    %4355 = vmatprep.subr.mxu0 0.0
    %4356 = vmatpush1.msra.mxu0 0.0
    %4357 = vmatprep.subr.mxu0 0.0
    %4358 = vmatpush1.msra.mxu0 0.0
    %4359 = vmatprep.subr.mxu0 0.0
    %4360 = vmatpush1.msra.mxu0 0.0
    %4361 = vmatprep.subr.mxu0 0.0
    %4362 = vmatpush1.msra.mxu0 0.0
    %4363 = vmatprep.subr.mxu0 0.0
    %4364 = vmatpush1.msra.mxu0 0.0
    %4365 = vmatprep.subr.mxu0 0.0
    %4366 = vmatpush1.msra.mxu0 0.0
    %4367 = vmatprep.subr.mxu0 0.0
    %4368 = vmatpush1.msra.mxu0 0.0
    %4369 = vmatprep.subr.mxu0 0.0
    %4370 = vmatpush1.msra.mxu0 0.0
    %4371 = vmatprep.subr.mxu0 0.0
    %4372 = vmatpush1.msra.mxu0 0.0
    %4373 = vmatprep.subr.mxu0 0.0
    %4374 = vmatpush1.msra.mxu0 0.0
    %4375 = vmatprep.mubr.f32.mxu0 0.0
    %v4376 = vand.u32 %v3947, 4294901760
    %v4377 = vsub.f32 %v3947, %v4376
    %v4378 = vand.u32 %v4377, 4294901760
    %4379 = vmatmul.mubr.f32.gmra.mrb[0].mxu0 %v4378
    %v4380 = vpop.f32.mrb[0].mxu0
    %v4381 = vadd.f32 %v4292, %v4380
    %v4382 = vpop.f32.mrb[0].mxu0
    %4383 = vdwg.mxu0
    %4384 = vmatprep.subr.mxu0 0.0
    %v4385 = vand.u32 %v3467, 4294901760
    %v4386 = vsub.f32 %v3467, %v4385
    %v4387 = vand.u32 %v4386, 4294901760
    %4388 = vmatpush1.msra.mxu0 %v4387
    %4389 = vmatprep.subr.mxu0 0.0
    %v4390 = vand.u32 %v3468, 4294901760
    %v4391 = vsub.f32 %v3468, %v4390
    %v4392 = vand.u32 %v4391, 4294901760
    %4393 = vmatpush1.msra.mxu0 %v4392
    %4394 = vmatprep.subr.mxu0 0.0
    %v4395 = vand.u32 %v3469, 4294901760
    %v4396 = vsub.f32 %v3469, %v4395
    %v4397 = vand.u32 %v4396, 4294901760
    %4398 = vmatpush1.msra.mxu0 %v4397
    %4399 = vmatprep.subr.mxu0 0.0
    %v4400 = vand.u32 %v3470, 4294901760
    %v4401 = vsub.f32 %v3470, %v4400
    %v4402 = vand.u32 %v4401, 4294901760
    %4403 = vmatpush1.msra.mxu0 %v4402
    %4404 = vmatprep.subr.mxu0 0.0
    %v4405 = vand.u32 %v3471, 4294901760
    %v4406 = vsub.f32 %v3471, %v4405
    %v4407 = vand.u32 %v4406, 4294901760
    %4408 = vmatpush1.msra.mxu0 %v4407
    %4409 = vmatprep.subr.mxu0 0.0
    %v4410 = vand.u32 %v3472, 4294901760
    %v4411 = vsub.f32 %v3472, %v4410
    %v4412 = vand.u32 %v4411, 4294901760
    %4413 = vmatpush1.msra.mxu0 %v4412
    %4414 = vmatprep.subr.mxu0 0.0
    %v4415 = vand.u32 %v3473, 4294901760
    %v4416 = vsub.f32 %v3473, %v4415
    %v4417 = vand.u32 %v4416, 4294901760
    %4418 = vmatpush1.msra.mxu0 %v4417
    %4419 = vmatprep.subr.mxu0 0.0
    %v4420 = vand.u32 %v3474, 4294901760
    %v4421 = vsub.f32 %v3474, %v4420
    %v4422 = vand.u32 %v4421, 4294901760
    %4423 = vmatpush1.msra.mxu0 %v4422
    %4424 = vmatprep.subr.mxu0 0.0
    %v4425 = vand.u32 %v3475, 4294901760
    %v4426 = vsub.f32 %v3475, %v4425
    %v4427 = vand.u32 %v4426, 4294901760
    %4428 = vmatpush1.msra.mxu0 %v4427
    %4429 = vmatprep.subr.mxu0 0.0
    %v4430 = vand.u32 %v3476, 4294901760
    %v4431 = vsub.f32 %v3476, %v4430
    %v4432 = vand.u32 %v4431, 4294901760
    %4433 = vmatpush1.msra.mxu0 %v4432
    %4434 = vmatprep.subr.mxu0 0.0
    %v4435 = vand.u32 %v3477, 4294901760
    %v4436 = vsub.f32 %v3477, %v4435
    %v4437 = vand.u32 %v4436, 4294901760
    %4438 = vmatpush1.msra.mxu0 %v4437
    %4439 = vmatprep.subr.mxu0 0.0
    %v4440 = vand.u32 %v3478, 4294901760
    %v4441 = vsub.f32 %v3478, %v4440
    %v4442 = vand.u32 %v4441, 4294901760
    %4443 = vmatpush1.msra.mxu0 %v4442
    %4444 = vmatprep.subr.mxu0 0.0
    %v4445 = vand.u32 %v3479, 4294901760
    %v4446 = vsub.f32 %v3479, %v4445
    %v4447 = vand.u32 %v4446, 4294901760
    %4448 = vmatpush1.msra.mxu0 %v4447
    %4449 = vmatprep.subr.mxu0 0.0
    %v4450 = vand.u32 %v3480, 4294901760
    %v4451 = vsub.f32 %v3480, %v4450
    %v4452 = vand.u32 %v4451, 4294901760
    %4453 = vmatpush1.msra.mxu0 %v4452
    %4454 = vmatprep.subr.mxu0 0.0
    %v4455 = vand.u32 %v3481, 4294901760
    %v4456 = vsub.f32 %v3481, %v4455
    %v4457 = vand.u32 %v4456, 4294901760
    %4458 = vmatpush1.msra.mxu0 %v4457
    %4459 = vmatprep.subr.mxu0 0.0
    %v4460 = vand.u32 %v3482, 4294901760
    %v4461 = vsub.f32 %v3482, %v4460
    %v4462 = vand.u32 %v4461, 4294901760
    %4463 = vmatpush1.msra.mxu0 %v4462
    %4464 = vmatprep.subr.mxu0 0.0
    %4465 = vmatpush1.msra.mxu0 0.0
    %4466 = vmatprep.subr.mxu0 0.0
    %4467 = vmatpush1.msra.mxu0 0.0
    %4468 = vmatprep.subr.mxu0 0.0
    %4469 = vmatpush1.msra.mxu0 0.0
    %4470 = vmatprep.subr.mxu0 0.0
    %4471 = vmatpush1.msra.mxu0 0.0
    %4472 = vmatprep.subr.mxu0 0.0
    %4473 = vmatpush1.msra.mxu0 0.0
    %4474 = vmatprep.subr.mxu0 0.0
    %4475 = vmatpush1.msra.mxu0 0.0
    %4476 = vmatprep.subr.mxu0 0.0
    %4477 = vmatpush1.msra.mxu0 0.0
    %4478 = vmatprep.subr.mxu0 0.0
    %4479 = vmatpush1.msra.mxu0 0.0
    %4480 = vmatprep.subr.mxu0 0.0
    %4481 = vmatpush1.msra.mxu0 0.0
    %4482 = vmatprep.subr.mxu0 0.0
    %4483 = vmatpush1.msra.mxu0 0.0
    %4484 = vmatprep.subr.mxu0 0.0
    %4485 = vmatpush1.msra.mxu0 0.0
    %4486 = vmatprep.subr.mxu0 0.0
    %4487 = vmatpush1.msra.mxu0 0.0
    %4488 = vmatprep.subr.mxu0 0.0
    %4489 = vmatpush1.msra.mxu0 0.0
    %4490 = vmatprep.subr.mxu0 0.0
    %4491 = vmatpush1.msra.mxu0 0.0
    %4492 = vmatprep.subr.mxu0 0.0
    %4493 = vmatpush1.msra.mxu0 0.0
    %4494 = vmatprep.subr.mxu0 0.0
    %4495 = vmatpush1.msra.mxu0 0.0
    %4496 = vmatprep.mubr.f32.mxu0 0.0
    %v4497 = vand.u32 %v3947, 4294901760
    %4498 = vmatmul.mubr.f32.gmra.mrb[0].mxu0 %v4497
    %v4499 = vpop.f32.mrb[0].mxu0
    %v4500 = vadd.f32 %v4381, %v4499
    %v4501 = vpop.f32.mrb[0].mxu0
    %4502 = vdwg.mxu0
    %4503 = vmatprep.subr.mxu0 0.0
    %v4504 = vand.u32 %v3467, 4294901760
    %4505 = vmatpush1.msra.mxu0 %v4504
    %4506 = vmatprep.subr.mxu0 0.0
    %v4507 = vand.u32 %v3468, 4294901760
    %4508 = vmatpush1.msra.mxu0 %v4507
    %4509 = vmatprep.subr.mxu0 0.0
    %v4510 = vand.u32 %v3469, 4294901760
    %4511 = vmatpush1.msra.mxu0 %v4510
    %4512 = vmatprep.subr.mxu0 0.0
    %v4513 = vand.u32 %v3470, 4294901760
    %4514 = vmatpush1.msra.mxu0 %v4513
    %4515 = vmatprep.subr.mxu0 0.0
    %v4516 = vand.u32 %v3471, 4294901760
    %4517 = vmatpush1.msra.mxu0 %v4516
    %4518 = vmatprep.subr.mxu0 0.0
    %v4519 = vand.u32 %v3472, 4294901760
    %4520 = vmatpush1.msra.mxu0 %v4519
    %4521 = vmatprep.subr.mxu0 0.0
    %v4522 = vand.u32 %v3473, 4294901760
    %4523 = vmatpush1.msra.mxu0 %v4522
    %4524 = vmatprep.subr.mxu0 0.0
    %v4525 = vand.u32 %v3474, 4294901760
    %4526 = vmatpush1.msra.mxu0 %v4525
    %4527 = vmatprep.subr.mxu0 0.0
    %v4528 = vand.u32 %v3475, 4294901760
    %4529 = vmatpush1.msra.mxu0 %v4528
    %4530 = vmatprep.subr.mxu0 0.0
    %v4531 = vand.u32 %v3476, 4294901760
    %4532 = vmatpush1.msra.mxu0 %v4531
    %4533 = vmatprep.subr.mxu0 0.0
    %v4534 = vand.u32 %v3477, 4294901760
    %4535 = vmatpush1.msra.mxu0 %v4534
    %4536 = vmatprep.subr.mxu0 0.0
    %v4537 = vand.u32 %v3478, 4294901760
    %4538 = vmatpush1.msra.mxu0 %v4537
    %4539 = vmatprep.subr.mxu0 0.0
    %v4540 = vand.u32 %v3479, 4294901760
    %4541 = vmatpush1.msra.mxu0 %v4540
    %4542 = vmatprep.subr.mxu0 0.0
    %v4543 = vand.u32 %v3480, 4294901760
    %4544 = vmatpush1.msra.mxu0 %v4543
    %4545 = vmatprep.subr.mxu0 0.0
    %v4546 = vand.u32 %v3481, 4294901760
    %4547 = vmatpush1.msra.mxu0 %v4546
    %4548 = vmatprep.subr.mxu0 0.0
    %v4549 = vand.u32 %v3482, 4294901760
    %4550 = vmatpush1.msra.mxu0 %v4549
    %4551 = vmatprep.subr.mxu0 0.0
    %4552 = vmatpush1.msra.mxu0 0.0
    %4553 = vmatprep.subr.mxu0 0.0
    %4554 = vmatpush1.msra.mxu0 0.0
    %4555 = vmatprep.subr.mxu0 0.0
    %4556 = vmatpush1.msra.mxu0 0.0
    %4557 = vmatprep.subr.mxu0 0.0
    %4558 = vmatpush1.msra.mxu0 0.0
    %4559 = vmatprep.subr.mxu0 0.0
    %4560 = vmatpush1.msra.mxu0 0.0
    %4561 = vmatprep.subr.mxu0 0.0
    %4562 = vmatpush1.msra.mxu0 0.0
    %4563 = vmatprep.subr.mxu0 0.0
    %4564 = vmatpush1.msra.mxu0 0.0
    %4565 = vmatprep.subr.mxu0 0.0
    %4566 = vmatpush1.msra.mxu0 0.0
    %4567 = vmatprep.subr.mxu0 0.0
    %4568 = vmatpush1.msra.mxu0 0.0
    %4569 = vmatprep.subr.mxu0 0.0
    %4570 = vmatpush1.msra.mxu0 0.0
    %4571 = vmatprep.subr.mxu0 0.0
    %4572 = vmatpush1.msra.mxu0 0.0
    %4573 = vmatprep.subr.mxu0 0.0
    %4574 = vmatpush1.msra.mxu0 0.0
    %4575 = vmatprep.subr.mxu0 0.0
    %4576 = vmatpush1.msra.mxu0 0.0
    %4577 = vmatprep.subr.mxu0 0.0
    %4578 = vmatpush1.msra.mxu0 0.0
    %4579 = vmatprep.subr.mxu0 0.0
    %4580 = vmatpush1.msra.mxu0 0.0
    %4581 = vmatprep.subr.mxu0 0.0
    %4582 = vmatpush1.msra.mxu0 0.0
    %4583 = vmatprep.mubr.f32.mxu0 0.0
    %v4584 = vand.u32 %v3947, 4294901760
    %4585 = vmatmul.mubr.f32.gmra.mrb[0].mxu0 %v4584
    %v4586 = vpop.f32.mrb[0].mxu0
    %v4587 = vadd.f32 %v4500, %v4586
    %v4588 = vpop.f32.mrb[0].mxu0
    %4589 = vdwg.mxu0
    %v4592 = vunpack.c.l.s4 1966171168
    %v4593 = vunpack.c.0.s8 %v4592
    %v4594 = vlaneseq
    %v4595 = vshrl.u32 %v4594, 7
    %v4596 = vsub.s32 %v4593, %v4595
    %v4597 = vrot.slane %v3466, %v4596
    %v4598 = vcombine.high %v4597, %v4597
    %v4600 = vunpack.c.l.s4 1966171168
    %v4601 = vunpack.c.0.s8 %v4600
    %v4602 = vlaneseq
    %v4603 = vshrl.u32 %v4602, 7
    %v4604 = vsub.s32 %v4601, %v4603
    %v4605 = vrot.slane %v4597, %v4604
    %v4607 = vunpack.c.l.s4 1966171168
    %v4608 = vunpack.c.0.s8 %v4607
    %v4609 = vlaneseq
    %v4610 = vshrl.u32 %v4609, 7
    %v4611 = vsub.s32 %v4608, %v4610
    %v4612 = vrot.slane %v4598, %v4611
    %v4613 = vcombine.high %v4605, %v4605
    %v4614 = vlaneseq
    %v4615 = vshrl.u32 %v4614, 7
    %v4616 = vsub.s32 0, %v4615
    %v4617 = vrot.slane %v4605, %v4616
    %v4618 = vlaneseq
    %v4619 = vshrl.u32 %v4618, 7
    %v4620 = vsub.s32 0, %v4619
    %v4621 = vrot.slane %v4612, %v4620
    %v4622 = vlaneseq
    %v4623 = vshrl.u32 %v4622, 7
    %v4624 = vsub.s32 0, %v4623
    %v4625 = vrot.slane %v4613, %v4624
    %v4629 = vadd.f32 %v4617, %v4587
    %v4630 = vadd.f32 %v4621, %v4587
    %v4631 = vadd.f32 %v4625, %v4587
    %v4632 = vmax.f32 %v4629, 0.0
    %v4633 = vmax.f32 %v4630, 0.0
    %v4634 = vmax.f32 %v4631, 0.0
    %v4635 = vld [vmem:[%s11] sm:$0x1]
    %v4637 = vlaneseq
    %v4638 = vshrl.u32 %v4637, 7
    %v4639 = vsub.s32 0, %v4638
    %v4640 = vrot.slane %v4635, %v4639
    %v4642 = vmul.f32 %v4632, %v4640
    %v4643 = vmul.f32 %v4633, %v4640
    %v4644 = vmul.f32 %v4634, %v4640
    %vm4645 = vcmask 519168
    %v4646 = vsel %vm4645, %v4642, 0.0
    %4647 = vadd.xlane.f32.xlu0 %v4646
    %v4648 = vpop.xlane.xlu0 %4647
    %v4649 = vsel %vm4645, %v4643, 0.0
    %4650 = vadd.xlane.f32.xlu0 %v4649
    %v4651 = vpop.xlane.xlu0 %4650
    %v4652 = vsel %vm4645, %v4644, 0.0
    %4653 = vadd.xlane.f32.xlu0 %v4652
    %v4654 = vpop.xlane.xlu0 %4653
    %v4655 = vld [vmem:[#allocation2] sm:$0x1]
    %v4657 = vlaneseq
    %v4658 = vshrl.u32 %v4657, 7
    %v4659 = vsub.s32 0, %v4658
    %v4660 = vrot.slane %v4655, %v4659
    %4661 = vset.pattern.permute.xlu0 0
    %4662 = vperm.xlu0 %4661, %v4660
    %v4663 = vpop.permute.xlu0 %4662
    %v4665 = vadd.f32 %v4648, %v4663
    %v4666 = vadd.f32 %v4651, %v4663
    %v4667 = vadd.f32 %v4654, %v4663
    %v4668 = vxor.u32 %v4665, 2147483648
    %v4669 = vxor.u32 %v4666, 2147483648
    %v4670 = vxor.u32 %v4667, 2147483648
    %v4671 = vmul.f32 %v4668, 1.442695
    %v4672 = vpow.pop %v4671
    %v4673 = vmul.f32 %v4669, 1.442695
    %v4674 = vpow.pop %v4673
    %v4675 = vmul.f32 %v4670, 1.442695
    %v4676 = vpow.pop %v4675
    %v4677 = vadd.f32 %v4672, 1.0
    %v4678 = vadd.f32 %v4674, 1.0
    %v4679 = vadd.f32 %v4676, 1.0
    %v4680 = vrcp.pop %v4677
    %v4681 = vmul.f32 1.0, %v4680
    %v4682 = vrcp.pop %v4678
    %v4683 = vmul.f32 1.0, %v4682
    %v4684 = vrcp.pop %v4679
    %v4685 = vmul.f32 1.0, %v4684
    %v4689 = vlaneseq
    %v4690 = vand.u32 %v4689, 127
    %v4691 = vlaneseq
    %v4692 = vshrl.u32 %v4691, 7
    %v4693 = vsub.s32 %v4690, %v4692
    %v4694 = vrot.slane %v4681, %v4693
    %v4695 = vlaneseq
    %v4696 = vshrl.u32 %v4695, 7
    %v4697 = vsub.s32 %v4690, %v4696
    %v4698 = vrot.slane %v4683, %v4697
    %v4699 = vlaneseq
    %v4700 = vshrl.u32 %v4699, 7
    %v4701 = vsub.s32 %v4690, %v4700
    %v4702 = vrot.slane %v4685, %v4701
    %vm4703 = vcmask 1041409
    %v4704 = vsel %vm4703, %v4698, %v4694
    %vm4705 = vcmask 1042434
    %v4706 = vsel %vm4705, %v4702, %v4704
    %vm4708 = vcmask 26624
    %4709 = vst.msk [vmem:[#allocation3] sm:$0x7] %vm4708, %v4706
    // Predicated region
    $region54: #{embnet_forward.3} parent=1 // pred_check
      _
    $region55: #{embnet_forward.3} parent=1 // pred_check_branch
      %4711 = sbr.rel (0) target = $region57
    $region56: #{embnet_forward.3} parent=1 // pred_region
      %s4713 = ssub.s32 64, 64
      %4714 = vsyncadd [#allocation4], %s4713
      %s4716 = sshll.u32 [#allocation3], 4
      %s4717 = int_to_ptr.vmem [resolvable:$true] %s4716
      %4719 = dma.vmem_to_hbm [thread:$0]  %s4717, 64, %s13, [#allocation4]
    $region57: #{embnet_forward.3} parent=1 // pred_fallthru
      _
    // Predicated region
    $region58: #{embnet_forward.3} parent=1 // pred_check
      _
    $region59: #{embnet_forward.3} parent=1 // pred_check_branch
      %4721 = sbr.rel (0) target = $region61
    $region60: #{embnet_forward.3} parent=1 // pred_region
      %s4723 = ssub.s32 128, 128
      %4724 = vsyncadd [#allocation6], %s4723
      %s4726 = sshll.u32 [#allocation5], 4
      %s4727 = int_to_ptr.vmem [resolvable:$true] %s4726
      %4729 = dma.vmem_to_hbm [thread:$0]  %s4727, 128, %s14, [#allocation6]
    $region61: #{embnet_forward.3} parent=1 // pred_fallthru
      _
    // Predicated region
    $region62: #{embnet_forward.3} parent=1 // pred_check
      _
    $region63: #{embnet_forward.3} parent=1 // pred_check_branch
      %4731 = sbr.rel (0) target = $region65
    $region64: #{embnet_forward.3} parent=1 // pred_region
      %s4733 = ssub.s32 128, 128
      %4734 = vsyncadd [#allocation6], %s4733
      %s4736 = sshll.u32 [#allocation7], 4
      %s4737 = int_to_ptr.vmem [resolvable:$true] %s4736
      %4739 = dma.vmem_to_hbm [thread:$0]  %s4737, 128, %s15, [#allocation6]
    $region65: #{embnet_forward.3} parent=1 // pred_fallthru
      _
    // Predicated region
    $region66: #{embnet_forward.3} parent=1 // pred_check
      _
    $region67: #{embnet_forward.3} parent=1 // pred_check_branch
      %4741 = sbr.rel (0) target = $region69
    $region68: #{embnet_forward.3} parent=1 // pred_region
      %4742 = dma.done [#allocation4], 64
    $region69: #{embnet_forward.3} parent=1 // pred_fallthru
      _
    // Predicated region
    $region70: #{embnet_forward.3} parent=1 // pred_check
      _
    $region71: #{embnet_forward.3} parent=1 // pred_check_branch
      %4744 = sbr.rel (0) target = $region73
    $region72: #{embnet_forward.3} parent=1 // pred_region
      %4745 = dma.done [#allocation6], 128
    $region73: #{embnet_forward.3} parent=1 // pred_fallthru
      _
    // Predicated region
    $region74: #{embnet_forward.3} parent=1 // pred_check
      _
    $region75: #{embnet_forward.3} parent=1 // pred_check_branch
      %4747 = sbr.rel (0) target = $region77
    $region76: #{embnet_forward.3} parent=1 // pred_region
      %4748 = dma.done [#allocation6], 128
    $region77: #{embnet_forward.3} parent=1 // pred_fallthru
      _
    %4749 = vsyncpa [#allocation4], 1
    %4750 = vsyncpa [#allocation6], 1

</llo_original>
